<compile_context>
chip_gen: v6e
topology: v6e:2x2x1
jax: 0.10.0
libtpu: 0.0.40
codegen_flags: <defaults>
</compile_context>

<pallas_src>
import jax
import jax.numpy as jnp
import numpy as np
from jax.experimental import pallas as pl
from jax.experimental.pallas import tpu as pltpu


# ----------------------------- in-kernel helpers -----------------------------

def _col_mask(s, pitch, valid_w):
    """(1, s) bool mask: True where (flat col % pitch) < valid_w; None if all valid."""
    if valid_w >= pitch:
        return None
    col = jax.lax.broadcasted_iota(jnp.int32, (1, s), 1)
    if pitch & (pitch - 1) == 0:          # power-of-two pitch: cheap bitwise-and
        col_in_row = jnp.bitwise_and(col, pitch - 1)
    else:
        col_in_row = col % pitch
    return col_in_row < valid_w


def _instance_norm(x, mask, inv_count, relu, eps=1e-5):
    """InstanceNorm2d (affine=False, biased variance, eps=1e-5) over the flat spatial
    axis restricted to `mask`, single pass (sum + sum-of-squares)."""
    xm = x if mask is None else jnp.where(mask, x, 0.0)
    s1 = jnp.sum(xm, axis=1, keepdims=True)
    s2 = jnp.sum(xm * x, axis=1, keepdims=True)     # masked cols contribute 0
    mu = s1 * inv_count
    var = jnp.maximum(s2 * inv_count - mu * mu, 0.0)
    y = (x - mu) * jax.lax.rsqrt(var + eps)
    return jnp.maximum(y, 0.0) if relu else y


def _make_kernel(nb, cout, hp, wp, pitch):
    s0 = hp * pitch                 # pooled slab length        (valid width wp)
    s1 = (hp - 2) * pitch           # after 1st 3x3             (valid width wp-2)
    s2 = (hp - 4) * pitch           # after 2nd 3x3             (valid width wp-4)
    inv0 = 1.0 / float(hp * wp)
    inv1 = 1.0 / float((hp - 2) * (wp - 2))
    inv2 = 1.0 / float((hp - 4) * (wp - 4))

    def kernel(x_ref, w0_ref, w1_ref, w3_ref, b_ref, o_ref):
        f32 = jnp.float32
        mask0 = _col_mask(s0, pitch, wp)
        mask1 = _col_mask(s1, pitch, wp - 2)
        mask2 = _col_mask(s2, pitch, wp - 4)

        def shift(v, d):
            # shifted[q] = v[(q + d) mod size].  Wrapped values land only in
            # garbage rows/cols that no valid output position ever reads.
            return pltpu.roll(v, shift=v.shape[1] - d, axis=1) if d else v

        def conv1x1(w, v, bias):        # whole-slab 1x1 conv: one MXU matmul
            return jnp.dot(w, v, preferred_element_type=f32) + bias

        def branch(x_in, mask_in, inv_in, w1_idx, w3_idx, b_idx,
                   hi, mask_out, inv_out):
            s_out = (hi - 2) * pitch
            # 1x1 -> IN -> ReLU
            a = conv1x1(w1_ref[w1_idx], x_in, b_ref[b_idx])
            a = _instance_norm(a, mask_in, inv_in, relu=True)
            # K-concatenated 3x3 valid conv: stack dj-shifted copies on the
            # contraction axis; 3 matmuls (one per row tap di) with K = 3*Cout.
            # All lane slices start at di*pitch (128-aligned).
            rstack = jnp.concatenate([a, shift(a, 1), shift(a, 2)], axis=0)
            acc = jnp.dot(w3_ref[w3_idx, 0], rstack[:, :s_out],
                          preferred_element_type=f32)
            acc = acc + jnp.dot(w3_ref[w3_idx, 1], rstack[:, pitch:pitch + s_out],
                                preferred_element_type=f32)
            acc = acc + jnp.dot(w3_ref[w3_idx, 2], rstack[:, 2 * pitch:2 * pitch + s_out],
                                preferred_element_type=f32)
            bact = _instance_norm(acc + b_ref[b_idx + 1], mask_out, inv_out, relu=True)
            # 1x1 -> IN
            c = conv1x1(w1_ref[w1_idx + 1], bact, b_ref[b_idx + 2])
            return _instance_norm(c, mask_out, inv_out, relu=False)

        for i in range(nb):             # static unroll over samples in this block
            # conv2out: 1x1 conv Cin -> Cout over the whole pooled slab.
            x0 = conv1x1(w0_ref[...], x_ref[i], b_ref[0])
            # residual slice x0[:, 1:-1, 1:-1] via +1 roll then aligned window
            x0s = shift(x0, 1)[:, pitch:pitch + s1]
            c1 = branch(x0, mask0, inv0, 0, 0, 1, hp, mask1, inv1)
            x1 = x0s + c1
            x1s = shift(x1, 1)[:, pitch:pitch + s2]
            c2 = branch(x1, mask1, inv1, 2, 1, 4, hp - 2, mask2, inv2)
            o_ref[i] = (x1s + c2).astype(o_ref.dtype)   # lane-dense store

    return kernel


# --------------------------------- wrapper -----------------------------------

def down_pallas(x, params, samples_per_step=None):
    N, Cin, H, W = x.shape
    assert H % 2 == 0 and W % 2 == 0, "MaxPool2d(2) needs even spatial dims"
    Cout = params["w0"].shape[0]
    Hp, Wp = H // 2, W // 2
    assert Hp >= 5 and Wp >= 5, "two valid 3x3 convs need pooled dims >= 5"
    H2, W2 = Hp - 4, Wp - 4
    P = ((Wp + 127) // 128) * 128          # 128-aligned row pitch (lane axis)
    S0, S2 = Hp * P, H2 * P                # lane-dense slab / output lengths
    f32 = jnp.float32

    # TODO(synk): the 2x2 max-pool reduce-window has no clean in-kernel Mosaic
    # lowering (stride-2 lane reduction); it is done as cheap XLA ops here and
    # allow_input_fusion lets XLA fuse it into the pallas operand so the pooled
    # slab is not separately materialized in HBM.
    xp = jnp.max(x.reshape(N, Cin, Hp, 2, Wp, 2), axis=(3, 5))
    xp = jnp.pad(xp, ((0, 0), (0, 0), (0, 0), (0, P - Wp)))
    xp_flat = xp.reshape(N, Cin, S0).astype(f32)

    # Parameter packing: PyTorch layouts -> kernel layouts, consolidated into
    # four replicated inputs (fewer DMA descriptors / VMEM input slots).
    def k1x1(w):   # (Co, Ci, 1, 1) -> (Co, Ci)
        return w[:, :, 0, 0]

    def k3x3(w):   # (Co, Ci, 3, 3) -> (3, Co, 3*Ci): [di, o, dj*Ci + i] = w[o,i,di,dj]
        co, ci = w.shape[0], w.shape[1]
        return jnp.transpose(w, (2, 0, 3, 1)).reshape(3, co, 3 * ci)

    w0 = k1x1(params["w0"]).astype(f32)                                          # (Cout, Cin)
    w1 = jnp.stack([k1x1(params["dc1_wA"]), k1x1(params["dc1_wC"]),
                    k1x1(params["dc2_wA"]), k1x1(params["dc2_wC"])]).astype(f32)  # (4, Cout, Cout)
    w3 = jnp.stack([k3x3(params["dc1_wB"]),
                    k3x3(params["dc2_wB"])]).astype(f32)                          # (2, 3, Cout, 3*Cout)
    b = jnp.stack([params["b0"],
                   params["dc1_bA"], params["dc1_bB"], params["dc1_bC"],
                   params["dc2_bA"], params["dc2_bB"], params["dc2_bC"]]
                  ).astype(f32)[:, :, None]                                       # (7, Cout, 1)

    # Samples per grid step: batch several tiny samples to amortize the ~0.35us
    # per-step overhead, capped by a rough VMEM budget for the in-flight slabs.
    # (On v7x with 2 TCs you may prefer N // nb >= 2 grid steps; pass
    # samples_per_step explicitly in that case.)
    if samples_per_step is None:
        per_sample = 4 * (2 * Cin * S0 + 2 * Cout * S2 + 10 * Cout * S0)
        nb = max(1, min(N, 8, (8 << 20) // max(per_sample, 1)))
        while N % nb:
            nb -= 1
    else:
        nb = int(samples_per_step)
        assert N % nb == 0

    def rep_spec(a):   # whole (small) parameter array, same block at every step
        zeros = (0,) * a.ndim
        return pl.BlockSpec(a.shape, lambda n, _z=zeros: _z)

    grid_spec = pltpu.PrefetchScalarGridSpec(
        num_scalar_prefetch=0,
        grid=(N // nb,),
        in_specs=[pl.BlockSpec((nb, Cin, S0), lambda n: (n, 0, 0)),
                  rep_spec(w0), rep_spec(w1), rep_spec(w3), rep_spec(b)],
        out_specs=pl.BlockSpec((nb, Cout, S2), lambda n: (n, 0, 0)),
    )

    out_flat = pl.pallas_call(
        _make_kernel(nb, Cout, Hp, Wp, P),
        out_shape=jax.ShapeDtypeStruct((N, Cout, S2), x.dtype),
        grid_spec=grid_spec,
        compiler_params=pltpu.CompilerParams(
            dimension_semantics=("parallel",),            # batch axis, megacore-friendly
            allow_input_fusion=[True, False, False, False, False],
        ),
    )(xp_flat, w0, w1, w3, b)

    # Flat row-pitch-P output -> NCHW: keep only the W2 valid columns per row.
    return out_flat.reshape(N, Cout, H2, P)[:, :, :, :W2]


# ----------------------------- pure-JAX reference ----------------------------

def _conv_ref(x, w, b):
    y = jax.lax.conv_general_dilated(
        x, w, window_strides=(1, 1), padding="VALID",
        dimension_numbers=("NCHW", "OIHW", "NCHW"),
        precision=jax.lax.Precision.HIGHEST,
    )
    return y + b[None, :, None, None]


def _inorm_ref(x, eps=1e-5):
    mu = jnp.mean(x, axis=(2, 3), keepdims=True)
    var = jnp.mean(jnp.square(x - mu), axis=(2, 3), keepdims=True)
    return (x - mu) / jnp.sqrt(var + eps)


def down_reference(x, p):
    N, C, H, W = x.shape
    xp = jnp.max(x.reshape(N, C, H // 2, 2, W // 2, 2), axis=(3, 5))

    def branch(z, pre):
        y = jax.nn.relu(_inorm_ref(_conv_ref(z, p[pre + "wA"], p[pre + "bA"])))
        y = jax.nn.relu(_inorm_ref(_conv_ref(y, p[pre + "wB"], p[pre + "bB"])))
        return _inorm_ref(_conv_ref(y, p[pre + "wC"], p[pre + "bC"]))

    x0 = _conv_ref(xp, p["w0"], p["b0"])
    x1 = x0[:, :, 1:-1, 1:-1] + branch(x0, "dc1_")
    x2 = x1[:, :, 1:-1, 1:-1] + branch(x1, "dc2_")
    return x2


# ------------------------------- params & main --------------------------------

def init_params(key, in_channels, out_channels):
    names_shapes = [
        ("w0", (out_channels, in_channels, 1, 1)), ("b0", (out_channels,)),
    ]
    for pre in ("dc1_", "dc2_"):
        names_shapes += [
            (pre + "wA", (out_channels, out_channels, 1, 1)), (pre + "bA", (out_channels,)),
            (pre + "wB", (out_channels, out_channels, 3, 3)), (pre + "bB", (out_channels,)),
            (pre + "wC", (out_channels, out_channels, 1, 1)), (pre + "bC", (out_channels,)),
        ]
    keys = jax.random.split(key, len(names_shapes))
    return {
        name: 0.2 * jax.random.normal(k, shape, jnp.float32)
        for (name, shape), k in zip(names_shapes, keys)
    }


if __name__ == "__main__":
    key = jax.random.PRNGKey(0)
    k_x, k_p = jax.random.split(key)

    N, Cin, Cout, H, W = 2, 4, 8, 16, 16
    x = jax.random.normal(k_x, (N, Cin, H, W), jnp.float32)
    params = init_params(k_p, Cin, Cout)

    out = down_pallas(x, params)
    out = jax.block_until_ready(out)

    ref = down_reference(x, params)
    assert out.shape == (N, Cout, H // 2 - 4, W // 2 - 4), out.shape
    # loose tolerance: in-kernel matmuls use default TPU f32 matmul precision,
    # reference pins Precision.HIGHEST.
    np.testing.assert_allclose(np.asarray(out), np.asarray(ref), atol=5e-2, rtol=5e-2)

    print("KERNEL_OK")
</pallas_src>

<mosaic_0001>
module attributes {stable_mosaic.version = 11 : i64} {
  func.func @kernel(%arg0: i32, %arg1: memref<2x4x1024xf32, #tpu.memory_space<vmem>>, %arg2: memref<8x4xf32, #tpu.memory_space<vmem>>, %arg3: memref<4x8x8xf32, #tpu.memory_space<vmem>>, %arg4: memref<2x3x8x24xf32, #tpu.memory_space<vmem>>, %arg5: memref<7x8x1xf32, #tpu.memory_space<vmem>>, %arg6: memref<2x8x512xf32, #tpu.memory_space<vmem>>) attributes {dimension_semantics = [#tpu.dimension_semantics<parallel>], iteration_bounds = array<i64: 1>, scalar_prefetch = 0 : i64, scratch_operands = 0 : i64, tpu.core_type = #tpu.core_type<tc>, window_params = [{transform_indices = @transform_0, window_bounds = array<i64: 2, 4, 1024>}, {pipeline_mode = #tpu.pipeline_mode<synchronous>, transform_indices = @transform_1, window_bounds = array<i64: 8, 4>}, {pipeline_mode = #tpu.pipeline_mode<synchronous>, transform_indices = @transform_2, window_bounds = array<i64: 4, 8, 8>}, {pipeline_mode = #tpu.pipeline_mode<synchronous>, transform_indices = @transform_3, window_bounds = array<i64: 2, 3, 8, 24>}, {pipeline_mode = #tpu.pipeline_mode<synchronous>, transform_indices = @transform_4, window_bounds = array<i64: 7, 8, 1>}, {transform_indices = @transform_5, window_bounds = array<i64: 2, 8, 512>}]} {
    %0 = tpu.iota {dimensions = array<i32: 1>} : vector<1x1024xi32>
    %c127_i32 = arith.constant 127 : i32
    %1 = vector.broadcast %c127_i32 : i32 to vector<1x1024xi32>
    %2 = arith.andi %0, %1 : vector<1x1024xi32>
    %c8_i32 = arith.constant 8 : i32
    %3 = vector.broadcast %c8_i32 : i32 to vector<1x1024xi32>
    %4 = arith.cmpi slt, %2, %3 : vector<1x1024xi32>
    %5 = tpu.iota {dimensions = array<i32: 1>} : vector<1x768xi32>
    %c127_i32_0 = arith.constant 127 : i32
    %6 = vector.broadcast %c127_i32_0 : i32 to vector<1x768xi32>
    %7 = arith.andi %5, %6 : vector<1x768xi32>
    %c6_i32 = arith.constant 6 : i32
    %8 = vector.broadcast %c6_i32 : i32 to vector<1x768xi32>
    %9 = arith.cmpi slt, %7, %8 : vector<1x768xi32>
    %10 = tpu.iota {dimensions = array<i32: 1>} : vector<1x512xi32>
    %c127_i32_1 = arith.constant 127 : i32
    %11 = vector.broadcast %c127_i32_1 : i32 to vector<1x512xi32>
    %12 = arith.andi %10, %11 : vector<1x512xi32>
    %c4_i32 = arith.constant 4 : i32
    %13 = vector.broadcast %c4_i32 : i32 to vector<1x512xi32>
    %14 = arith.cmpi slt, %12, %13 : vector<1x512xi32>
    %c0 = arith.constant 0 : index
    %c0_2 = arith.constant 0 : index
    %15 = vector.load %arg2[%c0, %c0_2] : memref<8x4xf32, #tpu.memory_space<vmem>>, vector<8x4xf32>
    %c0_3 = arith.constant 0 : index
    %c0_4 = arith.constant 0 : index
    %c0_5 = arith.constant 0 : index
    %16 = vector.load %arg1[%c0_3, %c0_4, %c0_5] : memref<2x4x1024xf32, #tpu.memory_space<vmem>>, vector<1x4x1024xf32>
    %17 = vector.shape_cast %16 : vector<1x4x1024xf32> to vector<4x1024xf32>
    %c0_6 = arith.constant 0 : index
    %c0_7 = arith.constant 0 : index
    %c0_8 = arith.constant 0 : index
    %18 = vector.load %arg5[%c0_6, %c0_7, %c0_8] : memref<7x8x1xf32, #tpu.memory_space<vmem>>, vector<1x8x1xf32>
    %19 = vector.shape_cast %18 : vector<1x8x1xf32> to vector<8x1xf32>
    %cst = arith.constant dense<0.000000e+00> : vector<8x1024xf32>
    %20 = tpu.matmul %15, %17, %cst {dimension_numbers = #tpu.dot_dimension_numbers<[1], [0], [0], [1], [0, 0, 1, 1], [], []>} : vector<8x4xf32>, vector<4x1024xf32>, vector<8x1024xf32> -> vector<8x1024xf32>
    %21 = vector.broadcast %19 : vector<8x1xf32> to vector<8x1024xf32>
    %22 = arith.addf %20, %21 : vector<8x1024xf32>
    %c1023_i32 = arith.constant 1023 : i32
    %23 = tpu.dynamic_rotate %22 by %c1023_i32 dim 1 : vector<8x1024xf32>, i32 -> vector<8x1024xf32>
    %24 = vector.extract_strided_slice %23 {offsets = [0, 128], sizes = [8, 768], strides = [1, 1]} : vector<8x1024xf32> to vector<8x768xf32>
    %c0_9 = arith.constant 0 : index
    %c0_10 = arith.constant 0 : index
    %c0_11 = arith.constant 0 : index
    %25 = vector.load %arg3[%c0_9, %c0_10, %c0_11] : memref<4x8x8xf32, #tpu.memory_space<vmem>>, vector<1x8x8xf32>
    %26 = vector.shape_cast %25 : vector<1x8x8xf32> to vector<8x8xf32>
    %c1 = arith.constant 1 : index
    %c0_12 = arith.constant 0 : index
    %c0_13 = arith.constant 0 : index
    %27 = vector.load %arg5[%c1, %c0_12, %c0_13] : memref<7x8x1xf32, #tpu.memory_space<vmem>>, vector<1x8x1xf32>
    %28 = vector.shape_cast %27 : vector<1x8x1xf32> to vector<8x1xf32>
    %cst_14 = arith.constant dense<0.000000e+00> : vector<8x1024xf32>
    %29 = tpu.matmul %26, %22, %cst_14 {dimension_numbers = #tpu.dot_dimension_numbers<[1], [0], [0], [1], [0, 0, 1, 1], [], []>} : vector<8x8xf32>, vector<8x1024xf32>, vector<8x1024xf32> -> vector<8x1024xf32>
    %30 = vector.broadcast %28 : vector<8x1xf32> to vector<8x1024xf32>
    %31 = arith.addf %29, %30 : vector<8x1024xf32>
    %cst_15 = arith.constant 0.000000e+00 : f32
    %32 = vector.shape_cast %4 : vector<1x1024xi1> to vector<1x1024xi1>
    %33 = vector.broadcast %32 : vector<1x1024xi1> to vector<8x1024xi1>
    %34 = vector.broadcast %cst_15 : f32 to vector<8x1024xf32>
    %35 = arith.select %33, %31, %34 : vector<8x1024xi1>, vector<8x1024xf32>
    %cst_16 = arith.constant dense<0.000000e+00> : vector<8xf32>
    %36 = vector.multi_reduction <add>, %35, %cst_16 [1] : vector<8x1024xf32> to vector<8xf32>
    %37 = vector.shape_cast %36 : vector<8xf32> to vector<8x1xf32>
    %38 = arith.mulf %35, %31 : vector<8x1024xf32>
    %cst_17 = arith.constant dense<0.000000e+00> : vector<8xf32>
    %39 = vector.multi_reduction <add>, %38, %cst_17 [1] : vector<8x1024xf32> to vector<8xf32>
    %40 = vector.shape_cast %39 : vector<8xf32> to vector<8x1xf32>
    %cst_18 = arith.constant 1.562500e-02 : f32
    %41 = vector.broadcast %cst_18 : f32 to vector<8x1xf32>
    %42 = arith.mulf %37, %41 : vector<8x1xf32>
    %cst_19 = arith.constant 1.562500e-02 : f32
    %43 = vector.broadcast %cst_19 : f32 to vector<8x1xf32>
    %44 = arith.mulf %40, %43 : vector<8x1xf32>
    %45 = arith.mulf %42, %42 : vector<8x1xf32>
    %46 = arith.subf %44, %45 : vector<8x1xf32>
    %cst_20 = arith.constant 0.000000e+00 : f32
    %47 = vector.broadcast %cst_20 : f32 to vector<8x1xf32>
    %48 = arith.maximumf %46, %47 : vector<8x1xf32>
    %49 = vector.broadcast %42 : vector<8x1xf32> to vector<8x1024xf32>
    %50 = arith.subf %31, %49 : vector<8x1024xf32>
    %cst_21 = arith.constant 9.99999974E-6 : f32
    %51 = vector.broadcast %cst_21 : f32 to vector<8x1xf32>
    %52 = arith.addf %48, %51 : vector<8x1xf32>
    %53 = math.rsqrt %52 : vector<8x1xf32>
    %54 = vector.broadcast %53 : vector<8x1xf32> to vector<8x1024xf32>
    %55 = arith.mulf %50, %54 : vector<8x1024xf32>
    %cst_22 = arith.constant 0.000000e+00 : f32
    %56 = vector.broadcast %cst_22 : f32 to vector<8x1024xf32>
    %57 = arith.maximumf %55, %56 : vector<8x1024xf32>
    %c1023_i32_23 = arith.constant 1023 : i32
    %58 = tpu.dynamic_rotate %57 by %c1023_i32_23 dim 1 : vector<8x1024xf32>, i32 -> vector<8x1024xf32>
    %c1022_i32 = arith.constant 1022 : i32
    %59 = tpu.dynamic_rotate %57 by %c1022_i32 dim 1 : vector<8x1024xf32>, i32 -> vector<8x1024xf32>
    %60 = tpu.concatenate %57, %58, %59 in 0 : vector<8x1024xf32>, vector<8x1024xf32>, vector<8x1024xf32> -> vector<24x1024xf32>
    %c0_24 = arith.constant 0 : index
    %c0_25 = arith.constant 0 : index
    %c0_26 = arith.constant 0 : index
    %c0_27 = arith.constant 0 : index
    %61 = vector.load %arg4[%c0_24, %c0_25, %c0_26, %c0_27] : memref<2x3x8x24xf32, #tpu.memory_space<vmem>>, vector<1x1x8x24xf32>
    %62 = vector.shape_cast %61 : vector<1x1x8x24xf32> to vector<8x24xf32>
    %63 = vector.extract_strided_slice %60 {offsets = [0, 0], sizes = [24, 768], strides = [1, 1]} : vector<24x1024xf32> to vector<24x768xf32>
    %cst_28 = arith.constant dense<0.000000e+00> : vector<8x768xf32>
    %64 = tpu.matmul %62, %63, %cst_28 {dimension_numbers = #tpu.dot_dimension_numbers<[1], [0], [0], [1], [0, 0, 1, 1], [], []>} : vector<8x24xf32>, vector<24x768xf32>, vector<8x768xf32> -> vector<8x768xf32>
    %c0_29 = arith.constant 0 : index
    %c1_30 = arith.constant 1 : index
    %c0_31 = arith.constant 0 : index
    %c0_32 = arith.constant 0 : index
    %65 = vector.load %arg4[%c0_29, %c1_30, %c0_31, %c0_32] : memref<2x3x8x24xf32, #tpu.memory_space<vmem>>, vector<1x1x8x24xf32>
    %66 = vector.shape_cast %65 : vector<1x1x8x24xf32> to vector<8x24xf32>
    %67 = vector.extract_strided_slice %60 {offsets = [0, 128], sizes = [24, 768], strides = [1, 1]} : vector<24x1024xf32> to vector<24x768xf32>
    %cst_33 = arith.constant dense<0.000000e+00> : vector<8x768xf32>
    %68 = tpu.matmul %66, %67, %cst_33 {dimension_numbers = #tpu.dot_dimension_numbers<[1], [0], [0], [1], [0, 0, 1, 1], [], []>} : vector<8x24xf32>, vector<24x768xf32>, vector<8x768xf32> -> vector<8x768xf32>
    %69 = arith.addf %64, %68 : vector<8x768xf32>
    %c0_34 = arith.constant 0 : index
    %c2 = arith.constant 2 : index
    %c0_35 = arith.constant 0 : index
    %c0_36 = arith.constant 0 : index
    %70 = vector.load %arg4[%c0_34, %c2, %c0_35, %c0_36] : memref<2x3x8x24xf32, #tpu.memory_space<vmem>>, vector<1x1x8x24xf32>
    %71 = vector.shape_cast %70 : vector<1x1x8x24xf32> to vector<8x24xf32>
    %72 = vector.extract_strided_slice %60 {offsets = [0, 256], sizes = [24, 768], strides = [1, 1]} : vector<24x1024xf32> to vector<24x768xf32>
    %cst_37 = arith.constant dense<0.000000e+00> : vector<8x768xf32>
    %73 = tpu.matmul %71, %72, %cst_37 {dimension_numbers = #tpu.dot_dimension_numbers<[1], [0], [0], [1], [0, 0, 1, 1], [], []>} : vector<8x24xf32>, vector<24x768xf32>, vector<8x768xf32> -> vector<8x768xf32>
    %74 = arith.addf %69, %73 : vector<8x768xf32>
    %c2_38 = arith.constant 2 : index
    %c0_39 = arith.constant 0 : index
    %c0_40 = arith.constant 0 : index
    %75 = vector.load %arg5[%c2_38, %c0_39, %c0_40] : memref<7x8x1xf32, #tpu.memory_space<vmem>>, vector<1x8x1xf32>
    %76 = vector.shape_cast %75 : vector<1x8x1xf32> to vector<8x1xf32>
    %77 = vector.broadcast %76 : vector<8x1xf32> to vector<8x768xf32>
    %78 = arith.addf %74, %77 : vector<8x768xf32>
    %cst_41 = arith.constant 0.000000e+00 : f32
    %79 = vector.shape_cast %9 : vector<1x768xi1> to vector<1x768xi1>
    %80 = vector.broadcast %79 : vector<1x768xi1> to vector<8x768xi1>
    %81 = vector.broadcast %cst_41 : f32 to vector<8x768xf32>
    %82 = arith.select %80, %78, %81 : vector<8x768xi1>, vector<8x768xf32>
    %cst_42 = arith.constant dense<0.000000e+00> : vector<8xf32>
    %83 = vector.multi_reduction <add>, %82, %cst_42 [1] : vector<8x768xf32> to vector<8xf32>
    %84 = vector.shape_cast %83 : vector<8xf32> to vector<8x1xf32>
    %85 = arith.mulf %82, %78 : vector<8x768xf32>
    %cst_43 = arith.constant dense<0.000000e+00> : vector<8xf32>
    %86 = vector.multi_reduction <add>, %85, %cst_43 [1] : vector<8x768xf32> to vector<8xf32>
    %87 = vector.shape_cast %86 : vector<8xf32> to vector<8x1xf32>
    %cst_44 = arith.constant 0.027777778 : f32
    %88 = vector.broadcast %cst_44 : f32 to vector<8x1xf32>
    %89 = arith.mulf %84, %88 : vector<8x1xf32>
    %cst_45 = arith.constant 0.027777778 : f32
    %90 = vector.broadcast %cst_45 : f32 to vector<8x1xf32>
    %91 = arith.mulf %87, %90 : vector<8x1xf32>
    %92 = arith.mulf %89, %89 : vector<8x1xf32>
    %93 = arith.subf %91, %92 : vector<8x1xf32>
    %cst_46 = arith.constant 0.000000e+00 : f32
    %94 = vector.broadcast %cst_46 : f32 to vector<8x1xf32>
    %95 = arith.maximumf %93, %94 : vector<8x1xf32>
    %96 = vector.broadcast %89 : vector<8x1xf32> to vector<8x768xf32>
    %97 = arith.subf %78, %96 : vector<8x768xf32>
    %cst_47 = arith.constant 9.99999974E-6 : f32
    %98 = vector.broadcast %cst_47 : f32 to vector<8x1xf32>
    %99 = arith.addf %95, %98 : vector<8x1xf32>
    %100 = math.rsqrt %99 : vector<8x1xf32>
    %101 = vector.broadcast %100 : vector<8x1xf32> to vector<8x768xf32>
    %102 = arith.mulf %97, %101 : vector<8x768xf32>
    %cst_48 = arith.constant 0.000000e+00 : f32
    %103 = vector.broadcast %cst_48 : f32 to vector<8x768xf32>
    %104 = arith.maximumf %102, %103 : vector<8x768xf32>
    %c1_49 = arith.constant 1 : index
    %c0_50 = arith.constant 0 : index
    %c0_51 = arith.constant 0 : index
    %105 = vector.load %arg3[%c1_49, %c0_50, %c0_51] : memref<4x8x8xf32, #tpu.memory_space<vmem>>, vector<1x8x8xf32>
    %106 = vector.shape_cast %105 : vector<1x8x8xf32> to vector<8x8xf32>
    %c3 = arith.constant 3 : index
    %c0_52 = arith.constant 0 : index
    %c0_53 = arith.constant 0 : index
    %107 = vector.load %arg5[%c3, %c0_52, %c0_53] : memref<7x8x1xf32, #tpu.memory_space<vmem>>, vector<1x8x1xf32>
    %108 = vector.shape_cast %107 : vector<1x8x1xf32> to vector<8x1xf32>
    %cst_54 = arith.constant dense<0.000000e+00> : vector<8x768xf32>
    %109 = tpu.matmul %106, %104, %cst_54 {dimension_numbers = #tpu.dot_dimension_numbers<[1], [0], [0], [1], [0, 0, 1, 1], [], []>} : vector<8x8xf32>, vector<8x768xf32>, vector<8x768xf32> -> vector<8x768xf32>
    %110 = vector.broadcast %108 : vector<8x1xf32> to vector<8x768xf32>
    %111 = arith.addf %109, %110 : vector<8x768xf32>
    %cst_55 = arith.constant 0.000000e+00 : f32
    %112 = vector.shape_cast %9 : vector<1x768xi1> to vector<1x768xi1>
    %113 = vector.broadcast %112 : vector<1x768xi1> to vector<8x768xi1>
    %114 = vector.broadcast %cst_55 : f32 to vector<8x768xf32>
    %115 = arith.select %113, %111, %114 : vector<8x768xi1>, vector<8x768xf32>
    %cst_56 = arith.constant dense<0.000000e+00> : vector<8xf32>
    %116 = vector.multi_reduction <add>, %115, %cst_56 [1] : vector<8x768xf32> to vector<8xf32>
    %117 = vector.shape_cast %116 : vector<8xf32> to vector<8x1xf32>
    %118 = arith.mulf %115, %111 : vector<8x768xf32>
    %cst_57 = arith.constant dense<0.000000e+00> : vector<8xf32>
    %119 = vector.multi_reduction <add>, %118, %cst_57 [1] : vector<8x768xf32> to vector<8xf32>
    %120 = vector.shape_cast %119 : vector<8xf32> to vector<8x1xf32>
    %cst_58 = arith.constant 0.027777778 : f32
    %121 = vector.broadcast %cst_58 : f32 to vector<8x1xf32>
    %122 = arith.mulf %117, %121 : vector<8x1xf32>
    %cst_59 = arith.constant 0.027777778 : f32
    %123 = vector.broadcast %cst_59 : f32 to vector<8x1xf32>
    %124 = arith.mulf %120, %123 : vector<8x1xf32>
    %125 = arith.mulf %122, %122 : vector<8x1xf32>
    %126 = arith.subf %124, %125 : vector<8x1xf32>
    %cst_60 = arith.constant 0.000000e+00 : f32
    %127 = vector.broadcast %cst_60 : f32 to vector<8x1xf32>
    %128 = arith.maximumf %126, %127 : vector<8x1xf32>
    %129 = vector.broadcast %122 : vector<8x1xf32> to vector<8x768xf32>
    %130 = arith.subf %111, %129 : vector<8x768xf32>
    %cst_61 = arith.constant 9.99999974E-6 : f32
    %131 = vector.broadcast %cst_61 : f32 to vector<8x1xf32>
    %132 = arith.addf %128, %131 : vector<8x1xf32>
    %133 = math.rsqrt %132 : vector<8x1xf32>
    %134 = vector.broadcast %133 : vector<8x1xf32> to vector<8x768xf32>
    %135 = arith.mulf %130, %134 : vector<8x768xf32>
    %136 = arith.addf %24, %135 : vector<8x768xf32>
    %c767_i32 = arith.constant 767 : i32
    %137 = tpu.dynamic_rotate %136 by %c767_i32 dim 1 : vector<8x768xf32>, i32 -> vector<8x768xf32>
    %138 = vector.extract_strided_slice %137 {offsets = [0, 128], sizes = [8, 512], strides = [1, 1]} : vector<8x768xf32> to vector<8x512xf32>
    %c2_62 = arith.constant 2 : index
    %c0_63 = arith.constant 0 : index
    %c0_64 = arith.constant 0 : index
    %139 = vector.load %arg3[%c2_62, %c0_63, %c0_64] : memref<4x8x8xf32, #tpu.memory_space<vmem>>, vector<1x8x8xf32>
    %140 = vector.shape_cast %139 : vector<1x8x8xf32> to vector<8x8xf32>
    %c4 = arith.constant 4 : index
    %c0_65 = arith.constant 0 : index
    %c0_66 = arith.constant 0 : index
    %141 = vector.load %arg5[%c4, %c0_65, %c0_66] : memref<7x8x1xf32, #tpu.memory_space<vmem>>, vector<1x8x1xf32>
    %142 = vector.shape_cast %141 : vector<1x8x1xf32> to vector<8x1xf32>
    %cst_67 = arith.constant dense<0.000000e+00> : vector<8x768xf32>
    %143 = tpu.matmul %140, %136, %cst_67 {dimension_numbers = #tpu.dot_dimension_numbers<[1], [0], [0], [1], [0, 0, 1, 1], [], []>} : vector<8x8xf32>, vector<8x768xf32>, vector<8x768xf32> -> vector<8x768xf32>
    %144 = vector.broadcast %142 : vector<8x1xf32> to vector<8x768xf32>
    %145 = arith.addf %143, %144 : vector<8x768xf32>
    %cst_68 = arith.constant 0.000000e+00 : f32
    %146 = vector.shape_cast %9 : vector<1x768xi1> to vector<1x768xi1>
    %147 = vector.broadcast %146 : vector<1x768xi1> to vector<8x768xi1>
    %148 = vector.broadcast %cst_68 : f32 to vector<8x768xf32>
    %149 = arith.select %147, %145, %148 : vector<8x768xi1>, vector<8x768xf32>
    %cst_69 = arith.constant dense<0.000000e+00> : vector<8xf32>
    %150 = vector.multi_reduction <add>, %149, %cst_69 [1] : vector<8x768xf32> to vector<8xf32>
    %151 = vector.shape_cast %150 : vector<8xf32> to vector<8x1xf32>
    %152 = arith.mulf %149, %145 : vector<8x768xf32>
    %cst_70 = arith.constant dense<0.000000e+00> : vector<8xf32>
    %153 = vector.multi_reduction <add>, %152, %cst_70 [1] : vector<8x768xf32> to vector<8xf32>
    %154 = vector.shape_cast %153 : vector<8xf32> to vector<8x1xf32>
    %cst_71 = arith.constant 0.027777778 : f32
    %155 = vector.broadcast %cst_71 : f32 to vector<8x1xf32>
    %156 = arith.mulf %151, %155 : vector<8x1xf32>
    %cst_72 = arith.constant 0.027777778 : f32
    %157 = vector.broadcast %cst_72 : f32 to vector<8x1xf32>
    %158 = arith.mulf %154, %157 : vector<8x1xf32>
    %159 = arith.mulf %156, %156 : vector<8x1xf32>
    %160 = arith.subf %158, %159 : vector<8x1xf32>
    %cst_73 = arith.constant 0.000000e+00 : f32
    %161 = vector.broadcast %cst_73 : f32 to vector<8x1xf32>
    %162 = arith.maximumf %160, %161 : vector<8x1xf32>
    %163 = vector.broadcast %156 : vector<8x1xf32> to vector<8x768xf32>
    %164 = arith.subf %145, %163 : vector<8x768xf32>
    %cst_74 = arith.constant 9.99999974E-6 : f32
    %165 = vector.broadcast %cst_74 : f32 to vector<8x1xf32>
    %166 = arith.addf %162, %165 : vector<8x1xf32>
    %167 = math.rsqrt %166 : vector<8x1xf32>
    %168 = vector.broadcast %167 : vector<8x1xf32> to vector<8x768xf32>
    %169 = arith.mulf %164, %168 : vector<8x768xf32>
    %cst_75 = arith.constant 0.000000e+00 : f32
    %170 = vector.broadcast %cst_75 : f32 to vector<8x768xf32>
    %171 = arith.maximumf %169, %170 : vector<8x768xf32>
    %c767_i32_76 = arith.constant 767 : i32
    %172 = tpu.dynamic_rotate %171 by %c767_i32_76 dim 1 : vector<8x768xf32>, i32 -> vector<8x768xf32>
    %c766_i32 = arith.constant 766 : i32
    %173 = tpu.dynamic_rotate %171 by %c766_i32 dim 1 : vector<8x768xf32>, i32 -> vector<8x768xf32>
    %174 = tpu.concatenate %171, %172, %173 in 0 : vector<8x768xf32>, vector<8x768xf32>, vector<8x768xf32> -> vector<24x768xf32>
    %c1_77 = arith.constant 1 : index
    %c0_78 = arith.constant 0 : index
    %c0_79 = arith.constant 0 : index
    %c0_80 = arith.constant 0 : index
    %175 = vector.load %arg4[%c1_77, %c0_78, %c0_79, %c0_80] : memref<2x3x8x24xf32, #tpu.memory_space<vmem>>, vector<1x1x8x24xf32>
    %176 = vector.shape_cast %175 : vector<1x1x8x24xf32> to vector<8x24xf32>
    %177 = vector.extract_strided_slice %174 {offsets = [0, 0], sizes = [24, 512], strides = [1, 1]} : vector<24x768xf32> to vector<24x512xf32>
    %cst_81 = arith.constant dense<0.000000e+00> : vector<8x512xf32>
    %178 = tpu.matmul %176, %177, %cst_81 {dimension_numbers = #tpu.dot_dimension_numbers<[1], [0], [0], [1], [0, 0, 1, 1], [], []>} : vector<8x24xf32>, vector<24x512xf32>, vector<8x512xf32> -> vector<8x512xf32>
    %c1_82 = arith.constant 1 : index
    %c1_83 = arith.constant 1 : index
    %c0_84 = arith.constant 0 : index
    %c0_85 = arith.constant 0 : index
    %179 = vector.load %arg4[%c1_82, %c1_83, %c0_84, %c0_85] : memref<2x3x8x24xf32, #tpu.memory_space<vmem>>, vector<1x1x8x24xf32>
    %180 = vector.shape_cast %179 : vector<1x1x8x24xf32> to vector<8x24xf32>
    %181 = vector.extract_strided_slice %174 {offsets = [0, 128], sizes = [24, 512], strides = [1, 1]} : vector<24x768xf32> to vector<24x512xf32>
    %cst_86 = arith.constant dense<0.000000e+00> : vector<8x512xf32>
    %182 = tpu.matmul %180, %181, %cst_86 {dimension_numbers = #tpu.dot_dimension_numbers<[1], [0], [0], [1], [0, 0, 1, 1], [], []>} : vector<8x24xf32>, vector<24x512xf32>, vector<8x512xf32> -> vector<8x512xf32>
    %183 = arith.addf %178, %182 : vector<8x512xf32>
    %c1_87 = arith.constant 1 : index
    %c2_88 = arith.constant 2 : index
    %c0_89 = arith.constant 0 : index
    %c0_90 = arith.constant 0 : index
    %184 = vector.load %arg4[%c1_87, %c2_88, %c0_89, %c0_90] : memref<2x3x8x24xf32, #tpu.memory_space<vmem>>, vector<1x1x8x24xf32>
    %185 = vector.shape_cast %184 : vector<1x1x8x24xf32> to vector<8x24xf32>
    %186 = vector.extract_strided_slice %174 {offsets = [0, 256], sizes = [24, 512], strides = [1, 1]} : vector<24x768xf32> to vector<24x512xf32>
    %cst_91 = arith.constant dense<0.000000e+00> : vector<8x512xf32>
    %187 = tpu.matmul %185, %186, %cst_91 {dimension_numbers = #tpu.dot_dimension_numbers<[1], [0], [0], [1], [0, 0, 1, 1], [], []>} : vector<8x24xf32>, vector<24x512xf32>, vector<8x512xf32> -> vector<8x512xf32>
    %188 = arith.addf %183, %187 : vector<8x512xf32>
    %c5 = arith.constant 5 : index
    %c0_92 = arith.constant 0 : index
    %c0_93 = arith.constant 0 : index
    %189 = vector.load %arg5[%c5, %c0_92, %c0_93] : memref<7x8x1xf32, #tpu.memory_space<vmem>>, vector<1x8x1xf32>
    %190 = vector.shape_cast %189 : vector<1x8x1xf32> to vector<8x1xf32>
    %191 = vector.broadcast %190 : vector<8x1xf32> to vector<8x512xf32>
    %192 = arith.addf %188, %191 : vector<8x512xf32>
    %cst_94 = arith.constant 0.000000e+00 : f32
    %193 = vector.shape_cast %14 : vector<1x512xi1> to vector<1x512xi1>
    %194 = vector.broadcast %193 : vector<1x512xi1> to vector<8x512xi1>
    %195 = vector.broadcast %cst_94 : f32 to vector<8x512xf32>
    %196 = arith.select %194, %192, %195 : vector<8x512xi1>, vector<8x512xf32>
    %cst_95 = arith.constant dense<0.000000e+00> : vector<8xf32>
    %197 = vector.multi_reduction <add>, %196, %cst_95 [1] : vector<8x512xf32> to vector<8xf32>
    %198 = vector.shape_cast %197 : vector<8xf32> to vector<8x1xf32>
    %199 = arith.mulf %196, %192 : vector<8x512xf32>
    %cst_96 = arith.constant dense<0.000000e+00> : vector<8xf32>
    %200 = vector.multi_reduction <add>, %199, %cst_96 [1] : vector<8x512xf32> to vector<8xf32>
    %201 = vector.shape_cast %200 : vector<8xf32> to vector<8x1xf32>
    %cst_97 = arith.constant 6.250000e-02 : f32
    %202 = vector.broadcast %cst_97 : f32 to vector<8x1xf32>
    %203 = arith.mulf %198, %202 : vector<8x1xf32>
    %cst_98 = arith.constant 6.250000e-02 : f32
    %204 = vector.broadcast %cst_98 : f32 to vector<8x1xf32>
    %205 = arith.mulf %201, %204 : vector<8x1xf32>
    %206 = arith.mulf %203, %203 : vector<8x1xf32>
    %207 = arith.subf %205, %206 : vector<8x1xf32>
    %cst_99 = arith.constant 0.000000e+00 : f32
    %208 = vector.broadcast %cst_99 : f32 to vector<8x1xf32>
    %209 = arith.maximumf %207, %208 : vector<8x1xf32>
    %210 = vector.broadcast %203 : vector<8x1xf32> to vector<8x512xf32>
    %211 = arith.subf %192, %210 : vector<8x512xf32>
    %cst_100 = arith.constant 9.99999974E-6 : f32
    %212 = vector.broadcast %cst_100 : f32 to vector<8x1xf32>
    %213 = arith.addf %209, %212 : vector<8x1xf32>
    %214 = math.rsqrt %213 : vector<8x1xf32>
    %215 = vector.broadcast %214 : vector<8x1xf32> to vector<8x512xf32>
    %216 = arith.mulf %211, %215 : vector<8x512xf32>
    %cst_101 = arith.constant 0.000000e+00 : f32
    %217 = vector.broadcast %cst_101 : f32 to vector<8x512xf32>
    %218 = arith.maximumf %216, %217 : vector<8x512xf32>
    %c3_102 = arith.constant 3 : index
    %c0_103 = arith.constant 0 : index
    %c0_104 = arith.constant 0 : index
    %219 = vector.load %arg3[%c3_102, %c0_103, %c0_104] : memref<4x8x8xf32, #tpu.memory_space<vmem>>, vector<1x8x8xf32>
    %220 = vector.shape_cast %219 : vector<1x8x8xf32> to vector<8x8xf32>
    %c6 = arith.constant 6 : index
    %c0_105 = arith.constant 0 : index
    %c0_106 = arith.constant 0 : index
    %221 = vector.load %arg5[%c6, %c0_105, %c0_106] : memref<7x8x1xf32, #tpu.memory_space<vmem>>, vector<1x8x1xf32>
    %222 = vector.shape_cast %221 : vector<1x8x1xf32> to vector<8x1xf32>
    %cst_107 = arith.constant dense<0.000000e+00> : vector<8x512xf32>
    %223 = tpu.matmul %220, %218, %cst_107 {dimension_numbers = #tpu.dot_dimension_numbers<[1], [0], [0], [1], [0, 0, 1, 1], [], []>} : vector<8x8xf32>, vector<8x512xf32>, vector<8x512xf32> -> vector<8x512xf32>
    %224 = vector.broadcast %222 : vector<8x1xf32> to vector<8x512xf32>
    %225 = arith.addf %223, %224 : vector<8x512xf32>
    %cst_108 = arith.constant 0.000000e+00 : f32
    %226 = vector.shape_cast %14 : vector<1x512xi1> to vector<1x512xi1>
    %227 = vector.broadcast %226 : vector<1x512xi1> to vector<8x512xi1>
    %228 = vector.broadcast %cst_108 : f32 to vector<8x512xf32>
    %229 = arith.select %227, %225, %228 : vector<8x512xi1>, vector<8x512xf32>
    %cst_109 = arith.constant dense<0.000000e+00> : vector<8xf32>
    %230 = vector.multi_reduction <add>, %229, %cst_109 [1] : vector<8x512xf32> to vector<8xf32>
    %231 = vector.shape_cast %230 : vector<8xf32> to vector<8x1xf32>
    %232 = arith.mulf %229, %225 : vector<8x512xf32>
    %cst_110 = arith.constant dense<0.000000e+00> : vector<8xf32>
    %233 = vector.multi_reduction <add>, %232, %cst_110 [1] : vector<8x512xf32> to vector<8xf32>
    %234 = vector.shape_cast %233 : vector<8xf32> to vector<8x1xf32>
    %cst_111 = arith.constant 6.250000e-02 : f32
    %235 = vector.broadcast %cst_111 : f32 to vector<8x1xf32>
    %236 = arith.mulf %231, %235 : vector<8x1xf32>
    %cst_112 = arith.constant 6.250000e-02 : f32
    %237 = vector.broadcast %cst_112 : f32 to vector<8x1xf32>
    %238 = arith.mulf %234, %237 : vector<8x1xf32>
    %239 = arith.mulf %236, %236 : vector<8x1xf32>
    %240 = arith.subf %238, %239 : vector<8x1xf32>
    %cst_113 = arith.constant 0.000000e+00 : f32
    %241 = vector.broadcast %cst_113 : f32 to vector<8x1xf32>
    %242 = arith.maximumf %240, %241 : vector<8x1xf32>
    %243 = vector.broadcast %236 : vector<8x1xf32> to vector<8x512xf32>
    %244 = arith.subf %225, %243 : vector<8x512xf32>
    %cst_114 = arith.constant 9.99999974E-6 : f32
    %245 = vector.broadcast %cst_114 : f32 to vector<8x1xf32>
    %246 = arith.addf %242, %245 : vector<8x1xf32>
    %247 = math.rsqrt %246 : vector<8x1xf32>
    %248 = vector.broadcast %247 : vector<8x1xf32> to vector<8x512xf32>
    %249 = arith.mulf %244, %248 : vector<8x512xf32>
    %250 = arith.addf %138, %249 : vector<8x512xf32>
    %c0_115 = arith.constant 0 : index
    %c0_116 = arith.constant 0 : index
    %c0_117 = arith.constant 0 : index
    %251 = vector.load %arg6[%c0_115, %c0_116, %c0_117] : memref<2x8x512xf32, #tpu.memory_space<vmem>>, vector<1x8x512xf32>
    %252 = vector.shape_cast %251 : vector<1x8x512xf32> to vector<8x512xf32>
    %253 = vector.shape_cast %250 : vector<8x512xf32> to vector<1x8x512xf32>
    tpu.vector_store %arg6[%c0_115, %c0_116, %c0_117], %253 {strides = array<i32>} : memref<2x8x512xf32, #tpu.memory_space<vmem>>, vector<1x8x512xf32>,
    %c0_118 = arith.constant 0 : index
    %c0_119 = arith.constant 0 : index
    %254 = vector.load %arg2[%c0_118, %c0_119] : memref<8x4xf32, #tpu.memory_space<vmem>>, vector<8x4xf32>
    %c1_120 = arith.constant 1 : index
    %c0_121 = arith.constant 0 : index
    %c0_122 = arith.constant 0 : index
    %255 = vector.load %arg1[%c1_120, %c0_121, %c0_122] : memref<2x4x1024xf32, #tpu.memory_space<vmem>>, vector<1x4x1024xf32>
    %256 = vector.shape_cast %255 : vector<1x4x1024xf32> to vector<4x1024xf32>
    %c0_123 = arith.constant 0 : index
    %c0_124 = arith.constant 0 : index
    %c0_125 = arith.constant 0 : index
    %257 = vector.load %arg5[%c0_123, %c0_124, %c0_125] : memref<7x8x1xf32, #tpu.memory_space<vmem>>, vector<1x8x1xf32>
    %258 = vector.shape_cast %257 : vector<1x8x1xf32> to vector<8x1xf32>
    %cst_126 = arith.constant dense<0.000000e+00> : vector<8x1024xf32>
    %259 = tpu.matmul %254, %256, %cst_126 {dimension_numbers = #tpu.dot_dimension_numbers<[1], [0], [0], [1], [0, 0, 1, 1], [], []>} : vector<8x4xf32>, vector<4x1024xf32>, vector<8x1024xf32> -> vector<8x1024xf32>
    %260 = vector.broadcast %258 : vector<8x1xf32> to vector<8x1024xf32>
    %261 = arith.addf %259, %260 : vector<8x1024xf32>
    %c1023_i32_127 = arith.constant 1023 : i32
    %262 = tpu.dynamic_rotate %261 by %c1023_i32_127 dim 1 : vector<8x1024xf32>, i32 -> vector<8x1024xf32>
    %263 = vector.extract_strided_slice %262 {offsets = [0, 128], sizes = [8, 768], strides = [1, 1]} : vector<8x1024xf32> to vector<8x768xf32>
    %c0_128 = arith.constant 0 : index
    %c0_129 = arith.constant 0 : index
    %c0_130 = arith.constant 0 : index
    %264 = vector.load %arg3[%c0_128, %c0_129, %c0_130] : memref<4x8x8xf32, #tpu.memory_space<vmem>>, vector<1x8x8xf32>
    %265 = vector.shape_cast %264 : vector<1x8x8xf32> to vector<8x8xf32>
    %c1_131 = arith.constant 1 : index
    %c0_132 = arith.constant 0 : index
    %c0_133 = arith.constant 0 : index
    %266 = vector.load %arg5[%c1_131, %c0_132, %c0_133] : memref<7x8x1xf32, #tpu.memory_space<vmem>>, vector<1x8x1xf32>
    %267 = vector.shape_cast %266 : vector<1x8x1xf32> to vector<8x1xf32>
    %cst_134 = arith.constant dense<0.000000e+00> : vector<8x1024xf32>
    %268 = tpu.matmul %265, %261, %cst_134 {dimension_numbers = #tpu.dot_dimension_numbers<[1], [0], [0], [1], [0, 0, 1, 1], [], []>} : vector<8x8xf32>, vector<8x1024xf32>, vector<8x1024xf32> -> vector<8x1024xf32>
    %269 = vector.broadcast %267 : vector<8x1xf32> to vector<8x1024xf32>
    %270 = arith.addf %268, %269 : vector<8x1024xf32>
    %cst_135 = arith.constant 0.000000e+00 : f32
    %271 = vector.shape_cast %4 : vector<1x1024xi1> to vector<1x1024xi1>
    %272 = vector.broadcast %271 : vector<1x1024xi1> to vector<8x1024xi1>
    %273 = vector.broadcast %cst_135 : f32 to vector<8x1024xf32>
    %274 = arith.select %272, %270, %273 : vector<8x1024xi1>, vector<8x1024xf32>
    %cst_136 = arith.constant dense<0.000000e+00> : vector<8xf32>
    %275 = vector.multi_reduction <add>, %274, %cst_136 [1] : vector<8x1024xf32> to vector<8xf32>
    %276 = vector.shape_cast %275 : vector<8xf32> to vector<8x1xf32>
    %277 = arith.mulf %274, %270 : vector<8x1024xf32>
    %cst_137 = arith.constant dense<0.000000e+00> : vector<8xf32>
    %278 = vector.multi_reduction <add>, %277, %cst_137 [1] : vector<8x1024xf32> to vector<8xf32>
    %279 = vector.shape_cast %278 : vector<8xf32> to vector<8x1xf32>
    %cst_138 = arith.constant 1.562500e-02 : f32
    %280 = vector.broadcast %cst_138 : f32 to vector<8x1xf32>
    %281 = arith.mulf %276, %280 : vector<8x1xf32>
    %cst_139 = arith.constant 1.562500e-02 : f32
    %282 = vector.broadcast %cst_139 : f32 to vector<8x1xf32>
    %283 = arith.mulf %279, %282 : vector<8x1xf32>
    %284 = arith.mulf %281, %281 : vector<8x1xf32>
    %285 = arith.subf %283, %284 : vector<8x1xf32>
    %cst_140 = arith.constant 0.000000e+00 : f32
    %286 = vector.broadcast %cst_140 : f32 to vector<8x1xf32>
    %287 = arith.maximumf %285, %286 : vector<8x1xf32>
    %288 = vector.broadcast %281 : vector<8x1xf32> to vector<8x1024xf32>
    %289 = arith.subf %270, %288 : vector<8x1024xf32>
    %cst_141 = arith.constant 9.99999974E-6 : f32
    %290 = vector.broadcast %cst_141 : f32 to vector<8x1xf32>
    %291 = arith.addf %287, %290 : vector<8x1xf32>
    %292 = math.rsqrt %291 : vector<8x1xf32>
    %293 = vector.broadcast %292 : vector<8x1xf32> to vector<8x1024xf32>
    %294 = arith.mulf %289, %293 : vector<8x1024xf32>
    %cst_142 = arith.constant 0.000000e+00 : f32
    %295 = vector.broadcast %cst_142 : f32 to vector<8x1024xf32>
    %296 = arith.maximumf %294, %295 : vector<8x1024xf32>
    %c1023_i32_143 = arith.constant 1023 : i32
    %297 = tpu.dynamic_rotate %296 by %c1023_i32_143 dim 1 : vector<8x1024xf32>, i32 -> vector<8x1024xf32>
    %c1022_i32_144 = arith.constant 1022 : i32
    %298 = tpu.dynamic_rotate %296 by %c1022_i32_144 dim 1 : vector<8x1024xf32>, i32 -> vector<8x1024xf32>
    %299 = tpu.concatenate %296, %297, %298 in 0 : vector<8x1024xf32>, vector<8x1024xf32>, vector<8x1024xf32> -> vector<24x1024xf32>
    %c0_145 = arith.constant 0 : index
    %c0_146 = arith.constant 0 : index
    %c0_147 = arith.constant 0 : index
    %c0_148 = arith.constant 0 : index
    %300 = vector.load %arg4[%c0_145, %c0_146, %c0_147, %c0_148] : memref<2x3x8x24xf32, #tpu.memory_space<vmem>>, vector<1x1x8x24xf32>
    %301 = vector.shape_cast %300 : vector<1x1x8x24xf32> to vector<8x24xf32>
    %302 = vector.extract_strided_slice %299 {offsets = [0, 0], sizes = [24, 768], strides = [1, 1]} : vector<24x1024xf32> to vector<24x768xf32>
    %cst_149 = arith.constant dense<0.000000e+00> : vector<8x768xf32>
    %303 = tpu.matmul %301, %302, %cst_149 {dimension_numbers = #tpu.dot_dimension_numbers<[1], [0], [0], [1], [0, 0, 1, 1], [], []>} : vector<8x24xf32>, vector<24x768xf32>, vector<8x768xf32> -> vector<8x768xf32>
    %c0_150 = arith.constant 0 : index
    %c1_151 = arith.constant 1 : index
    %c0_152 = arith.constant 0 : index
    %c0_153 = arith.constant 0 : index
    %304 = vector.load %arg4[%c0_150, %c1_151, %c0_152, %c0_153] : memref<2x3x8x24xf32, #tpu.memory_space<vmem>>, vector<1x1x8x24xf32>
    %305 = vector.shape_cast %304 : vector<1x1x8x24xf32> to vector<8x24xf32>
    %306 = vector.extract_strided_slice %299 {offsets = [0, 128], sizes = [24, 768], strides = [1, 1]} : vector<24x1024xf32> to vector<24x768xf32>
    %cst_154 = arith.constant dense<0.000000e+00> : vector<8x768xf32>
    %307 = tpu.matmul %305, %306, %cst_154 {dimension_numbers = #tpu.dot_dimension_numbers<[1], [0], [0], [1], [0, 0, 1, 1], [], []>} : vector<8x24xf32>, vector<24x768xf32>, vector<8x768xf32> -> vector<8x768xf32>
    %308 = arith.addf %303, %307 : vector<8x768xf32>
    %c0_155 = arith.constant 0 : index
    %c2_156 = arith.constant 2 : index
    %c0_157 = arith.constant 0 : index
    %c0_158 = arith.constant 0 : index
    %309 = vector.load %arg4[%c0_155, %c2_156, %c0_157, %c0_158] : memref<2x3x8x24xf32, #tpu.memory_space<vmem>>, vector<1x1x8x24xf32>
    %310 = vector.shape_cast %309 : vector<1x1x8x24xf32> to vector<8x24xf32>
    %311 = vector.extract_strided_slice %299 {offsets = [0, 256], sizes = [24, 768], strides = [1, 1]} : vector<24x1024xf32> to vector<24x768xf32>
    %cst_159 = arith.constant dense<0.000000e+00> : vector<8x768xf32>
    %312 = tpu.matmul %310, %311, %cst_159 {dimension_numbers = #tpu.dot_dimension_numbers<[1], [0], [0], [1], [0, 0, 1, 1], [], []>} : vector<8x24xf32>, vector<24x768xf32>, vector<8x768xf32> -> vector<8x768xf32>
    %313 = arith.addf %308, %312 : vector<8x768xf32>
    %c2_160 = arith.constant 2 : index
    %c0_161 = arith.constant 0 : index
    %c0_162 = arith.constant 0 : index
    %314 = vector.load %arg5[%c2_160, %c0_161, %c0_162] : memref<7x8x1xf32, #tpu.memory_space<vmem>>, vector<1x8x1xf32>
    %315 = vector.shape_cast %314 : vector<1x8x1xf32> to vector<8x1xf32>
    %316 = vector.broadcast %315 : vector<8x1xf32> to vector<8x768xf32>
    %317 = arith.addf %313, %316 : vector<8x768xf32>
    %cst_163 = arith.constant 0.000000e+00 : f32
    %318 = vector.shape_cast %9 : vector<1x768xi1> to vector<1x768xi1>
    %319 = vector.broadcast %318 : vector<1x768xi1> to vector<8x768xi1>
    %320 = vector.broadcast %cst_163 : f32 to vector<8x768xf32>
    %321 = arith.select %319, %317, %320 : vector<8x768xi1>, vector<8x768xf32>
    %cst_164 = arith.constant dense<0.000000e+00> : vector<8xf32>
    %322 = vector.multi_reduction <add>, %321, %cst_164 [1] : vector<8x768xf32> to vector<8xf32>
    %323 = vector.shape_cast %322 : vector<8xf32> to vector<8x1xf32>
    %324 = arith.mulf %321, %317 : vector<8x768xf32>
    %cst_165 = arith.constant dense<0.000000e+00> : vector<8xf32>
    %325 = vector.multi_reduction <add>, %324, %cst_165 [1] : vector<8x768xf32> to vector<8xf32>
    %326 = vector.shape_cast %325 : vector<8xf32> to vector<8x1xf32>
    %cst_166 = arith.constant 0.027777778 : f32
    %327 = vector.broadcast %cst_166 : f32 to vector<8x1xf32>
    %328 = arith.mulf %323, %327 : vector<8x1xf32>
    %cst_167 = arith.constant 0.027777778 : f32
    %329 = vector.broadcast %cst_167 : f32 to vector<8x1xf32>
    %330 = arith.mulf %326, %329 : vector<8x1xf32>
    %331 = arith.mulf %328, %328 : vector<8x1xf32>
    %332 = arith.subf %330, %331 : vector<8x1xf32>
    %cst_168 = arith.constant 0.000000e+00 : f32
    %333 = vector.broadcast %cst_168 : f32 to vector<8x1xf32>
    %334 = arith.maximumf %332, %333 : vector<8x1xf32>
    %335 = vector.broadcast %328 : vector<8x1xf32> to vector<8x768xf32>
    %336 = arith.subf %317, %335 : vector<8x768xf32>
    %cst_169 = arith.constant 9.99999974E-6 : f32
    %337 = vector.broadcast %cst_169 : f32 to vector<8x1xf32>
    %338 = arith.addf %334, %337 : vector<8x1xf32>
    %339 = math.rsqrt %338 : vector<8x1xf32>
    %340 = vector.broadcast %339 : vector<8x1xf32> to vector<8x768xf32>
    %341 = arith.mulf %336, %340 : vector<8x768xf32>
    %cst_170 = arith.constant 0.000000e+00 : f32
    %342 = vector.broadcast %cst_170 : f32 to vector<8x768xf32>
    %343 = arith.maximumf %341, %342 : vector<8x768xf32>
    %c1_171 = arith.constant 1 : index
    %c0_172 = arith.constant 0 : index
    %c0_173 = arith.constant 0 : index
    %344 = vector.load %arg3[%c1_171, %c0_172, %c0_173] : memref<4x8x8xf32, #tpu.memory_space<vmem>>, vector<1x8x8xf32>
    %345 = vector.shape_cast %344 : vector<1x8x8xf32> to vector<8x8xf32>
    %c3_174 = arith.constant 3 : index
    %c0_175 = arith.constant 0 : index
    %c0_176 = arith.constant 0 : index
    %346 = vector.load %arg5[%c3_174, %c0_175, %c0_176] : memref<7x8x1xf32, #tpu.memory_space<vmem>>, vector<1x8x1xf32>
    %347 = vector.shape_cast %346 : vector<1x8x1xf32> to vector<8x1xf32>
    %cst_177 = arith.constant dense<0.000000e+00> : vector<8x768xf32>
    %348 = tpu.matmul %345, %343, %cst_177 {dimension_numbers = #tpu.dot_dimension_numbers<[1], [0], [0], [1], [0, 0, 1, 1], [], []>} : vector<8x8xf32>, vector<8x768xf32>, vector<8x768xf32> -> vector<8x768xf32>
    %349 = vector.broadcast %347 : vector<8x1xf32> to vector<8x768xf32>
    %350 = arith.addf %348, %349 : vector<8x768xf32>
    %cst_178 = arith.constant 0.000000e+00 : f32
    %351 = vector.shape_cast %9 : vector<1x768xi1> to vector<1x768xi1>
    %352 = vector.broadcast %351 : vector<1x768xi1> to vector<8x768xi1>
    %353 = vector.broadcast %cst_178 : f32 to vector<8x768xf32>
    %354 = arith.select %352, %350, %353 : vector<8x768xi1>, vector<8x768xf32>
    %cst_179 = arith.constant dense<0.000000e+00> : vector<8xf32>
    %355 = vector.multi_reduction <add>, %354, %cst_179 [1] : vector<8x768xf32> to vector<8xf32>
    %356 = vector.shape_cast %355 : vector<8xf32> to vector<8x1xf32>
    %357 = arith.mulf %354, %350 : vector<8x768xf32>
    %cst_180 = arith.constant dense<0.000000e+00> : vector<8xf32>
    %358 = vector.multi_reduction <add>, %357, %cst_180 [1] : vector<8x768xf32> to vector<8xf32>
    %359 = vector.shape_cast %358 : vector<8xf32> to vector<8x1xf32>
    %cst_181 = arith.constant 0.027777778 : f32
    %360 = vector.broadcast %cst_181 : f32 to vector<8x1xf32>
    %361 = arith.mulf %356, %360 : vector<8x1xf32>
    %cst_182 = arith.constant 0.027777778 : f32
    %362 = vector.broadcast %cst_182 : f32 to vector<8x1xf32>
    %363 = arith.mulf %359, %362 : vector<8x1xf32>
    %364 = arith.mulf %361, %361 : vector<8x1xf32>
    %365 = arith.subf %363, %364 : vector<8x1xf32>
    %cst_183 = arith.constant 0.000000e+00 : f32
    %366 = vector.broadcast %cst_183 : f32 to vector<8x1xf32>
    %367 = arith.maximumf %365, %366 : vector<8x1xf32>
    %368 = vector.broadcast %361 : vector<8x1xf32> to vector<8x768xf32>
    %369 = arith.subf %350, %368 : vector<8x768xf32>
    %cst_184 = arith.constant 9.99999974E-6 : f32
    %370 = vector.broadcast %cst_184 : f32 to vector<8x1xf32>
    %371 = arith.addf %367, %370 : vector<8x1xf32>
    %372 = math.rsqrt %371 : vector<8x1xf32>
    %373 = vector.broadcast %372 : vector<8x1xf32> to vector<8x768xf32>
    %374 = arith.mulf %369, %373 : vector<8x768xf32>
    %375 = arith.addf %263, %374 : vector<8x768xf32>
    %c767_i32_185 = arith.constant 767 : i32
    %376 = tpu.dynamic_rotate %375 by %c767_i32_185 dim 1 : vector<8x768xf32>, i32 -> vector<8x768xf32>
    %377 = vector.extract_strided_slice %376 {offsets = [0, 128], sizes = [8, 512], strides = [1, 1]} : vector<8x768xf32> to vector<8x512xf32>
    %c2_186 = arith.constant 2 : index
    %c0_187 = arith.constant 0 : index
    %c0_188 = arith.constant 0 : index
    %378 = vector.load %arg3[%c2_186, %c0_187, %c0_188] : memref<4x8x8xf32, #tpu.memory_space<vmem>>, vector<1x8x8xf32>
    %379 = vector.shape_cast %378 : vector<1x8x8xf32> to vector<8x8xf32>
    %c4_189 = arith.constant 4 : index
    %c0_190 = arith.constant 0 : index
    %c0_191 = arith.constant 0 : index
    %380 = vector.load %arg5[%c4_189, %c0_190, %c0_191] : memref<7x8x1xf32, #tpu.memory_space<vmem>>, vector<1x8x1xf32>
    %381 = vector.shape_cast %380 : vector<1x8x1xf32> to vector<8x1xf32>
    %cst_192 = arith.constant dense<0.000000e+00> : vector<8x768xf32>
    %382 = tpu.matmul %379, %375, %cst_192 {dimension_numbers = #tpu.dot_dimension_numbers<[1], [0], [0], [1], [0, 0, 1, 1], [], []>} : vector<8x8xf32>, vector<8x768xf32>, vector<8x768xf32> -> vector<8x768xf32>
    %383 = vector.broadcast %381 : vector<8x1xf32> to vector<8x768xf32>
    %384 = arith.addf %382, %383 : vector<8x768xf32>
    %cst_193 = arith.constant 0.000000e+00 : f32
    %385 = vector.shape_cast %9 : vector<1x768xi1> to vector<1x768xi1>
    %386 = vector.broadcast %385 : vector<1x768xi1> to vector<8x768xi1>
    %387 = vector.broadcast %cst_193 : f32 to vector<8x768xf32>
    %388 = arith.select %386, %384, %387 : vector<8x768xi1>, vector<8x768xf32>
    %cst_194 = arith.constant dense<0.000000e+00> : vector<8xf32>
    %389 = vector.multi_reduction <add>, %388, %cst_194 [1] : vector<8x768xf32> to vector<8xf32>
    %390 = vector.shape_cast %389 : vector<8xf32> to vector<8x1xf32>
    %391 = arith.mulf %388, %384 : vector<8x768xf32>
    %cst_195 = arith.constant dense<0.000000e+00> : vector<8xf32>
    %392 = vector.multi_reduction <add>, %391, %cst_195 [1] : vector<8x768xf32> to vector<8xf32>
    %393 = vector.shape_cast %392 : vector<8xf32> to vector<8x1xf32>
    %cst_196 = arith.constant 0.027777778 : f32
    %394 = vector.broadcast %cst_196 : f32 to vector<8x1xf32>
    %395 = arith.mulf %390, %394 : vector<8x1xf32>
    %cst_197 = arith.constant 0.027777778 : f32
    %396 = vector.broadcast %cst_197 : f32 to vector<8x1xf32>
    %397 = arith.mulf %393, %396 : vector<8x1xf32>
    %398 = arith.mulf %395, %395 : vector<8x1xf32>
    %399 = arith.subf %397, %398 : vector<8x1xf32>
    %cst_198 = arith.constant 0.000000e+00 : f32
    %400 = vector.broadcast %cst_198 : f32 to vector<8x1xf32>
    %401 = arith.maximumf %399, %400 : vector<8x1xf32>
    %402 = vector.broadcast %395 : vector<8x1xf32> to vector<8x768xf32>
    %403 = arith.subf %384, %402 : vector<8x768xf32>
    %cst_199 = arith.constant 9.99999974E-6 : f32
    %404 = vector.broadcast %cst_199 : f32 to vector<8x1xf32>
    %405 = arith.addf %401, %404 : vector<8x1xf32>
    %406 = math.rsqrt %405 : vector<8x1xf32>
    %407 = vector.broadcast %406 : vector<8x1xf32> to vector<8x768xf32>
    %408 = arith.mulf %403, %407 : vector<8x768xf32>
    %cst_200 = arith.constant 0.000000e+00 : f32
    %409 = vector.broadcast %cst_200 : f32 to vector<8x768xf32>
    %410 = arith.maximumf %408, %409 : vector<8x768xf32>
    %c767_i32_201 = arith.constant 767 : i32
    %411 = tpu.dynamic_rotate %410 by %c767_i32_201 dim 1 : vector<8x768xf32>, i32 -> vector<8x768xf32>
    %c766_i32_202 = arith.constant 766 : i32
    %412 = tpu.dynamic_rotate %410 by %c766_i32_202 dim 1 : vector<8x768xf32>, i32 -> vector<8x768xf32>
    %413 = tpu.concatenate %410, %411, %412 in 0 : vector<8x768xf32>, vector<8x768xf32>, vector<8x768xf32> -> vector<24x768xf32>
    %c1_203 = arith.constant 1 : index
    %c0_204 = arith.constant 0 : index
    %c0_205 = arith.constant 0 : index
    %c0_206 = arith.constant 0 : index
    %414 = vector.load %arg4[%c1_203, %c0_204, %c0_205, %c0_206] : memref<2x3x8x24xf32, #tpu.memory_space<vmem>>, vector<1x1x8x24xf32>
    %415 = vector.shape_cast %414 : vector<1x1x8x24xf32> to vector<8x24xf32>
    %416 = vector.extract_strided_slice %413 {offsets = [0, 0], sizes = [24, 512], strides = [1, 1]} : vector<24x768xf32> to vector<24x512xf32>
    %cst_207 = arith.constant dense<0.000000e+00> : vector<8x512xf32>
    %417 = tpu.matmul %415, %416, %cst_207 {dimension_numbers = #tpu.dot_dimension_numbers<[1], [0], [0], [1], [0, 0, 1, 1], [], []>} : vector<8x24xf32>, vector<24x512xf32>, vector<8x512xf32> -> vector<8x512xf32>
    %c1_208 = arith.constant 1 : index
    %c1_209 = arith.constant 1 : index
    %c0_210 = arith.constant 0 : index
    %c0_211 = arith.constant 0 : index
    %418 = vector.load %arg4[%c1_208, %c1_209, %c0_210, %c0_211] : memref<2x3x8x24xf32, #tpu.memory_space<vmem>>, vector<1x1x8x24xf32>
    %419 = vector.shape_cast %418 : vector<1x1x8x24xf32> to vector<8x24xf32>
    %420 = vector.extract_strided_slice %413 {offsets = [0, 128], sizes = [24, 512], strides = [1, 1]} : vector<24x768xf32> to vector<24x512xf32>
    %cst_212 = arith.constant dense<0.000000e+00> : vector<8x512xf32>
    %421 = tpu.matmul %419, %420, %cst_212 {dimension_numbers = #tpu.dot_dimension_numbers<[1], [0], [0], [1], [0, 0, 1, 1], [], []>} : vector<8x24xf32>, vector<24x512xf32>, vector<8x512xf32> -> vector<8x512xf32>
    %422 = arith.addf %417, %421 : vector<8x512xf32>
    %c1_213 = arith.constant 1 : index
    %c2_214 = arith.constant 2 : index
    %c0_215 = arith.constant 0 : index
    %c0_216 = arith.constant 0 : index
    %423 = vector.load %arg4[%c1_213, %c2_214, %c0_215, %c0_216] : memref<2x3x8x24xf32, #tpu.memory_space<vmem>>, vector<1x1x8x24xf32>
    %424 = vector.shape_cast %423 : vector<1x1x8x24xf32> to vector<8x24xf32>
    %425 = vector.extract_strided_slice %413 {offsets = [0, 256], sizes = [24, 512], strides = [1, 1]} : vector<24x768xf32> to vector<24x512xf32>
    %cst_217 = arith.constant dense<0.000000e+00> : vector<8x512xf32>
    %426 = tpu.matmul %424, %425, %cst_217 {dimension_numbers = #tpu.dot_dimension_numbers<[1], [0], [0], [1], [0, 0, 1, 1], [], []>} : vector<8x24xf32>, vector<24x512xf32>, vector<8x512xf32> -> vector<8x512xf32>
    %427 = arith.addf %422, %426 : vector<8x512xf32>
    %c5_218 = arith.constant 5 : index
    %c0_219 = arith.constant 0 : index
    %c0_220 = arith.constant 0 : index
    %428 = vector.load %arg5[%c5_218, %c0_219, %c0_220] : memref<7x8x1xf32, #tpu.memory_space<vmem>>, vector<1x8x1xf32>
    %429 = vector.shape_cast %428 : vector<1x8x1xf32> to vector<8x1xf32>
    %430 = vector.broadcast %429 : vector<8x1xf32> to vector<8x512xf32>
    %431 = arith.addf %427, %430 : vector<8x512xf32>
    %cst_221 = arith.constant 0.000000e+00 : f32
    %432 = vector.shape_cast %14 : vector<1x512xi1> to vector<1x512xi1>
    %433 = vector.broadcast %432 : vector<1x512xi1> to vector<8x512xi1>
    %434 = vector.broadcast %cst_221 : f32 to vector<8x512xf32>
    %435 = arith.select %433, %431, %434 : vector<8x512xi1>, vector<8x512xf32>
    %cst_222 = arith.constant dense<0.000000e+00> : vector<8xf32>
    %436 = vector.multi_reduction <add>, %435, %cst_222 [1] : vector<8x512xf32> to vector<8xf32>
    %437 = vector.shape_cast %436 : vector<8xf32> to vector<8x1xf32>
    %438 = arith.mulf %435, %431 : vector<8x512xf32>
    %cst_223 = arith.constant dense<0.000000e+00> : vector<8xf32>
    %439 = vector.multi_reduction <add>, %438, %cst_223 [1] : vector<8x512xf32> to vector<8xf32>
    %440 = vector.shape_cast %439 : vector<8xf32> to vector<8x1xf32>
    %cst_224 = arith.constant 6.250000e-02 : f32
    %441 = vector.broadcast %cst_224 : f32 to vector<8x1xf32>
    %442 = arith.mulf %437, %441 : vector<8x1xf32>
    %cst_225 = arith.constant 6.250000e-02 : f32
    %443 = vector.broadcast %cst_225 : f32 to vector<8x1xf32>
    %444 = arith.mulf %440, %443 : vector<8x1xf32>
    %445 = arith.mulf %442, %442 : vector<8x1xf32>
    %446 = arith.subf %444, %445 : vector<8x1xf32>
    %cst_226 = arith.constant 0.000000e+00 : f32
    %447 = vector.broadcast %cst_226 : f32 to vector<8x1xf32>
    %448 = arith.maximumf %446, %447 : vector<8x1xf32>
    %449 = vector.broadcast %442 : vector<8x1xf32> to vector<8x512xf32>
    %450 = arith.subf %431, %449 : vector<8x512xf32>
    %cst_227 = arith.constant 9.99999974E-6 : f32
    %451 = vector.broadcast %cst_227 : f32 to vector<8x1xf32>
    %452 = arith.addf %448, %451 : vector<8x1xf32>
    %453 = math.rsqrt %452 : vector<8x1xf32>
    %454 = vector.broadcast %453 : vector<8x1xf32> to vector<8x512xf32>
    %455 = arith.mulf %450, %454 : vector<8x512xf32>
    %cst_228 = arith.constant 0.000000e+00 : f32
    %456 = vector.broadcast %cst_228 : f32 to vector<8x512xf32>
    %457 = arith.maximumf %455, %456 : vector<8x512xf32>
    %c3_229 = arith.constant 3 : index
    %c0_230 = arith.constant 0 : index
    %c0_231 = arith.constant 0 : index
    %458 = vector.load %arg3[%c3_229, %c0_230, %c0_231] : memref<4x8x8xf32, #tpu.memory_space<vmem>>, vector<1x8x8xf32>
    %459 = vector.shape_cast %458 : vector<1x8x8xf32> to vector<8x8xf32>
    %c6_232 = arith.constant 6 : index
    %c0_233 = arith.constant 0 : index
    %c0_234 = arith.constant 0 : index
    %460 = vector.load %arg5[%c6_232, %c0_233, %c0_234] : memref<7x8x1xf32, #tpu.memory_space<vmem>>, vector<1x8x1xf32>
    %461 = vector.shape_cast %460 : vector<1x8x1xf32> to vector<8x1xf32>
    %cst_235 = arith.constant dense<0.000000e+00> : vector<8x512xf32>
    %462 = tpu.matmul %459, %457, %cst_235 {dimension_numbers = #tpu.dot_dimension_numbers<[1], [0], [0], [1], [0, 0, 1, 1], [], []>} : vector<8x8xf32>, vector<8x512xf32>, vector<8x512xf32> -> vector<8x512xf32>
    %463 = vector.broadcast %461 : vector<8x1xf32> to vector<8x512xf32>
    %464 = arith.addf %462, %463 : vector<8x512xf32>
    %cst_236 = arith.constant 0.000000e+00 : f32
    %465 = vector.shape_cast %14 : vector<1x512xi1> to vector<1x512xi1>
    %466 = vector.broadcast %465 : vector<1x512xi1> to vector<8x512xi1>
    %467 = vector.broadcast %cst_236 : f32 to vector<8x512xf32>
    %468 = arith.select %466, %464, %467 : vector<8x512xi1>, vector<8x512xf32>
    %cst_237 = arith.constant dense<0.000000e+00> : vector<8xf32>
    %469 = vector.multi_reduction <add>, %468, %cst_237 [1] : vector<8x512xf32> to vector<8xf32>
    %470 = vector.shape_cast %469 : vector<8xf32> to vector<8x1xf32>
    %471 = arith.mulf %468, %464 : vector<8x512xf32>
    %cst_238 = arith.constant dense<0.000000e+00> : vector<8xf32>
    %472 = vector.multi_reduction <add>, %471, %cst_238 [1] : vector<8x512xf32> to vector<8xf32>
    %473 = vector.shape_cast %472 : vector<8xf32> to vector<8x1xf32>
    %cst_239 = arith.constant 6.250000e-02 : f32
    %474 = vector.broadcast %cst_239 : f32 to vector<8x1xf32>
    %475 = arith.mulf %470, %474 : vector<8x1xf32>
    %cst_240 = arith.constant 6.250000e-02 : f32
    %476 = vector.broadcast %cst_240 : f32 to vector<8x1xf32>
    %477 = arith.mulf %473, %476 : vector<8x1xf32>
    %478 = arith.mulf %475, %475 : vector<8x1xf32>
    %479 = arith.subf %477, %478 : vector<8x1xf32>
    %cst_241 = arith.constant 0.000000e+00 : f32
    %480 = vector.broadcast %cst_241 : f32 to vector<8x1xf32>
    %481 = arith.maximumf %479, %480 : vector<8x1xf32>
    %482 = vector.broadcast %475 : vector<8x1xf32> to vector<8x512xf32>
    %483 = arith.subf %464, %482 : vector<8x512xf32>
    %cst_242 = arith.constant 9.99999974E-6 : f32
    %484 = vector.broadcast %cst_242 : f32 to vector<8x1xf32>
    %485 = arith.addf %481, %484 : vector<8x1xf32>
    %486 = math.rsqrt %485 : vector<8x1xf32>
    %487 = vector.broadcast %486 : vector<8x1xf32> to vector<8x512xf32>
    %488 = arith.mulf %483, %487 : vector<8x512xf32>
    %489 = arith.addf %377, %488 : vector<8x512xf32>
    %c1_243 = arith.constant 1 : index
    %c0_244 = arith.constant 0 : index
    %c0_245 = arith.constant 0 : index
    %490 = vector.load %arg6[%c1_243, %c0_244, %c0_245] : memref<2x8x512xf32, #tpu.memory_space<vmem>>, vector<1x8x512xf32>
    %491 = vector.shape_cast %490 : vector<1x8x512xf32> to vector<8x512xf32>
    %492 = vector.shape_cast %489 : vector<8x512xf32> to vector<1x8x512xf32>
    tpu.vector_store %arg6[%c1_243, %c0_244, %c0_245], %492 {strides = array<i32>} : memref<2x8x512xf32, #tpu.memory_space<vmem>>, vector<1x8x512xf32>,
    return
  }
  func.func @transform_0(%arg0: i32) -> (i32, i32, i32) {
    %c0_i32 = arith.constant 0 : i32
    %c0_i32_0 = arith.constant 0 : i32
    %c0_i32_1 = arith.constant 0 : i32
    return %arg0, %c0_i32, %c0_i32_0 : i32, i32, i32
  }
  func.func @transform_1(%arg0: i32) -> (i32, i32) {
    %c0_i32 = arith.constant 0 : i32
    %c0_i32_0 = arith.constant 0 : i32
    %c0_i32_1 = arith.constant 0 : i32
    return %c0_i32, %c0_i32_0 : i32, i32
  }
  func.func @transform_2(%arg0: i32) -> (i32, i32, i32) {
    %c0_i32 = arith.constant 0 : i32
    %c0_i32_0 = arith.constant 0 : i32
    %c0_i32_1 = arith.constant 0 : i32
    %c0_i32_2 = arith.constant 0 : i32
    return %c0_i32, %c0_i32_0, %c0_i32_1 : i32, i32, i32
  }
  func.func @transform_3(%arg0: i32) -> (i32, i32, i32, i32) {
    %c0_i32 = arith.constant 0 : i32
    %c0_i32_0 = arith.constant 0 : i32
    %c0_i32_1 = arith.constant 0 : i32
    %c0_i32_2 = arith.constant 0 : i32
    %c0_i32_3 = arith.constant 0 : i32
    return %c0_i32, %c0_i32_0, %c0_i32_1, %c0_i32_2 : i32, i32, i32, i32
  }
  func.func @transform_4(%arg0: i32) -> (i32, i32, i32) {
    %c0_i32 = arith.constant 0 : i32
    %c0_i32_0 = arith.constant 0 : i32
    %c0_i32_1 = arith.constant 0 : i32
    %c0_i32_2 = arith.constant 0 : i32
    return %c0_i32, %c0_i32_0, %c0_i32_1 : i32, i32, i32
  }
  func.func @transform_5(%arg0: i32) -> (i32, i32, i32) {
    %c0_i32 = arith.constant 0 : i32
    %c0_i32_0 = arith.constant 0 : i32
    %c0_i32_1 = arith.constant 0 : i32
    return %arg0, %c0_i32, %c0_i32_0 : i32, i32, i32
  }
}

</mosaic_0001>

<llo_original>
// kernel: tpu_custom_call.1
$region0: #{tpu_custom_call.1}
  #allocation0 [shape = 'u32[]', space=smem, size = 0x4, offset = 0x4, fixed_abs, tag = 'smem constant byte address 0x4 - core index']
  #allocation1 [shape = 'u32[144,128]{1,0:T(1,128)}', space=vmem, size = 0x12000, scoped, tag = 'internal scratch']
  %s0 = inlined_call_operand.vmem [shape: f32[2,4,1024], index: 0, kind: input, shape index: {}]
  %s1 = inlined_call_operand.vmem [shape: f32[8,4], index: 1, kind: input, shape index: {}]
  %s2 = inlined_call_operand.hbm [shape: f32[4,8,8], index: 2, kind: input, shape index: {}]
  %s3 = inlined_call_operand.hbm [shape: f32[2,3,8,24], index: 3, kind: input, shape index: {}]
  %s4 = inlined_call_operand.vmem [shape: f32[7,8,1], index: 4, kind: input, shape index: {}]
  %s5 = inlined_call_operand.hbm [shape: f32[2,8,512], index: 5, kind: output, shape index: {}]
  %s6 = sld [smem:[#allocation0]]
  $region38: #{tpu_custom_call.1} parent=0
    _
  %s8 = ssub.s32 1, %s6
  %s9 = scalar_select 0, %s8, %s6
  $region1: #{tpu_custom_call.1} parent=0
    #allocation2 [shape = 'u8[16384]{0}', space=vmem, size = 0x4000, scoped, tag = 'input window, operand 2, single buffered']
    #allocation3 [shape = 's32[1]{0}', space=sflag, size = 0x4, scoped, tag = 'scoped memory for tpu_custom_call.1']
    #allocation4 [shape = 's32[1]{0}', space=sflag, size = 0x4, scoped, tag = 'scoped memory for tpu_custom_call.1']
    #allocation5 [shape = 'u8[24576]{0}', space=vmem, size = 0x6000, scoped, tag = 'input window, operand 3, single buffered']
    #allocation6 [shape = 's32[1]{0}', space=sflag, size = 0x4, scoped, tag = 'scoped memory for tpu_custom_call.1']
    #allocation7 [shape = 'u8[32768]{0}', space=vmem, size = 0x8000, scoped, tag = 'output window, operand 0, single buffered']
    %10 = vsyncpa [#allocation3], 0
    %11 = vsyncpa [#allocation6], 0
    %12 = vsyncpa [#allocation4], 0
    // Predicated region
    $region2: #{tpu_custom_call.1} parent=1 // pred_check
      _
    $region3: #{tpu_custom_call.1} parent=1 // pred_check_branch
      %14 = sbr.rel (0) target = $region5
    $region4: #{tpu_custom_call.1} parent=1 // pred_region
      _
    $region5: #{tpu_custom_call.1} parent=1 // pred_fallthru
      _
    // Predicated region
    $region6: #{tpu_custom_call.1} parent=1 // pred_check
      _
    $region7: #{tpu_custom_call.1} parent=1 // pred_check_branch
      %16 = sbr.rel (0) target = $region9
    $region8: #{tpu_custom_call.1} parent=1 // pred_region
      _
    $region9: #{tpu_custom_call.1} parent=1 // pred_fallthru
      _
    // Predicated region
    $region10: #{tpu_custom_call.1} parent=1 // pred_check
      _
    $region11: #{tpu_custom_call.1} parent=1 // pred_check_branch
      %18 = sbr.rel (0) target = $region13
    $region12: #{tpu_custom_call.1} parent=1 // pred_region
      %s20 = ssub.s32 512, 512
      %21 = vsyncadd [#allocation3], %s20
      %s22 = sshll.u32 [#allocation2], 4
      %s23 = int_to_ptr.vmem [resolvable:$true] %s22
      %28 = dma.hbm_to_vmem [thread:$0]  %s2, 512, %s23, [#allocation3], 128, 128, 8
    $region13: #{tpu_custom_call.1} parent=1 // pred_fallthru
      _
    // Predicated region
    $region14: #{tpu_custom_call.1} parent=1 // pred_check
      _
    $region15: #{tpu_custom_call.1} parent=1 // pred_check_branch
      %30 = sbr.rel (0) target = $region17
    $region16: #{tpu_custom_call.1} parent=1 // pred_region
      %s32 = ssub.s32 768, 768
      %33 = vsyncadd [#allocation6], %s32
      %s34 = sshll.u32 [#allocation5], 4
      %s35 = int_to_ptr.vmem [resolvable:$true] %s34
      %40 = dma.hbm_to_vmem [thread:$0]  %s3, 768, %s35, [#allocation6], 128, 128, 8
    $region17: #{tpu_custom_call.1} parent=1 // pred_fallthru
      _
    // Predicated region
    $region18: #{tpu_custom_call.1} parent=1 // pred_check
      _
    $region19: #{tpu_custom_call.1} parent=1 // pred_check_branch
      %42 = sbr.rel (0) target = $region21
    $region20: #{tpu_custom_call.1} parent=1 // pred_region
      _
    $region21: #{tpu_custom_call.1} parent=1 // pred_fallthru
      _
    // Predicated region
    $region22: #{tpu_custom_call.1} parent=1 // pred_check
      _
    $region23: #{tpu_custom_call.1} parent=1 // pred_check_branch
      %44 = sbr.rel (0) target = $region25
    $region24: #{tpu_custom_call.1} parent=1 // pred_region
      %45 = dma.done [#allocation3], 512
    $region25: #{tpu_custom_call.1} parent=1 // pred_fallthru
      _
    // Predicated region
    $region26: #{tpu_custom_call.1} parent=1 // pred_check
      _
    $region27: #{tpu_custom_call.1} parent=1 // pred_check_branch
      %47 = sbr.rel (0) target = $region29
    $region28: #{tpu_custom_call.1} parent=1 // pred_region
      %48 = dma.done [#allocation6], 768
    $region29: #{tpu_custom_call.1} parent=1 // pred_fallthru
      _
    %v49 = vlaneseq
    %v50 = vand.u32 %v49, 127
    %v51 = vadd.s32 %v50, 128
    %v52 = vadd.s32 %v50, 256
    %v53 = vadd.s32 %v50, 384
    %v54 = vadd.s32 %v50, 512
    %v55 = vadd.s32 %v50, 640
    %v56 = vadd.s32 %v50, 768
    %v57 = vadd.s32 %v50, 896
    %v58 = vand.u32 %v50, 127
    %v59 = vand.u32 %v51, 127
    %v60 = vand.u32 %v52, 127
    %v61 = vand.u32 %v53, 127
    %v62 = vand.u32 %v54, 127
    %v63 = vand.u32 %v55, 127
    %v64 = vand.u32 %v56, 127
    %v65 = vand.u32 %v57, 127
    %vm66 = vcmp.lt.s32.totalorder %v58, 8
    %vm67 = vcmp.lt.s32.totalorder %v59, 8
    %vm68 = vcmp.lt.s32.totalorder %v60, 8
    %vm69 = vcmp.lt.s32.totalorder %v61, 8
    %vm70 = vcmp.lt.s32.totalorder %v62, 8
    %vm71 = vcmp.lt.s32.totalorder %v63, 8
    %vm72 = vcmp.lt.s32.totalorder %v64, 8
    %vm73 = vcmp.lt.s32.totalorder %v65, 8
    %vm74 = vcmp.lt.s32.totalorder %v58, 6
    %vm75 = vcmp.lt.s32.totalorder %v59, 6
    %vm76 = vcmp.lt.s32.totalorder %v60, 6
    %vm77 = vcmp.lt.s32.totalorder %v61, 6
    %vm78 = vcmp.lt.s32.totalorder %v62, 6
    %vm79 = vcmp.lt.s32.totalorder %v63, 6
    %vm80 = vcmp.lt.s32.totalorder %v58, 4
    %vm81 = vcmp.lt.s32.totalorder %v59, 4
    %vm82 = vcmp.lt.s32.totalorder %v60, 4
    %vm83 = vcmp.lt.s32.totalorder %v61, 4
    %v84 = vld [vmem:[%s1] sm:$0xff]
    %v85 = vld [vmem:[%s0] sm:$0xff]
    %v86 = vld [vmem:[%s0 + $0x8] sm:$0xff]
    %v87 = vld [vmem:[%s0 + $0x10] sm:$0xff]
    %v88 = vld [vmem:[%s0 + $0x18] sm:$0xff]
    %v89 = vld [vmem:[%s4] sm:$0xff]
    %91 = vset.pattern.permute.xlu0 0
    %92 = vperm.xlu0 %91, %v89
    %v93 = vpop.permute.xlu0 %92
    %v99 = vcombine.high %v85, %v85
    %v100 = vcombine.high %v86, %v86
    %v101 = vcombine.high %v87, %v87
    %v102 = vcombine.high %v88, %v88
    %vm103 = vcmask 31744
    %v105 = vsel %vm103, %v84, 0
    %vm107 = vcmask 1043456
    %v108 = vsel %vm107, %v85, 0
    %v110 = vsel %vm107, %v99, 0
    %v112 = vsel %vm107, %v86, 0
    %v114 = vsel %vm107, %v100, 0
    %v116 = vsel %vm107, %v87, 0
    %v118 = vsel %vm107, %v101, 0
    %v120 = vsel %vm107, %v88, 0
    %v122 = vsel %vm107, %v102, 0
    %124 = vmatprep.subr.mxu0 0.0
    %125 = vmatpush1.msra.mxu0 0.0
    %126 = vmatprep.subr.mxu0 0.0
    %127 = vmatpush1.msra.mxu0 0.0
    %128 = vmatprep.subr.mxu0 0.0
    %129 = vmatpush1.msra.mxu0 0.0
    %130 = vmatprep.subr.mxu0 0.0
    %131 = vmatpush1.msra.mxu0 0.0
    %132 = vmatprep.subr.mxu0 0.0
    %133 = vmatpush1.msra.mxu0 0.0
    %134 = vmatprep.subr.mxu0 0.0
    %135 = vmatpush1.msra.mxu0 0.0
    %136 = vmatprep.subr.mxu0 0.0
    %137 = vmatpush1.msra.mxu0 0.0
    %138 = vmatprep.subr.mxu0 0.0
    %139 = vmatpush1.msra.mxu0 0.0
    %140 = vmatprep.subr.mxu0 0.0
    %141 = vmatpush1.msra.mxu0 0.0
    %142 = vmatprep.subr.mxu0 0.0
    %143 = vmatpush1.msra.mxu0 0.0
    %144 = vmatprep.subr.mxu0 0.0
    %145 = vmatpush1.msra.mxu0 0.0
    %146 = vmatprep.subr.mxu0 0.0
    %147 = vmatpush1.msra.mxu0 0.0
    %148 = vmatprep.subr.mxu0 0.0
    %149 = vmatpush1.msra.mxu0 0.0
    %150 = vmatprep.subr.mxu0 0.0
    %151 = vmatpush1.msra.mxu0 0.0
    %152 = vmatprep.subr.mxu0 0.0
    %153 = vmatpush1.msra.mxu0 0.0
    %154 = vmatprep.subr.mxu0 %v110
    %155 = vmatpush1.msra.mxu0 %v108
    %156 = vmatprep.subr.mxu0 0.0
    %157 = vmatpush2.msra.mxu0 0.0
    %158 = vmatprep.subr.mxu0 0.0
    %159 = vmatpush2.msra.mxu0 0.0
    %160 = vmatprep.subr.mxu0 0.0
    %161 = vmatpush2.msra.mxu0 0.0
    %162 = vmatprep.subr.mxu0 0.0
    %163 = vmatpush2.msra.mxu0 0.0
    %164 = vmatprep.subr.mxu0 0.0
    %165 = vmatpush2.msra.mxu0 0.0
    %166 = vmatprep.subr.mxu0 0.0
    %167 = vmatpush2.msra.mxu0 0.0
    %168 = vmatprep.subr.mxu0 0.0
    %169 = vmatpush2.msra.mxu0 0.0
    %170 = vmatprep.subr.mxu0 0.0
    %171 = vmatpush2.msra.mxu0 0.0
    %172 = vmatprep.subr.mxu0 0.0
    %173 = vmatpush2.msra.mxu0 0.0
    %174 = vmatprep.subr.mxu0 0.0
    %175 = vmatpush2.msra.mxu0 0.0
    %176 = vmatprep.subr.mxu0 0.0
    %177 = vmatpush2.msra.mxu0 0.0
    %178 = vmatprep.subr.mxu0 0.0
    %179 = vmatpush2.msra.mxu0 0.0
    %180 = vmatprep.subr.mxu0 0.0
    %181 = vmatpush2.msra.mxu0 0.0
    %182 = vmatprep.subr.mxu0 0.0
    %183 = vmatpush2.msra.mxu0 0.0
    %184 = vmatprep.subr.mxu0 0.0
    %185 = vmatpush2.msra.mxu0 0.0
    %186 = vmatprep.subr.mxu0 0.0
    %187 = vmatpush2.msra.mxu0 0.0
    %188 = vmatprep.mubr.f32.mxu0 0.0
    %189 = vmatmul.mubr.f32.gmra.mxu0 %v105
    %v190 = vpop.f32.mrf.mxu0
    %v191 = vadd.f32 %v93, %v190
    %v192 = vpop.f32.mrf.mxu0
    %v193 = vadd.f32 %v93, %v192
    %194 = vdwg.mxu0
    %195 = vmatprep.subr.mxu0 0.0
    %196 = vmatpush1.msra.mxu0 0.0
    %197 = vmatprep.subr.mxu0 0.0
    %198 = vmatpush1.msra.mxu0 0.0
    %199 = vmatprep.subr.mxu0 0.0
    %200 = vmatpush1.msra.mxu0 0.0
    %201 = vmatprep.subr.mxu0 0.0
    %202 = vmatpush1.msra.mxu0 0.0
    %203 = vmatprep.subr.mxu0 0.0
    %204 = vmatpush1.msra.mxu0 0.0
    %205 = vmatprep.subr.mxu0 0.0
    %206 = vmatpush1.msra.mxu0 0.0
    %207 = vmatprep.subr.mxu0 0.0
    %208 = vmatpush1.msra.mxu0 0.0
    %209 = vmatprep.subr.mxu0 0.0
    %210 = vmatpush1.msra.mxu0 0.0
    %211 = vmatprep.subr.mxu0 0.0
    %212 = vmatpush1.msra.mxu0 0.0
    %213 = vmatprep.subr.mxu0 0.0
    %214 = vmatpush1.msra.mxu0 0.0
    %215 = vmatprep.subr.mxu0 0.0
    %216 = vmatpush1.msra.mxu0 0.0
    %217 = vmatprep.subr.mxu0 0.0
    %218 = vmatpush1.msra.mxu0 0.0
    %219 = vmatprep.subr.mxu0 0.0
    %220 = vmatpush1.msra.mxu0 0.0
    %221 = vmatprep.subr.mxu0 0.0
    %222 = vmatpush1.msra.mxu0 0.0
    %223 = vmatprep.subr.mxu0 0.0
    %224 = vmatpush1.msra.mxu0 0.0
    %225 = vmatprep.subr.mxu0 %v114
    %226 = vmatpush1.msra.mxu0 %v112
    %227 = vmatprep.subr.mxu0 0.0
    %228 = vmatpush2.msra.mxu0 0.0
    %229 = vmatprep.subr.mxu0 0.0
    %230 = vmatpush2.msra.mxu0 0.0
    %231 = vmatprep.subr.mxu0 0.0
    %232 = vmatpush2.msra.mxu0 0.0
    %233 = vmatprep.subr.mxu0 0.0
    %234 = vmatpush2.msra.mxu0 0.0
    %235 = vmatprep.subr.mxu0 0.0
    %236 = vmatpush2.msra.mxu0 0.0
    %237 = vmatprep.subr.mxu0 0.0
    %238 = vmatpush2.msra.mxu0 0.0
    %239 = vmatprep.subr.mxu0 0.0
    %240 = vmatpush2.msra.mxu0 0.0
    %241 = vmatprep.subr.mxu0 0.0
    %242 = vmatpush2.msra.mxu0 0.0
    %243 = vmatprep.subr.mxu0 0.0
    %244 = vmatpush2.msra.mxu0 0.0
    %245 = vmatprep.subr.mxu0 0.0
    %246 = vmatpush2.msra.mxu0 0.0
    %247 = vmatprep.subr.mxu0 0.0
    %248 = vmatpush2.msra.mxu0 0.0
    %249 = vmatprep.subr.mxu0 0.0
    %250 = vmatpush2.msra.mxu0 0.0
    %251 = vmatprep.subr.mxu0 0.0
    %252 = vmatpush2.msra.mxu0 0.0
    %253 = vmatprep.subr.mxu0 0.0
    %254 = vmatpush2.msra.mxu0 0.0
    %255 = vmatprep.subr.mxu0 0.0
    %256 = vmatpush2.msra.mxu0 0.0
    %257 = vmatprep.subr.mxu0 0.0
    %258 = vmatpush2.msra.mxu0 0.0
    %259 = vmatprep.mubr.f32.mxu0 0.0
    %260 = vmatmul.mubr.f32.gmra.mxu0 %v105
    %v261 = vpop.f32.mrf.mxu0
    %v262 = vadd.f32 %v93, %v261
    %v263 = vpop.f32.mrf.mxu0
    %v264 = vadd.f32 %v93, %v263
    %265 = vdwg.mxu0
    %266 = vmatprep.subr.mxu0 0.0
    %267 = vmatpush1.msra.mxu0 0.0
    %268 = vmatprep.subr.mxu0 0.0
    %269 = vmatpush1.msra.mxu0 0.0
    %270 = vmatprep.subr.mxu0 0.0
    %271 = vmatpush1.msra.mxu0 0.0
    %272 = vmatprep.subr.mxu0 0.0
    %273 = vmatpush1.msra.mxu0 0.0
    %274 = vmatprep.subr.mxu0 0.0
    %275 = vmatpush1.msra.mxu0 0.0
    %276 = vmatprep.subr.mxu0 0.0
    %277 = vmatpush1.msra.mxu0 0.0
    %278 = vmatprep.subr.mxu0 0.0
    %279 = vmatpush1.msra.mxu0 0.0
    %280 = vmatprep.subr.mxu0 0.0
    %281 = vmatpush1.msra.mxu0 0.0
    %282 = vmatprep.subr.mxu0 0.0
    %283 = vmatpush1.msra.mxu0 0.0
    %284 = vmatprep.subr.mxu0 0.0
    %285 = vmatpush1.msra.mxu0 0.0
    %286 = vmatprep.subr.mxu0 0.0
    %287 = vmatpush1.msra.mxu0 0.0
    %288 = vmatprep.subr.mxu0 0.0
    %289 = vmatpush1.msra.mxu0 0.0
    %290 = vmatprep.subr.mxu0 0.0
    %291 = vmatpush1.msra.mxu0 0.0
    %292 = vmatprep.subr.mxu0 0.0
    %293 = vmatpush1.msra.mxu0 0.0
    %294 = vmatprep.subr.mxu0 0.0
    %295 = vmatpush1.msra.mxu0 0.0
    %296 = vmatprep.subr.mxu0 %v118
    %297 = vmatpush1.msra.mxu0 %v116
    %298 = vmatprep.subr.mxu0 0.0
    %299 = vmatpush2.msra.mxu0 0.0
    %300 = vmatprep.subr.mxu0 0.0
    %301 = vmatpush2.msra.mxu0 0.0
    %302 = vmatprep.subr.mxu0 0.0
    %303 = vmatpush2.msra.mxu0 0.0
    %304 = vmatprep.subr.mxu0 0.0
    %305 = vmatpush2.msra.mxu0 0.0
    %306 = vmatprep.subr.mxu0 0.0
    %307 = vmatpush2.msra.mxu0 0.0
    %308 = vmatprep.subr.mxu0 0.0
    %309 = vmatpush2.msra.mxu0 0.0
    %310 = vmatprep.subr.mxu0 0.0
    %311 = vmatpush2.msra.mxu0 0.0
    %312 = vmatprep.subr.mxu0 0.0
    %313 = vmatpush2.msra.mxu0 0.0
    %314 = vmatprep.subr.mxu0 0.0
    %315 = vmatpush2.msra.mxu0 0.0
    %316 = vmatprep.subr.mxu0 0.0
    %317 = vmatpush2.msra.mxu0 0.0
    %318 = vmatprep.subr.mxu0 0.0
    %319 = vmatpush2.msra.mxu0 0.0
    %320 = vmatprep.subr.mxu0 0.0
    %321 = vmatpush2.msra.mxu0 0.0
    %322 = vmatprep.subr.mxu0 0.0
    %323 = vmatpush2.msra.mxu0 0.0
    %324 = vmatprep.subr.mxu0 0.0
    %325 = vmatpush2.msra.mxu0 0.0
    %326 = vmatprep.subr.mxu0 0.0
    %327 = vmatpush2.msra.mxu0 0.0
    %328 = vmatprep.subr.mxu0 0.0
    %329 = vmatpush2.msra.mxu0 0.0
    %330 = vmatprep.mubr.f32.mxu0 0.0
    %331 = vmatmul.mubr.f32.gmra.mxu0 %v105
    %v332 = vpop.f32.mrf.mxu0
    %v333 = vadd.f32 %v93, %v332
    %v334 = vpop.f32.mrf.mxu0
    %v335 = vadd.f32 %v93, %v334
    %336 = vdwg.mxu0
    %337 = vmatprep.subr.mxu0 0.0
    %338 = vmatpush1.msra.mxu0 0.0
    %339 = vmatprep.subr.mxu0 0.0
    %340 = vmatpush1.msra.mxu0 0.0
    %341 = vmatprep.subr.mxu0 0.0
    %342 = vmatpush1.msra.mxu0 0.0
    %343 = vmatprep.subr.mxu0 0.0
    %344 = vmatpush1.msra.mxu0 0.0
    %345 = vmatprep.subr.mxu0 0.0
    %346 = vmatpush1.msra.mxu0 0.0
    %347 = vmatprep.subr.mxu0 0.0
    %348 = vmatpush1.msra.mxu0 0.0
    %349 = vmatprep.subr.mxu0 0.0
    %350 = vmatpush1.msra.mxu0 0.0
    %351 = vmatprep.subr.mxu0 0.0
    %352 = vmatpush1.msra.mxu0 0.0
    %353 = vmatprep.subr.mxu0 0.0
    %354 = vmatpush1.msra.mxu0 0.0
    %355 = vmatprep.subr.mxu0 0.0
    %356 = vmatpush1.msra.mxu0 0.0
    %357 = vmatprep.subr.mxu0 0.0
    %358 = vmatpush1.msra.mxu0 0.0
    %359 = vmatprep.subr.mxu0 0.0
    %360 = vmatpush1.msra.mxu0 0.0
    %361 = vmatprep.subr.mxu0 0.0
    %362 = vmatpush1.msra.mxu0 0.0
    %363 = vmatprep.subr.mxu0 0.0
    %364 = vmatpush1.msra.mxu0 0.0
    %365 = vmatprep.subr.mxu0 0.0
    %366 = vmatpush1.msra.mxu0 0.0
    %367 = vmatprep.subr.mxu0 %v122
    %368 = vmatpush1.msra.mxu0 %v120
    %369 = vmatprep.subr.mxu0 0.0
    %370 = vmatpush2.msra.mxu0 0.0
    %371 = vmatprep.subr.mxu0 0.0
    %372 = vmatpush2.msra.mxu0 0.0
    %373 = vmatprep.subr.mxu0 0.0
    %374 = vmatpush2.msra.mxu0 0.0
    %375 = vmatprep.subr.mxu0 0.0
    %376 = vmatpush2.msra.mxu0 0.0
    %377 = vmatprep.subr.mxu0 0.0
    %378 = vmatpush2.msra.mxu0 0.0
    %379 = vmatprep.subr.mxu0 0.0
    %380 = vmatpush2.msra.mxu0 0.0
    %381 = vmatprep.subr.mxu0 0.0
    %382 = vmatpush2.msra.mxu0 0.0
    %383 = vmatprep.subr.mxu0 0.0
    %384 = vmatpush2.msra.mxu0 0.0
    %385 = vmatprep.subr.mxu0 0.0
    %386 = vmatpush2.msra.mxu0 0.0
    %387 = vmatprep.subr.mxu0 0.0
    %388 = vmatpush2.msra.mxu0 0.0
    %389 = vmatprep.subr.mxu0 0.0
    %390 = vmatpush2.msra.mxu0 0.0
    %391 = vmatprep.subr.mxu0 0.0
    %392 = vmatpush2.msra.mxu0 0.0
    %393 = vmatprep.subr.mxu0 0.0
    %394 = vmatpush2.msra.mxu0 0.0
    %395 = vmatprep.subr.mxu0 0.0
    %396 = vmatpush2.msra.mxu0 0.0
    %397 = vmatprep.subr.mxu0 0.0
    %398 = vmatpush2.msra.mxu0 0.0
    %399 = vmatprep.subr.mxu0 0.0
    %400 = vmatpush2.msra.mxu0 0.0
    %401 = vmatprep.mubr.f32.mxu0 0.0
    %402 = vmatmul.mubr.f32.gmra.mxu0 %v105
    %v403 = vpop.f32.mrf.mxu0
    %v404 = vadd.f32 %v93, %v403
    %v405 = vpop.f32.mrf.mxu0
    %v406 = vadd.f32 %v93, %v405
    %407 = vdwg.mxu0
    %408 = vrot.lane.b32.xlu0 %v193, 127
    %v409 = vpop.permute.xlu0 %408
    %410 = vrot.lane.b32.xlu0 %v262, 127
    %v411 = vpop.permute.xlu0 %410
    %412 = vrot.lane.b32.xlu0 %v264, 127
    %v413 = vpop.permute.xlu0 %412
    %414 = vrot.lane.b32.xlu0 %v333, 127
    %v415 = vpop.permute.xlu0 %414
    %416 = vrot.lane.b32.xlu0 %v335, 127
    %v417 = vpop.permute.xlu0 %416
    %418 = vrot.lane.b32.xlu0 %v404, 127
    %v419 = vpop.permute.xlu0 %418
    %420 = vrot.lane.b32.xlu0 %v406, 127
    %v421 = vpop.permute.xlu0 %420
    %vm422 = vcmp.lt.s32.totalorder %v50, 127
    %v423 = vsel %vm422, %v419, %v421
    %v424 = vsel %vm422, %v417, %v419
    %v425 = vsel %vm422, %v415, %v417
    %v426 = vsel %vm422, %v413, %v415
    %v427 = vsel %vm422, %v411, %v413
    %v428 = vsel %vm422, %v409, %v411
    %v429 = vld [vmem:[#allocation2] sm:$0xff]
    %s430 = scalar_lea.vmem %s4, 8
    %v431 = vld [vmem:[%s430] sm:$0xff]
    %433 = vset.pattern.permute.xlu0 0
    %434 = vperm.xlu0 %433, %v431
    %v435 = vpop.permute.xlu0 %434
    %vm437 = vcmask 64512
    %v439 = vsel %vm437, %v429, 0
    %441 = vmatprep.subr.mxu0 0.0
    %442 = vmatpush1.msra.mxu0 0.0
    %443 = vmatprep.subr.mxu0 0.0
    %444 = vmatpush1.msra.mxu0 0.0
    %445 = vmatprep.subr.mxu0 0.0
    %446 = vmatpush1.msra.mxu0 0.0
    %447 = vmatprep.subr.mxu0 0.0
    %448 = vmatpush1.msra.mxu0 0.0
    %449 = vmatprep.subr.mxu0 0.0
    %450 = vmatpush1.msra.mxu0 0.0
    %451 = vmatprep.subr.mxu0 0.0
    %452 = vmatpush1.msra.mxu0 0.0
    %453 = vmatprep.subr.mxu0 0.0
    %454 = vmatpush1.msra.mxu0 0.0
    %455 = vmatprep.subr.mxu0 0.0
    %456 = vmatpush1.msra.mxu0 0.0
    %457 = vmatprep.subr.mxu0 0.0
    %458 = vmatpush1.msra.mxu0 0.0
    %459 = vmatprep.subr.mxu0 0.0
    %460 = vmatpush1.msra.mxu0 0.0
    %461 = vmatprep.subr.mxu0 0.0
    %462 = vmatpush1.msra.mxu0 0.0
    %463 = vmatprep.subr.mxu0 0.0
    %464 = vmatpush1.msra.mxu0 0.0
    %465 = vmatprep.subr.mxu0 0.0
    %466 = vmatpush1.msra.mxu0 0.0
    %467 = vmatprep.subr.mxu0 0.0
    %468 = vmatpush1.msra.mxu0 0.0
    %469 = vmatprep.subr.mxu0 0.0
    %470 = vmatpush1.msra.mxu0 0.0
    %471 = vmatprep.subr.mxu0 %v193
    %472 = vmatpush1.msra.mxu0 %v191
    %473 = vmatprep.subr.mxu0 0.0
    %474 = vmatpush2.msra.mxu0 0.0
    %475 = vmatprep.subr.mxu0 0.0
    %476 = vmatpush2.msra.mxu0 0.0
    %477 = vmatprep.subr.mxu0 0.0
    %478 = vmatpush2.msra.mxu0 0.0
    %479 = vmatprep.subr.mxu0 0.0
    %480 = vmatpush2.msra.mxu0 0.0
    %481 = vmatprep.subr.mxu0 0.0
    %482 = vmatpush2.msra.mxu0 0.0
    %483 = vmatprep.subr.mxu0 0.0
    %484 = vmatpush2.msra.mxu0 0.0
    %485 = vmatprep.subr.mxu0 0.0
    %486 = vmatpush2.msra.mxu0 0.0
    %487 = vmatprep.subr.mxu0 0.0
    %488 = vmatpush2.msra.mxu0 0.0
    %489 = vmatprep.subr.mxu0 0.0
    %490 = vmatpush2.msra.mxu0 0.0
    %491 = vmatprep.subr.mxu0 0.0
    %492 = vmatpush2.msra.mxu0 0.0
    %493 = vmatprep.subr.mxu0 0.0
    %494 = vmatpush2.msra.mxu0 0.0
    %495 = vmatprep.subr.mxu0 0.0
    %496 = vmatpush2.msra.mxu0 0.0
    %497 = vmatprep.subr.mxu0 0.0
    %498 = vmatpush2.msra.mxu0 0.0
    %499 = vmatprep.subr.mxu0 0.0
    %500 = vmatpush2.msra.mxu0 0.0
    %501 = vmatprep.subr.mxu0 0.0
    %502 = vmatpush2.msra.mxu0 0.0
    %503 = vmatprep.subr.mxu0 0.0
    %504 = vmatpush2.msra.mxu0 0.0
    %505 = vmatprep.mubr.f32.mxu0 0.0
    %506 = vmatmul.mubr.f32.gmra.mxu0 %v439
    %v507 = vpop.f32.mrf.mxu0
    %v508 = vadd.f32 %v435, %v507
    %v509 = vpop.f32.mrf.mxu0
    %v510 = vadd.f32 %v435, %v509
    %511 = vdwg.mxu0
    %512 = vmatprep.subr.mxu0 0.0
    %513 = vmatpush1.msra.mxu0 0.0
    %514 = vmatprep.subr.mxu0 0.0
    %515 = vmatpush1.msra.mxu0 0.0
    %516 = vmatprep.subr.mxu0 0.0
    %517 = vmatpush1.msra.mxu0 0.0
    %518 = vmatprep.subr.mxu0 0.0
    %519 = vmatpush1.msra.mxu0 0.0
    %520 = vmatprep.subr.mxu0 0.0
    %521 = vmatpush1.msra.mxu0 0.0
    %522 = vmatprep.subr.mxu0 0.0
    %523 = vmatpush1.msra.mxu0 0.0
    %524 = vmatprep.subr.mxu0 0.0
    %525 = vmatpush1.msra.mxu0 0.0
    %526 = vmatprep.subr.mxu0 0.0
    %527 = vmatpush1.msra.mxu0 0.0
    %528 = vmatprep.subr.mxu0 0.0
    %529 = vmatpush1.msra.mxu0 0.0
    %530 = vmatprep.subr.mxu0 0.0
    %531 = vmatpush1.msra.mxu0 0.0
    %532 = vmatprep.subr.mxu0 0.0
    %533 = vmatpush1.msra.mxu0 0.0
    %534 = vmatprep.subr.mxu0 0.0
    %535 = vmatpush1.msra.mxu0 0.0
    %536 = vmatprep.subr.mxu0 0.0
    %537 = vmatpush1.msra.mxu0 0.0
    %538 = vmatprep.subr.mxu0 0.0
    %539 = vmatpush1.msra.mxu0 0.0
    %540 = vmatprep.subr.mxu0 0.0
    %541 = vmatpush1.msra.mxu0 0.0
    %542 = vmatprep.subr.mxu0 %v264
    %543 = vmatpush1.msra.mxu0 %v262
    %544 = vmatprep.subr.mxu0 0.0
    %545 = vmatpush2.msra.mxu0 0.0
    %546 = vmatprep.subr.mxu0 0.0
    %547 = vmatpush2.msra.mxu0 0.0
    %548 = vmatprep.subr.mxu0 0.0
    %549 = vmatpush2.msra.mxu0 0.0
    %550 = vmatprep.subr.mxu0 0.0
    %551 = vmatpush2.msra.mxu0 0.0
    %552 = vmatprep.subr.mxu0 0.0
    %553 = vmatpush2.msra.mxu0 0.0
    %554 = vmatprep.subr.mxu0 0.0
    %555 = vmatpush2.msra.mxu0 0.0
    %556 = vmatprep.subr.mxu0 0.0
    %557 = vmatpush2.msra.mxu0 0.0
    %558 = vmatprep.subr.mxu0 0.0
    %559 = vmatpush2.msra.mxu0 0.0
    %560 = vmatprep.subr.mxu0 0.0
    %561 = vmatpush2.msra.mxu0 0.0
    %562 = vmatprep.subr.mxu0 0.0
    %563 = vmatpush2.msra.mxu0 0.0
    %564 = vmatprep.subr.mxu0 0.0
    %565 = vmatpush2.msra.mxu0 0.0
    %566 = vmatprep.subr.mxu0 0.0
    %567 = vmatpush2.msra.mxu0 0.0
    %568 = vmatprep.subr.mxu0 0.0
    %569 = vmatpush2.msra.mxu0 0.0
    %570 = vmatprep.subr.mxu0 0.0
    %571 = vmatpush2.msra.mxu0 0.0
    %572 = vmatprep.subr.mxu0 0.0
    %573 = vmatpush2.msra.mxu0 0.0
    %574 = vmatprep.subr.mxu0 0.0
    %575 = vmatpush2.msra.mxu0 0.0
    %576 = vmatprep.mubr.f32.mxu0 0.0
    %577 = vmatmul.mubr.f32.gmra.mxu0 %v439
    %v578 = vpop.f32.mrf.mxu0
    %v579 = vadd.f32 %v435, %v578
    %v580 = vpop.f32.mrf.mxu0
    %v581 = vadd.f32 %v435, %v580
    %582 = vdwg.mxu0
    %583 = vmatprep.subr.mxu0 0.0
    %584 = vmatpush1.msra.mxu0 0.0
    %585 = vmatprep.subr.mxu0 0.0
    %586 = vmatpush1.msra.mxu0 0.0
    %587 = vmatprep.subr.mxu0 0.0
    %588 = vmatpush1.msra.mxu0 0.0
    %589 = vmatprep.subr.mxu0 0.0
    %590 = vmatpush1.msra.mxu0 0.0
    %591 = vmatprep.subr.mxu0 0.0
    %592 = vmatpush1.msra.mxu0 0.0
    %593 = vmatprep.subr.mxu0 0.0
    %594 = vmatpush1.msra.mxu0 0.0
    %595 = vmatprep.subr.mxu0 0.0
    %596 = vmatpush1.msra.mxu0 0.0
    %597 = vmatprep.subr.mxu0 0.0
    %598 = vmatpush1.msra.mxu0 0.0
    %599 = vmatprep.subr.mxu0 0.0
    %600 = vmatpush1.msra.mxu0 0.0
    %601 = vmatprep.subr.mxu0 0.0
    %602 = vmatpush1.msra.mxu0 0.0
    %603 = vmatprep.subr.mxu0 0.0
    %604 = vmatpush1.msra.mxu0 0.0
    %605 = vmatprep.subr.mxu0 0.0
    %606 = vmatpush1.msra.mxu0 0.0
    %607 = vmatprep.subr.mxu0 0.0
    %608 = vmatpush1.msra.mxu0 0.0
    %609 = vmatprep.subr.mxu0 0.0
    %610 = vmatpush1.msra.mxu0 0.0
    %611 = vmatprep.subr.mxu0 0.0
    %612 = vmatpush1.msra.mxu0 0.0
    %613 = vmatprep.subr.mxu0 %v335
    %614 = vmatpush1.msra.mxu0 %v333
    %615 = vmatprep.subr.mxu0 0.0
    %616 = vmatpush2.msra.mxu0 0.0
    %617 = vmatprep.subr.mxu0 0.0
    %618 = vmatpush2.msra.mxu0 0.0
    %619 = vmatprep.subr.mxu0 0.0
    %620 = vmatpush2.msra.mxu0 0.0
    %621 = vmatprep.subr.mxu0 0.0
    %622 = vmatpush2.msra.mxu0 0.0
    %623 = vmatprep.subr.mxu0 0.0
    %624 = vmatpush2.msra.mxu0 0.0
    %625 = vmatprep.subr.mxu0 0.0
    %626 = vmatpush2.msra.mxu0 0.0
    %627 = vmatprep.subr.mxu0 0.0
    %628 = vmatpush2.msra.mxu0 0.0
    %629 = vmatprep.subr.mxu0 0.0
    %630 = vmatpush2.msra.mxu0 0.0
    %631 = vmatprep.subr.mxu0 0.0
    %632 = vmatpush2.msra.mxu0 0.0
    %633 = vmatprep.subr.mxu0 0.0
    %634 = vmatpush2.msra.mxu0 0.0
    %635 = vmatprep.subr.mxu0 0.0
    %636 = vmatpush2.msra.mxu0 0.0
    %637 = vmatprep.subr.mxu0 0.0
    %638 = vmatpush2.msra.mxu0 0.0
    %639 = vmatprep.subr.mxu0 0.0
    %640 = vmatpush2.msra.mxu0 0.0
    %641 = vmatprep.subr.mxu0 0.0
    %642 = vmatpush2.msra.mxu0 0.0
    %643 = vmatprep.subr.mxu0 0.0
    %644 = vmatpush2.msra.mxu0 0.0
    %645 = vmatprep.subr.mxu0 0.0
    %646 = vmatpush2.msra.mxu0 0.0
    %647 = vmatprep.mubr.f32.mxu0 0.0
    %648 = vmatmul.mubr.f32.gmra.mxu0 %v439
    %v649 = vpop.f32.mrf.mxu0
    %v650 = vadd.f32 %v435, %v649
    %v651 = vpop.f32.mrf.mxu0
    %v652 = vadd.f32 %v435, %v651
    %653 = vdwg.mxu0
    %654 = vmatprep.subr.mxu0 0.0
    %655 = vmatpush1.msra.mxu0 0.0
    %656 = vmatprep.subr.mxu0 0.0
    %657 = vmatpush1.msra.mxu0 0.0
    %658 = vmatprep.subr.mxu0 0.0
    %659 = vmatpush1.msra.mxu0 0.0
    %660 = vmatprep.subr.mxu0 0.0
    %661 = vmatpush1.msra.mxu0 0.0
    %662 = vmatprep.subr.mxu0 0.0
    %663 = vmatpush1.msra.mxu0 0.0
    %664 = vmatprep.subr.mxu0 0.0
    %665 = vmatpush1.msra.mxu0 0.0
    %666 = vmatprep.subr.mxu0 0.0
    %667 = vmatpush1.msra.mxu0 0.0
    %668 = vmatprep.subr.mxu0 0.0
    %669 = vmatpush1.msra.mxu0 0.0
    %670 = vmatprep.subr.mxu0 0.0
    %671 = vmatpush1.msra.mxu0 0.0
    %672 = vmatprep.subr.mxu0 0.0
    %673 = vmatpush1.msra.mxu0 0.0
    %674 = vmatprep.subr.mxu0 0.0
    %675 = vmatpush1.msra.mxu0 0.0
    %676 = vmatprep.subr.mxu0 0.0
    %677 = vmatpush1.msra.mxu0 0.0
    %678 = vmatprep.subr.mxu0 0.0
    %679 = vmatpush1.msra.mxu0 0.0
    %680 = vmatprep.subr.mxu0 0.0
    %681 = vmatpush1.msra.mxu0 0.0
    %682 = vmatprep.subr.mxu0 0.0
    %683 = vmatpush1.msra.mxu0 0.0
    %684 = vmatprep.subr.mxu0 %v406
    %685 = vmatpush1.msra.mxu0 %v404
    %686 = vmatprep.subr.mxu0 0.0
    %687 = vmatpush2.msra.mxu0 0.0
    %688 = vmatprep.subr.mxu0 0.0
    %689 = vmatpush2.msra.mxu0 0.0
    %690 = vmatprep.subr.mxu0 0.0
    %691 = vmatpush2.msra.mxu0 0.0
    %692 = vmatprep.subr.mxu0 0.0
    %693 = vmatpush2.msra.mxu0 0.0
    %694 = vmatprep.subr.mxu0 0.0
    %695 = vmatpush2.msra.mxu0 0.0
    %696 = vmatprep.subr.mxu0 0.0
    %697 = vmatpush2.msra.mxu0 0.0
    %698 = vmatprep.subr.mxu0 0.0
    %699 = vmatpush2.msra.mxu0 0.0
    %700 = vmatprep.subr.mxu0 0.0
    %701 = vmatpush2.msra.mxu0 0.0
    %702 = vmatprep.subr.mxu0 0.0
    %703 = vmatpush2.msra.mxu0 0.0
    %704 = vmatprep.subr.mxu0 0.0
    %705 = vmatpush2.msra.mxu0 0.0
    %706 = vmatprep.subr.mxu0 0.0
    %707 = vmatpush2.msra.mxu0 0.0
    %708 = vmatprep.subr.mxu0 0.0
    %709 = vmatpush2.msra.mxu0 0.0
    %710 = vmatprep.subr.mxu0 0.0
    %711 = vmatpush2.msra.mxu0 0.0
    %712 = vmatprep.subr.mxu0 0.0
    %713 = vmatpush2.msra.mxu0 0.0
    %714 = vmatprep.subr.mxu0 0.0
    %715 = vmatpush2.msra.mxu0 0.0
    %716 = vmatprep.subr.mxu0 0.0
    %717 = vmatpush2.msra.mxu0 0.0
    %718 = vmatprep.mubr.f32.mxu0 0.0
    %719 = vmatmul.mubr.f32.gmra.mxu0 %v439
    %v720 = vpop.f32.mrf.mxu0
    %v721 = vadd.f32 %v435, %v720
    %v722 = vpop.f32.mrf.mxu0
    %v723 = vadd.f32 %v435, %v722
    %724 = vdwg.mxu0
    %v725 = vsel %vm66, 1, 0
    %v726 = vsel %vm67, 1, 0
    %v727 = vsel %vm68, 1, 0
    %v728 = vsel %vm69, 1, 0
    %v729 = vsel %vm70, 1, 0
    %v730 = vsel %vm71, 1, 0
    %v731 = vsel %vm72, 1, 0
    %v732 = vsel %vm73, 1, 0
    %vm733 = vcmp.eq.s32.totalorder %v725, 1
    %vm734 = vcmp.eq.s32.totalorder %v726, 1
    %vm735 = vcmp.eq.s32.totalorder %v727, 1
    %vm736 = vcmp.eq.s32.totalorder %v728, 1
    %vm737 = vcmp.eq.s32.totalorder %v729, 1
    %vm738 = vcmp.eq.s32.totalorder %v730, 1
    %vm739 = vcmp.eq.s32.totalorder %v731, 1
    %vm740 = vcmp.eq.s32.totalorder %v732, 1
    %v741 = vsel %vm733, %v508, 0.0
    %v742 = vsel %vm734, %v510, 0.0
    %v743 = vsel %vm735, %v579, 0.0
    %v744 = vsel %vm736, %v581, 0.0
    %v745 = vsel %vm737, %v650, 0.0
    %v746 = vsel %vm738, %v652, 0.0
    %v747 = vsel %vm739, %v721, 0.0
    %v748 = vsel %vm740, %v723, 0.0
    %v749 = vadd.f32 %v741, %v742
    %v750 = vadd.f32 %v749, %v743
    %v751 = vadd.f32 %v750, %v744
    %v752 = vadd.f32 %v751, %v745
    %v753 = vadd.f32 %v752, %v746
    %v754 = vadd.f32 %v753, %v747
    %v755 = vadd.f32 %v754, %v748
    %756 = vadd.xlane.f32.xlu0 %v755
    %v757 = vpop.xlane.xlu0 %756
    %v758 = vmul.f32 %v741, %v508
    %v759 = vmul.f32 %v742, %v510
    %v760 = vmul.f32 %v743, %v579
    %v761 = vmul.f32 %v744, %v581
    %v762 = vmul.f32 %v745, %v650
    %v763 = vmul.f32 %v746, %v652
    %v764 = vmul.f32 %v747, %v721
    %v765 = vmul.f32 %v748, %v723
    %v766 = vadd.f32 %v758, %v759
    %v767 = vadd.f32 %v766, %v760
    %v768 = vadd.f32 %v767, %v761
    %v769 = vadd.f32 %v768, %v762
    %v770 = vadd.f32 %v769, %v763
    %v771 = vadd.f32 %v770, %v764
    %v772 = vadd.f32 %v771, %v765
    %773 = vadd.xlane.f32.xlu0 %v772
    %v774 = vpop.xlane.xlu0 %773
    %v775 = vmul.f32 %v757, 0.015625
    %v776 = vmul.f32 %v774, 0.015625
    %v777 = vmul.f32 %v775, %v775
    %v778 = vsub.f32 %v776, %v777
    %v779 = vmax.f32 %v778, 0.0
    %v780 = vsub.f32 %v508, %v775
    %v781 = vsub.f32 %v510, %v775
    %v782 = vsub.f32 %v579, %v775
    %v783 = vsub.f32 %v581, %v775
    %v784 = vsub.f32 %v650, %v775
    %v785 = vsub.f32 %v652, %v775
    %v786 = vsub.f32 %v721, %v775
    %v787 = vsub.f32 %v723, %v775
    %v788 = vadd.f32 %v779, 1e-05
    %v789 = vrsqrt.pop %v788
    %v790 = vmul.f32 %v780, %v789
    %v791 = vmul.f32 %v781, %v789
    %v792 = vmul.f32 %v782, %v789
    %v793 = vmul.f32 %v783, %v789
    %v794 = vmul.f32 %v784, %v789
    %v795 = vmul.f32 %v785, %v789
    %v796 = vmul.f32 %v786, %v789
    %v797 = vmul.f32 %v787, %v789
    %v798 = vmax.f32 %v790, 0.0
    %v799 = vmax.f32 %v791, 0.0
    %v800 = vmax.f32 %v792, 0.0
    %v801 = vmax.f32 %v793, 0.0
    %v802 = vmax.f32 %v794, 0.0
    %v803 = vmax.f32 %v795, 0.0
    %v804 = vmax.f32 %v796, 0.0
    %v805 = vmax.f32 %v797, 0.0
    %806 = vrot.lane.b32.xlu0 %v798, 127
    %v807 = vpop.permute.xlu0 %806
    %808 = vrot.lane.b32.xlu0 %v799, 127
    %v809 = vpop.permute.xlu0 %808
    %810 = vrot.lane.b32.xlu0 %v800, 127
    %v811 = vpop.permute.xlu0 %810
    %812 = vrot.lane.b32.xlu0 %v801, 127
    %v813 = vpop.permute.xlu0 %812
    %814 = vrot.lane.b32.xlu0 %v802, 127
    %v815 = vpop.permute.xlu0 %814
    %816 = vrot.lane.b32.xlu0 %v803, 127
    %v817 = vpop.permute.xlu0 %816
    %818 = vrot.lane.b32.xlu0 %v804, 127
    %v819 = vpop.permute.xlu0 %818
    %820 = vrot.lane.b32.xlu0 %v805, 127
    %v821 = vpop.permute.xlu0 %820
    %v822 = vsel %vm422, %v819, %v821
    %v823 = vsel %vm422, %v817, %v819
    %v824 = vsel %vm422, %v815, %v817
    %v825 = vsel %vm422, %v813, %v815
    %v826 = vsel %vm422, %v811, %v813
    %v827 = vsel %vm422, %v809, %v811
    %v828 = vsel %vm422, %v807, %v809
    %v829 = vsel %vm422, %v821, %v807
    %830 = vrot.lane.b32.xlu0 %v798, 126
    %v831 = vpop.permute.xlu0 %830
    %832 = vrot.lane.b32.xlu0 %v799, 126
    %v833 = vpop.permute.xlu0 %832
    %834 = vrot.lane.b32.xlu0 %v800, 126
    %v835 = vpop.permute.xlu0 %834
    %836 = vrot.lane.b32.xlu0 %v801, 126
    %v837 = vpop.permute.xlu0 %836
    %838 = vrot.lane.b32.xlu0 %v802, 126
    %v839 = vpop.permute.xlu0 %838
    %840 = vrot.lane.b32.xlu0 %v803, 126
    %v841 = vpop.permute.xlu0 %840
    %842 = vrot.lane.b32.xlu0 %v804, 126
    %v843 = vpop.permute.xlu0 %842
    %844 = vrot.lane.b32.xlu0 %v805, 126
    %v845 = vpop.permute.xlu0 %844
    %vm846 = vcmp.lt.s32.totalorder %v50, 126
    %v847 = vsel %vm846, %v843, %v845
    %v848 = vsel %vm846, %v841, %v843
    %v849 = vsel %vm846, %v839, %v841
    %v850 = vsel %vm846, %v837, %v839
    %v851 = vsel %vm846, %v835, %v837
    %v852 = vsel %vm846, %v833, %v835
    %v853 = vsel %vm846, %v831, %v833
    %v854 = vsel %vm846, %v845, %v831
    %v855 = vld [vmem:[#allocation5] sm:$0xff]
    %s856 = scalar_lea.vmem [#allocation5], 8
    %v857 = vld [vmem:[%s856] sm:$0xff]
    %vm858 = vcmask 195584
    %v860 = vsel %vm858, %v857, 0
    %862 = vmatprep.subr.mxu0 0.0
    %863 = vmatpush1.msra.mxu0 0.0
    %864 = vmatprep.subr.mxu0 0.0
    %865 = vmatpush1.msra.mxu0 0.0
    %866 = vmatprep.subr.mxu0 0.0
    %867 = vmatpush1.msra.mxu0 0.0
    %868 = vmatprep.subr.mxu0 0.0
    %869 = vmatpush1.msra.mxu0 0.0
    %870 = vmatprep.subr.mxu0 0.0
    %871 = vmatpush1.msra.mxu0 0.0
    %872 = vmatprep.subr.mxu0 0.0
    %873 = vmatpush1.msra.mxu0 0.0
    %874 = vmatprep.subr.mxu0 0.0
    %875 = vmatpush1.msra.mxu0 0.0
    %876 = vmatprep.subr.mxu0 0.0
    %877 = vmatpush1.msra.mxu0 0.0
    %878 = vmatprep.subr.mxu0 0.0
    %879 = vmatpush1.msra.mxu0 0.0
    %880 = vmatprep.subr.mxu0 0.0
    %881 = vmatpush1.msra.mxu0 0.0
    %882 = vmatprep.subr.mxu0 0.0
    %883 = vmatpush1.msra.mxu0 0.0
    %884 = vmatprep.subr.mxu0 0.0
    %885 = vmatpush1.msra.mxu0 0.0
    %886 = vmatprep.subr.mxu0 0.0
    %887 = vmatpush1.msra.mxu0 0.0
    %888 = vmatprep.subr.mxu0 %v851
    %889 = vmatpush1.msra.mxu0 %v852
    %890 = vmatprep.subr.mxu0 %v826
    %891 = vmatpush1.msra.mxu0 %v827
    %892 = vmatprep.subr.mxu0 %v800
    %893 = vmatpush1.msra.mxu0 %v799
    %894 = vmatprep.subr.mxu0 0.0
    %895 = vmatpush2.msra.mxu0 0.0
    %896 = vmatprep.subr.mxu0 0.0
    %897 = vmatpush2.msra.mxu0 0.0
    %898 = vmatprep.subr.mxu0 0.0
    %899 = vmatpush2.msra.mxu0 0.0
    %900 = vmatprep.subr.mxu0 0.0
    %901 = vmatpush2.msra.mxu0 0.0
    %902 = vmatprep.subr.mxu0 0.0
    %903 = vmatpush2.msra.mxu0 0.0
    %904 = vmatprep.subr.mxu0 0.0
    %905 = vmatpush2.msra.mxu0 0.0
    %906 = vmatprep.subr.mxu0 0.0
    %907 = vmatpush2.msra.mxu0 0.0
    %908 = vmatprep.subr.mxu0 0.0
    %909 = vmatpush2.msra.mxu0 0.0
    %910 = vmatprep.subr.mxu0 0.0
    %911 = vmatpush2.msra.mxu0 0.0
    %912 = vmatprep.subr.mxu0 0.0
    %913 = vmatpush2.msra.mxu0 0.0
    %914 = vmatprep.subr.mxu0 0.0
    %915 = vmatpush2.msra.mxu0 0.0
    %916 = vmatprep.subr.mxu0 0.0
    %917 = vmatpush2.msra.mxu0 0.0
    %918 = vmatprep.subr.mxu0 0.0
    %919 = vmatpush2.msra.mxu0 0.0
    %920 = vmatprep.subr.mxu0 0.0
    %921 = vmatpush2.msra.mxu0 0.0
    %922 = vmatprep.subr.mxu0 0.0
    %923 = vmatpush2.msra.mxu0 0.0
    %924 = vmatprep.subr.mxu0 0.0
    %925 = vmatpush2.msra.mxu0 0.0
    %926 = vmatprep.mubr.f32.mxu0 0.0
    %927 = vmatmul.mubr.f32.gmra.mxu0 %v860
    %v928 = vpop.f32.mrf.mxu0
    %v929 = vadd.f32 0.0, %v928
    %v930 = vpop.f32.mrf.mxu0
    %v931 = vadd.f32 0.0, %v930
    %932 = vdwg.mxu0
    %933 = vmatprep.subr.mxu0 0.0
    %934 = vmatpush1.msra.mxu0 0.0
    %935 = vmatprep.subr.mxu0 0.0
    %936 = vmatpush1.msra.mxu0 0.0
    %937 = vmatprep.subr.mxu0 0.0
    %938 = vmatpush1.msra.mxu0 0.0
    %939 = vmatprep.subr.mxu0 0.0
    %940 = vmatpush1.msra.mxu0 0.0
    %941 = vmatprep.subr.mxu0 0.0
    %942 = vmatpush1.msra.mxu0 0.0
    %943 = vmatprep.subr.mxu0 0.0
    %944 = vmatpush1.msra.mxu0 0.0
    %945 = vmatprep.subr.mxu0 0.0
    %946 = vmatpush1.msra.mxu0 0.0
    %947 = vmatprep.subr.mxu0 0.0
    %948 = vmatpush1.msra.mxu0 0.0
    %949 = vmatprep.subr.mxu0 0.0
    %950 = vmatpush1.msra.mxu0 0.0
    %951 = vmatprep.subr.mxu0 0.0
    %952 = vmatpush1.msra.mxu0 0.0
    %953 = vmatprep.subr.mxu0 0.0
    %954 = vmatpush1.msra.mxu0 0.0
    %955 = vmatprep.subr.mxu0 0.0
    %956 = vmatpush1.msra.mxu0 0.0
    %957 = vmatprep.subr.mxu0 0.0
    %958 = vmatpush1.msra.mxu0 0.0
    %959 = vmatprep.subr.mxu0 %v849
    %960 = vmatpush1.msra.mxu0 %v850
    %961 = vmatprep.subr.mxu0 %v824
    %962 = vmatpush1.msra.mxu0 %v825
    %963 = vmatprep.subr.mxu0 %v802
    %964 = vmatpush1.msra.mxu0 %v801
    %965 = vmatprep.subr.mxu0 0.0
    %966 = vmatpush2.msra.mxu0 0.0
    %967 = vmatprep.subr.mxu0 0.0
    %968 = vmatpush2.msra.mxu0 0.0
    %969 = vmatprep.subr.mxu0 0.0
    %970 = vmatpush2.msra.mxu0 0.0
    %971 = vmatprep.subr.mxu0 0.0
    %972 = vmatpush2.msra.mxu0 0.0
    %973 = vmatprep.subr.mxu0 0.0
    %974 = vmatpush2.msra.mxu0 0.0
    %975 = vmatprep.subr.mxu0 0.0
    %976 = vmatpush2.msra.mxu0 0.0
    %977 = vmatprep.subr.mxu0 0.0
    %978 = vmatpush2.msra.mxu0 0.0
    %979 = vmatprep.subr.mxu0 0.0
    %980 = vmatpush2.msra.mxu0 0.0
    %981 = vmatprep.subr.mxu0 0.0
    %982 = vmatpush2.msra.mxu0 0.0
    %983 = vmatprep.subr.mxu0 0.0
    %984 = vmatpush2.msra.mxu0 0.0
    %985 = vmatprep.subr.mxu0 0.0
    %986 = vmatpush2.msra.mxu0 0.0
    %987 = vmatprep.subr.mxu0 0.0
    %988 = vmatpush2.msra.mxu0 0.0
    %989 = vmatprep.subr.mxu0 0.0
    %990 = vmatpush2.msra.mxu0 0.0
    %991 = vmatprep.subr.mxu0 0.0
    %992 = vmatpush2.msra.mxu0 0.0
    %993 = vmatprep.subr.mxu0 0.0
    %994 = vmatpush2.msra.mxu0 0.0
    %995 = vmatprep.subr.mxu0 0.0
    %996 = vmatpush2.msra.mxu0 0.0
    %997 = vmatprep.mubr.f32.mxu0 0.0
    %998 = vmatmul.mubr.f32.gmra.mxu0 %v860
    %v999 = vpop.f32.mrf.mxu0
    %v1000 = vadd.f32 0.0, %v999
    %v1001 = vpop.f32.mrf.mxu0
    %v1002 = vadd.f32 0.0, %v1001
    %1003 = vdwg.mxu0
    %1004 = vmatprep.subr.mxu0 0.0
    %1005 = vmatpush1.msra.mxu0 0.0
    %1006 = vmatprep.subr.mxu0 0.0
    %1007 = vmatpush1.msra.mxu0 0.0
    %1008 = vmatprep.subr.mxu0 0.0
    %1009 = vmatpush1.msra.mxu0 0.0
    %1010 = vmatprep.subr.mxu0 0.0
    %1011 = vmatpush1.msra.mxu0 0.0
    %1012 = vmatprep.subr.mxu0 0.0
    %1013 = vmatpush1.msra.mxu0 0.0
    %1014 = vmatprep.subr.mxu0 0.0
    %1015 = vmatpush1.msra.mxu0 0.0
    %1016 = vmatprep.subr.mxu0 0.0
    %1017 = vmatpush1.msra.mxu0 0.0
    %1018 = vmatprep.subr.mxu0 0.0
    %1019 = vmatpush1.msra.mxu0 0.0
    %1020 = vmatprep.subr.mxu0 0.0
    %1021 = vmatpush1.msra.mxu0 0.0
    %1022 = vmatprep.subr.mxu0 0.0
    %1023 = vmatpush1.msra.mxu0 0.0
    %1024 = vmatprep.subr.mxu0 0.0
    %1025 = vmatpush1.msra.mxu0 0.0
    %1026 = vmatprep.subr.mxu0 0.0
    %1027 = vmatpush1.msra.mxu0 0.0
    %1028 = vmatprep.subr.mxu0 0.0
    %1029 = vmatpush1.msra.mxu0 0.0
    %1030 = vmatprep.subr.mxu0 %v847
    %1031 = vmatpush1.msra.mxu0 %v848
    %1032 = vmatprep.subr.mxu0 %v822
    %1033 = vmatpush1.msra.mxu0 %v823
    %1034 = vmatprep.subr.mxu0 %v804
    %1035 = vmatpush1.msra.mxu0 %v803
    %1036 = vmatprep.subr.mxu0 0.0
    %1037 = vmatpush2.msra.mxu0 0.0
    %1038 = vmatprep.subr.mxu0 0.0
    %1039 = vmatpush2.msra.mxu0 0.0
    %1040 = vmatprep.subr.mxu0 0.0
    %1041 = vmatpush2.msra.mxu0 0.0
    %1042 = vmatprep.subr.mxu0 0.0
    %1043 = vmatpush2.msra.mxu0 0.0
    %1044 = vmatprep.subr.mxu0 0.0
    %1045 = vmatpush2.msra.mxu0 0.0
    %1046 = vmatprep.subr.mxu0 0.0
    %1047 = vmatpush2.msra.mxu0 0.0
    %1048 = vmatprep.subr.mxu0 0.0
    %1049 = vmatpush2.msra.mxu0 0.0
    %1050 = vmatprep.subr.mxu0 0.0
    %1051 = vmatpush2.msra.mxu0 0.0
    %1052 = vmatprep.subr.mxu0 0.0
    %1053 = vmatpush2.msra.mxu0 0.0
    %1054 = vmatprep.subr.mxu0 0.0
    %1055 = vmatpush2.msra.mxu0 0.0
    %1056 = vmatprep.subr.mxu0 0.0
    %1057 = vmatpush2.msra.mxu0 0.0
    %1058 = vmatprep.subr.mxu0 0.0
    %1059 = vmatpush2.msra.mxu0 0.0
    %1060 = vmatprep.subr.mxu0 0.0
    %1061 = vmatpush2.msra.mxu0 0.0
    %1062 = vmatprep.subr.mxu0 0.0
    %1063 = vmatpush2.msra.mxu0 0.0
    %1064 = vmatprep.subr.mxu0 0.0
    %1065 = vmatpush2.msra.mxu0 0.0
    %1066 = vmatprep.subr.mxu0 0.0
    %1067 = vmatpush2.msra.mxu0 0.0
    %1068 = vmatprep.mubr.f32.mxu0 0.0
    %1069 = vmatmul.mubr.f32.gmra.mxu0 %v860
    %v1070 = vpop.f32.mrf.mxu0
    %v1071 = vadd.f32 0.0, %v1070
    %v1072 = vpop.f32.mrf.mxu0
    %v1073 = vadd.f32 0.0, %v1072
    %1074 = vdwg.mxu0
    %v1076 = vsel %vm858, %v855, 0
    %1078 = vmatprep.subr.mxu0 0.0
    %1079 = vmatpush1.msra.mxu0 0.0
    %1080 = vmatprep.subr.mxu0 0.0
    %1081 = vmatpush1.msra.mxu0 0.0
    %1082 = vmatprep.subr.mxu0 0.0
    %1083 = vmatpush1.msra.mxu0 0.0
    %1084 = vmatprep.subr.mxu0 0.0
    %1085 = vmatpush1.msra.mxu0 0.0
    %1086 = vmatprep.subr.mxu0 0.0
    %1087 = vmatpush1.msra.mxu0 0.0
    %1088 = vmatprep.subr.mxu0 0.0
    %1089 = vmatpush1.msra.mxu0 0.0
    %1090 = vmatprep.subr.mxu0 0.0
    %1091 = vmatpush1.msra.mxu0 0.0
    %1092 = vmatprep.subr.mxu0 0.0
    %1093 = vmatpush1.msra.mxu0 0.0
    %1094 = vmatprep.subr.mxu0 0.0
    %1095 = vmatpush1.msra.mxu0 0.0
    %1096 = vmatprep.subr.mxu0 0.0
    %1097 = vmatpush1.msra.mxu0 0.0
    %1098 = vmatprep.subr.mxu0 0.0
    %1099 = vmatpush1.msra.mxu0 0.0
    %1100 = vmatprep.subr.mxu0 0.0
    %1101 = vmatpush1.msra.mxu0 0.0
    %1102 = vmatprep.subr.mxu0 0.0
    %1103 = vmatpush1.msra.mxu0 0.0
    %1104 = vmatprep.subr.mxu0 %v852
    %1105 = vmatpush1.msra.mxu0 %v853
    %1106 = vmatprep.subr.mxu0 %v827
    %1107 = vmatpush1.msra.mxu0 %v828
    %1108 = vmatprep.subr.mxu0 %v799
    %1109 = vmatpush1.msra.mxu0 %v798
    %1110 = vmatprep.subr.mxu0 0.0
    %1111 = vmatpush2.msra.mxu0 0.0
    %1112 = vmatprep.subr.mxu0 0.0
    %1113 = vmatpush2.msra.mxu0 0.0
    %1114 = vmatprep.subr.mxu0 0.0
    %1115 = vmatpush2.msra.mxu0 0.0
    %1116 = vmatprep.subr.mxu0 0.0
    %1117 = vmatpush2.msra.mxu0 0.0
    %1118 = vmatprep.subr.mxu0 0.0
    %1119 = vmatpush2.msra.mxu0 0.0
    %1120 = vmatprep.subr.mxu0 0.0
    %1121 = vmatpush2.msra.mxu0 0.0
    %1122 = vmatprep.subr.mxu0 0.0
    %1123 = vmatpush2.msra.mxu0 0.0
    %1124 = vmatprep.subr.mxu0 0.0
    %1125 = vmatpush2.msra.mxu0 0.0
    %1126 = vmatprep.subr.mxu0 0.0
    %1127 = vmatpush2.msra.mxu0 0.0
    %1128 = vmatprep.subr.mxu0 0.0
    %1129 = vmatpush2.msra.mxu0 0.0
    %1130 = vmatprep.subr.mxu0 0.0
    %1131 = vmatpush2.msra.mxu0 0.0
    %1132 = vmatprep.subr.mxu0 0.0
    %1133 = vmatpush2.msra.mxu0 0.0
    %1134 = vmatprep.subr.mxu0 0.0
    %1135 = vmatpush2.msra.mxu0 0.0
    %1136 = vmatprep.subr.mxu0 0.0
    %1137 = vmatpush2.msra.mxu0 0.0
    %1138 = vmatprep.subr.mxu0 0.0
    %1139 = vmatpush2.msra.mxu0 0.0
    %1140 = vmatprep.subr.mxu0 0.0
    %1141 = vmatpush2.msra.mxu0 0.0
    %1142 = vmatprep.mubr.f32.mxu0 0.0
    %1143 = vmatmul.mubr.f32.gmra.mxu0 %v1076
    %v1144 = vpop.f32.mrf.mxu0
    %v1145 = vadd.f32 %v929, %v1144
    %v1146 = vpop.f32.mrf.mxu0
    %v1147 = vadd.f32 %v931, %v1146
    %1148 = vdwg.mxu0
    %1149 = vmatprep.subr.mxu0 0.0
    %1150 = vmatpush1.msra.mxu0 0.0
    %1151 = vmatprep.subr.mxu0 0.0
    %1152 = vmatpush1.msra.mxu0 0.0
    %1153 = vmatprep.subr.mxu0 0.0
    %1154 = vmatpush1.msra.mxu0 0.0
    %1155 = vmatprep.subr.mxu0 0.0
    %1156 = vmatpush1.msra.mxu0 0.0
    %1157 = vmatprep.subr.mxu0 0.0
    %1158 = vmatpush1.msra.mxu0 0.0
    %1159 = vmatprep.subr.mxu0 0.0
    %1160 = vmatpush1.msra.mxu0 0.0
    %1161 = vmatprep.subr.mxu0 0.0
    %1162 = vmatpush1.msra.mxu0 0.0
    %1163 = vmatprep.subr.mxu0 0.0
    %1164 = vmatpush1.msra.mxu0 0.0
    %1165 = vmatprep.subr.mxu0 0.0
    %1166 = vmatpush1.msra.mxu0 0.0
    %1167 = vmatprep.subr.mxu0 0.0
    %1168 = vmatpush1.msra.mxu0 0.0
    %1169 = vmatprep.subr.mxu0 0.0
    %1170 = vmatpush1.msra.mxu0 0.0
    %1171 = vmatprep.subr.mxu0 0.0
    %1172 = vmatpush1.msra.mxu0 0.0
    %1173 = vmatprep.subr.mxu0 0.0
    %1174 = vmatpush1.msra.mxu0 0.0
    %1175 = vmatprep.subr.mxu0 %v850
    %1176 = vmatpush1.msra.mxu0 %v851
    %1177 = vmatprep.subr.mxu0 %v825
    %1178 = vmatpush1.msra.mxu0 %v826
    %1179 = vmatprep.subr.mxu0 %v801
    %1180 = vmatpush1.msra.mxu0 %v800
    %1181 = vmatprep.subr.mxu0 0.0
    %1182 = vmatpush2.msra.mxu0 0.0
    %1183 = vmatprep.subr.mxu0 0.0
    %1184 = vmatpush2.msra.mxu0 0.0
    %1185 = vmatprep.subr.mxu0 0.0
    %1186 = vmatpush2.msra.mxu0 0.0
    %1187 = vmatprep.subr.mxu0 0.0
    %1188 = vmatpush2.msra.mxu0 0.0
    %1189 = vmatprep.subr.mxu0 0.0
    %1190 = vmatpush2.msra.mxu0 0.0
    %1191 = vmatprep.subr.mxu0 0.0
    %1192 = vmatpush2.msra.mxu0 0.0
    %1193 = vmatprep.subr.mxu0 0.0
    %1194 = vmatpush2.msra.mxu0 0.0
    %1195 = vmatprep.subr.mxu0 0.0
    %1196 = vmatpush2.msra.mxu0 0.0
    %1197 = vmatprep.subr.mxu0 0.0
    %1198 = vmatpush2.msra.mxu0 0.0
    %1199 = vmatprep.subr.mxu0 0.0
    %1200 = vmatpush2.msra.mxu0 0.0
    %1201 = vmatprep.subr.mxu0 0.0
    %1202 = vmatpush2.msra.mxu0 0.0
    %1203 = vmatprep.subr.mxu0 0.0
    %1204 = vmatpush2.msra.mxu0 0.0
    %1205 = vmatprep.subr.mxu0 0.0
    %1206 = vmatpush2.msra.mxu0 0.0
    %1207 = vmatprep.subr.mxu0 0.0
    %1208 = vmatpush2.msra.mxu0 0.0
    %1209 = vmatprep.subr.mxu0 0.0
    %1210 = vmatpush2.msra.mxu0 0.0
    %1211 = vmatprep.subr.mxu0 0.0
    %1212 = vmatpush2.msra.mxu0 0.0
    %1213 = vmatprep.mubr.f32.mxu0 0.0
    %1214 = vmatmul.mubr.f32.gmra.mxu0 %v1076
    %v1215 = vpop.f32.mrf.mxu0
    %v1216 = vadd.f32 %v1000, %v1215
    %v1217 = vpop.f32.mrf.mxu0
    %v1218 = vadd.f32 %v1002, %v1217
    %1219 = vdwg.mxu0
    %1220 = vmatprep.subr.mxu0 0.0
    %1221 = vmatpush1.msra.mxu0 0.0
    %1222 = vmatprep.subr.mxu0 0.0
    %1223 = vmatpush1.msra.mxu0 0.0
    %1224 = vmatprep.subr.mxu0 0.0
    %1225 = vmatpush1.msra.mxu0 0.0
    %1226 = vmatprep.subr.mxu0 0.0
    %1227 = vmatpush1.msra.mxu0 0.0
    %1228 = vmatprep.subr.mxu0 0.0
    %1229 = vmatpush1.msra.mxu0 0.0
    %1230 = vmatprep.subr.mxu0 0.0
    %1231 = vmatpush1.msra.mxu0 0.0
    %1232 = vmatprep.subr.mxu0 0.0
    %1233 = vmatpush1.msra.mxu0 0.0
    %1234 = vmatprep.subr.mxu0 0.0
    %1235 = vmatpush1.msra.mxu0 0.0
    %1236 = vmatprep.subr.mxu0 0.0
    %1237 = vmatpush1.msra.mxu0 0.0
    %1238 = vmatprep.subr.mxu0 0.0
    %1239 = vmatpush1.msra.mxu0 0.0
    %1240 = vmatprep.subr.mxu0 0.0
    %1241 = vmatpush1.msra.mxu0 0.0
    %1242 = vmatprep.subr.mxu0 0.0
    %1243 = vmatpush1.msra.mxu0 0.0
    %1244 = vmatprep.subr.mxu0 0.0
    %1245 = vmatpush1.msra.mxu0 0.0
    %1246 = vmatprep.subr.mxu0 %v848
    %1247 = vmatpush1.msra.mxu0 %v849
    %1248 = vmatprep.subr.mxu0 %v823
    %1249 = vmatpush1.msra.mxu0 %v824
    %1250 = vmatprep.subr.mxu0 %v803
    %1251 = vmatpush1.msra.mxu0 %v802
    %1252 = vmatprep.subr.mxu0 0.0
    %1253 = vmatpush2.msra.mxu0 0.0
    %1254 = vmatprep.subr.mxu0 0.0
    %1255 = vmatpush2.msra.mxu0 0.0
    %1256 = vmatprep.subr.mxu0 0.0
    %1257 = vmatpush2.msra.mxu0 0.0
    %1258 = vmatprep.subr.mxu0 0.0
    %1259 = vmatpush2.msra.mxu0 0.0
    %1260 = vmatprep.subr.mxu0 0.0
    %1261 = vmatpush2.msra.mxu0 0.0
    %1262 = vmatprep.subr.mxu0 0.0
    %1263 = vmatpush2.msra.mxu0 0.0
    %1264 = vmatprep.subr.mxu0 0.0
    %1265 = vmatpush2.msra.mxu0 0.0
    %1266 = vmatprep.subr.mxu0 0.0
    %1267 = vmatpush2.msra.mxu0 0.0
    %1268 = vmatprep.subr.mxu0 0.0
    %1269 = vmatpush2.msra.mxu0 0.0
    %1270 = vmatprep.subr.mxu0 0.0
    %1271 = vmatpush2.msra.mxu0 0.0
    %1272 = vmatprep.subr.mxu0 0.0
    %1273 = vmatpush2.msra.mxu0 0.0
    %1274 = vmatprep.subr.mxu0 0.0
    %1275 = vmatpush2.msra.mxu0 0.0
    %1276 = vmatprep.subr.mxu0 0.0
    %1277 = vmatpush2.msra.mxu0 0.0
    %1278 = vmatprep.subr.mxu0 0.0
    %1279 = vmatpush2.msra.mxu0 0.0
    %1280 = vmatprep.subr.mxu0 0.0
    %1281 = vmatpush2.msra.mxu0 0.0
    %1282 = vmatprep.subr.mxu0 0.0
    %1283 = vmatpush2.msra.mxu0 0.0
    %1284 = vmatprep.mubr.f32.mxu0 0.0
    %1285 = vmatmul.mubr.f32.gmra.mxu0 %v1076
    %v1286 = vpop.f32.mrf.mxu0
    %v1287 = vadd.f32 %v1071, %v1286
    %v1288 = vpop.f32.mrf.mxu0
    %v1289 = vadd.f32 %v1073, %v1288
    %1290 = vdwg.mxu0
    %s1291 = scalar_lea.vmem [#allocation5], 16
    %v1292 = vld [vmem:[%s1291] sm:$0xff]
    %v1294 = vsel %vm858, %v1292, 0
    %1296 = vmatprep.subr.mxu0 0.0
    %1297 = vmatpush1.msra.mxu0 0.0
    %1298 = vmatprep.subr.mxu0 0.0
    %1299 = vmatpush1.msra.mxu0 0.0
    %1300 = vmatprep.subr.mxu0 0.0
    %1301 = vmatpush1.msra.mxu0 0.0
    %1302 = vmatprep.subr.mxu0 0.0
    %1303 = vmatpush1.msra.mxu0 0.0
    %1304 = vmatprep.subr.mxu0 0.0
    %1305 = vmatpush1.msra.mxu0 0.0
    %1306 = vmatprep.subr.mxu0 0.0
    %1307 = vmatpush1.msra.mxu0 0.0
    %1308 = vmatprep.subr.mxu0 0.0
    %1309 = vmatpush1.msra.mxu0 0.0
    %1310 = vmatprep.subr.mxu0 0.0
    %1311 = vmatpush1.msra.mxu0 0.0
    %1312 = vmatprep.subr.mxu0 0.0
    %1313 = vmatpush1.msra.mxu0 0.0
    %1314 = vmatprep.subr.mxu0 0.0
    %1315 = vmatpush1.msra.mxu0 0.0
    %1316 = vmatprep.subr.mxu0 0.0
    %1317 = vmatpush1.msra.mxu0 0.0
    %1318 = vmatprep.subr.mxu0 0.0
    %1319 = vmatpush1.msra.mxu0 0.0
    %1320 = vmatprep.subr.mxu0 0.0
    %1321 = vmatpush1.msra.mxu0 0.0
    %1322 = vmatprep.subr.mxu0 %v850
    %1323 = vmatpush1.msra.mxu0 %v851
    %1324 = vmatprep.subr.mxu0 %v825
    %1325 = vmatpush1.msra.mxu0 %v826
    %1326 = vmatprep.subr.mxu0 %v801
    %1327 = vmatpush1.msra.mxu0 %v800
    %1328 = vmatprep.subr.mxu0 0.0
    %1329 = vmatpush2.msra.mxu0 0.0
    %1330 = vmatprep.subr.mxu0 0.0
    %1331 = vmatpush2.msra.mxu0 0.0
    %1332 = vmatprep.subr.mxu0 0.0
    %1333 = vmatpush2.msra.mxu0 0.0
    %1334 = vmatprep.subr.mxu0 0.0
    %1335 = vmatpush2.msra.mxu0 0.0
    %1336 = vmatprep.subr.mxu0 0.0
    %1337 = vmatpush2.msra.mxu0 0.0
    %1338 = vmatprep.subr.mxu0 0.0
    %1339 = vmatpush2.msra.mxu0 0.0
    %1340 = vmatprep.subr.mxu0 0.0
    %1341 = vmatpush2.msra.mxu0 0.0
    %1342 = vmatprep.subr.mxu0 0.0
    %1343 = vmatpush2.msra.mxu0 0.0
    %1344 = vmatprep.subr.mxu0 0.0
    %1345 = vmatpush2.msra.mxu0 0.0
    %1346 = vmatprep.subr.mxu0 0.0
    %1347 = vmatpush2.msra.mxu0 0.0
    %1348 = vmatprep.subr.mxu0 0.0
    %1349 = vmatpush2.msra.mxu0 0.0
    %1350 = vmatprep.subr.mxu0 0.0
    %1351 = vmatpush2.msra.mxu0 0.0
    %1352 = vmatprep.subr.mxu0 0.0
    %1353 = vmatpush2.msra.mxu0 0.0
    %1354 = vmatprep.subr.mxu0 0.0
    %1355 = vmatpush2.msra.mxu0 0.0
    %1356 = vmatprep.subr.mxu0 0.0
    %1357 = vmatpush2.msra.mxu0 0.0
    %1358 = vmatprep.subr.mxu0 0.0
    %1359 = vmatpush2.msra.mxu0 0.0
    %1360 = vmatprep.mubr.f32.mxu0 0.0
    %1361 = vmatmul.mubr.f32.gmra.mxu0 %v1294
    %v1362 = vpop.f32.mrf.mxu0
    %v1363 = vadd.f32 0.0, %v1362
    %v1364 = vpop.f32.mrf.mxu0
    %v1365 = vadd.f32 0.0, %v1364
    %1366 = vdwg.mxu0
    %1367 = vmatprep.subr.mxu0 0.0
    %1368 = vmatpush1.msra.mxu0 0.0
    %1369 = vmatprep.subr.mxu0 0.0
    %1370 = vmatpush1.msra.mxu0 0.0
    %1371 = vmatprep.subr.mxu0 0.0
    %1372 = vmatpush1.msra.mxu0 0.0
    %1373 = vmatprep.subr.mxu0 0.0
    %1374 = vmatpush1.msra.mxu0 0.0
    %1375 = vmatprep.subr.mxu0 0.0
    %1376 = vmatpush1.msra.mxu0 0.0
    %1377 = vmatprep.subr.mxu0 0.0
    %1378 = vmatpush1.msra.mxu0 0.0
    %1379 = vmatprep.subr.mxu0 0.0
    %1380 = vmatpush1.msra.mxu0 0.0
    %1381 = vmatprep.subr.mxu0 0.0
    %1382 = vmatpush1.msra.mxu0 0.0
    %1383 = vmatprep.subr.mxu0 0.0
    %1384 = vmatpush1.msra.mxu0 0.0
    %1385 = vmatprep.subr.mxu0 0.0
    %1386 = vmatpush1.msra.mxu0 0.0
    %1387 = vmatprep.subr.mxu0 0.0
    %1388 = vmatpush1.msra.mxu0 0.0
    %1389 = vmatprep.subr.mxu0 0.0
    %1390 = vmatpush1.msra.mxu0 0.0
    %1391 = vmatprep.subr.mxu0 0.0
    %1392 = vmatpush1.msra.mxu0 0.0
    %1393 = vmatprep.subr.mxu0 %v848
    %1394 = vmatpush1.msra.mxu0 %v849
    %1395 = vmatprep.subr.mxu0 %v823
    %1396 = vmatpush1.msra.mxu0 %v824
    %1397 = vmatprep.subr.mxu0 %v803
    %1398 = vmatpush1.msra.mxu0 %v802
    %1399 = vmatprep.subr.mxu0 0.0
    %1400 = vmatpush2.msra.mxu0 0.0
    %1401 = vmatprep.subr.mxu0 0.0
    %1402 = vmatpush2.msra.mxu0 0.0
    %1403 = vmatprep.subr.mxu0 0.0
    %1404 = vmatpush2.msra.mxu0 0.0
    %1405 = vmatprep.subr.mxu0 0.0
    %1406 = vmatpush2.msra.mxu0 0.0
    %1407 = vmatprep.subr.mxu0 0.0
    %1408 = vmatpush2.msra.mxu0 0.0
    %1409 = vmatprep.subr.mxu0 0.0
    %1410 = vmatpush2.msra.mxu0 0.0
    %1411 = vmatprep.subr.mxu0 0.0
    %1412 = vmatpush2.msra.mxu0 0.0
    %1413 = vmatprep.subr.mxu0 0.0
    %1414 = vmatpush2.msra.mxu0 0.0
    %1415 = vmatprep.subr.mxu0 0.0
    %1416 = vmatpush2.msra.mxu0 0.0
    %1417 = vmatprep.subr.mxu0 0.0
    %1418 = vmatpush2.msra.mxu0 0.0
    %1419 = vmatprep.subr.mxu0 0.0
    %1420 = vmatpush2.msra.mxu0 0.0
    %1421 = vmatprep.subr.mxu0 0.0
    %1422 = vmatpush2.msra.mxu0 0.0
    %1423 = vmatprep.subr.mxu0 0.0
    %1424 = vmatpush2.msra.mxu0 0.0
    %1425 = vmatprep.subr.mxu0 0.0
    %1426 = vmatpush2.msra.mxu0 0.0
    %1427 = vmatprep.subr.mxu0 0.0
    %1428 = vmatpush2.msra.mxu0 0.0
    %1429 = vmatprep.subr.mxu0 0.0
    %1430 = vmatpush2.msra.mxu0 0.0
    %1431 = vmatprep.mubr.f32.mxu0 0.0
    %1432 = vmatmul.mubr.f32.gmra.mxu0 %v1294
    %v1433 = vpop.f32.mrf.mxu0
    %v1434 = vadd.f32 0.0, %v1433
    %v1435 = vpop.f32.mrf.mxu0
    %v1436 = vadd.f32 0.0, %v1435
    %1437 = vdwg.mxu0
    %1438 = vmatprep.subr.mxu0 0.0
    %1439 = vmatpush1.msra.mxu0 0.0
    %1440 = vmatprep.subr.mxu0 0.0
    %1441 = vmatpush1.msra.mxu0 0.0
    %1442 = vmatprep.subr.mxu0 0.0
    %1443 = vmatpush1.msra.mxu0 0.0
    %1444 = vmatprep.subr.mxu0 0.0
    %1445 = vmatpush1.msra.mxu0 0.0
    %1446 = vmatprep.subr.mxu0 0.0
    %1447 = vmatpush1.msra.mxu0 0.0
    %1448 = vmatprep.subr.mxu0 0.0
    %1449 = vmatpush1.msra.mxu0 0.0
    %1450 = vmatprep.subr.mxu0 0.0
    %1451 = vmatpush1.msra.mxu0 0.0
    %1452 = vmatprep.subr.mxu0 0.0
    %1453 = vmatpush1.msra.mxu0 0.0
    %1454 = vmatprep.subr.mxu0 0.0
    %1455 = vmatpush1.msra.mxu0 0.0
    %1456 = vmatprep.subr.mxu0 0.0
    %1457 = vmatpush1.msra.mxu0 0.0
    %1458 = vmatprep.subr.mxu0 0.0
    %1459 = vmatpush1.msra.mxu0 0.0
    %1460 = vmatprep.subr.mxu0 0.0
    %1461 = vmatpush1.msra.mxu0 0.0
    %1462 = vmatprep.subr.mxu0 0.0
    %1463 = vmatpush1.msra.mxu0 0.0
    %1464 = vmatprep.subr.mxu0 %v854
    %1465 = vmatpush1.msra.mxu0 %v847
    %1466 = vmatprep.subr.mxu0 %v829
    %1467 = vmatpush1.msra.mxu0 %v822
    %1468 = vmatprep.subr.mxu0 %v805
    %1469 = vmatpush1.msra.mxu0 %v804
    %1470 = vmatprep.subr.mxu0 0.0
    %1471 = vmatpush2.msra.mxu0 0.0
    %1472 = vmatprep.subr.mxu0 0.0
    %1473 = vmatpush2.msra.mxu0 0.0
    %1474 = vmatprep.subr.mxu0 0.0
    %1475 = vmatpush2.msra.mxu0 0.0
    %1476 = vmatprep.subr.mxu0 0.0
    %1477 = vmatpush2.msra.mxu0 0.0
    %1478 = vmatprep.subr.mxu0 0.0
    %1479 = vmatpush2.msra.mxu0 0.0
    %1480 = vmatprep.subr.mxu0 0.0
    %1481 = vmatpush2.msra.mxu0 0.0
    %1482 = vmatprep.subr.mxu0 0.0
    %1483 = vmatpush2.msra.mxu0 0.0
    %1484 = vmatprep.subr.mxu0 0.0
    %1485 = vmatpush2.msra.mxu0 0.0
    %1486 = vmatprep.subr.mxu0 0.0
    %1487 = vmatpush2.msra.mxu0 0.0
    %1488 = vmatprep.subr.mxu0 0.0
    %1489 = vmatpush2.msra.mxu0 0.0
    %1490 = vmatprep.subr.mxu0 0.0
    %1491 = vmatpush2.msra.mxu0 0.0
    %1492 = vmatprep.subr.mxu0 0.0
    %1493 = vmatpush2.msra.mxu0 0.0
    %1494 = vmatprep.subr.mxu0 0.0
    %1495 = vmatpush2.msra.mxu0 0.0
    %1496 = vmatprep.subr.mxu0 0.0
    %1497 = vmatpush2.msra.mxu0 0.0
    %1498 = vmatprep.subr.mxu0 0.0
    %1499 = vmatpush2.msra.mxu0 0.0
    %1500 = vmatprep.subr.mxu0 0.0
    %1501 = vmatpush2.msra.mxu0 0.0
    %1502 = vmatprep.mubr.f32.mxu0 0.0
    %1503 = vmatmul.mubr.f32.gmra.mxu0 %v1294
    %v1504 = vpop.f32.mrf.mxu0
    %v1505 = vadd.f32 0.0, %v1504
    %v1506 = vpop.f32.mrf.mxu0
    %v1507 = vadd.f32 0.0, %v1506
    %1508 = vdwg.mxu0
    %v1509 = vadd.f32 %v1145, %v1363
    %v1510 = vadd.f32 %v1147, %v1365
    %v1511 = vadd.f32 %v1216, %v1434
    %v1512 = vadd.f32 %v1218, %v1436
    %v1513 = vadd.f32 %v1287, %v1505
    %v1514 = vadd.f32 %v1289, %v1507
    %s1515 = scalar_lea.vmem %s4, 16
    %v1516 = vld [vmem:[%s1515] sm:$0xff]
    %1518 = vset.pattern.permute.xlu0 0
    %1519 = vperm.xlu0 %1518, %v1516
    %v1520 = vpop.permute.xlu0 %1519
    %v1522 = vadd.f32 %v1509, %v1520
    %v1523 = vadd.f32 %v1510, %v1520
    %v1524 = vadd.f32 %v1511, %v1520
    %v1525 = vadd.f32 %v1512, %v1520
    %v1526 = vadd.f32 %v1513, %v1520
    %v1527 = vadd.f32 %v1514, %v1520
    %v1528 = vsel %vm74, 1, 0
    %v1529 = vsel %vm75, 1, 0
    %v1530 = vsel %vm76, 1, 0
    %v1531 = vsel %vm77, 1, 0
    %v1532 = vsel %vm78, 1, 0
    %v1533 = vsel %vm79, 1, 0
    %vm1534 = vcmp.eq.s32.totalorder %v1528, 1
    %vm1535 = vcmp.eq.s32.totalorder %v1529, 1
    %vm1536 = vcmp.eq.s32.totalorder %v1530, 1
    %vm1537 = vcmp.eq.s32.totalorder %v1531, 1
    %vm1538 = vcmp.eq.s32.totalorder %v1532, 1
    %vm1539 = vcmp.eq.s32.totalorder %v1533, 1
    %v1540 = vsel %vm1534, %v1522, 0.0
    %v1541 = vsel %vm1535, %v1523, 0.0
    %v1542 = vsel %vm1536, %v1524, 0.0
    %v1543 = vsel %vm1537, %v1525, 0.0
    %v1544 = vsel %vm1538, %v1526, 0.0
    %v1545 = vsel %vm1539, %v1527, 0.0
    %v1546 = vadd.f32 %v1540, %v1541
    %v1547 = vadd.f32 %v1546, %v1542
    %v1548 = vadd.f32 %v1547, %v1543
    %v1549 = vadd.f32 %v1548, %v1544
    %v1550 = vadd.f32 %v1549, %v1545
    %1551 = vadd.xlane.f32.xlu0 %v1550
    %v1552 = vpop.xlane.xlu0 %1551
    %v1553 = vmul.f32 %v1540, %v1522
    %v1554 = vmul.f32 %v1541, %v1523
    %v1555 = vmul.f32 %v1542, %v1524
    %v1556 = vmul.f32 %v1543, %v1525
    %v1557 = vmul.f32 %v1544, %v1526
    %v1558 = vmul.f32 %v1545, %v1527
    %v1559 = vadd.f32 %v1553, %v1554
    %v1560 = vadd.f32 %v1559, %v1555
    %v1561 = vadd.f32 %v1560, %v1556
    %v1562 = vadd.f32 %v1561, %v1557
    %v1563 = vadd.f32 %v1562, %v1558
    %1564 = vadd.xlane.f32.xlu0 %v1563
    %v1565 = vpop.xlane.xlu0 %1564
    %v1566 = vmul.f32 %v1552, 0.027777778
    %v1567 = vmul.f32 %v1565, 0.027777778
    %v1568 = vmul.f32 %v1566, %v1566
    %v1569 = vsub.f32 %v1567, %v1568
    %v1570 = vmax.f32 %v1569, 0.0
    %v1571 = vsub.f32 %v1522, %v1566
    %v1572 = vsub.f32 %v1523, %v1566
    %v1573 = vsub.f32 %v1524, %v1566
    %v1574 = vsub.f32 %v1525, %v1566
    %v1575 = vsub.f32 %v1526, %v1566
    %v1576 = vsub.f32 %v1527, %v1566
    %v1577 = vadd.f32 %v1570, 1e-05
    %v1578 = vrsqrt.pop %v1577
    %v1579 = vmul.f32 %v1571, %v1578
    %v1580 = vmul.f32 %v1572, %v1578
    %v1581 = vmul.f32 %v1573, %v1578
    %v1582 = vmul.f32 %v1574, %v1578
    %v1583 = vmul.f32 %v1575, %v1578
    %v1584 = vmul.f32 %v1576, %v1578
    %v1585 = vmax.f32 %v1579, 0.0
    %v1586 = vmax.f32 %v1580, 0.0
    %v1587 = vmax.f32 %v1581, 0.0
    %v1588 = vmax.f32 %v1582, 0.0
    %v1589 = vmax.f32 %v1583, 0.0
    %v1590 = vmax.f32 %v1584, 0.0
    %s1591 = scalar_lea.vmem [#allocation2], 8
    %v1592 = vld [vmem:[%s1591] sm:$0xff]
    %s1593 = scalar_lea.vmem %s4, 24
    %v1594 = vld [vmem:[%s1593] sm:$0xff]
    %1596 = vset.pattern.permute.xlu0 0
    %1597 = vperm.xlu0 %1596, %v1594
    %v1598 = vpop.permute.xlu0 %1597
    %v1601 = vsel %vm437, %v1592, 0
    %1603 = vmatprep.subr.mxu0 0.0
    %1604 = vmatpush1.msra.mxu0 0.0
    %1605 = vmatprep.subr.mxu0 0.0
    %1606 = vmatpush1.msra.mxu0 0.0
    %1607 = vmatprep.subr.mxu0 0.0
    %1608 = vmatpush1.msra.mxu0 0.0
    %1609 = vmatprep.subr.mxu0 0.0
    %1610 = vmatpush1.msra.mxu0 0.0
    %1611 = vmatprep.subr.mxu0 0.0
    %1612 = vmatpush1.msra.mxu0 0.0
    %1613 = vmatprep.subr.mxu0 0.0
    %1614 = vmatpush1.msra.mxu0 0.0
    %1615 = vmatprep.subr.mxu0 0.0
    %1616 = vmatpush1.msra.mxu0 0.0
    %1617 = vmatprep.subr.mxu0 0.0
    %1618 = vmatpush1.msra.mxu0 0.0
    %1619 = vmatprep.subr.mxu0 0.0
    %1620 = vmatpush1.msra.mxu0 0.0
    %1621 = vmatprep.subr.mxu0 0.0
    %1622 = vmatpush1.msra.mxu0 0.0
    %1623 = vmatprep.subr.mxu0 0.0
    %1624 = vmatpush1.msra.mxu0 0.0
    %1625 = vmatprep.subr.mxu0 0.0
    %1626 = vmatpush1.msra.mxu0 0.0
    %1627 = vmatprep.subr.mxu0 0.0
    %1628 = vmatpush1.msra.mxu0 0.0
    %1629 = vmatprep.subr.mxu0 0.0
    %1630 = vmatpush1.msra.mxu0 0.0
    %1631 = vmatprep.subr.mxu0 0.0
    %1632 = vmatpush1.msra.mxu0 0.0
    %1633 = vmatprep.subr.mxu0 %v1586
    %1634 = vmatpush1.msra.mxu0 %v1585
    %1635 = vmatprep.subr.mxu0 0.0
    %1636 = vmatpush2.msra.mxu0 0.0
    %1637 = vmatprep.subr.mxu0 0.0
    %1638 = vmatpush2.msra.mxu0 0.0
    %1639 = vmatprep.subr.mxu0 0.0
    %1640 = vmatpush2.msra.mxu0 0.0
    %1641 = vmatprep.subr.mxu0 0.0
    %1642 = vmatpush2.msra.mxu0 0.0
    %1643 = vmatprep.subr.mxu0 0.0
    %1644 = vmatpush2.msra.mxu0 0.0
    %1645 = vmatprep.subr.mxu0 0.0
    %1646 = vmatpush2.msra.mxu0 0.0
    %1647 = vmatprep.subr.mxu0 0.0
    %1648 = vmatpush2.msra.mxu0 0.0
    %1649 = vmatprep.subr.mxu0 0.0
    %1650 = vmatpush2.msra.mxu0 0.0
    %1651 = vmatprep.subr.mxu0 0.0
    %1652 = vmatpush2.msra.mxu0 0.0
    %1653 = vmatprep.subr.mxu0 0.0
    %1654 = vmatpush2.msra.mxu0 0.0
    %1655 = vmatprep.subr.mxu0 0.0
    %1656 = vmatpush2.msra.mxu0 0.0
    %1657 = vmatprep.subr.mxu0 0.0
    %1658 = vmatpush2.msra.mxu0 0.0
    %1659 = vmatprep.subr.mxu0 0.0
    %1660 = vmatpush2.msra.mxu0 0.0
    %1661 = vmatprep.subr.mxu0 0.0
    %1662 = vmatpush2.msra.mxu0 0.0
    %1663 = vmatprep.subr.mxu0 0.0
    %1664 = vmatpush2.msra.mxu0 0.0
    %1665 = vmatprep.subr.mxu0 0.0
    %1666 = vmatpush2.msra.mxu0 0.0
    %1667 = vmatprep.mubr.f32.mxu0 0.0
    %1668 = vmatmul.mubr.f32.gmra.mxu0 %v1601
    %v1669 = vpop.f32.mrf.mxu0
    %v1670 = vadd.f32 %v1598, %v1669
    %v1671 = vpop.f32.mrf.mxu0
    %v1672 = vadd.f32 %v1598, %v1671
    %1673 = vdwg.mxu0
    %1674 = vmatprep.subr.mxu0 0.0
    %1675 = vmatpush1.msra.mxu0 0.0
    %1676 = vmatprep.subr.mxu0 0.0
    %1677 = vmatpush1.msra.mxu0 0.0
    %1678 = vmatprep.subr.mxu0 0.0
    %1679 = vmatpush1.msra.mxu0 0.0
    %1680 = vmatprep.subr.mxu0 0.0
    %1681 = vmatpush1.msra.mxu0 0.0
    %1682 = vmatprep.subr.mxu0 0.0
    %1683 = vmatpush1.msra.mxu0 0.0
    %1684 = vmatprep.subr.mxu0 0.0
    %1685 = vmatpush1.msra.mxu0 0.0
    %1686 = vmatprep.subr.mxu0 0.0
    %1687 = vmatpush1.msra.mxu0 0.0
    %1688 = vmatprep.subr.mxu0 0.0
    %1689 = vmatpush1.msra.mxu0 0.0
    %1690 = vmatprep.subr.mxu0 0.0
    %1691 = vmatpush1.msra.mxu0 0.0
    %1692 = vmatprep.subr.mxu0 0.0
    %1693 = vmatpush1.msra.mxu0 0.0
    %1694 = vmatprep.subr.mxu0 0.0
    %1695 = vmatpush1.msra.mxu0 0.0
    %1696 = vmatprep.subr.mxu0 0.0
    %1697 = vmatpush1.msra.mxu0 0.0
    %1698 = vmatprep.subr.mxu0 0.0
    %1699 = vmatpush1.msra.mxu0 0.0
    %1700 = vmatprep.subr.mxu0 0.0
    %1701 = vmatpush1.msra.mxu0 0.0
    %1702 = vmatprep.subr.mxu0 0.0
    %1703 = vmatpush1.msra.mxu0 0.0
    %1704 = vmatprep.subr.mxu0 %v1588
    %1705 = vmatpush1.msra.mxu0 %v1587
    %1706 = vmatprep.subr.mxu0 0.0
    %1707 = vmatpush2.msra.mxu0 0.0
    %1708 = vmatprep.subr.mxu0 0.0
    %1709 = vmatpush2.msra.mxu0 0.0
    %1710 = vmatprep.subr.mxu0 0.0
    %1711 = vmatpush2.msra.mxu0 0.0
    %1712 = vmatprep.subr.mxu0 0.0
    %1713 = vmatpush2.msra.mxu0 0.0
    %1714 = vmatprep.subr.mxu0 0.0
    %1715 = vmatpush2.msra.mxu0 0.0
    %1716 = vmatprep.subr.mxu0 0.0
    %1717 = vmatpush2.msra.mxu0 0.0
    %1718 = vmatprep.subr.mxu0 0.0
    %1719 = vmatpush2.msra.mxu0 0.0
    %1720 = vmatprep.subr.mxu0 0.0
    %1721 = vmatpush2.msra.mxu0 0.0
    %1722 = vmatprep.subr.mxu0 0.0
    %1723 = vmatpush2.msra.mxu0 0.0
    %1724 = vmatprep.subr.mxu0 0.0
    %1725 = vmatpush2.msra.mxu0 0.0
    %1726 = vmatprep.subr.mxu0 0.0
    %1727 = vmatpush2.msra.mxu0 0.0
    %1728 = vmatprep.subr.mxu0 0.0
    %1729 = vmatpush2.msra.mxu0 0.0
    %1730 = vmatprep.subr.mxu0 0.0
    %1731 = vmatpush2.msra.mxu0 0.0
    %1732 = vmatprep.subr.mxu0 0.0
    %1733 = vmatpush2.msra.mxu0 0.0
    %1734 = vmatprep.subr.mxu0 0.0
    %1735 = vmatpush2.msra.mxu0 0.0
    %1736 = vmatprep.subr.mxu0 0.0
    %1737 = vmatpush2.msra.mxu0 0.0
    %1738 = vmatprep.mubr.f32.mxu0 0.0
    %1739 = vmatmul.mubr.f32.gmra.mxu0 %v1601
    %v1740 = vpop.f32.mrf.mxu0
    %v1741 = vadd.f32 %v1598, %v1740
    %v1742 = vpop.f32.mrf.mxu0
    %v1743 = vadd.f32 %v1598, %v1742
    %1744 = vdwg.mxu0
    %1745 = vmatprep.subr.mxu0 0.0
    %1746 = vmatpush1.msra.mxu0 0.0
    %1747 = vmatprep.subr.mxu0 0.0
    %1748 = vmatpush1.msra.mxu0 0.0
    %1749 = vmatprep.subr.mxu0 0.0
    %1750 = vmatpush1.msra.mxu0 0.0
    %1751 = vmatprep.subr.mxu0 0.0
    %1752 = vmatpush1.msra.mxu0 0.0
    %1753 = vmatprep.subr.mxu0 0.0
    %1754 = vmatpush1.msra.mxu0 0.0
    %1755 = vmatprep.subr.mxu0 0.0
    %1756 = vmatpush1.msra.mxu0 0.0
    %1757 = vmatprep.subr.mxu0 0.0
    %1758 = vmatpush1.msra.mxu0 0.0
    %1759 = vmatprep.subr.mxu0 0.0
    %1760 = vmatpush1.msra.mxu0 0.0
    %1761 = vmatprep.subr.mxu0 0.0
    %1762 = vmatpush1.msra.mxu0 0.0
    %1763 = vmatprep.subr.mxu0 0.0
    %1764 = vmatpush1.msra.mxu0 0.0
    %1765 = vmatprep.subr.mxu0 0.0
    %1766 = vmatpush1.msra.mxu0 0.0
    %1767 = vmatprep.subr.mxu0 0.0
    %1768 = vmatpush1.msra.mxu0 0.0
    %1769 = vmatprep.subr.mxu0 0.0
    %1770 = vmatpush1.msra.mxu0 0.0
    %1771 = vmatprep.subr.mxu0 0.0
    %1772 = vmatpush1.msra.mxu0 0.0
    %1773 = vmatprep.subr.mxu0 0.0
    %1774 = vmatpush1.msra.mxu0 0.0
    %1775 = vmatprep.subr.mxu0 %v1590
    %1776 = vmatpush1.msra.mxu0 %v1589
    %1777 = vmatprep.subr.mxu0 0.0
    %1778 = vmatpush2.msra.mxu0 0.0
    %1779 = vmatprep.subr.mxu0 0.0
    %1780 = vmatpush2.msra.mxu0 0.0
    %1781 = vmatprep.subr.mxu0 0.0
    %1782 = vmatpush2.msra.mxu0 0.0
    %1783 = vmatprep.subr.mxu0 0.0
    %1784 = vmatpush2.msra.mxu0 0.0
    %1785 = vmatprep.subr.mxu0 0.0
    %1786 = vmatpush2.msra.mxu0 0.0
    %1787 = vmatprep.subr.mxu0 0.0
    %1788 = vmatpush2.msra.mxu0 0.0
    %1789 = vmatprep.subr.mxu0 0.0
    %1790 = vmatpush2.msra.mxu0 0.0
    %1791 = vmatprep.subr.mxu0 0.0
    %1792 = vmatpush2.msra.mxu0 0.0
    %1793 = vmatprep.subr.mxu0 0.0
    %1794 = vmatpush2.msra.mxu0 0.0
    %1795 = vmatprep.subr.mxu0 0.0
    %1796 = vmatpush2.msra.mxu0 0.0
    %1797 = vmatprep.subr.mxu0 0.0
    %1798 = vmatpush2.msra.mxu0 0.0
    %1799 = vmatprep.subr.mxu0 0.0
    %1800 = vmatpush2.msra.mxu0 0.0
    %1801 = vmatprep.subr.mxu0 0.0
    %1802 = vmatpush2.msra.mxu0 0.0
    %1803 = vmatprep.subr.mxu0 0.0
    %1804 = vmatpush2.msra.mxu0 0.0
    %1805 = vmatprep.subr.mxu0 0.0
    %1806 = vmatpush2.msra.mxu0 0.0
    %1807 = vmatprep.subr.mxu0 0.0
    %1808 = vmatpush2.msra.mxu0 0.0
    %1809 = vmatprep.mubr.f32.mxu0 0.0
    %1810 = vmatmul.mubr.f32.gmra.mxu0 %v1601
    %v1811 = vpop.f32.mrf.mxu0
    %v1812 = vadd.f32 %v1598, %v1811
    %v1813 = vpop.f32.mrf.mxu0
    %v1814 = vadd.f32 %v1598, %v1813
    %1815 = vdwg.mxu0
    %v1816 = vsel %vm1534, %v1670, 0.0
    %v1817 = vsel %vm1535, %v1672, 0.0
    %v1818 = vsel %vm1536, %v1741, 0.0
    %v1819 = vsel %vm1537, %v1743, 0.0
    %v1820 = vsel %vm1538, %v1812, 0.0
    %v1821 = vsel %vm1539, %v1814, 0.0
    %v1822 = vadd.f32 %v1816, %v1817
    %v1823 = vadd.f32 %v1822, %v1818
    %v1824 = vadd.f32 %v1823, %v1819
    %v1825 = vadd.f32 %v1824, %v1820
    %v1826 = vadd.f32 %v1825, %v1821
    %1827 = vadd.xlane.f32.xlu0 %v1826
    %v1828 = vpop.xlane.xlu0 %1827
    %v1829 = vmul.f32 %v1816, %v1670
    %v1830 = vmul.f32 %v1817, %v1672
    %v1831 = vmul.f32 %v1818, %v1741
    %v1832 = vmul.f32 %v1819, %v1743
    %v1833 = vmul.f32 %v1820, %v1812
    %v1834 = vmul.f32 %v1821, %v1814
    %v1835 = vadd.f32 %v1829, %v1830
    %v1836 = vadd.f32 %v1835, %v1831
    %v1837 = vadd.f32 %v1836, %v1832
    %v1838 = vadd.f32 %v1837, %v1833
    %v1839 = vadd.f32 %v1838, %v1834
    %1840 = vadd.xlane.f32.xlu0 %v1839
    %v1841 = vpop.xlane.xlu0 %1840
    %v1842 = vmul.f32 %v1828, 0.027777778
    %v1843 = vmul.f32 %v1841, 0.027777778
    %v1844 = vmul.f32 %v1842, %v1842
    %v1845 = vsub.f32 %v1843, %v1844
    %v1846 = vmax.f32 %v1845, 0.0
    %v1847 = vsub.f32 %v1670, %v1842
    %v1848 = vsub.f32 %v1672, %v1842
    %v1849 = vsub.f32 %v1741, %v1842
    %v1850 = vsub.f32 %v1743, %v1842
    %v1851 = vsub.f32 %v1812, %v1842
    %v1852 = vsub.f32 %v1814, %v1842
    %v1853 = vadd.f32 %v1846, 1e-05
    %v1854 = vrsqrt.pop %v1853
    %v1855 = vmul.f32 %v1847, %v1854
    %v1856 = vmul.f32 %v1848, %v1854
    %v1857 = vmul.f32 %v1849, %v1854
    %v1858 = vmul.f32 %v1850, %v1854
    %v1859 = vmul.f32 %v1851, %v1854
    %v1860 = vmul.f32 %v1852, %v1854
    %v1861 = vadd.f32 %v428, %v1855
    %v1862 = vadd.f32 %v427, %v1856
    %v1863 = vadd.f32 %v426, %v1857
    %v1864 = vadd.f32 %v425, %v1858
    %v1865 = vadd.f32 %v424, %v1859
    %v1866 = vadd.f32 %v423, %v1860
    %1867 = vrot.lane.b32.xlu0 %v1862, 127
    %v1868 = vpop.permute.xlu0 %1867
    %1869 = vrot.lane.b32.xlu0 %v1863, 127
    %v1870 = vpop.permute.xlu0 %1869
    %1871 = vrot.lane.b32.xlu0 %v1864, 127
    %v1872 = vpop.permute.xlu0 %1871
    %1873 = vrot.lane.b32.xlu0 %v1865, 127
    %v1874 = vpop.permute.xlu0 %1873
    %1875 = vrot.lane.b32.xlu0 %v1866, 127
    %v1876 = vpop.permute.xlu0 %1875
    %v1877 = vsel %vm422, %v1874, %v1876
    %v1878 = vsel %vm422, %v1872, %v1874
    %v1879 = vsel %vm422, %v1870, %v1872
    %v1880 = vsel %vm422, %v1868, %v1870
    %s1881 = scalar_lea.vmem [#allocation2], 16
    %v1882 = vld [vmem:[%s1881] sm:$0xff]
    %s1883 = scalar_lea.vmem %s4, 32
    %v1884 = vld [vmem:[%s1883] sm:$0xff]
    %1886 = vset.pattern.permute.xlu0 0
    %1887 = vperm.xlu0 %1886, %v1884
    %v1888 = vpop.permute.xlu0 %1887
    %v1891 = vsel %vm437, %v1882, 0
    %1893 = vmatprep.subr.mxu0 0.0
    %1894 = vmatpush1.msra.mxu0 0.0
    %1895 = vmatprep.subr.mxu0 0.0
    %1896 = vmatpush1.msra.mxu0 0.0
    %1897 = vmatprep.subr.mxu0 0.0
    %1898 = vmatpush1.msra.mxu0 0.0
    %1899 = vmatprep.subr.mxu0 0.0
    %1900 = vmatpush1.msra.mxu0 0.0
    %1901 = vmatprep.subr.mxu0 0.0
    %1902 = vmatpush1.msra.mxu0 0.0
    %1903 = vmatprep.subr.mxu0 0.0
    %1904 = vmatpush1.msra.mxu0 0.0
    %1905 = vmatprep.subr.mxu0 0.0
    %1906 = vmatpush1.msra.mxu0 0.0
    %1907 = vmatprep.subr.mxu0 0.0
    %1908 = vmatpush1.msra.mxu0 0.0
    %1909 = vmatprep.subr.mxu0 0.0
    %1910 = vmatpush1.msra.mxu0 0.0
    %1911 = vmatprep.subr.mxu0 0.0
    %1912 = vmatpush1.msra.mxu0 0.0
    %1913 = vmatprep.subr.mxu0 0.0
    %1914 = vmatpush1.msra.mxu0 0.0
    %1915 = vmatprep.subr.mxu0 0.0
    %1916 = vmatpush1.msra.mxu0 0.0
    %1917 = vmatprep.subr.mxu0 0.0
    %1918 = vmatpush1.msra.mxu0 0.0
    %1919 = vmatprep.subr.mxu0 0.0
    %1920 = vmatpush1.msra.mxu0 0.0
    %1921 = vmatprep.subr.mxu0 0.0
    %1922 = vmatpush1.msra.mxu0 0.0
    %1923 = vmatprep.subr.mxu0 %v1862
    %1924 = vmatpush1.msra.mxu0 %v1861
    %1925 = vmatprep.subr.mxu0 0.0
    %1926 = vmatpush2.msra.mxu0 0.0
    %1927 = vmatprep.subr.mxu0 0.0
    %1928 = vmatpush2.msra.mxu0 0.0
    %1929 = vmatprep.subr.mxu0 0.0
    %1930 = vmatpush2.msra.mxu0 0.0
    %1931 = vmatprep.subr.mxu0 0.0
    %1932 = vmatpush2.msra.mxu0 0.0
    %1933 = vmatprep.subr.mxu0 0.0
    %1934 = vmatpush2.msra.mxu0 0.0
    %1935 = vmatprep.subr.mxu0 0.0
    %1936 = vmatpush2.msra.mxu0 0.0
    %1937 = vmatprep.subr.mxu0 0.0
    %1938 = vmatpush2.msra.mxu0 0.0
    %1939 = vmatprep.subr.mxu0 0.0
    %1940 = vmatpush2.msra.mxu0 0.0
    %1941 = vmatprep.subr.mxu0 0.0
    %1942 = vmatpush2.msra.mxu0 0.0
    %1943 = vmatprep.subr.mxu0 0.0
    %1944 = vmatpush2.msra.mxu0 0.0
    %1945 = vmatprep.subr.mxu0 0.0
    %1946 = vmatpush2.msra.mxu0 0.0
    %1947 = vmatprep.subr.mxu0 0.0
    %1948 = vmatpush2.msra.mxu0 0.0
    %1949 = vmatprep.subr.mxu0 0.0
    %1950 = vmatpush2.msra.mxu0 0.0
    %1951 = vmatprep.subr.mxu0 0.0
    %1952 = vmatpush2.msra.mxu0 0.0
    %1953 = vmatprep.subr.mxu0 0.0
    %1954 = vmatpush2.msra.mxu0 0.0
    %1955 = vmatprep.subr.mxu0 0.0
    %1956 = vmatpush2.msra.mxu0 0.0
    %1957 = vmatprep.mubr.f32.mxu0 0.0
    %1958 = vmatmul.mubr.f32.gmra.mxu0 %v1891
    %v1959 = vpop.f32.mrf.mxu0
    %v1960 = vadd.f32 %v1888, %v1959
    %v1961 = vpop.f32.mrf.mxu0
    %v1962 = vadd.f32 %v1888, %v1961
    %1963 = vdwg.mxu0
    %1964 = vmatprep.subr.mxu0 0.0
    %1965 = vmatpush1.msra.mxu0 0.0
    %1966 = vmatprep.subr.mxu0 0.0
    %1967 = vmatpush1.msra.mxu0 0.0
    %1968 = vmatprep.subr.mxu0 0.0
    %1969 = vmatpush1.msra.mxu0 0.0
    %1970 = vmatprep.subr.mxu0 0.0
    %1971 = vmatpush1.msra.mxu0 0.0
    %1972 = vmatprep.subr.mxu0 0.0
    %1973 = vmatpush1.msra.mxu0 0.0
    %1974 = vmatprep.subr.mxu0 0.0
    %1975 = vmatpush1.msra.mxu0 0.0
    %1976 = vmatprep.subr.mxu0 0.0
    %1977 = vmatpush1.msra.mxu0 0.0
    %1978 = vmatprep.subr.mxu0 0.0
    %1979 = vmatpush1.msra.mxu0 0.0
    %1980 = vmatprep.subr.mxu0 0.0
    %1981 = vmatpush1.msra.mxu0 0.0
    %1982 = vmatprep.subr.mxu0 0.0
    %1983 = vmatpush1.msra.mxu0 0.0
    %1984 = vmatprep.subr.mxu0 0.0
    %1985 = vmatpush1.msra.mxu0 0.0
    %1986 = vmatprep.subr.mxu0 0.0
    %1987 = vmatpush1.msra.mxu0 0.0
    %1988 = vmatprep.subr.mxu0 0.0
    %1989 = vmatpush1.msra.mxu0 0.0
    %1990 = vmatprep.subr.mxu0 0.0
    %1991 = vmatpush1.msra.mxu0 0.0
    %1992 = vmatprep.subr.mxu0 0.0
    %1993 = vmatpush1.msra.mxu0 0.0
    %1994 = vmatprep.subr.mxu0 %v1864
    %1995 = vmatpush1.msra.mxu0 %v1863
    %1996 = vmatprep.subr.mxu0 0.0
    %1997 = vmatpush2.msra.mxu0 0.0
    %1998 = vmatprep.subr.mxu0 0.0
    %1999 = vmatpush2.msra.mxu0 0.0
    %2000 = vmatprep.subr.mxu0 0.0
    %2001 = vmatpush2.msra.mxu0 0.0
    %2002 = vmatprep.subr.mxu0 0.0
    %2003 = vmatpush2.msra.mxu0 0.0
    %2004 = vmatprep.subr.mxu0 0.0
    %2005 = vmatpush2.msra.mxu0 0.0
    %2006 = vmatprep.subr.mxu0 0.0
    %2007 = vmatpush2.msra.mxu0 0.0
    %2008 = vmatprep.subr.mxu0 0.0
    %2009 = vmatpush2.msra.mxu0 0.0
    %2010 = vmatprep.subr.mxu0 0.0
    %2011 = vmatpush2.msra.mxu0 0.0
    %2012 = vmatprep.subr.mxu0 0.0
    %2013 = vmatpush2.msra.mxu0 0.0
    %2014 = vmatprep.subr.mxu0 0.0
    %2015 = vmatpush2.msra.mxu0 0.0
    %2016 = vmatprep.subr.mxu0 0.0
    %2017 = vmatpush2.msra.mxu0 0.0
    %2018 = vmatprep.subr.mxu0 0.0
    %2019 = vmatpush2.msra.mxu0 0.0
    %2020 = vmatprep.subr.mxu0 0.0
    %2021 = vmatpush2.msra.mxu0 0.0
    %2022 = vmatprep.subr.mxu0 0.0
    %2023 = vmatpush2.msra.mxu0 0.0
    %2024 = vmatprep.subr.mxu0 0.0
    %2025 = vmatpush2.msra.mxu0 0.0
    %2026 = vmatprep.subr.mxu0 0.0
    %2027 = vmatpush2.msra.mxu0 0.0
    %2028 = vmatprep.mubr.f32.mxu0 0.0
    %2029 = vmatmul.mubr.f32.gmra.mxu0 %v1891
    %v2030 = vpop.f32.mrf.mxu0
    %v2031 = vadd.f32 %v1888, %v2030
    %v2032 = vpop.f32.mrf.mxu0
    %v2033 = vadd.f32 %v1888, %v2032
    %2034 = vdwg.mxu0
    %2035 = vmatprep.subr.mxu0 0.0
    %2036 = vmatpush1.msra.mxu0 0.0
    %2037 = vmatprep.subr.mxu0 0.0
    %2038 = vmatpush1.msra.mxu0 0.0
    %2039 = vmatprep.subr.mxu0 0.0
    %2040 = vmatpush1.msra.mxu0 0.0
    %2041 = vmatprep.subr.mxu0 0.0
    %2042 = vmatpush1.msra.mxu0 0.0
    %2043 = vmatprep.subr.mxu0 0.0
    %2044 = vmatpush1.msra.mxu0 0.0
    %2045 = vmatprep.subr.mxu0 0.0
    %2046 = vmatpush1.msra.mxu0 0.0
    %2047 = vmatprep.subr.mxu0 0.0
    %2048 = vmatpush1.msra.mxu0 0.0
    %2049 = vmatprep.subr.mxu0 0.0
    %2050 = vmatpush1.msra.mxu0 0.0
    %2051 = vmatprep.subr.mxu0 0.0
    %2052 = vmatpush1.msra.mxu0 0.0
    %2053 = vmatprep.subr.mxu0 0.0
    %2054 = vmatpush1.msra.mxu0 0.0
    %2055 = vmatprep.subr.mxu0 0.0
    %2056 = vmatpush1.msra.mxu0 0.0
    %2057 = vmatprep.subr.mxu0 0.0
    %2058 = vmatpush1.msra.mxu0 0.0
    %2059 = vmatprep.subr.mxu0 0.0
    %2060 = vmatpush1.msra.mxu0 0.0
    %2061 = vmatprep.subr.mxu0 0.0
    %2062 = vmatpush1.msra.mxu0 0.0
    %2063 = vmatprep.subr.mxu0 0.0
    %2064 = vmatpush1.msra.mxu0 0.0
    %2065 = vmatprep.subr.mxu0 %v1866
    %2066 = vmatpush1.msra.mxu0 %v1865
    %2067 = vmatprep.subr.mxu0 0.0
    %2068 = vmatpush2.msra.mxu0 0.0
    %2069 = vmatprep.subr.mxu0 0.0
    %2070 = vmatpush2.msra.mxu0 0.0
    %2071 = vmatprep.subr.mxu0 0.0
    %2072 = vmatpush2.msra.mxu0 0.0
    %2073 = vmatprep.subr.mxu0 0.0
    %2074 = vmatpush2.msra.mxu0 0.0
    %2075 = vmatprep.subr.mxu0 0.0
    %2076 = vmatpush2.msra.mxu0 0.0
    %2077 = vmatprep.subr.mxu0 0.0
    %2078 = vmatpush2.msra.mxu0 0.0
    %2079 = vmatprep.subr.mxu0 0.0
    %2080 = vmatpush2.msra.mxu0 0.0
    %2081 = vmatprep.subr.mxu0 0.0
    %2082 = vmatpush2.msra.mxu0 0.0
    %2083 = vmatprep.subr.mxu0 0.0
    %2084 = vmatpush2.msra.mxu0 0.0
    %2085 = vmatprep.subr.mxu0 0.0
    %2086 = vmatpush2.msra.mxu0 0.0
    %2087 = vmatprep.subr.mxu0 0.0
    %2088 = vmatpush2.msra.mxu0 0.0
    %2089 = vmatprep.subr.mxu0 0.0
    %2090 = vmatpush2.msra.mxu0 0.0
    %2091 = vmatprep.subr.mxu0 0.0
    %2092 = vmatpush2.msra.mxu0 0.0
    %2093 = vmatprep.subr.mxu0 0.0
    %2094 = vmatpush2.msra.mxu0 0.0
    %2095 = vmatprep.subr.mxu0 0.0
    %2096 = vmatpush2.msra.mxu0 0.0
    %2097 = vmatprep.subr.mxu0 0.0
    %2098 = vmatpush2.msra.mxu0 0.0
    %2099 = vmatprep.mubr.f32.mxu0 0.0
    %2100 = vmatmul.mubr.f32.gmra.mxu0 %v1891
    %v2101 = vpop.f32.mrf.mxu0
    %v2102 = vadd.f32 %v1888, %v2101
    %v2103 = vpop.f32.mrf.mxu0
    %v2104 = vadd.f32 %v1888, %v2103
    %2105 = vdwg.mxu0
    %v2106 = vsel %vm1534, %v1960, 0.0
    %v2107 = vsel %vm1535, %v1962, 0.0
    %v2108 = vsel %vm1536, %v2031, 0.0
    %v2109 = vsel %vm1537, %v2033, 0.0
    %v2110 = vsel %vm1538, %v2102, 0.0
    %v2111 = vsel %vm1539, %v2104, 0.0
    %v2112 = vadd.f32 %v2106, %v2107
    %v2113 = vadd.f32 %v2112, %v2108
    %v2114 = vadd.f32 %v2113, %v2109
    %v2115 = vadd.f32 %v2114, %v2110
    %v2116 = vadd.f32 %v2115, %v2111
    %2117 = vadd.xlane.f32.xlu0 %v2116
    %v2118 = vpop.xlane.xlu0 %2117
    %v2119 = vmul.f32 %v2106, %v1960
    %v2120 = vmul.f32 %v2107, %v1962
    %v2121 = vmul.f32 %v2108, %v2031
    %v2122 = vmul.f32 %v2109, %v2033
    %v2123 = vmul.f32 %v2110, %v2102
    %v2124 = vmul.f32 %v2111, %v2104
    %v2125 = vadd.f32 %v2119, %v2120
    %v2126 = vadd.f32 %v2125, %v2121
    %v2127 = vadd.f32 %v2126, %v2122
    %v2128 = vadd.f32 %v2127, %v2123
    %v2129 = vadd.f32 %v2128, %v2124
    %2130 = vadd.xlane.f32.xlu0 %v2129
    %v2131 = vpop.xlane.xlu0 %2130
    %v2132 = vmul.f32 %v2118, 0.027777778
    %v2133 = vmul.f32 %v2131, 0.027777778
    %v2134 = vmul.f32 %v2132, %v2132
    %v2135 = vsub.f32 %v2133, %v2134
    %v2136 = vmax.f32 %v2135, 0.0
    %v2137 = vsub.f32 %v1960, %v2132
    %v2138 = vsub.f32 %v1962, %v2132
    %v2139 = vsub.f32 %v2031, %v2132
    %v2140 = vsub.f32 %v2033, %v2132
    %v2141 = vsub.f32 %v2102, %v2132
    %v2142 = vsub.f32 %v2104, %v2132
    %v2143 = vadd.f32 %v2136, 1e-05
    %v2144 = vrsqrt.pop %v2143
    %v2145 = vmul.f32 %v2137, %v2144
    %v2146 = vmul.f32 %v2138, %v2144
    %v2147 = vmul.f32 %v2139, %v2144
    %v2148 = vmul.f32 %v2140, %v2144
    %v2149 = vmul.f32 %v2141, %v2144
    %v2150 = vmul.f32 %v2142, %v2144
    %v2151 = vmax.f32 %v2145, 0.0
    %v2152 = vmax.f32 %v2146, 0.0
    %v2153 = vmax.f32 %v2147, 0.0
    %v2154 = vmax.f32 %v2148, 0.0
    %v2155 = vmax.f32 %v2149, 0.0
    %v2156 = vmax.f32 %v2150, 0.0
    %2157 = vrot.lane.b32.xlu0 %v2151, 127
    %v2158 = vpop.permute.xlu0 %2157
    %2159 = vrot.lane.b32.xlu0 %v2152, 127
    %v2160 = vpop.permute.xlu0 %2159
    %2161 = vrot.lane.b32.xlu0 %v2153, 127
    %v2162 = vpop.permute.xlu0 %2161
    %2163 = vrot.lane.b32.xlu0 %v2154, 127
    %v2164 = vpop.permute.xlu0 %2163
    %2165 = vrot.lane.b32.xlu0 %v2155, 127
    %v2166 = vpop.permute.xlu0 %2165
    %2167 = vrot.lane.b32.xlu0 %v2156, 127
    %v2168 = vpop.permute.xlu0 %2167
    %v2169 = vsel %vm422, %v2166, %v2168
    %v2170 = vsel %vm422, %v2164, %v2166
    %v2171 = vsel %vm422, %v2162, %v2164
    %v2172 = vsel %vm422, %v2160, %v2162
    %v2173 = vsel %vm422, %v2158, %v2160
    %v2174 = vsel %vm422, %v2168, %v2158
    %2175 = vrot.lane.b32.xlu0 %v2151, 126
    %v2176 = vpop.permute.xlu0 %2175
    %2177 = vrot.lane.b32.xlu0 %v2152, 126
    %v2178 = vpop.permute.xlu0 %2177
    %2179 = vrot.lane.b32.xlu0 %v2153, 126
    %v2180 = vpop.permute.xlu0 %2179
    %2181 = vrot.lane.b32.xlu0 %v2154, 126
    %v2182 = vpop.permute.xlu0 %2181
    %2183 = vrot.lane.b32.xlu0 %v2155, 126
    %v2184 = vpop.permute.xlu0 %2183
    %2185 = vrot.lane.b32.xlu0 %v2156, 126
    %v2186 = vpop.permute.xlu0 %2185
    %v2187 = vsel %vm846, %v2184, %v2186
    %v2188 = vsel %vm846, %v2182, %v2184
    %v2189 = vsel %vm846, %v2180, %v2182
    %v2190 = vsel %vm846, %v2178, %v2180
    %v2191 = vsel %vm846, %v2176, %v2178
    %v2192 = vsel %vm846, %v2186, %v2176
    %s2193 = scalar_lea.vmem [#allocation5], 24
    %v2194 = vld [vmem:[%s2193] sm:$0xff]
    %s2195 = scalar_lea.vmem [#allocation5], 32
    %v2196 = vld [vmem:[%s2195] sm:$0xff]
    %v2198 = vsel %vm858, %v2196, 0
    %2200 = vmatprep.subr.mxu0 0.0
    %2201 = vmatpush1.msra.mxu0 0.0
    %2202 = vmatprep.subr.mxu0 0.0
    %2203 = vmatpush1.msra.mxu0 0.0
    %2204 = vmatprep.subr.mxu0 0.0
    %2205 = vmatpush1.msra.mxu0 0.0
    %2206 = vmatprep.subr.mxu0 0.0
    %2207 = vmatpush1.msra.mxu0 0.0
    %2208 = vmatprep.subr.mxu0 0.0
    %2209 = vmatpush1.msra.mxu0 0.0
    %2210 = vmatprep.subr.mxu0 0.0
    %2211 = vmatpush1.msra.mxu0 0.0
    %2212 = vmatprep.subr.mxu0 0.0
    %2213 = vmatpush1.msra.mxu0 0.0
    %2214 = vmatprep.subr.mxu0 0.0
    %2215 = vmatpush1.msra.mxu0 0.0
    %2216 = vmatprep.subr.mxu0 0.0
    %2217 = vmatpush1.msra.mxu0 0.0
    %2218 = vmatprep.subr.mxu0 0.0
    %2219 = vmatpush1.msra.mxu0 0.0
    %2220 = vmatprep.subr.mxu0 0.0
    %2221 = vmatpush1.msra.mxu0 0.0
    %2222 = vmatprep.subr.mxu0 0.0
    %2223 = vmatpush1.msra.mxu0 0.0
    %2224 = vmatprep.subr.mxu0 0.0
    %2225 = vmatpush1.msra.mxu0 0.0
    %2226 = vmatprep.subr.mxu0 %v2189
    %2227 = vmatpush1.msra.mxu0 %v2190
    %2228 = vmatprep.subr.mxu0 %v2171
    %2229 = vmatpush1.msra.mxu0 %v2172
    %2230 = vmatprep.subr.mxu0 %v2153
    %2231 = vmatpush1.msra.mxu0 %v2152
    %2232 = vmatprep.subr.mxu0 0.0
    %2233 = vmatpush2.msra.mxu0 0.0
    %2234 = vmatprep.subr.mxu0 0.0
    %2235 = vmatpush2.msra.mxu0 0.0
    %2236 = vmatprep.subr.mxu0 0.0
    %2237 = vmatpush2.msra.mxu0 0.0
    %2238 = vmatprep.subr.mxu0 0.0
    %2239 = vmatpush2.msra.mxu0 0.0
    %2240 = vmatprep.subr.mxu0 0.0
    %2241 = vmatpush2.msra.mxu0 0.0
    %2242 = vmatprep.subr.mxu0 0.0
    %2243 = vmatpush2.msra.mxu0 0.0
    %2244 = vmatprep.subr.mxu0 0.0
    %2245 = vmatpush2.msra.mxu0 0.0
    %2246 = vmatprep.subr.mxu0 0.0
    %2247 = vmatpush2.msra.mxu0 0.0
    %2248 = vmatprep.subr.mxu0 0.0
    %2249 = vmatpush2.msra.mxu0 0.0
    %2250 = vmatprep.subr.mxu0 0.0
    %2251 = vmatpush2.msra.mxu0 0.0
    %2252 = vmatprep.subr.mxu0 0.0
    %2253 = vmatpush2.msra.mxu0 0.0
    %2254 = vmatprep.subr.mxu0 0.0
    %2255 = vmatpush2.msra.mxu0 0.0
    %2256 = vmatprep.subr.mxu0 0.0
    %2257 = vmatpush2.msra.mxu0 0.0
    %2258 = vmatprep.subr.mxu0 0.0
    %2259 = vmatpush2.msra.mxu0 0.0
    %2260 = vmatprep.subr.mxu0 0.0
    %2261 = vmatpush2.msra.mxu0 0.0
    %2262 = vmatprep.subr.mxu0 0.0
    %2263 = vmatpush2.msra.mxu0 0.0
    %2264 = vmatprep.mubr.f32.mxu0 0.0
    %2265 = vmatmul.mubr.f32.gmra.mxu0 %v2198
    %v2266 = vpop.f32.mrf.mxu0
    %v2267 = vadd.f32 0.0, %v2266
    %v2268 = vpop.f32.mrf.mxu0
    %v2269 = vadd.f32 0.0, %v2268
    %2270 = vdwg.mxu0
    %2271 = vmatprep.subr.mxu0 0.0
    %2272 = vmatpush1.msra.mxu0 0.0
    %2273 = vmatprep.subr.mxu0 0.0
    %2274 = vmatpush1.msra.mxu0 0.0
    %2275 = vmatprep.subr.mxu0 0.0
    %2276 = vmatpush1.msra.mxu0 0.0
    %2277 = vmatprep.subr.mxu0 0.0
    %2278 = vmatpush1.msra.mxu0 0.0
    %2279 = vmatprep.subr.mxu0 0.0
    %2280 = vmatpush1.msra.mxu0 0.0
    %2281 = vmatprep.subr.mxu0 0.0
    %2282 = vmatpush1.msra.mxu0 0.0
    %2283 = vmatprep.subr.mxu0 0.0
    %2284 = vmatpush1.msra.mxu0 0.0
    %2285 = vmatprep.subr.mxu0 0.0
    %2286 = vmatpush1.msra.mxu0 0.0
    %2287 = vmatprep.subr.mxu0 0.0
    %2288 = vmatpush1.msra.mxu0 0.0
    %2289 = vmatprep.subr.mxu0 0.0
    %2290 = vmatpush1.msra.mxu0 0.0
    %2291 = vmatprep.subr.mxu0 0.0
    %2292 = vmatpush1.msra.mxu0 0.0
    %2293 = vmatprep.subr.mxu0 0.0
    %2294 = vmatpush1.msra.mxu0 0.0
    %2295 = vmatprep.subr.mxu0 0.0
    %2296 = vmatpush1.msra.mxu0 0.0
    %2297 = vmatprep.subr.mxu0 %v2187
    %2298 = vmatpush1.msra.mxu0 %v2188
    %2299 = vmatprep.subr.mxu0 %v2169
    %2300 = vmatpush1.msra.mxu0 %v2170
    %2301 = vmatprep.subr.mxu0 %v2155
    %2302 = vmatpush1.msra.mxu0 %v2154
    %2303 = vmatprep.subr.mxu0 0.0
    %2304 = vmatpush2.msra.mxu0 0.0
    %2305 = vmatprep.subr.mxu0 0.0
    %2306 = vmatpush2.msra.mxu0 0.0
    %2307 = vmatprep.subr.mxu0 0.0
    %2308 = vmatpush2.msra.mxu0 0.0
    %2309 = vmatprep.subr.mxu0 0.0
    %2310 = vmatpush2.msra.mxu0 0.0
    %2311 = vmatprep.subr.mxu0 0.0
    %2312 = vmatpush2.msra.mxu0 0.0
    %2313 = vmatprep.subr.mxu0 0.0
    %2314 = vmatpush2.msra.mxu0 0.0
    %2315 = vmatprep.subr.mxu0 0.0
    %2316 = vmatpush2.msra.mxu0 0.0
    %2317 = vmatprep.subr.mxu0 0.0
    %2318 = vmatpush2.msra.mxu0 0.0
    %2319 = vmatprep.subr.mxu0 0.0
    %2320 = vmatpush2.msra.mxu0 0.0
    %2321 = vmatprep.subr.mxu0 0.0
    %2322 = vmatpush2.msra.mxu0 0.0
    %2323 = vmatprep.subr.mxu0 0.0
    %2324 = vmatpush2.msra.mxu0 0.0
    %2325 = vmatprep.subr.mxu0 0.0
    %2326 = vmatpush2.msra.mxu0 0.0
    %2327 = vmatprep.subr.mxu0 0.0
    %2328 = vmatpush2.msra.mxu0 0.0
    %2329 = vmatprep.subr.mxu0 0.0
    %2330 = vmatpush2.msra.mxu0 0.0
    %2331 = vmatprep.subr.mxu0 0.0
    %2332 = vmatpush2.msra.mxu0 0.0
    %2333 = vmatprep.subr.mxu0 0.0
    %2334 = vmatpush2.msra.mxu0 0.0
    %2335 = vmatprep.mubr.f32.mxu0 0.0
    %2336 = vmatmul.mubr.f32.gmra.mxu0 %v2198
    %v2337 = vpop.f32.mrf.mxu0
    %v2338 = vadd.f32 0.0, %v2337
    %v2339 = vpop.f32.mrf.mxu0
    %v2340 = vadd.f32 0.0, %v2339
    %2341 = vdwg.mxu0
    %v2343 = vsel %vm858, %v2194, 0
    %2345 = vmatprep.subr.mxu0 0.0
    %2346 = vmatpush1.msra.mxu0 0.0
    %2347 = vmatprep.subr.mxu0 0.0
    %2348 = vmatpush1.msra.mxu0 0.0
    %2349 = vmatprep.subr.mxu0 0.0
    %2350 = vmatpush1.msra.mxu0 0.0
    %2351 = vmatprep.subr.mxu0 0.0
    %2352 = vmatpush1.msra.mxu0 0.0
    %2353 = vmatprep.subr.mxu0 0.0
    %2354 = vmatpush1.msra.mxu0 0.0
    %2355 = vmatprep.subr.mxu0 0.0
    %2356 = vmatpush1.msra.mxu0 0.0
    %2357 = vmatprep.subr.mxu0 0.0
    %2358 = vmatpush1.msra.mxu0 0.0
    %2359 = vmatprep.subr.mxu0 0.0
    %2360 = vmatpush1.msra.mxu0 0.0
    %2361 = vmatprep.subr.mxu0 0.0
    %2362 = vmatpush1.msra.mxu0 0.0
    %2363 = vmatprep.subr.mxu0 0.0
    %2364 = vmatpush1.msra.mxu0 0.0
    %2365 = vmatprep.subr.mxu0 0.0
    %2366 = vmatpush1.msra.mxu0 0.0
    %2367 = vmatprep.subr.mxu0 0.0
    %2368 = vmatpush1.msra.mxu0 0.0
    %2369 = vmatprep.subr.mxu0 0.0
    %2370 = vmatpush1.msra.mxu0 0.0
    %2371 = vmatprep.subr.mxu0 %v2190
    %2372 = vmatpush1.msra.mxu0 %v2191
    %2373 = vmatprep.subr.mxu0 %v2172
    %2374 = vmatpush1.msra.mxu0 %v2173
    %2375 = vmatprep.subr.mxu0 %v2152
    %2376 = vmatpush1.msra.mxu0 %v2151
    %2377 = vmatprep.subr.mxu0 0.0
    %2378 = vmatpush2.msra.mxu0 0.0
    %2379 = vmatprep.subr.mxu0 0.0
    %2380 = vmatpush2.msra.mxu0 0.0
    %2381 = vmatprep.subr.mxu0 0.0
    %2382 = vmatpush2.msra.mxu0 0.0
    %2383 = vmatprep.subr.mxu0 0.0
    %2384 = vmatpush2.msra.mxu0 0.0
    %2385 = vmatprep.subr.mxu0 0.0
    %2386 = vmatpush2.msra.mxu0 0.0
    %2387 = vmatprep.subr.mxu0 0.0
    %2388 = vmatpush2.msra.mxu0 0.0
    %2389 = vmatprep.subr.mxu0 0.0
    %2390 = vmatpush2.msra.mxu0 0.0
    %2391 = vmatprep.subr.mxu0 0.0
    %2392 = vmatpush2.msra.mxu0 0.0
    %2393 = vmatprep.subr.mxu0 0.0
    %2394 = vmatpush2.msra.mxu0 0.0
    %2395 = vmatprep.subr.mxu0 0.0
    %2396 = vmatpush2.msra.mxu0 0.0
    %2397 = vmatprep.subr.mxu0 0.0
    %2398 = vmatpush2.msra.mxu0 0.0
    %2399 = vmatprep.subr.mxu0 0.0
    %2400 = vmatpush2.msra.mxu0 0.0
    %2401 = vmatprep.subr.mxu0 0.0
    %2402 = vmatpush2.msra.mxu0 0.0
    %2403 = vmatprep.subr.mxu0 0.0
    %2404 = vmatpush2.msra.mxu0 0.0
    %2405 = vmatprep.subr.mxu0 0.0
    %2406 = vmatpush2.msra.mxu0 0.0
    %2407 = vmatprep.subr.mxu0 0.0
    %2408 = vmatpush2.msra.mxu0 0.0
    %2409 = vmatprep.mubr.f32.mxu0 0.0
    %2410 = vmatmul.mubr.f32.gmra.mxu0 %v2343
    %v2411 = vpop.f32.mrf.mxu0
    %v2412 = vadd.f32 %v2267, %v2411
    %v2413 = vpop.f32.mrf.mxu0
    %v2414 = vadd.f32 %v2269, %v2413
    %2415 = vdwg.mxu0
    %2416 = vmatprep.subr.mxu0 0.0
    %2417 = vmatpush1.msra.mxu0 0.0
    %2418 = vmatprep.subr.mxu0 0.0
    %2419 = vmatpush1.msra.mxu0 0.0
    %2420 = vmatprep.subr.mxu0 0.0
    %2421 = vmatpush1.msra.mxu0 0.0
    %2422 = vmatprep.subr.mxu0 0.0
    %2423 = vmatpush1.msra.mxu0 0.0
    %2424 = vmatprep.subr.mxu0 0.0
    %2425 = vmatpush1.msra.mxu0 0.0
    %2426 = vmatprep.subr.mxu0 0.0
    %2427 = vmatpush1.msra.mxu0 0.0
    %2428 = vmatprep.subr.mxu0 0.0
    %2429 = vmatpush1.msra.mxu0 0.0
    %2430 = vmatprep.subr.mxu0 0.0
    %2431 = vmatpush1.msra.mxu0 0.0
    %2432 = vmatprep.subr.mxu0 0.0
    %2433 = vmatpush1.msra.mxu0 0.0
    %2434 = vmatprep.subr.mxu0 0.0
    %2435 = vmatpush1.msra.mxu0 0.0
    %2436 = vmatprep.subr.mxu0 0.0
    %2437 = vmatpush1.msra.mxu0 0.0
    %2438 = vmatprep.subr.mxu0 0.0
    %2439 = vmatpush1.msra.mxu0 0.0
    %2440 = vmatprep.subr.mxu0 0.0
    %2441 = vmatpush1.msra.mxu0 0.0
    %2442 = vmatprep.subr.mxu0 %v2188
    %2443 = vmatpush1.msra.mxu0 %v2189
    %2444 = vmatprep.subr.mxu0 %v2170
    %2445 = vmatpush1.msra.mxu0 %v2171
    %2446 = vmatprep.subr.mxu0 %v2154
    %2447 = vmatpush1.msra.mxu0 %v2153
    %2448 = vmatprep.subr.mxu0 0.0
    %2449 = vmatpush2.msra.mxu0 0.0
    %2450 = vmatprep.subr.mxu0 0.0
    %2451 = vmatpush2.msra.mxu0 0.0
    %2452 = vmatprep.subr.mxu0 0.0
    %2453 = vmatpush2.msra.mxu0 0.0
    %2454 = vmatprep.subr.mxu0 0.0
    %2455 = vmatpush2.msra.mxu0 0.0
    %2456 = vmatprep.subr.mxu0 0.0
    %2457 = vmatpush2.msra.mxu0 0.0
    %2458 = vmatprep.subr.mxu0 0.0
    %2459 = vmatpush2.msra.mxu0 0.0
    %2460 = vmatprep.subr.mxu0 0.0
    %2461 = vmatpush2.msra.mxu0 0.0
    %2462 = vmatprep.subr.mxu0 0.0
    %2463 = vmatpush2.msra.mxu0 0.0
    %2464 = vmatprep.subr.mxu0 0.0
    %2465 = vmatpush2.msra.mxu0 0.0
    %2466 = vmatprep.subr.mxu0 0.0
    %2467 = vmatpush2.msra.mxu0 0.0
    %2468 = vmatprep.subr.mxu0 0.0
    %2469 = vmatpush2.msra.mxu0 0.0
    %2470 = vmatprep.subr.mxu0 0.0
    %2471 = vmatpush2.msra.mxu0 0.0
    %2472 = vmatprep.subr.mxu0 0.0
    %2473 = vmatpush2.msra.mxu0 0.0
    %2474 = vmatprep.subr.mxu0 0.0
    %2475 = vmatpush2.msra.mxu0 0.0
    %2476 = vmatprep.subr.mxu0 0.0
    %2477 = vmatpush2.msra.mxu0 0.0
    %2478 = vmatprep.subr.mxu0 0.0
    %2479 = vmatpush2.msra.mxu0 0.0
    %2480 = vmatprep.mubr.f32.mxu0 0.0
    %2481 = vmatmul.mubr.f32.gmra.mxu0 %v2343
    %v2482 = vpop.f32.mrf.mxu0
    %v2483 = vadd.f32 %v2338, %v2482
    %v2484 = vpop.f32.mrf.mxu0
    %v2485 = vadd.f32 %v2340, %v2484
    %2486 = vdwg.mxu0
    %s2487 = scalar_lea.vmem [#allocation5], 40
    %v2488 = vld [vmem:[%s2487] sm:$0xff]
    %v2490 = vsel %vm858, %v2488, 0
    %2492 = vmatprep.subr.mxu0 0.0
    %2493 = vmatpush1.msra.mxu0 0.0
    %2494 = vmatprep.subr.mxu0 0.0
    %2495 = vmatpush1.msra.mxu0 0.0
    %2496 = vmatprep.subr.mxu0 0.0
    %2497 = vmatpush1.msra.mxu0 0.0
    %2498 = vmatprep.subr.mxu0 0.0
    %2499 = vmatpush1.msra.mxu0 0.0
    %2500 = vmatprep.subr.mxu0 0.0
    %2501 = vmatpush1.msra.mxu0 0.0
    %2502 = vmatprep.subr.mxu0 0.0
    %2503 = vmatpush1.msra.mxu0 0.0
    %2504 = vmatprep.subr.mxu0 0.0
    %2505 = vmatpush1.msra.mxu0 0.0
    %2506 = vmatprep.subr.mxu0 0.0
    %2507 = vmatpush1.msra.mxu0 0.0
    %2508 = vmatprep.subr.mxu0 0.0
    %2509 = vmatpush1.msra.mxu0 0.0
    %2510 = vmatprep.subr.mxu0 0.0
    %2511 = vmatpush1.msra.mxu0 0.0
    %2512 = vmatprep.subr.mxu0 0.0
    %2513 = vmatpush1.msra.mxu0 0.0
    %2514 = vmatprep.subr.mxu0 0.0
    %2515 = vmatpush1.msra.mxu0 0.0
    %2516 = vmatprep.subr.mxu0 0.0
    %2517 = vmatpush1.msra.mxu0 0.0
    %2518 = vmatprep.subr.mxu0 %v2188
    %2519 = vmatpush1.msra.mxu0 %v2189
    %2520 = vmatprep.subr.mxu0 %v2170
    %2521 = vmatpush1.msra.mxu0 %v2171
    %2522 = vmatprep.subr.mxu0 %v2154
    %2523 = vmatpush1.msra.mxu0 %v2153
    %2524 = vmatprep.subr.mxu0 0.0
    %2525 = vmatpush2.msra.mxu0 0.0
    %2526 = vmatprep.subr.mxu0 0.0
    %2527 = vmatpush2.msra.mxu0 0.0
    %2528 = vmatprep.subr.mxu0 0.0
    %2529 = vmatpush2.msra.mxu0 0.0
    %2530 = vmatprep.subr.mxu0 0.0
    %2531 = vmatpush2.msra.mxu0 0.0
    %2532 = vmatprep.subr.mxu0 0.0
    %2533 = vmatpush2.msra.mxu0 0.0
    %2534 = vmatprep.subr.mxu0 0.0
    %2535 = vmatpush2.msra.mxu0 0.0
    %2536 = vmatprep.subr.mxu0 0.0
    %2537 = vmatpush2.msra.mxu0 0.0
    %2538 = vmatprep.subr.mxu0 0.0
    %2539 = vmatpush2.msra.mxu0 0.0
    %2540 = vmatprep.subr.mxu0 0.0
    %2541 = vmatpush2.msra.mxu0 0.0
    %2542 = vmatprep.subr.mxu0 0.0
    %2543 = vmatpush2.msra.mxu0 0.0
    %2544 = vmatprep.subr.mxu0 0.0
    %2545 = vmatpush2.msra.mxu0 0.0
    %2546 = vmatprep.subr.mxu0 0.0
    %2547 = vmatpush2.msra.mxu0 0.0
    %2548 = vmatprep.subr.mxu0 0.0
    %2549 = vmatpush2.msra.mxu0 0.0
    %2550 = vmatprep.subr.mxu0 0.0
    %2551 = vmatpush2.msra.mxu0 0.0
    %2552 = vmatprep.subr.mxu0 0.0
    %2553 = vmatpush2.msra.mxu0 0.0
    %2554 = vmatprep.subr.mxu0 0.0
    %2555 = vmatpush2.msra.mxu0 0.0
    %2556 = vmatprep.mubr.f32.mxu0 0.0
    %2557 = vmatmul.mubr.f32.gmra.mxu0 %v2490
    %v2558 = vpop.f32.mrf.mxu0
    %v2559 = vadd.f32 0.0, %v2558
    %v2560 = vpop.f32.mrf.mxu0
    %v2561 = vadd.f32 0.0, %v2560
    %2562 = vdwg.mxu0
    %2563 = vmatprep.subr.mxu0 0.0
    %2564 = vmatpush1.msra.mxu0 0.0
    %2565 = vmatprep.subr.mxu0 0.0
    %2566 = vmatpush1.msra.mxu0 0.0
    %2567 = vmatprep.subr.mxu0 0.0
    %2568 = vmatpush1.msra.mxu0 0.0
    %2569 = vmatprep.subr.mxu0 0.0
    %2570 = vmatpush1.msra.mxu0 0.0
    %2571 = vmatprep.subr.mxu0 0.0
    %2572 = vmatpush1.msra.mxu0 0.0
    %2573 = vmatprep.subr.mxu0 0.0
    %2574 = vmatpush1.msra.mxu0 0.0
    %2575 = vmatprep.subr.mxu0 0.0
    %2576 = vmatpush1.msra.mxu0 0.0
    %2577 = vmatprep.subr.mxu0 0.0
    %2578 = vmatpush1.msra.mxu0 0.0
    %2579 = vmatprep.subr.mxu0 0.0
    %2580 = vmatpush1.msra.mxu0 0.0
    %2581 = vmatprep.subr.mxu0 0.0
    %2582 = vmatpush1.msra.mxu0 0.0
    %2583 = vmatprep.subr.mxu0 0.0
    %2584 = vmatpush1.msra.mxu0 0.0
    %2585 = vmatprep.subr.mxu0 0.0
    %2586 = vmatpush1.msra.mxu0 0.0
    %2587 = vmatprep.subr.mxu0 0.0
    %2588 = vmatpush1.msra.mxu0 0.0
    %2589 = vmatprep.subr.mxu0 %v2192
    %2590 = vmatpush1.msra.mxu0 %v2187
    %2591 = vmatprep.subr.mxu0 %v2174
    %2592 = vmatpush1.msra.mxu0 %v2169
    %2593 = vmatprep.subr.mxu0 %v2156
    %2594 = vmatpush1.msra.mxu0 %v2155
    %2595 = vmatprep.subr.mxu0 0.0
    %2596 = vmatpush2.msra.mxu0 0.0
    %2597 = vmatprep.subr.mxu0 0.0
    %2598 = vmatpush2.msra.mxu0 0.0
    %2599 = vmatprep.subr.mxu0 0.0
    %2600 = vmatpush2.msra.mxu0 0.0
    %2601 = vmatprep.subr.mxu0 0.0
    %2602 = vmatpush2.msra.mxu0 0.0
    %2603 = vmatprep.subr.mxu0 0.0
    %2604 = vmatpush2.msra.mxu0 0.0
    %2605 = vmatprep.subr.mxu0 0.0
    %2606 = vmatpush2.msra.mxu0 0.0
    %2607 = vmatprep.subr.mxu0 0.0
    %2608 = vmatpush2.msra.mxu0 0.0
    %2609 = vmatprep.subr.mxu0 0.0
    %2610 = vmatpush2.msra.mxu0 0.0
    %2611 = vmatprep.subr.mxu0 0.0
    %2612 = vmatpush2.msra.mxu0 0.0
    %2613 = vmatprep.subr.mxu0 0.0
    %2614 = vmatpush2.msra.mxu0 0.0
    %2615 = vmatprep.subr.mxu0 0.0
    %2616 = vmatpush2.msra.mxu0 0.0
    %2617 = vmatprep.subr.mxu0 0.0
    %2618 = vmatpush2.msra.mxu0 0.0
    %2619 = vmatprep.subr.mxu0 0.0
    %2620 = vmatpush2.msra.mxu0 0.0
    %2621 = vmatprep.subr.mxu0 0.0
    %2622 = vmatpush2.msra.mxu0 0.0
    %2623 = vmatprep.subr.mxu0 0.0
    %2624 = vmatpush2.msra.mxu0 0.0
    %2625 = vmatprep.subr.mxu0 0.0
    %2626 = vmatpush2.msra.mxu0 0.0
    %2627 = vmatprep.mubr.f32.mxu0 0.0
    %2628 = vmatmul.mubr.f32.gmra.mxu0 %v2490
    %v2629 = vpop.f32.mrf.mxu0
    %v2630 = vadd.f32 0.0, %v2629
    %v2631 = vpop.f32.mrf.mxu0
    %v2632 = vadd.f32 0.0, %v2631
    %2633 = vdwg.mxu0
    %v2634 = vadd.f32 %v2412, %v2559
    %v2635 = vadd.f32 %v2414, %v2561
    %v2636 = vadd.f32 %v2483, %v2630
    %v2637 = vadd.f32 %v2485, %v2632
    %s2638 = scalar_lea.vmem %s4, 40
    %v2639 = vld [vmem:[%s2638] sm:$0xff]
    %2641 = vset.pattern.permute.xlu0 0
    %2642 = vperm.xlu0 %2641, %v2639
    %v2643 = vpop.permute.xlu0 %2642
    %v2645 = vadd.f32 %v2634, %v2643
    %v2646 = vadd.f32 %v2635, %v2643
    %v2647 = vadd.f32 %v2636, %v2643
    %v2648 = vadd.f32 %v2637, %v2643
    %v2649 = vsel %vm80, 1, 0
    %v2650 = vsel %vm81, 1, 0
    %v2651 = vsel %vm82, 1, 0
    %v2652 = vsel %vm83, 1, 0
    %vm2653 = vcmp.eq.s32.totalorder %v2649, 1
    %vm2654 = vcmp.eq.s32.totalorder %v2650, 1
    %vm2655 = vcmp.eq.s32.totalorder %v2651, 1
    %vm2656 = vcmp.eq.s32.totalorder %v2652, 1
    %v2657 = vsel %vm2653, %v2645, 0.0
    %v2658 = vsel %vm2654, %v2646, 0.0
    %v2659 = vsel %vm2655, %v2647, 0.0
    %v2660 = vsel %vm2656, %v2648, 0.0
    %v2661 = vadd.f32 %v2657, %v2658
    %v2662 = vadd.f32 %v2661, %v2659
    %v2663 = vadd.f32 %v2662, %v2660
    %2664 = vadd.xlane.f32.xlu0 %v2663
    %v2665 = vpop.xlane.xlu0 %2664
    %v2666 = vmul.f32 %v2657, %v2645
    %v2667 = vmul.f32 %v2658, %v2646
    %v2668 = vmul.f32 %v2659, %v2647
    %v2669 = vmul.f32 %v2660, %v2648
    %v2670 = vadd.f32 %v2666, %v2667
    %v2671 = vadd.f32 %v2670, %v2668
    %v2672 = vadd.f32 %v2671, %v2669
    %2673 = vadd.xlane.f32.xlu0 %v2672
    %v2674 = vpop.xlane.xlu0 %2673
    %v2675 = vmul.f32 %v2665, 0.0625
    %v2676 = vmul.f32 %v2674, 0.0625
    %v2677 = vmul.f32 %v2675, %v2675
    %v2678 = vsub.f32 %v2676, %v2677
    %v2679 = vmax.f32 %v2678, 0.0
    %v2680 = vsub.f32 %v2645, %v2675
    %v2681 = vsub.f32 %v2646, %v2675
    %v2682 = vsub.f32 %v2647, %v2675
    %v2683 = vsub.f32 %v2648, %v2675
    %v2684 = vadd.f32 %v2679, 1e-05
    %v2685 = vrsqrt.pop %v2684
    %v2686 = vmul.f32 %v2680, %v2685
    %v2687 = vmul.f32 %v2681, %v2685
    %v2688 = vmul.f32 %v2682, %v2685
    %v2689 = vmul.f32 %v2683, %v2685
    %v2690 = vmax.f32 %v2686, 0.0
    %v2691 = vmax.f32 %v2687, 0.0
    %v2692 = vmax.f32 %v2688, 0.0
    %v2693 = vmax.f32 %v2689, 0.0
    %s2694 = scalar_lea.vmem [#allocation2], 24
    %v2695 = vld [vmem:[%s2694] sm:$0xff]
    %s2696 = scalar_lea.vmem %s4, 48
    %v2697 = vld [vmem:[%s2696] sm:$0xff]
    %2699 = vset.pattern.permute.xlu0 0
    %2700 = vperm.xlu0 %2699, %v2697
    %v2701 = vpop.permute.xlu0 %2700
    %v2704 = vsel %vm437, %v2695, 0
    %2706 = vmatprep.subr.mxu0 0.0
    %2707 = vmatpush1.msra.mxu0 0.0
    %2708 = vmatprep.subr.mxu0 0.0
    %2709 = vmatpush1.msra.mxu0 0.0
    %2710 = vmatprep.subr.mxu0 0.0
    %2711 = vmatpush1.msra.mxu0 0.0
    %2712 = vmatprep.subr.mxu0 0.0
    %2713 = vmatpush1.msra.mxu0 0.0
    %2714 = vmatprep.subr.mxu0 0.0
    %2715 = vmatpush1.msra.mxu0 0.0
    %2716 = vmatprep.subr.mxu0 0.0
    %2717 = vmatpush1.msra.mxu0 0.0
    %2718 = vmatprep.subr.mxu0 0.0
    %2719 = vmatpush1.msra.mxu0 0.0
    %2720 = vmatprep.subr.mxu0 0.0
    %2721 = vmatpush1.msra.mxu0 0.0
    %2722 = vmatprep.subr.mxu0 0.0
    %2723 = vmatpush1.msra.mxu0 0.0
    %2724 = vmatprep.subr.mxu0 0.0
    %2725 = vmatpush1.msra.mxu0 0.0
    %2726 = vmatprep.subr.mxu0 0.0
    %2727 = vmatpush1.msra.mxu0 0.0
    %2728 = vmatprep.subr.mxu0 0.0
    %2729 = vmatpush1.msra.mxu0 0.0
    %2730 = vmatprep.subr.mxu0 0.0
    %2731 = vmatpush1.msra.mxu0 0.0
    %2732 = vmatprep.subr.mxu0 0.0
    %2733 = vmatpush1.msra.mxu0 0.0
    %2734 = vmatprep.subr.mxu0 0.0
    %2735 = vmatpush1.msra.mxu0 0.0
    %2736 = vmatprep.subr.mxu0 %v2691
    %2737 = vmatpush1.msra.mxu0 %v2690
    %2738 = vmatprep.subr.mxu0 0.0
    %2739 = vmatpush2.msra.mxu0 0.0
    %2740 = vmatprep.subr.mxu0 0.0
    %2741 = vmatpush2.msra.mxu0 0.0
    %2742 = vmatprep.subr.mxu0 0.0
    %2743 = vmatpush2.msra.mxu0 0.0
    %2744 = vmatprep.subr.mxu0 0.0
    %2745 = vmatpush2.msra.mxu0 0.0
    %2746 = vmatprep.subr.mxu0 0.0
    %2747 = vmatpush2.msra.mxu0 0.0
    %2748 = vmatprep.subr.mxu0 0.0
    %2749 = vmatpush2.msra.mxu0 0.0
    %2750 = vmatprep.subr.mxu0 0.0
    %2751 = vmatpush2.msra.mxu0 0.0
    %2752 = vmatprep.subr.mxu0 0.0
    %2753 = vmatpush2.msra.mxu0 0.0
    %2754 = vmatprep.subr.mxu0 0.0
    %2755 = vmatpush2.msra.mxu0 0.0
    %2756 = vmatprep.subr.mxu0 0.0
    %2757 = vmatpush2.msra.mxu0 0.0
    %2758 = vmatprep.subr.mxu0 0.0
    %2759 = vmatpush2.msra.mxu0 0.0
    %2760 = vmatprep.subr.mxu0 0.0
    %2761 = vmatpush2.msra.mxu0 0.0
    %2762 = vmatprep.subr.mxu0 0.0
    %2763 = vmatpush2.msra.mxu0 0.0
    %2764 = vmatprep.subr.mxu0 0.0
    %2765 = vmatpush2.msra.mxu0 0.0
    %2766 = vmatprep.subr.mxu0 0.0
    %2767 = vmatpush2.msra.mxu0 0.0
    %2768 = vmatprep.subr.mxu0 0.0
    %2769 = vmatpush2.msra.mxu0 0.0
    %2770 = vmatprep.mubr.f32.mxu0 0.0
    %2771 = vmatmul.mubr.f32.gmra.mxu0 %v2704
    %v2772 = vpop.f32.mrf.mxu0
    %v2773 = vadd.f32 %v2701, %v2772
    %v2774 = vpop.f32.mrf.mxu0
    %v2775 = vadd.f32 %v2701, %v2774
    %2776 = vdwg.mxu0
    %2777 = vmatprep.subr.mxu0 0.0
    %2778 = vmatpush1.msra.mxu0 0.0
    %2779 = vmatprep.subr.mxu0 0.0
    %2780 = vmatpush1.msra.mxu0 0.0
    %2781 = vmatprep.subr.mxu0 0.0
    %2782 = vmatpush1.msra.mxu0 0.0
    %2783 = vmatprep.subr.mxu0 0.0
    %2784 = vmatpush1.msra.mxu0 0.0
    %2785 = vmatprep.subr.mxu0 0.0
    %2786 = vmatpush1.msra.mxu0 0.0
    %2787 = vmatprep.subr.mxu0 0.0
    %2788 = vmatpush1.msra.mxu0 0.0
    %2789 = vmatprep.subr.mxu0 0.0
    %2790 = vmatpush1.msra.mxu0 0.0
    %2791 = vmatprep.subr.mxu0 0.0
    %2792 = vmatpush1.msra.mxu0 0.0
    %2793 = vmatprep.subr.mxu0 0.0
    %2794 = vmatpush1.msra.mxu0 0.0
    %2795 = vmatprep.subr.mxu0 0.0
    %2796 = vmatpush1.msra.mxu0 0.0
    %2797 = vmatprep.subr.mxu0 0.0
    %2798 = vmatpush1.msra.mxu0 0.0
    %2799 = vmatprep.subr.mxu0 0.0
    %2800 = vmatpush1.msra.mxu0 0.0
    %2801 = vmatprep.subr.mxu0 0.0
    %2802 = vmatpush1.msra.mxu0 0.0
    %2803 = vmatprep.subr.mxu0 0.0
    %2804 = vmatpush1.msra.mxu0 0.0
    %2805 = vmatprep.subr.mxu0 0.0
    %2806 = vmatpush1.msra.mxu0 0.0
    %2807 = vmatprep.subr.mxu0 %v2693
    %2808 = vmatpush1.msra.mxu0 %v2692
    %2809 = vmatprep.subr.mxu0 0.0
    %2810 = vmatpush2.msra.mxu0 0.0
    %2811 = vmatprep.subr.mxu0 0.0
    %2812 = vmatpush2.msra.mxu0 0.0
    %2813 = vmatprep.subr.mxu0 0.0
    %2814 = vmatpush2.msra.mxu0 0.0
    %2815 = vmatprep.subr.mxu0 0.0
    %2816 = vmatpush2.msra.mxu0 0.0
    %2817 = vmatprep.subr.mxu0 0.0
    %2818 = vmatpush2.msra.mxu0 0.0
    %2819 = vmatprep.subr.mxu0 0.0
    %2820 = vmatpush2.msra.mxu0 0.0
    %2821 = vmatprep.subr.mxu0 0.0
    %2822 = vmatpush2.msra.mxu0 0.0
    %2823 = vmatprep.subr.mxu0 0.0
    %2824 = vmatpush2.msra.mxu0 0.0
    %2825 = vmatprep.subr.mxu0 0.0
    %2826 = vmatpush2.msra.mxu0 0.0
    %2827 = vmatprep.subr.mxu0 0.0
    %2828 = vmatpush2.msra.mxu0 0.0
    %2829 = vmatprep.subr.mxu0 0.0
    %2830 = vmatpush2.msra.mxu0 0.0
    %2831 = vmatprep.subr.mxu0 0.0
    %2832 = vmatpush2.msra.mxu0 0.0
    %2833 = vmatprep.subr.mxu0 0.0
    %2834 = vmatpush2.msra.mxu0 0.0
    %2835 = vmatprep.subr.mxu0 0.0
    %2836 = vmatpush2.msra.mxu0 0.0
    %2837 = vmatprep.subr.mxu0 0.0
    %2838 = vmatpush2.msra.mxu0 0.0
    %2839 = vmatprep.subr.mxu0 0.0
    %2840 = vmatpush2.msra.mxu0 0.0
    %2841 = vmatprep.mubr.f32.mxu0 0.0
    %2842 = vmatmul.mubr.f32.gmra.mxu0 %v2704
    %v2843 = vpop.f32.mrf.mxu0
    %v2844 = vadd.f32 %v2701, %v2843
    %v2845 = vpop.f32.mrf.mxu0
    %v2846 = vadd.f32 %v2701, %v2845
    %2847 = vdwg.mxu0
    %v2848 = vsel %vm2653, %v2773, 0.0
    %v2849 = vsel %vm2654, %v2775, 0.0
    %v2850 = vsel %vm2655, %v2844, 0.0
    %v2851 = vsel %vm2656, %v2846, 0.0
    %v2852 = vadd.f32 %v2848, %v2849
    %v2853 = vadd.f32 %v2852, %v2850
    %v2854 = vadd.f32 %v2853, %v2851
    %2855 = vadd.xlane.f32.xlu0 %v2854
    %v2856 = vpop.xlane.xlu0 %2855
    %v2857 = vmul.f32 %v2848, %v2773
    %v2858 = vmul.f32 %v2849, %v2775
    %v2859 = vmul.f32 %v2850, %v2844
    %v2860 = vmul.f32 %v2851, %v2846
    %v2861 = vadd.f32 %v2857, %v2858
    %v2862 = vadd.f32 %v2861, %v2859
    %v2863 = vadd.f32 %v2862, %v2860
    %2864 = vadd.xlane.f32.xlu0 %v2863
    %v2865 = vpop.xlane.xlu0 %2864
    %v2866 = vmul.f32 %v2856, 0.0625
    %v2867 = vmul.f32 %v2865, 0.0625
    %v2868 = vmul.f32 %v2866, %v2866
    %v2869 = vsub.f32 %v2867, %v2868
    %v2870 = vmax.f32 %v2869, 0.0
    %v2871 = vsub.f32 %v2773, %v2866
    %v2872 = vsub.f32 %v2775, %v2866
    %v2873 = vsub.f32 %v2844, %v2866
    %v2874 = vsub.f32 %v2846, %v2866
    %v2875 = vadd.f32 %v2870, 1e-05
    %v2876 = vrsqrt.pop %v2875
    %v2877 = vmul.f32 %v2871, %v2876
    %v2878 = vmul.f32 %v2872, %v2876
    %v2879 = vmul.f32 %v2873, %v2876
    %v2880 = vmul.f32 %v2874, %v2876
    %v2881 = vadd.f32 %v1880, %v2877
    %v2882 = vadd.f32 %v1879, %v2878
    %v2883 = vadd.f32 %v1878, %v2879
    %v2884 = vadd.f32 %v1877, %v2880
    %2885 = vst [vmem:[#allocation7] sm:$0xff] %v2881
    %2886 = vst [vmem:[#allocation7 + $0x8] sm:$0xff] %v2882
    %2887 = vst [vmem:[#allocation7 + $0x10] sm:$0xff] %v2883
    %2888 = vst [vmem:[#allocation7 + $0x18] sm:$0xff] %v2884
    %v2889 = vld [vmem:[%s1] sm:$0xff]
    %s2890 = scalar_lea.vmem %s0, 32
    %v2891 = vld [vmem:[%s2890] sm:$0xff]
    %v2892 = vld [vmem:[%s2890 + $0x8] sm:$0xff]
    %v2893 = vld [vmem:[%s2890 + $0x10] sm:$0xff]
    %v2894 = vld [vmem:[%s2890 + $0x18] sm:$0xff]
    %v2895 = vld [vmem:[%s4] sm:$0xff]
    %2897 = vset.pattern.permute.xlu0 0
    %2898 = vperm.xlu0 %2897, %v2895
    %v2899 = vpop.permute.xlu0 %2898
    %v2905 = vcombine.high %v2891, %v2891
    %v2906 = vcombine.high %v2892, %v2892
    %v2907 = vcombine.high %v2893, %v2893
    %v2908 = vcombine.high %v2894, %v2894
    %v2910 = vsel %vm103, %v2889, 0
    %v2912 = vsel %vm107, %v2891, 0
    %v2914 = vsel %vm107, %v2905, 0
    %v2916 = vsel %vm107, %v2892, 0
    %v2918 = vsel %vm107, %v2906, 0
    %v2920 = vsel %vm107, %v2893, 0
    %v2922 = vsel %vm107, %v2907, 0
    %v2924 = vsel %vm107, %v2894, 0
    %v2926 = vsel %vm107, %v2908, 0
    %2928 = vmatprep.subr.mxu0 0.0
    %2929 = vmatpush1.msra.mxu0 0.0
    %2930 = vmatprep.subr.mxu0 0.0
    %2931 = vmatpush1.msra.mxu0 0.0
    %2932 = vmatprep.subr.mxu0 0.0
    %2933 = vmatpush1.msra.mxu0 0.0
    %2934 = vmatprep.subr.mxu0 0.0
    %2935 = vmatpush1.msra.mxu0 0.0
    %2936 = vmatprep.subr.mxu0 0.0
    %2937 = vmatpush1.msra.mxu0 0.0
    %2938 = vmatprep.subr.mxu0 0.0
    %2939 = vmatpush1.msra.mxu0 0.0
    %2940 = vmatprep.subr.mxu0 0.0
    %2941 = vmatpush1.msra.mxu0 0.0
    %2942 = vmatprep.subr.mxu0 0.0
    %2943 = vmatpush1.msra.mxu0 0.0
    %2944 = vmatprep.subr.mxu0 0.0
    %2945 = vmatpush1.msra.mxu0 0.0
    %2946 = vmatprep.subr.mxu0 0.0
    %2947 = vmatpush1.msra.mxu0 0.0
    %2948 = vmatprep.subr.mxu0 0.0
    %2949 = vmatpush1.msra.mxu0 0.0
    %2950 = vmatprep.subr.mxu0 0.0
    %2951 = vmatpush1.msra.mxu0 0.0
    %2952 = vmatprep.subr.mxu0 0.0
    %2953 = vmatpush1.msra.mxu0 0.0
    %2954 = vmatprep.subr.mxu0 0.0
    %2955 = vmatpush1.msra.mxu0 0.0
    %2956 = vmatprep.subr.mxu0 0.0
    %2957 = vmatpush1.msra.mxu0 0.0
    %2958 = vmatprep.subr.mxu0 %v2914
    %2959 = vmatpush1.msra.mxu0 %v2912
    %2960 = vmatprep.subr.mxu0 0.0
    %2961 = vmatpush2.msra.mxu0 0.0
    %2962 = vmatprep.subr.mxu0 0.0
    %2963 = vmatpush2.msra.mxu0 0.0
    %2964 = vmatprep.subr.mxu0 0.0
    %2965 = vmatpush2.msra.mxu0 0.0
    %2966 = vmatprep.subr.mxu0 0.0
    %2967 = vmatpush2.msra.mxu0 0.0
    %2968 = vmatprep.subr.mxu0 0.0
    %2969 = vmatpush2.msra.mxu0 0.0
    %2970 = vmatprep.subr.mxu0 0.0
    %2971 = vmatpush2.msra.mxu0 0.0
    %2972 = vmatprep.subr.mxu0 0.0
    %2973 = vmatpush2.msra.mxu0 0.0
    %2974 = vmatprep.subr.mxu0 0.0
    %2975 = vmatpush2.msra.mxu0 0.0
    %2976 = vmatprep.subr.mxu0 0.0
    %2977 = vmatpush2.msra.mxu0 0.0
    %2978 = vmatprep.subr.mxu0 0.0
    %2979 = vmatpush2.msra.mxu0 0.0
    %2980 = vmatprep.subr.mxu0 0.0
    %2981 = vmatpush2.msra.mxu0 0.0
    %2982 = vmatprep.subr.mxu0 0.0
    %2983 = vmatpush2.msra.mxu0 0.0
    %2984 = vmatprep.subr.mxu0 0.0
    %2985 = vmatpush2.msra.mxu0 0.0
    %2986 = vmatprep.subr.mxu0 0.0
    %2987 = vmatpush2.msra.mxu0 0.0
    %2988 = vmatprep.subr.mxu0 0.0
    %2989 = vmatpush2.msra.mxu0 0.0
    %2990 = vmatprep.subr.mxu0 0.0
    %2991 = vmatpush2.msra.mxu0 0.0
    %2992 = vmatprep.mubr.f32.mxu0 0.0
    %2993 = vmatmul.mubr.f32.gmra.mxu0 %v2910
    %v2994 = vpop.f32.mrf.mxu0
    %v2995 = vadd.f32 %v2899, %v2994
    %v2996 = vpop.f32.mrf.mxu0
    %v2997 = vadd.f32 %v2899, %v2996
    %2998 = vdwg.mxu0
    %2999 = vmatprep.subr.mxu0 0.0
    %3000 = vmatpush1.msra.mxu0 0.0
    %3001 = vmatprep.subr.mxu0 0.0
    %3002 = vmatpush1.msra.mxu0 0.0
    %3003 = vmatprep.subr.mxu0 0.0
    %3004 = vmatpush1.msra.mxu0 0.0
    %3005 = vmatprep.subr.mxu0 0.0
    %3006 = vmatpush1.msra.mxu0 0.0
    %3007 = vmatprep.subr.mxu0 0.0
    %3008 = vmatpush1.msra.mxu0 0.0
    %3009 = vmatprep.subr.mxu0 0.0
    %3010 = vmatpush1.msra.mxu0 0.0
    %3011 = vmatprep.subr.mxu0 0.0
    %3012 = vmatpush1.msra.mxu0 0.0
    %3013 = vmatprep.subr.mxu0 0.0
    %3014 = vmatpush1.msra.mxu0 0.0
    %3015 = vmatprep.subr.mxu0 0.0
    %3016 = vmatpush1.msra.mxu0 0.0
    %3017 = vmatprep.subr.mxu0 0.0
    %3018 = vmatpush1.msra.mxu0 0.0
    %3019 = vmatprep.subr.mxu0 0.0
    %3020 = vmatpush1.msra.mxu0 0.0
    %3021 = vmatprep.subr.mxu0 0.0
    %3022 = vmatpush1.msra.mxu0 0.0
    %3023 = vmatprep.subr.mxu0 0.0
    %3024 = vmatpush1.msra.mxu0 0.0
    %3025 = vmatprep.subr.mxu0 0.0
    %3026 = vmatpush1.msra.mxu0 0.0
    %3027 = vmatprep.subr.mxu0 0.0
    %3028 = vmatpush1.msra.mxu0 0.0
    %3029 = vmatprep.subr.mxu0 %v2918
    %3030 = vmatpush1.msra.mxu0 %v2916
    %3031 = vmatprep.subr.mxu0 0.0
    %3032 = vmatpush2.msra.mxu0 0.0
    %3033 = vmatprep.subr.mxu0 0.0
    %3034 = vmatpush2.msra.mxu0 0.0
    %3035 = vmatprep.subr.mxu0 0.0
    %3036 = vmatpush2.msra.mxu0 0.0
    %3037 = vmatprep.subr.mxu0 0.0
    %3038 = vmatpush2.msra.mxu0 0.0
    %3039 = vmatprep.subr.mxu0 0.0
    %3040 = vmatpush2.msra.mxu0 0.0
    %3041 = vmatprep.subr.mxu0 0.0
    %3042 = vmatpush2.msra.mxu0 0.0
    %3043 = vmatprep.subr.mxu0 0.0
    %3044 = vmatpush2.msra.mxu0 0.0
    %3045 = vmatprep.subr.mxu0 0.0
    %3046 = vmatpush2.msra.mxu0 0.0
    %3047 = vmatprep.subr.mxu0 0.0
    %3048 = vmatpush2.msra.mxu0 0.0
    %3049 = vmatprep.subr.mxu0 0.0
    %3050 = vmatpush2.msra.mxu0 0.0
    %3051 = vmatprep.subr.mxu0 0.0
    %3052 = vmatpush2.msra.mxu0 0.0
    %3053 = vmatprep.subr.mxu0 0.0
    %3054 = vmatpush2.msra.mxu0 0.0
    %3055 = vmatprep.subr.mxu0 0.0
    %3056 = vmatpush2.msra.mxu0 0.0
    %3057 = vmatprep.subr.mxu0 0.0
    %3058 = vmatpush2.msra.mxu0 0.0
    %3059 = vmatprep.subr.mxu0 0.0
    %3060 = vmatpush2.msra.mxu0 0.0
    %3061 = vmatprep.subr.mxu0 0.0
    %3062 = vmatpush2.msra.mxu0 0.0
    %3063 = vmatprep.mubr.f32.mxu0 0.0
    %3064 = vmatmul.mubr.f32.gmra.mxu0 %v2910
    %v3065 = vpop.f32.mrf.mxu0
    %v3066 = vadd.f32 %v2899, %v3065
    %v3067 = vpop.f32.mrf.mxu0
    %v3068 = vadd.f32 %v2899, %v3067
    %3069 = vdwg.mxu0
    %3070 = vmatprep.subr.mxu0 0.0
    %3071 = vmatpush1.msra.mxu0 0.0
    %3072 = vmatprep.subr.mxu0 0.0
    %3073 = vmatpush1.msra.mxu0 0.0
    %3074 = vmatprep.subr.mxu0 0.0
    %3075 = vmatpush1.msra.mxu0 0.0
    %3076 = vmatprep.subr.mxu0 0.0
    %3077 = vmatpush1.msra.mxu0 0.0
    %3078 = vmatprep.subr.mxu0 0.0
    %3079 = vmatpush1.msra.mxu0 0.0
    %3080 = vmatprep.subr.mxu0 0.0
    %3081 = vmatpush1.msra.mxu0 0.0
    %3082 = vmatprep.subr.mxu0 0.0
    %3083 = vmatpush1.msra.mxu0 0.0
    %3084 = vmatprep.subr.mxu0 0.0
    %3085 = vmatpush1.msra.mxu0 0.0
    %3086 = vmatprep.subr.mxu0 0.0
    %3087 = vmatpush1.msra.mxu0 0.0
    %3088 = vmatprep.subr.mxu0 0.0
    %3089 = vmatpush1.msra.mxu0 0.0
    %3090 = vmatprep.subr.mxu0 0.0
    %3091 = vmatpush1.msra.mxu0 0.0
    %3092 = vmatprep.subr.mxu0 0.0
    %3093 = vmatpush1.msra.mxu0 0.0
    %3094 = vmatprep.subr.mxu0 0.0
    %3095 = vmatpush1.msra.mxu0 0.0
    %3096 = vmatprep.subr.mxu0 0.0
    %3097 = vmatpush1.msra.mxu0 0.0
    %3098 = vmatprep.subr.mxu0 0.0
    %3099 = vmatpush1.msra.mxu0 0.0
    %3100 = vmatprep.subr.mxu0 %v2922
    %3101 = vmatpush1.msra.mxu0 %v2920
    %3102 = vmatprep.subr.mxu0 0.0
    %3103 = vmatpush2.msra.mxu0 0.0
    %3104 = vmatprep.subr.mxu0 0.0
    %3105 = vmatpush2.msra.mxu0 0.0
    %3106 = vmatprep.subr.mxu0 0.0
    %3107 = vmatpush2.msra.mxu0 0.0
    %3108 = vmatprep.subr.mxu0 0.0
    %3109 = vmatpush2.msra.mxu0 0.0
    %3110 = vmatprep.subr.mxu0 0.0
    %3111 = vmatpush2.msra.mxu0 0.0
    %3112 = vmatprep.subr.mxu0 0.0
    %3113 = vmatpush2.msra.mxu0 0.0
    %3114 = vmatprep.subr.mxu0 0.0
    %3115 = vmatpush2.msra.mxu0 0.0
    %3116 = vmatprep.subr.mxu0 0.0
    %3117 = vmatpush2.msra.mxu0 0.0
    %3118 = vmatprep.subr.mxu0 0.0
    %3119 = vmatpush2.msra.mxu0 0.0
    %3120 = vmatprep.subr.mxu0 0.0
    %3121 = vmatpush2.msra.mxu0 0.0
    %3122 = vmatprep.subr.mxu0 0.0
    %3123 = vmatpush2.msra.mxu0 0.0
    %3124 = vmatprep.subr.mxu0 0.0
    %3125 = vmatpush2.msra.mxu0 0.0
    %3126 = vmatprep.subr.mxu0 0.0
    %3127 = vmatpush2.msra.mxu0 0.0
    %3128 = vmatprep.subr.mxu0 0.0
    %3129 = vmatpush2.msra.mxu0 0.0
    %3130 = vmatprep.subr.mxu0 0.0
    %3131 = vmatpush2.msra.mxu0 0.0
    %3132 = vmatprep.subr.mxu0 0.0
    %3133 = vmatpush2.msra.mxu0 0.0
    %3134 = vmatprep.mubr.f32.mxu0 0.0
    %3135 = vmatmul.mubr.f32.gmra.mxu0 %v2910
    %v3136 = vpop.f32.mrf.mxu0
    %v3137 = vadd.f32 %v2899, %v3136
    %v3138 = vpop.f32.mrf.mxu0
    %v3139 = vadd.f32 %v2899, %v3138
    %3140 = vdwg.mxu0
    %3141 = vmatprep.subr.mxu0 0.0
    %3142 = vmatpush1.msra.mxu0 0.0
    %3143 = vmatprep.subr.mxu0 0.0
    %3144 = vmatpush1.msra.mxu0 0.0
    %3145 = vmatprep.subr.mxu0 0.0
    %3146 = vmatpush1.msra.mxu0 0.0
    %3147 = vmatprep.subr.mxu0 0.0
    %3148 = vmatpush1.msra.mxu0 0.0
    %3149 = vmatprep.subr.mxu0 0.0
    %3150 = vmatpush1.msra.mxu0 0.0
    %3151 = vmatprep.subr.mxu0 0.0
    %3152 = vmatpush1.msra.mxu0 0.0
    %3153 = vmatprep.subr.mxu0 0.0
    %3154 = vmatpush1.msra.mxu0 0.0
    %3155 = vmatprep.subr.mxu0 0.0
    %3156 = vmatpush1.msra.mxu0 0.0
    %3157 = vmatprep.subr.mxu0 0.0
    %3158 = vmatpush1.msra.mxu0 0.0
    %3159 = vmatprep.subr.mxu0 0.0
    %3160 = vmatpush1.msra.mxu0 0.0
    %3161 = vmatprep.subr.mxu0 0.0
    %3162 = vmatpush1.msra.mxu0 0.0
    %3163 = vmatprep.subr.mxu0 0.0
    %3164 = vmatpush1.msra.mxu0 0.0
    %3165 = vmatprep.subr.mxu0 0.0
    %3166 = vmatpush1.msra.mxu0 0.0
    %3167 = vmatprep.subr.mxu0 0.0
    %3168 = vmatpush1.msra.mxu0 0.0
    %3169 = vmatprep.subr.mxu0 0.0
    %3170 = vmatpush1.msra.mxu0 0.0
    %3171 = vmatprep.subr.mxu0 %v2926
    %3172 = vmatpush1.msra.mxu0 %v2924
    %3173 = vmatprep.subr.mxu0 0.0
    %3174 = vmatpush2.msra.mxu0 0.0
    %3175 = vmatprep.subr.mxu0 0.0
    %3176 = vmatpush2.msra.mxu0 0.0
    %3177 = vmatprep.subr.mxu0 0.0
    %3178 = vmatpush2.msra.mxu0 0.0
    %3179 = vmatprep.subr.mxu0 0.0
    %3180 = vmatpush2.msra.mxu0 0.0
    %3181 = vmatprep.subr.mxu0 0.0
    %3182 = vmatpush2.msra.mxu0 0.0
    %3183 = vmatprep.subr.mxu0 0.0
    %3184 = vmatpush2.msra.mxu0 0.0
    %3185 = vmatprep.subr.mxu0 0.0
    %3186 = vmatpush2.msra.mxu0 0.0
    %3187 = vmatprep.subr.mxu0 0.0
    %3188 = vmatpush2.msra.mxu0 0.0
    %3189 = vmatprep.subr.mxu0 0.0
    %3190 = vmatpush2.msra.mxu0 0.0
    %3191 = vmatprep.subr.mxu0 0.0
    %3192 = vmatpush2.msra.mxu0 0.0
    %3193 = vmatprep.subr.mxu0 0.0
    %3194 = vmatpush2.msra.mxu0 0.0
    %3195 = vmatprep.subr.mxu0 0.0
    %3196 = vmatpush2.msra.mxu0 0.0
    %3197 = vmatprep.subr.mxu0 0.0
    %3198 = vmatpush2.msra.mxu0 0.0
    %3199 = vmatprep.subr.mxu0 0.0
    %3200 = vmatpush2.msra.mxu0 0.0
    %3201 = vmatprep.subr.mxu0 0.0
    %3202 = vmatpush2.msra.mxu0 0.0
    %3203 = vmatprep.subr.mxu0 0.0
    %3204 = vmatpush2.msra.mxu0 0.0
    %3205 = vmatprep.mubr.f32.mxu0 0.0
    %3206 = vmatmul.mubr.f32.gmra.mxu0 %v2910
    %v3207 = vpop.f32.mrf.mxu0
    %v3208 = vadd.f32 %v2899, %v3207
    %v3209 = vpop.f32.mrf.mxu0
    %v3210 = vadd.f32 %v2899, %v3209
    %3211 = vdwg.mxu0
    %3212 = vrot.lane.b32.xlu0 %v2997, 127
    %v3213 = vpop.permute.xlu0 %3212
    %3214 = vrot.lane.b32.xlu0 %v3066, 127
    %v3215 = vpop.permute.xlu0 %3214
    %3216 = vrot.lane.b32.xlu0 %v3068, 127
    %v3217 = vpop.permute.xlu0 %3216
    %3218 = vrot.lane.b32.xlu0 %v3137, 127
    %v3219 = vpop.permute.xlu0 %3218
    %3220 = vrot.lane.b32.xlu0 %v3139, 127
    %v3221 = vpop.permute.xlu0 %3220
    %3222 = vrot.lane.b32.xlu0 %v3208, 127
    %v3223 = vpop.permute.xlu0 %3222
    %3224 = vrot.lane.b32.xlu0 %v3210, 127
    %v3225 = vpop.permute.xlu0 %3224
    %v3226 = vsel %vm422, %v3223, %v3225
    %v3227 = vsel %vm422, %v3221, %v3223
    %v3228 = vsel %vm422, %v3219, %v3221
    %v3229 = vsel %vm422, %v3217, %v3219
    %v3230 = vsel %vm422, %v3215, %v3217
    %v3231 = vsel %vm422, %v3213, %v3215
    %v3232 = vld [vmem:[#allocation2] sm:$0xff]
    %v3233 = vld [vmem:[%s430] sm:$0xff]
    %3235 = vset.pattern.permute.xlu0 0
    %3236 = vperm.xlu0 %3235, %v3233
    %v3237 = vpop.permute.xlu0 %3236
    %v3240 = vsel %vm437, %v3232, 0
    %3242 = vmatprep.subr.mxu0 0.0
    %3243 = vmatpush1.msra.mxu0 0.0
    %3244 = vmatprep.subr.mxu0 0.0
    %3245 = vmatpush1.msra.mxu0 0.0
    %3246 = vmatprep.subr.mxu0 0.0
    %3247 = vmatpush1.msra.mxu0 0.0
    %3248 = vmatprep.subr.mxu0 0.0
    %3249 = vmatpush1.msra.mxu0 0.0
    %3250 = vmatprep.subr.mxu0 0.0
    %3251 = vmatpush1.msra.mxu0 0.0
    %3252 = vmatprep.subr.mxu0 0.0
    %3253 = vmatpush1.msra.mxu0 0.0
    %3254 = vmatprep.subr.mxu0 0.0
    %3255 = vmatpush1.msra.mxu0 0.0
    %3256 = vmatprep.subr.mxu0 0.0
    %3257 = vmatpush1.msra.mxu0 0.0
    %3258 = vmatprep.subr.mxu0 0.0
    %3259 = vmatpush1.msra.mxu0 0.0
    %3260 = vmatprep.subr.mxu0 0.0
    %3261 = vmatpush1.msra.mxu0 0.0
    %3262 = vmatprep.subr.mxu0 0.0
    %3263 = vmatpush1.msra.mxu0 0.0
    %3264 = vmatprep.subr.mxu0 0.0
    %3265 = vmatpush1.msra.mxu0 0.0
    %3266 = vmatprep.subr.mxu0 0.0
    %3267 = vmatpush1.msra.mxu0 0.0
    %3268 = vmatprep.subr.mxu0 0.0
    %3269 = vmatpush1.msra.mxu0 0.0
    %3270 = vmatprep.subr.mxu0 0.0
    %3271 = vmatpush1.msra.mxu0 0.0
    %3272 = vmatprep.subr.mxu0 %v2997
    %3273 = vmatpush1.msra.mxu0 %v2995
    %3274 = vmatprep.subr.mxu0 0.0
    %3275 = vmatpush2.msra.mxu0 0.0
    %3276 = vmatprep.subr.mxu0 0.0
    %3277 = vmatpush2.msra.mxu0 0.0
    %3278 = vmatprep.subr.mxu0 0.0
    %3279 = vmatpush2.msra.mxu0 0.0
    %3280 = vmatprep.subr.mxu0 0.0
    %3281 = vmatpush2.msra.mxu0 0.0
    %3282 = vmatprep.subr.mxu0 0.0
    %3283 = vmatpush2.msra.mxu0 0.0
    %3284 = vmatprep.subr.mxu0 0.0
    %3285 = vmatpush2.msra.mxu0 0.0
    %3286 = vmatprep.subr.mxu0 0.0
    %3287 = vmatpush2.msra.mxu0 0.0
    %3288 = vmatprep.subr.mxu0 0.0
    %3289 = vmatpush2.msra.mxu0 0.0
    %3290 = vmatprep.subr.mxu0 0.0
    %3291 = vmatpush2.msra.mxu0 0.0
    %3292 = vmatprep.subr.mxu0 0.0
    %3293 = vmatpush2.msra.mxu0 0.0
    %3294 = vmatprep.subr.mxu0 0.0
    %3295 = vmatpush2.msra.mxu0 0.0
    %3296 = vmatprep.subr.mxu0 0.0
    %3297 = vmatpush2.msra.mxu0 0.0
    %3298 = vmatprep.subr.mxu0 0.0
    %3299 = vmatpush2.msra.mxu0 0.0
    %3300 = vmatprep.subr.mxu0 0.0
    %3301 = vmatpush2.msra.mxu0 0.0
    %3302 = vmatprep.subr.mxu0 0.0
    %3303 = vmatpush2.msra.mxu0 0.0
    %3304 = vmatprep.subr.mxu0 0.0
    %3305 = vmatpush2.msra.mxu0 0.0
    %3306 = vmatprep.mubr.f32.mxu0 0.0
    %3307 = vmatmul.mubr.f32.gmra.mxu0 %v3240
    %v3308 = vpop.f32.mrf.mxu0
    %v3309 = vadd.f32 %v3237, %v3308
    %v3310 = vpop.f32.mrf.mxu0
    %v3311 = vadd.f32 %v3237, %v3310
    %3312 = vdwg.mxu0
    %3313 = vmatprep.subr.mxu0 0.0
    %3314 = vmatpush1.msra.mxu0 0.0
    %3315 = vmatprep.subr.mxu0 0.0
    %3316 = vmatpush1.msra.mxu0 0.0
    %3317 = vmatprep.subr.mxu0 0.0
    %3318 = vmatpush1.msra.mxu0 0.0
    %3319 = vmatprep.subr.mxu0 0.0
    %3320 = vmatpush1.msra.mxu0 0.0
    %3321 = vmatprep.subr.mxu0 0.0
    %3322 = vmatpush1.msra.mxu0 0.0
    %3323 = vmatprep.subr.mxu0 0.0
    %3324 = vmatpush1.msra.mxu0 0.0
    %3325 = vmatprep.subr.mxu0 0.0
    %3326 = vmatpush1.msra.mxu0 0.0
    %3327 = vmatprep.subr.mxu0 0.0
    %3328 = vmatpush1.msra.mxu0 0.0
    %3329 = vmatprep.subr.mxu0 0.0
    %3330 = vmatpush1.msra.mxu0 0.0
    %3331 = vmatprep.subr.mxu0 0.0
    %3332 = vmatpush1.msra.mxu0 0.0
    %3333 = vmatprep.subr.mxu0 0.0
    %3334 = vmatpush1.msra.mxu0 0.0
    %3335 = vmatprep.subr.mxu0 0.0
    %3336 = vmatpush1.msra.mxu0 0.0
    %3337 = vmatprep.subr.mxu0 0.0
    %3338 = vmatpush1.msra.mxu0 0.0
    %3339 = vmatprep.subr.mxu0 0.0
    %3340 = vmatpush1.msra.mxu0 0.0
    %3341 = vmatprep.subr.mxu0 0.0
    %3342 = vmatpush1.msra.mxu0 0.0
    %3343 = vmatprep.subr.mxu0 %v3068
    %3344 = vmatpush1.msra.mxu0 %v3066
    %3345 = vmatprep.subr.mxu0 0.0
    %3346 = vmatpush2.msra.mxu0 0.0
    %3347 = vmatprep.subr.mxu0 0.0
    %3348 = vmatpush2.msra.mxu0 0.0
    %3349 = vmatprep.subr.mxu0 0.0
    %3350 = vmatpush2.msra.mxu0 0.0
    %3351 = vmatprep.subr.mxu0 0.0
    %3352 = vmatpush2.msra.mxu0 0.0
    %3353 = vmatprep.subr.mxu0 0.0
    %3354 = vmatpush2.msra.mxu0 0.0
    %3355 = vmatprep.subr.mxu0 0.0
    %3356 = vmatpush2.msra.mxu0 0.0
    %3357 = vmatprep.subr.mxu0 0.0
    %3358 = vmatpush2.msra.mxu0 0.0
    %3359 = vmatprep.subr.mxu0 0.0
    %3360 = vmatpush2.msra.mxu0 0.0
    %3361 = vmatprep.subr.mxu0 0.0
    %3362 = vmatpush2.msra.mxu0 0.0
    %3363 = vmatprep.subr.mxu0 0.0
    %3364 = vmatpush2.msra.mxu0 0.0
    %3365 = vmatprep.subr.mxu0 0.0
    %3366 = vmatpush2.msra.mxu0 0.0
    %3367 = vmatprep.subr.mxu0 0.0
    %3368 = vmatpush2.msra.mxu0 0.0
    %3369 = vmatprep.subr.mxu0 0.0
    %3370 = vmatpush2.msra.mxu0 0.0
    %3371 = vmatprep.subr.mxu0 0.0
    %3372 = vmatpush2.msra.mxu0 0.0
    %3373 = vmatprep.subr.mxu0 0.0
    %3374 = vmatpush2.msra.mxu0 0.0
    %3375 = vmatprep.subr.mxu0 0.0
    %3376 = vmatpush2.msra.mxu0 0.0
    %3377 = vmatprep.mubr.f32.mxu0 0.0
    %3378 = vmatmul.mubr.f32.gmra.mxu0 %v3240
    %v3379 = vpop.f32.mrf.mxu0
    %v3380 = vadd.f32 %v3237, %v3379
    %v3381 = vpop.f32.mrf.mxu0
    %v3382 = vadd.f32 %v3237, %v3381
    %3383 = vdwg.mxu0
    %3384 = vmatprep.subr.mxu0 0.0
    %3385 = vmatpush1.msra.mxu0 0.0
    %3386 = vmatprep.subr.mxu0 0.0
    %3387 = vmatpush1.msra.mxu0 0.0
    %3388 = vmatprep.subr.mxu0 0.0
    %3389 = vmatpush1.msra.mxu0 0.0
    %3390 = vmatprep.subr.mxu0 0.0
    %3391 = vmatpush1.msra.mxu0 0.0
    %3392 = vmatprep.subr.mxu0 0.0
    %3393 = vmatpush1.msra.mxu0 0.0
    %3394 = vmatprep.subr.mxu0 0.0
    %3395 = vmatpush1.msra.mxu0 0.0
    %3396 = vmatprep.subr.mxu0 0.0
    %3397 = vmatpush1.msra.mxu0 0.0
    %3398 = vmatprep.subr.mxu0 0.0
    %3399 = vmatpush1.msra.mxu0 0.0
    %3400 = vmatprep.subr.mxu0 0.0
    %3401 = vmatpush1.msra.mxu0 0.0
    %3402 = vmatprep.subr.mxu0 0.0
    %3403 = vmatpush1.msra.mxu0 0.0
    %3404 = vmatprep.subr.mxu0 0.0
    %3405 = vmatpush1.msra.mxu0 0.0
    %3406 = vmatprep.subr.mxu0 0.0
    %3407 = vmatpush1.msra.mxu0 0.0
    %3408 = vmatprep.subr.mxu0 0.0
    %3409 = vmatpush1.msra.mxu0 0.0
    %3410 = vmatprep.subr.mxu0 0.0
    %3411 = vmatpush1.msra.mxu0 0.0
    %3412 = vmatprep.subr.mxu0 0.0
    %3413 = vmatpush1.msra.mxu0 0.0
    %3414 = vmatprep.subr.mxu0 %v3139
    %3415 = vmatpush1.msra.mxu0 %v3137
    %3416 = vmatprep.subr.mxu0 0.0
    %3417 = vmatpush2.msra.mxu0 0.0
    %3418 = vmatprep.subr.mxu0 0.0
    %3419 = vmatpush2.msra.mxu0 0.0
    %3420 = vmatprep.subr.mxu0 0.0
    %3421 = vmatpush2.msra.mxu0 0.0
    %3422 = vmatprep.subr.mxu0 0.0
    %3423 = vmatpush2.msra.mxu0 0.0
    %3424 = vmatprep.subr.mxu0 0.0
    %3425 = vmatpush2.msra.mxu0 0.0
    %3426 = vmatprep.subr.mxu0 0.0
    %3427 = vmatpush2.msra.mxu0 0.0
    %3428 = vmatprep.subr.mxu0 0.0
    %3429 = vmatpush2.msra.mxu0 0.0
    %3430 = vmatprep.subr.mxu0 0.0
    %3431 = vmatpush2.msra.mxu0 0.0
    %3432 = vmatprep.subr.mxu0 0.0
    %3433 = vmatpush2.msra.mxu0 0.0
    %3434 = vmatprep.subr.mxu0 0.0
    %3435 = vmatpush2.msra.mxu0 0.0
    %3436 = vmatprep.subr.mxu0 0.0
    %3437 = vmatpush2.msra.mxu0 0.0
    %3438 = vmatprep.subr.mxu0 0.0
    %3439 = vmatpush2.msra.mxu0 0.0
    %3440 = vmatprep.subr.mxu0 0.0
    %3441 = vmatpush2.msra.mxu0 0.0
    %3442 = vmatprep.subr.mxu0 0.0
    %3443 = vmatpush2.msra.mxu0 0.0
    %3444 = vmatprep.subr.mxu0 0.0
    %3445 = vmatpush2.msra.mxu0 0.0
    %3446 = vmatprep.subr.mxu0 0.0
    %3447 = vmatpush2.msra.mxu0 0.0
    %3448 = vmatprep.mubr.f32.mxu0 0.0
    %3449 = vmatmul.mubr.f32.gmra.mxu0 %v3240
    %v3450 = vpop.f32.mrf.mxu0
    %v3451 = vadd.f32 %v3237, %v3450
    %v3452 = vpop.f32.mrf.mxu0
    %v3453 = vadd.f32 %v3237, %v3452
    %3454 = vdwg.mxu0
    %3455 = vmatprep.subr.mxu0 0.0
    %3456 = vmatpush1.msra.mxu0 0.0
    %3457 = vmatprep.subr.mxu0 0.0
    %3458 = vmatpush1.msra.mxu0 0.0
    %3459 = vmatprep.subr.mxu0 0.0
    %3460 = vmatpush1.msra.mxu0 0.0
    %3461 = vmatprep.subr.mxu0 0.0
    %3462 = vmatpush1.msra.mxu0 0.0
    %3463 = vmatprep.subr.mxu0 0.0
    %3464 = vmatpush1.msra.mxu0 0.0
    %3465 = vmatprep.subr.mxu0 0.0
    %3466 = vmatpush1.msra.mxu0 0.0
    %3467 = vmatprep.subr.mxu0 0.0
    %3468 = vmatpush1.msra.mxu0 0.0
    %3469 = vmatprep.subr.mxu0 0.0
    %3470 = vmatpush1.msra.mxu0 0.0
    %3471 = vmatprep.subr.mxu0 0.0
    %3472 = vmatpush1.msra.mxu0 0.0
    %3473 = vmatprep.subr.mxu0 0.0
    %3474 = vmatpush1.msra.mxu0 0.0
    %3475 = vmatprep.subr.mxu0 0.0
    %3476 = vmatpush1.msra.mxu0 0.0
    %3477 = vmatprep.subr.mxu0 0.0
    %3478 = vmatpush1.msra.mxu0 0.0
    %3479 = vmatprep.subr.mxu0 0.0
    %3480 = vmatpush1.msra.mxu0 0.0
    %3481 = vmatprep.subr.mxu0 0.0
    %3482 = vmatpush1.msra.mxu0 0.0
    %3483 = vmatprep.subr.mxu0 0.0
    %3484 = vmatpush1.msra.mxu0 0.0
    %3485 = vmatprep.subr.mxu0 %v3210
    %3486 = vmatpush1.msra.mxu0 %v3208
    %3487 = vmatprep.subr.mxu0 0.0
    %3488 = vmatpush2.msra.mxu0 0.0
    %3489 = vmatprep.subr.mxu0 0.0
    %3490 = vmatpush2.msra.mxu0 0.0
    %3491 = vmatprep.subr.mxu0 0.0
    %3492 = vmatpush2.msra.mxu0 0.0
    %3493 = vmatprep.subr.mxu0 0.0
    %3494 = vmatpush2.msra.mxu0 0.0
    %3495 = vmatprep.subr.mxu0 0.0
    %3496 = vmatpush2.msra.mxu0 0.0
    %3497 = vmatprep.subr.mxu0 0.0
    %3498 = vmatpush2.msra.mxu0 0.0
    %3499 = vmatprep.subr.mxu0 0.0
    %3500 = vmatpush2.msra.mxu0 0.0
    %3501 = vmatprep.subr.mxu0 0.0
    %3502 = vmatpush2.msra.mxu0 0.0
    %3503 = vmatprep.subr.mxu0 0.0
    %3504 = vmatpush2.msra.mxu0 0.0
    %3505 = vmatprep.subr.mxu0 0.0
    %3506 = vmatpush2.msra.mxu0 0.0
    %3507 = vmatprep.subr.mxu0 0.0
    %3508 = vmatpush2.msra.mxu0 0.0
    %3509 = vmatprep.subr.mxu0 0.0
    %3510 = vmatpush2.msra.mxu0 0.0
    %3511 = vmatprep.subr.mxu0 0.0
    %3512 = vmatpush2.msra.mxu0 0.0
    %3513 = vmatprep.subr.mxu0 0.0
    %3514 = vmatpush2.msra.mxu0 0.0
    %3515 = vmatprep.subr.mxu0 0.0
    %3516 = vmatpush2.msra.mxu0 0.0
    %3517 = vmatprep.subr.mxu0 0.0
    %3518 = vmatpush2.msra.mxu0 0.0
    %3519 = vmatprep.mubr.f32.mxu0 0.0
    %3520 = vmatmul.mubr.f32.gmra.mxu0 %v3240
    %v3521 = vpop.f32.mrf.mxu0
    %v3522 = vadd.f32 %v3237, %v3521
    %v3523 = vpop.f32.mrf.mxu0
    %v3524 = vadd.f32 %v3237, %v3523
    %3525 = vdwg.mxu0
    %v3526 = vsel %vm733, %v3309, 0.0
    %v3527 = vsel %vm734, %v3311, 0.0
    %v3528 = vsel %vm735, %v3380, 0.0
    %v3529 = vsel %vm736, %v3382, 0.0
    %v3530 = vsel %vm737, %v3451, 0.0
    %v3531 = vsel %vm738, %v3453, 0.0
    %v3532 = vsel %vm739, %v3522, 0.0
    %v3533 = vsel %vm740, %v3524, 0.0
    %v3534 = vadd.f32 %v3526, %v3527
    %v3535 = vadd.f32 %v3534, %v3528
    %v3536 = vadd.f32 %v3535, %v3529
    %v3537 = vadd.f32 %v3536, %v3530
    %v3538 = vadd.f32 %v3537, %v3531
    %v3539 = vadd.f32 %v3538, %v3532
    %v3540 = vadd.f32 %v3539, %v3533
    %3541 = vadd.xlane.f32.xlu0 %v3540
    %v3542 = vpop.xlane.xlu0 %3541
    %v3543 = vmul.f32 %v3526, %v3309
    %v3544 = vmul.f32 %v3527, %v3311
    %v3545 = vmul.f32 %v3528, %v3380
    %v3546 = vmul.f32 %v3529, %v3382
    %v3547 = vmul.f32 %v3530, %v3451
    %v3548 = vmul.f32 %v3531, %v3453
    %v3549 = vmul.f32 %v3532, %v3522
    %v3550 = vmul.f32 %v3533, %v3524
    %v3551 = vadd.f32 %v3543, %v3544
    %v3552 = vadd.f32 %v3551, %v3545
    %v3553 = vadd.f32 %v3552, %v3546
    %v3554 = vadd.f32 %v3553, %v3547
    %v3555 = vadd.f32 %v3554, %v3548
    %v3556 = vadd.f32 %v3555, %v3549
    %v3557 = vadd.f32 %v3556, %v3550
    %3558 = vadd.xlane.f32.xlu0 %v3557
    %v3559 = vpop.xlane.xlu0 %3558
    %v3560 = vmul.f32 %v3542, 0.015625
    %v3561 = vmul.f32 %v3559, 0.015625
    %v3562 = vmul.f32 %v3560, %v3560
    %v3563 = vsub.f32 %v3561, %v3562
    %v3564 = vmax.f32 %v3563, 0.0
    %v3565 = vsub.f32 %v3309, %v3560
    %v3566 = vsub.f32 %v3311, %v3560
    %v3567 = vsub.f32 %v3380, %v3560
    %v3568 = vsub.f32 %v3382, %v3560
    %v3569 = vsub.f32 %v3451, %v3560
    %v3570 = vsub.f32 %v3453, %v3560
    %v3571 = vsub.f32 %v3522, %v3560
    %v3572 = vsub.f32 %v3524, %v3560
    %v3573 = vadd.f32 %v3564, 1e-05
    %v3574 = vrsqrt.pop %v3573
    %v3575 = vmul.f32 %v3565, %v3574
    %v3576 = vmul.f32 %v3566, %v3574
    %v3577 = vmul.f32 %v3567, %v3574
    %v3578 = vmul.f32 %v3568, %v3574
    %v3579 = vmul.f32 %v3569, %v3574
    %v3580 = vmul.f32 %v3570, %v3574
    %v3581 = vmul.f32 %v3571, %v3574
    %v3582 = vmul.f32 %v3572, %v3574
    %v3583 = vmax.f32 %v3575, 0.0
    %v3584 = vmax.f32 %v3576, 0.0
    %v3585 = vmax.f32 %v3577, 0.0
    %v3586 = vmax.f32 %v3578, 0.0
    %v3587 = vmax.f32 %v3579, 0.0
    %v3588 = vmax.f32 %v3580, 0.0
    %v3589 = vmax.f32 %v3581, 0.0
    %v3590 = vmax.f32 %v3582, 0.0
    %3591 = vrot.lane.b32.xlu0 %v3583, 127
    %v3592 = vpop.permute.xlu0 %3591
    %3593 = vrot.lane.b32.xlu0 %v3584, 127
    %v3594 = vpop.permute.xlu0 %3593
    %3595 = vrot.lane.b32.xlu0 %v3585, 127
    %v3596 = vpop.permute.xlu0 %3595
    %3597 = vrot.lane.b32.xlu0 %v3586, 127
    %v3598 = vpop.permute.xlu0 %3597
    %3599 = vrot.lane.b32.xlu0 %v3587, 127
    %v3600 = vpop.permute.xlu0 %3599
    %3601 = vrot.lane.b32.xlu0 %v3588, 127
    %v3602 = vpop.permute.xlu0 %3601
    %3603 = vrot.lane.b32.xlu0 %v3589, 127
    %v3604 = vpop.permute.xlu0 %3603
    %3605 = vrot.lane.b32.xlu0 %v3590, 127
    %v3606 = vpop.permute.xlu0 %3605
    %v3607 = vsel %vm422, %v3604, %v3606
    %v3608 = vsel %vm422, %v3602, %v3604
    %v3609 = vsel %vm422, %v3600, %v3602
    %v3610 = vsel %vm422, %v3598, %v3600
    %v3611 = vsel %vm422, %v3596, %v3598
    %v3612 = vsel %vm422, %v3594, %v3596
    %v3613 = vsel %vm422, %v3592, %v3594
    %v3614 = vsel %vm422, %v3606, %v3592
    %3615 = vrot.lane.b32.xlu0 %v3583, 126
    %v3616 = vpop.permute.xlu0 %3615
    %3617 = vrot.lane.b32.xlu0 %v3584, 126
    %v3618 = vpop.permute.xlu0 %3617
    %3619 = vrot.lane.b32.xlu0 %v3585, 126
    %v3620 = vpop.permute.xlu0 %3619
    %3621 = vrot.lane.b32.xlu0 %v3586, 126
    %v3622 = vpop.permute.xlu0 %3621
    %3623 = vrot.lane.b32.xlu0 %v3587, 126
    %v3624 = vpop.permute.xlu0 %3623
    %3625 = vrot.lane.b32.xlu0 %v3588, 126
    %v3626 = vpop.permute.xlu0 %3625
    %3627 = vrot.lane.b32.xlu0 %v3589, 126
    %v3628 = vpop.permute.xlu0 %3627
    %3629 = vrot.lane.b32.xlu0 %v3590, 126
    %v3630 = vpop.permute.xlu0 %3629
    %v3631 = vsel %vm846, %v3628, %v3630
    %v3632 = vsel %vm846, %v3626, %v3628
    %v3633 = vsel %vm846, %v3624, %v3626
    %v3634 = vsel %vm846, %v3622, %v3624
    %v3635 = vsel %vm846, %v3620, %v3622
    %v3636 = vsel %vm846, %v3618, %v3620
    %v3637 = vsel %vm846, %v3616, %v3618
    %v3638 = vsel %vm846, %v3630, %v3616
    %v3639 = vld [vmem:[#allocation5] sm:$0xff]
    %v3640 = vld [vmem:[%s856] sm:$0xff]
    %v3642 = vsel %vm858, %v3640, 0
    %3644 = vmatprep.subr.mxu0 0.0
    %3645 = vmatpush1.msra.mxu0 0.0
    %3646 = vmatprep.subr.mxu0 0.0
    %3647 = vmatpush1.msra.mxu0 0.0
    %3648 = vmatprep.subr.mxu0 0.0
    %3649 = vmatpush1.msra.mxu0 0.0
    %3650 = vmatprep.subr.mxu0 0.0
    %3651 = vmatpush1.msra.mxu0 0.0
    %3652 = vmatprep.subr.mxu0 0.0
    %3653 = vmatpush1.msra.mxu0 0.0
    %3654 = vmatprep.subr.mxu0 0.0
    %3655 = vmatpush1.msra.mxu0 0.0
    %3656 = vmatprep.subr.mxu0 0.0
    %3657 = vmatpush1.msra.mxu0 0.0
    %3658 = vmatprep.subr.mxu0 0.0
    %3659 = vmatpush1.msra.mxu0 0.0
    %3660 = vmatprep.subr.mxu0 0.0
    %3661 = vmatpush1.msra.mxu0 0.0
    %3662 = vmatprep.subr.mxu0 0.0
    %3663 = vmatpush1.msra.mxu0 0.0
    %3664 = vmatprep.subr.mxu0 0.0
    %3665 = vmatpush1.msra.mxu0 0.0
    %3666 = vmatprep.subr.mxu0 0.0
    %3667 = vmatpush1.msra.mxu0 0.0
    %3668 = vmatprep.subr.mxu0 0.0
    %3669 = vmatpush1.msra.mxu0 0.0
    %3670 = vmatprep.subr.mxu0 %v3635
    %3671 = vmatpush1.msra.mxu0 %v3636
    %3672 = vmatprep.subr.mxu0 %v3611
    %3673 = vmatpush1.msra.mxu0 %v3612
    %3674 = vmatprep.subr.mxu0 %v3585
    %3675 = vmatpush1.msra.mxu0 %v3584
    %3676 = vmatprep.subr.mxu0 0.0
    %3677 = vmatpush2.msra.mxu0 0.0
    %3678 = vmatprep.subr.mxu0 0.0
    %3679 = vmatpush2.msra.mxu0 0.0
    %3680 = vmatprep.subr.mxu0 0.0
    %3681 = vmatpush2.msra.mxu0 0.0
    %3682 = vmatprep.subr.mxu0 0.0
    %3683 = vmatpush2.msra.mxu0 0.0
    %3684 = vmatprep.subr.mxu0 0.0
    %3685 = vmatpush2.msra.mxu0 0.0
    %3686 = vmatprep.subr.mxu0 0.0
    %3687 = vmatpush2.msra.mxu0 0.0
    %3688 = vmatprep.subr.mxu0 0.0
    %3689 = vmatpush2.msra.mxu0 0.0
    %3690 = vmatprep.subr.mxu0 0.0
    %3691 = vmatpush2.msra.mxu0 0.0
    %3692 = vmatprep.subr.mxu0 0.0
    %3693 = vmatpush2.msra.mxu0 0.0
    %3694 = vmatprep.subr.mxu0 0.0
    %3695 = vmatpush2.msra.mxu0 0.0
    %3696 = vmatprep.subr.mxu0 0.0
    %3697 = vmatpush2.msra.mxu0 0.0
    %3698 = vmatprep.subr.mxu0 0.0
    %3699 = vmatpush2.msra.mxu0 0.0
    %3700 = vmatprep.subr.mxu0 0.0
    %3701 = vmatpush2.msra.mxu0 0.0
    %3702 = vmatprep.subr.mxu0 0.0
    %3703 = vmatpush2.msra.mxu0 0.0
    %3704 = vmatprep.subr.mxu0 0.0
    %3705 = vmatpush2.msra.mxu0 0.0
    %3706 = vmatprep.subr.mxu0 0.0
    %3707 = vmatpush2.msra.mxu0 0.0
    %3708 = vmatprep.mubr.f32.mxu0 0.0
    %3709 = vmatmul.mubr.f32.gmra.mxu0 %v3642
    %v3710 = vpop.f32.mrf.mxu0
    %v3711 = vadd.f32 0.0, %v3710
    %v3712 = vpop.f32.mrf.mxu0
    %v3713 = vadd.f32 0.0, %v3712
    %3714 = vdwg.mxu0
    %3715 = vmatprep.subr.mxu0 0.0
    %3716 = vmatpush1.msra.mxu0 0.0
    %3717 = vmatprep.subr.mxu0 0.0
    %3718 = vmatpush1.msra.mxu0 0.0
    %3719 = vmatprep.subr.mxu0 0.0
    %3720 = vmatpush1.msra.mxu0 0.0
    %3721 = vmatprep.subr.mxu0 0.0
    %3722 = vmatpush1.msra.mxu0 0.0
    %3723 = vmatprep.subr.mxu0 0.0
    %3724 = vmatpush1.msra.mxu0 0.0
    %3725 = vmatprep.subr.mxu0 0.0
    %3726 = vmatpush1.msra.mxu0 0.0
    %3727 = vmatprep.subr.mxu0 0.0
    %3728 = vmatpush1.msra.mxu0 0.0
    %3729 = vmatprep.subr.mxu0 0.0
    %3730 = vmatpush1.msra.mxu0 0.0
    %3731 = vmatprep.subr.mxu0 0.0
    %3732 = vmatpush1.msra.mxu0 0.0
    %3733 = vmatprep.subr.mxu0 0.0
    %3734 = vmatpush1.msra.mxu0 0.0
    %3735 = vmatprep.subr.mxu0 0.0
    %3736 = vmatpush1.msra.mxu0 0.0
    %3737 = vmatprep.subr.mxu0 0.0
    %3738 = vmatpush1.msra.mxu0 0.0
    %3739 = vmatprep.subr.mxu0 0.0
    %3740 = vmatpush1.msra.mxu0 0.0
    %3741 = vmatprep.subr.mxu0 %v3633
    %3742 = vmatpush1.msra.mxu0 %v3634
    %3743 = vmatprep.subr.mxu0 %v3609
    %3744 = vmatpush1.msra.mxu0 %v3610
    %3745 = vmatprep.subr.mxu0 %v3587
    %3746 = vmatpush1.msra.mxu0 %v3586
    %3747 = vmatprep.subr.mxu0 0.0
    %3748 = vmatpush2.msra.mxu0 0.0
    %3749 = vmatprep.subr.mxu0 0.0
    %3750 = vmatpush2.msra.mxu0 0.0
    %3751 = vmatprep.subr.mxu0 0.0
    %3752 = vmatpush2.msra.mxu0 0.0
    %3753 = vmatprep.subr.mxu0 0.0
    %3754 = vmatpush2.msra.mxu0 0.0
    %3755 = vmatprep.subr.mxu0 0.0
    %3756 = vmatpush2.msra.mxu0 0.0
    %3757 = vmatprep.subr.mxu0 0.0
    %3758 = vmatpush2.msra.mxu0 0.0
    %3759 = vmatprep.subr.mxu0 0.0
    %3760 = vmatpush2.msra.mxu0 0.0
    %3761 = vmatprep.subr.mxu0 0.0
    %3762 = vmatpush2.msra.mxu0 0.0
    %3763 = vmatprep.subr.mxu0 0.0
    %3764 = vmatpush2.msra.mxu0 0.0
    %3765 = vmatprep.subr.mxu0 0.0
    %3766 = vmatpush2.msra.mxu0 0.0
    %3767 = vmatprep.subr.mxu0 0.0
    %3768 = vmatpush2.msra.mxu0 0.0
    %3769 = vmatprep.subr.mxu0 0.0
    %3770 = vmatpush2.msra.mxu0 0.0
    %3771 = vmatprep.subr.mxu0 0.0
    %3772 = vmatpush2.msra.mxu0 0.0
    %3773 = vmatprep.subr.mxu0 0.0
    %3774 = vmatpush2.msra.mxu0 0.0
    %3775 = vmatprep.subr.mxu0 0.0
    %3776 = vmatpush2.msra.mxu0 0.0
    %3777 = vmatprep.subr.mxu0 0.0
    %3778 = vmatpush2.msra.mxu0 0.0
    %3779 = vmatprep.mubr.f32.mxu0 0.0
    %3780 = vmatmul.mubr.f32.gmra.mxu0 %v3642
    %v3781 = vpop.f32.mrf.mxu0
    %v3782 = vadd.f32 0.0, %v3781
    %v3783 = vpop.f32.mrf.mxu0
    %v3784 = vadd.f32 0.0, %v3783
    %3785 = vdwg.mxu0
    %3786 = vmatprep.subr.mxu0 0.0
    %3787 = vmatpush1.msra.mxu0 0.0
    %3788 = vmatprep.subr.mxu0 0.0
    %3789 = vmatpush1.msra.mxu0 0.0
    %3790 = vmatprep.subr.mxu0 0.0
    %3791 = vmatpush1.msra.mxu0 0.0
    %3792 = vmatprep.subr.mxu0 0.0
    %3793 = vmatpush1.msra.mxu0 0.0
    %3794 = vmatprep.subr.mxu0 0.0
    %3795 = vmatpush1.msra.mxu0 0.0
    %3796 = vmatprep.subr.mxu0 0.0
    %3797 = vmatpush1.msra.mxu0 0.0
    %3798 = vmatprep.subr.mxu0 0.0
    %3799 = vmatpush1.msra.mxu0 0.0
    %3800 = vmatprep.subr.mxu0 0.0
    %3801 = vmatpush1.msra.mxu0 0.0
    %3802 = vmatprep.subr.mxu0 0.0
    %3803 = vmatpush1.msra.mxu0 0.0
    %3804 = vmatprep.subr.mxu0 0.0
    %3805 = vmatpush1.msra.mxu0 0.0
    %3806 = vmatprep.subr.mxu0 0.0
    %3807 = vmatpush1.msra.mxu0 0.0
    %3808 = vmatprep.subr.mxu0 0.0
    %3809 = vmatpush1.msra.mxu0 0.0
    %3810 = vmatprep.subr.mxu0 0.0
    %3811 = vmatpush1.msra.mxu0 0.0
    %3812 = vmatprep.subr.mxu0 %v3631
    %3813 = vmatpush1.msra.mxu0 %v3632
    %3814 = vmatprep.subr.mxu0 %v3607
    %3815 = vmatpush1.msra.mxu0 %v3608
    %3816 = vmatprep.subr.mxu0 %v3589
    %3817 = vmatpush1.msra.mxu0 %v3588
    %3818 = vmatprep.subr.mxu0 0.0
    %3819 = vmatpush2.msra.mxu0 0.0
    %3820 = vmatprep.subr.mxu0 0.0
    %3821 = vmatpush2.msra.mxu0 0.0
    %3822 = vmatprep.subr.mxu0 0.0
    %3823 = vmatpush2.msra.mxu0 0.0
    %3824 = vmatprep.subr.mxu0 0.0
    %3825 = vmatpush2.msra.mxu0 0.0
    %3826 = vmatprep.subr.mxu0 0.0
    %3827 = vmatpush2.msra.mxu0 0.0
    %3828 = vmatprep.subr.mxu0 0.0
    %3829 = vmatpush2.msra.mxu0 0.0
    %3830 = vmatprep.subr.mxu0 0.0
    %3831 = vmatpush2.msra.mxu0 0.0
    %3832 = vmatprep.subr.mxu0 0.0
    %3833 = vmatpush2.msra.mxu0 0.0
    %3834 = vmatprep.subr.mxu0 0.0
    %3835 = vmatpush2.msra.mxu0 0.0
    %3836 = vmatprep.subr.mxu0 0.0
    %3837 = vmatpush2.msra.mxu0 0.0
    %3838 = vmatprep.subr.mxu0 0.0
    %3839 = vmatpush2.msra.mxu0 0.0
    %3840 = vmatprep.subr.mxu0 0.0
    %3841 = vmatpush2.msra.mxu0 0.0
    %3842 = vmatprep.subr.mxu0 0.0
    %3843 = vmatpush2.msra.mxu0 0.0
    %3844 = vmatprep.subr.mxu0 0.0
    %3845 = vmatpush2.msra.mxu0 0.0
    %3846 = vmatprep.subr.mxu0 0.0
    %3847 = vmatpush2.msra.mxu0 0.0
    %3848 = vmatprep.subr.mxu0 0.0
    %3849 = vmatpush2.msra.mxu0 0.0
    %3850 = vmatprep.mubr.f32.mxu0 0.0
    %3851 = vmatmul.mubr.f32.gmra.mxu0 %v3642
    %v3852 = vpop.f32.mrf.mxu0
    %v3853 = vadd.f32 0.0, %v3852
    %v3854 = vpop.f32.mrf.mxu0
    %v3855 = vadd.f32 0.0, %v3854
    %3856 = vdwg.mxu0
    %v3858 = vsel %vm858, %v3639, 0
    %3860 = vmatprep.subr.mxu0 0.0
    %3861 = vmatpush1.msra.mxu0 0.0
    %3862 = vmatprep.subr.mxu0 0.0
    %3863 = vmatpush1.msra.mxu0 0.0
    %3864 = vmatprep.subr.mxu0 0.0
    %3865 = vmatpush1.msra.mxu0 0.0
    %3866 = vmatprep.subr.mxu0 0.0
    %3867 = vmatpush1.msra.mxu0 0.0
    %3868 = vmatprep.subr.mxu0 0.0
    %3869 = vmatpush1.msra.mxu0 0.0
    %3870 = vmatprep.subr.mxu0 0.0
    %3871 = vmatpush1.msra.mxu0 0.0
    %3872 = vmatprep.subr.mxu0 0.0
    %3873 = vmatpush1.msra.mxu0 0.0
    %3874 = vmatprep.subr.mxu0 0.0
    %3875 = vmatpush1.msra.mxu0 0.0
    %3876 = vmatprep.subr.mxu0 0.0
    %3877 = vmatpush1.msra.mxu0 0.0
    %3878 = vmatprep.subr.mxu0 0.0
    %3879 = vmatpush1.msra.mxu0 0.0
    %3880 = vmatprep.subr.mxu0 0.0
    %3881 = vmatpush1.msra.mxu0 0.0
    %3882 = vmatprep.subr.mxu0 0.0
    %3883 = vmatpush1.msra.mxu0 0.0
    %3884 = vmatprep.subr.mxu0 0.0
    %3885 = vmatpush1.msra.mxu0 0.0
    %3886 = vmatprep.subr.mxu0 %v3636
    %3887 = vmatpush1.msra.mxu0 %v3637
    %3888 = vmatprep.subr.mxu0 %v3612
    %3889 = vmatpush1.msra.mxu0 %v3613
    %3890 = vmatprep.subr.mxu0 %v3584
    %3891 = vmatpush1.msra.mxu0 %v3583
    %3892 = vmatprep.subr.mxu0 0.0
    %3893 = vmatpush2.msra.mxu0 0.0
    %3894 = vmatprep.subr.mxu0 0.0
    %3895 = vmatpush2.msra.mxu0 0.0
    %3896 = vmatprep.subr.mxu0 0.0
    %3897 = vmatpush2.msra.mxu0 0.0
    %3898 = vmatprep.subr.mxu0 0.0
    %3899 = vmatpush2.msra.mxu0 0.0
    %3900 = vmatprep.subr.mxu0 0.0
    %3901 = vmatpush2.msra.mxu0 0.0
    %3902 = vmatprep.subr.mxu0 0.0
    %3903 = vmatpush2.msra.mxu0 0.0
    %3904 = vmatprep.subr.mxu0 0.0
    %3905 = vmatpush2.msra.mxu0 0.0
    %3906 = vmatprep.subr.mxu0 0.0
    %3907 = vmatpush2.msra.mxu0 0.0
    %3908 = vmatprep.subr.mxu0 0.0
    %3909 = vmatpush2.msra.mxu0 0.0
    %3910 = vmatprep.subr.mxu0 0.0
    %3911 = vmatpush2.msra.mxu0 0.0
    %3912 = vmatprep.subr.mxu0 0.0
    %3913 = vmatpush2.msra.mxu0 0.0
    %3914 = vmatprep.subr.mxu0 0.0
    %3915 = vmatpush2.msra.mxu0 0.0
    %3916 = vmatprep.subr.mxu0 0.0
    %3917 = vmatpush2.msra.mxu0 0.0
    %3918 = vmatprep.subr.mxu0 0.0
    %3919 = vmatpush2.msra.mxu0 0.0
    %3920 = vmatprep.subr.mxu0 0.0
    %3921 = vmatpush2.msra.mxu0 0.0
    %3922 = vmatprep.subr.mxu0 0.0
    %3923 = vmatpush2.msra.mxu0 0.0
    %3924 = vmatprep.mubr.f32.mxu0 0.0
    %3925 = vmatmul.mubr.f32.gmra.mxu0 %v3858
    %v3926 = vpop.f32.mrf.mxu0
    %v3927 = vadd.f32 %v3711, %v3926
    %v3928 = vpop.f32.mrf.mxu0
    %v3929 = vadd.f32 %v3713, %v3928
    %3930 = vdwg.mxu0
    %3931 = vmatprep.subr.mxu0 0.0
    %3932 = vmatpush1.msra.mxu0 0.0
    %3933 = vmatprep.subr.mxu0 0.0
    %3934 = vmatpush1.msra.mxu0 0.0
    %3935 = vmatprep.subr.mxu0 0.0
    %3936 = vmatpush1.msra.mxu0 0.0
    %3937 = vmatprep.subr.mxu0 0.0
    %3938 = vmatpush1.msra.mxu0 0.0
    %3939 = vmatprep.subr.mxu0 0.0
    %3940 = vmatpush1.msra.mxu0 0.0
    %3941 = vmatprep.subr.mxu0 0.0
    %3942 = vmatpush1.msra.mxu0 0.0
    %3943 = vmatprep.subr.mxu0 0.0
    %3944 = vmatpush1.msra.mxu0 0.0
    %3945 = vmatprep.subr.mxu0 0.0
    %3946 = vmatpush1.msra.mxu0 0.0
    %3947 = vmatprep.subr.mxu0 0.0
    %3948 = vmatpush1.msra.mxu0 0.0
    %3949 = vmatprep.subr.mxu0 0.0
    %3950 = vmatpush1.msra.mxu0 0.0
    %3951 = vmatprep.subr.mxu0 0.0
    %3952 = vmatpush1.msra.mxu0 0.0
    %3953 = vmatprep.subr.mxu0 0.0
    %3954 = vmatpush1.msra.mxu0 0.0
    %3955 = vmatprep.subr.mxu0 0.0
    %3956 = vmatpush1.msra.mxu0 0.0
    %3957 = vmatprep.subr.mxu0 %v3634
    %3958 = vmatpush1.msra.mxu0 %v3635
    %3959 = vmatprep.subr.mxu0 %v3610
    %3960 = vmatpush1.msra.mxu0 %v3611
    %3961 = vmatprep.subr.mxu0 %v3586
    %3962 = vmatpush1.msra.mxu0 %v3585
    %3963 = vmatprep.subr.mxu0 0.0
    %3964 = vmatpush2.msra.mxu0 0.0
    %3965 = vmatprep.subr.mxu0 0.0
    %3966 = vmatpush2.msra.mxu0 0.0
    %3967 = vmatprep.subr.mxu0 0.0
    %3968 = vmatpush2.msra.mxu0 0.0
    %3969 = vmatprep.subr.mxu0 0.0
    %3970 = vmatpush2.msra.mxu0 0.0
    %3971 = vmatprep.subr.mxu0 0.0
    %3972 = vmatpush2.msra.mxu0 0.0
    %3973 = vmatprep.subr.mxu0 0.0
    %3974 = vmatpush2.msra.mxu0 0.0
    %3975 = vmatprep.subr.mxu0 0.0
    %3976 = vmatpush2.msra.mxu0 0.0
    %3977 = vmatprep.subr.mxu0 0.0
    %3978 = vmatpush2.msra.mxu0 0.0
    %3979 = vmatprep.subr.mxu0 0.0
    %3980 = vmatpush2.msra.mxu0 0.0
    %3981 = vmatprep.subr.mxu0 0.0
    %3982 = vmatpush2.msra.mxu0 0.0
    %3983 = vmatprep.subr.mxu0 0.0
    %3984 = vmatpush2.msra.mxu0 0.0
    %3985 = vmatprep.subr.mxu0 0.0
    %3986 = vmatpush2.msra.mxu0 0.0
    %3987 = vmatprep.subr.mxu0 0.0
    %3988 = vmatpush2.msra.mxu0 0.0
    %3989 = vmatprep.subr.mxu0 0.0
    %3990 = vmatpush2.msra.mxu0 0.0
    %3991 = vmatprep.subr.mxu0 0.0
    %3992 = vmatpush2.msra.mxu0 0.0
    %3993 = vmatprep.subr.mxu0 0.0
    %3994 = vmatpush2.msra.mxu0 0.0
    %3995 = vmatprep.mubr.f32.mxu0 0.0
    %3996 = vmatmul.mubr.f32.gmra.mxu0 %v3858
    %v3997 = vpop.f32.mrf.mxu0
    %v3998 = vadd.f32 %v3782, %v3997
    %v3999 = vpop.f32.mrf.mxu0
    %v4000 = vadd.f32 %v3784, %v3999
    %4001 = vdwg.mxu0
    %4002 = vmatprep.subr.mxu0 0.0
    %4003 = vmatpush1.msra.mxu0 0.0
    %4004 = vmatprep.subr.mxu0 0.0
    %4005 = vmatpush1.msra.mxu0 0.0
    %4006 = vmatprep.subr.mxu0 0.0
    %4007 = vmatpush1.msra.mxu0 0.0
    %4008 = vmatprep.subr.mxu0 0.0
    %4009 = vmatpush1.msra.mxu0 0.0
    %4010 = vmatprep.subr.mxu0 0.0
    %4011 = vmatpush1.msra.mxu0 0.0
    %4012 = vmatprep.subr.mxu0 0.0
    %4013 = vmatpush1.msra.mxu0 0.0
    %4014 = vmatprep.subr.mxu0 0.0
    %4015 = vmatpush1.msra.mxu0 0.0
    %4016 = vmatprep.subr.mxu0 0.0
    %4017 = vmatpush1.msra.mxu0 0.0
    %4018 = vmatprep.subr.mxu0 0.0
    %4019 = vmatpush1.msra.mxu0 0.0
    %4020 = vmatprep.subr.mxu0 0.0
    %4021 = vmatpush1.msra.mxu0 0.0
    %4022 = vmatprep.subr.mxu0 0.0
    %4023 = vmatpush1.msra.mxu0 0.0
    %4024 = vmatprep.subr.mxu0 0.0
    %4025 = vmatpush1.msra.mxu0 0.0
    %4026 = vmatprep.subr.mxu0 0.0
    %4027 = vmatpush1.msra.mxu0 0.0
    %4028 = vmatprep.subr.mxu0 %v3632
    %4029 = vmatpush1.msra.mxu0 %v3633
    %4030 = vmatprep.subr.mxu0 %v3608
    %4031 = vmatpush1.msra.mxu0 %v3609
    %4032 = vmatprep.subr.mxu0 %v3588
    %4033 = vmatpush1.msra.mxu0 %v3587
    %4034 = vmatprep.subr.mxu0 0.0
    %4035 = vmatpush2.msra.mxu0 0.0
    %4036 = vmatprep.subr.mxu0 0.0
    %4037 = vmatpush2.msra.mxu0 0.0
    %4038 = vmatprep.subr.mxu0 0.0
    %4039 = vmatpush2.msra.mxu0 0.0
    %4040 = vmatprep.subr.mxu0 0.0
    %4041 = vmatpush2.msra.mxu0 0.0
    %4042 = vmatprep.subr.mxu0 0.0
    %4043 = vmatpush2.msra.mxu0 0.0
    %4044 = vmatprep.subr.mxu0 0.0
    %4045 = vmatpush2.msra.mxu0 0.0
    %4046 = vmatprep.subr.mxu0 0.0
    %4047 = vmatpush2.msra.mxu0 0.0
    %4048 = vmatprep.subr.mxu0 0.0
    %4049 = vmatpush2.msra.mxu0 0.0
    %4050 = vmatprep.subr.mxu0 0.0
    %4051 = vmatpush2.msra.mxu0 0.0
    %4052 = vmatprep.subr.mxu0 0.0
    %4053 = vmatpush2.msra.mxu0 0.0
    %4054 = vmatprep.subr.mxu0 0.0
    %4055 = vmatpush2.msra.mxu0 0.0
    %4056 = vmatprep.subr.mxu0 0.0
    %4057 = vmatpush2.msra.mxu0 0.0
    %4058 = vmatprep.subr.mxu0 0.0
    %4059 = vmatpush2.msra.mxu0 0.0
    %4060 = vmatprep.subr.mxu0 0.0
    %4061 = vmatpush2.msra.mxu0 0.0
    %4062 = vmatprep.subr.mxu0 0.0
    %4063 = vmatpush2.msra.mxu0 0.0
    %4064 = vmatprep.subr.mxu0 0.0
    %4065 = vmatpush2.msra.mxu0 0.0
    %4066 = vmatprep.mubr.f32.mxu0 0.0
    %4067 = vmatmul.mubr.f32.gmra.mxu0 %v3858
    %v4068 = vpop.f32.mrf.mxu0
    %v4069 = vadd.f32 %v3853, %v4068
    %v4070 = vpop.f32.mrf.mxu0
    %v4071 = vadd.f32 %v3855, %v4070
    %4072 = vdwg.mxu0
    %v4073 = vld [vmem:[%s1291] sm:$0xff]
    %v4075 = vsel %vm858, %v4073, 0
    %4077 = vmatprep.subr.mxu0 0.0
    %4078 = vmatpush1.msra.mxu0 0.0
    %4079 = vmatprep.subr.mxu0 0.0
    %4080 = vmatpush1.msra.mxu0 0.0
    %4081 = vmatprep.subr.mxu0 0.0
    %4082 = vmatpush1.msra.mxu0 0.0
    %4083 = vmatprep.subr.mxu0 0.0
    %4084 = vmatpush1.msra.mxu0 0.0
    %4085 = vmatprep.subr.mxu0 0.0
    %4086 = vmatpush1.msra.mxu0 0.0
    %4087 = vmatprep.subr.mxu0 0.0
    %4088 = vmatpush1.msra.mxu0 0.0
    %4089 = vmatprep.subr.mxu0 0.0
    %4090 = vmatpush1.msra.mxu0 0.0
    %4091 = vmatprep.subr.mxu0 0.0
    %4092 = vmatpush1.msra.mxu0 0.0
    %4093 = vmatprep.subr.mxu0 0.0
    %4094 = vmatpush1.msra.mxu0 0.0
    %4095 = vmatprep.subr.mxu0 0.0
    %4096 = vmatpush1.msra.mxu0 0.0
    %4097 = vmatprep.subr.mxu0 0.0
    %4098 = vmatpush1.msra.mxu0 0.0
    %4099 = vmatprep.subr.mxu0 0.0
    %4100 = vmatpush1.msra.mxu0 0.0
    %4101 = vmatprep.subr.mxu0 0.0
    %4102 = vmatpush1.msra.mxu0 0.0
    %4103 = vmatprep.subr.mxu0 %v3634
    %4104 = vmatpush1.msra.mxu0 %v3635
    %4105 = vmatprep.subr.mxu0 %v3610
    %4106 = vmatpush1.msra.mxu0 %v3611
    %4107 = vmatprep.subr.mxu0 %v3586
    %4108 = vmatpush1.msra.mxu0 %v3585
    %4109 = vmatprep.subr.mxu0 0.0
    %4110 = vmatpush2.msra.mxu0 0.0
    %4111 = vmatprep.subr.mxu0 0.0
    %4112 = vmatpush2.msra.mxu0 0.0
    %4113 = vmatprep.subr.mxu0 0.0
    %4114 = vmatpush2.msra.mxu0 0.0
    %4115 = vmatprep.subr.mxu0 0.0
    %4116 = vmatpush2.msra.mxu0 0.0
    %4117 = vmatprep.subr.mxu0 0.0
    %4118 = vmatpush2.msra.mxu0 0.0
    %4119 = vmatprep.subr.mxu0 0.0
    %4120 = vmatpush2.msra.mxu0 0.0
    %4121 = vmatprep.subr.mxu0 0.0
    %4122 = vmatpush2.msra.mxu0 0.0
    %4123 = vmatprep.subr.mxu0 0.0
    %4124 = vmatpush2.msra.mxu0 0.0
    %4125 = vmatprep.subr.mxu0 0.0
    %4126 = vmatpush2.msra.mxu0 0.0
    %4127 = vmatprep.subr.mxu0 0.0
    %4128 = vmatpush2.msra.mxu0 0.0
    %4129 = vmatprep.subr.mxu0 0.0
    %4130 = vmatpush2.msra.mxu0 0.0
    %4131 = vmatprep.subr.mxu0 0.0
    %4132 = vmatpush2.msra.mxu0 0.0
    %4133 = vmatprep.subr.mxu0 0.0
    %4134 = vmatpush2.msra.mxu0 0.0
    %4135 = vmatprep.subr.mxu0 0.0
    %4136 = vmatpush2.msra.mxu0 0.0
    %4137 = vmatprep.subr.mxu0 0.0
    %4138 = vmatpush2.msra.mxu0 0.0
    %4139 = vmatprep.subr.mxu0 0.0
    %4140 = vmatpush2.msra.mxu0 0.0
    %4141 = vmatprep.mubr.f32.mxu0 0.0
    %4142 = vmatmul.mubr.f32.gmra.mxu0 %v4075
    %v4143 = vpop.f32.mrf.mxu0
    %v4144 = vadd.f32 0.0, %v4143
    %v4145 = vpop.f32.mrf.mxu0
    %v4146 = vadd.f32 0.0, %v4145
    %4147 = vdwg.mxu0
    %4148 = vmatprep.subr.mxu0 0.0
    %4149 = vmatpush1.msra.mxu0 0.0
    %4150 = vmatprep.subr.mxu0 0.0
    %4151 = vmatpush1.msra.mxu0 0.0
    %4152 = vmatprep.subr.mxu0 0.0
    %4153 = vmatpush1.msra.mxu0 0.0
    %4154 = vmatprep.subr.mxu0 0.0
    %4155 = vmatpush1.msra.mxu0 0.0
    %4156 = vmatprep.subr.mxu0 0.0
    %4157 = vmatpush1.msra.mxu0 0.0
    %4158 = vmatprep.subr.mxu0 0.0
    %4159 = vmatpush1.msra.mxu0 0.0
    %4160 = vmatprep.subr.mxu0 0.0
    %4161 = vmatpush1.msra.mxu0 0.0
    %4162 = vmatprep.subr.mxu0 0.0
    %4163 = vmatpush1.msra.mxu0 0.0
    %4164 = vmatprep.subr.mxu0 0.0
    %4165 = vmatpush1.msra.mxu0 0.0
    %4166 = vmatprep.subr.mxu0 0.0
    %4167 = vmatpush1.msra.mxu0 0.0
    %4168 = vmatprep.subr.mxu0 0.0
    %4169 = vmatpush1.msra.mxu0 0.0
    %4170 = vmatprep.subr.mxu0 0.0
    %4171 = vmatpush1.msra.mxu0 0.0
    %4172 = vmatprep.subr.mxu0 0.0
    %4173 = vmatpush1.msra.mxu0 0.0
    %4174 = vmatprep.subr.mxu0 %v3632
    %4175 = vmatpush1.msra.mxu0 %v3633
    %4176 = vmatprep.subr.mxu0 %v3608
    %4177 = vmatpush1.msra.mxu0 %v3609
    %4178 = vmatprep.subr.mxu0 %v3588
    %4179 = vmatpush1.msra.mxu0 %v3587
    %4180 = vmatprep.subr.mxu0 0.0
    %4181 = vmatpush2.msra.mxu0 0.0
    %4182 = vmatprep.subr.mxu0 0.0
    %4183 = vmatpush2.msra.mxu0 0.0
    %4184 = vmatprep.subr.mxu0 0.0
    %4185 = vmatpush2.msra.mxu0 0.0
    %4186 = vmatprep.subr.mxu0 0.0
    %4187 = vmatpush2.msra.mxu0 0.0
    %4188 = vmatprep.subr.mxu0 0.0
    %4189 = vmatpush2.msra.mxu0 0.0
    %4190 = vmatprep.subr.mxu0 0.0
    %4191 = vmatpush2.msra.mxu0 0.0
    %4192 = vmatprep.subr.mxu0 0.0
    %4193 = vmatpush2.msra.mxu0 0.0
    %4194 = vmatprep.subr.mxu0 0.0
    %4195 = vmatpush2.msra.mxu0 0.0
    %4196 = vmatprep.subr.mxu0 0.0
    %4197 = vmatpush2.msra.mxu0 0.0
    %4198 = vmatprep.subr.mxu0 0.0
    %4199 = vmatpush2.msra.mxu0 0.0
    %4200 = vmatprep.subr.mxu0 0.0
    %4201 = vmatpush2.msra.mxu0 0.0
    %4202 = vmatprep.subr.mxu0 0.0
    %4203 = vmatpush2.msra.mxu0 0.0
    %4204 = vmatprep.subr.mxu0 0.0
    %4205 = vmatpush2.msra.mxu0 0.0
    %4206 = vmatprep.subr.mxu0 0.0
    %4207 = vmatpush2.msra.mxu0 0.0
    %4208 = vmatprep.subr.mxu0 0.0
    %4209 = vmatpush2.msra.mxu0 0.0
    %4210 = vmatprep.subr.mxu0 0.0
    %4211 = vmatpush2.msra.mxu0 0.0
    %4212 = vmatprep.mubr.f32.mxu0 0.0
    %4213 = vmatmul.mubr.f32.gmra.mxu0 %v4075
    %v4214 = vpop.f32.mrf.mxu0
    %v4215 = vadd.f32 0.0, %v4214
    %v4216 = vpop.f32.mrf.mxu0
    %v4217 = vadd.f32 0.0, %v4216
    %4218 = vdwg.mxu0
    %4219 = vmatprep.subr.mxu0 0.0
    %4220 = vmatpush1.msra.mxu0 0.0
    %4221 = vmatprep.subr.mxu0 0.0
    %4222 = vmatpush1.msra.mxu0 0.0
    %4223 = vmatprep.subr.mxu0 0.0
    %4224 = vmatpush1.msra.mxu0 0.0
    %4225 = vmatprep.subr.mxu0 0.0
    %4226 = vmatpush1.msra.mxu0 0.0
    %4227 = vmatprep.subr.mxu0 0.0
    %4228 = vmatpush1.msra.mxu0 0.0
    %4229 = vmatprep.subr.mxu0 0.0
    %4230 = vmatpush1.msra.mxu0 0.0
    %4231 = vmatprep.subr.mxu0 0.0
    %4232 = vmatpush1.msra.mxu0 0.0
    %4233 = vmatprep.subr.mxu0 0.0
    %4234 = vmatpush1.msra.mxu0 0.0
    %4235 = vmatprep.subr.mxu0 0.0
    %4236 = vmatpush1.msra.mxu0 0.0
    %4237 = vmatprep.subr.mxu0 0.0
    %4238 = vmatpush1.msra.mxu0 0.0
    %4239 = vmatprep.subr.mxu0 0.0
    %4240 = vmatpush1.msra.mxu0 0.0
    %4241 = vmatprep.subr.mxu0 0.0
    %4242 = vmatpush1.msra.mxu0 0.0
    %4243 = vmatprep.subr.mxu0 0.0
    %4244 = vmatpush1.msra.mxu0 0.0
    %4245 = vmatprep.subr.mxu0 %v3638
    %4246 = vmatpush1.msra.mxu0 %v3631
    %4247 = vmatprep.subr.mxu0 %v3614
    %4248 = vmatpush1.msra.mxu0 %v3607
    %4249 = vmatprep.subr.mxu0 %v3590
    %4250 = vmatpush1.msra.mxu0 %v3589
    %4251 = vmatprep.subr.mxu0 0.0
    %4252 = vmatpush2.msra.mxu0 0.0
    %4253 = vmatprep.subr.mxu0 0.0
    %4254 = vmatpush2.msra.mxu0 0.0
    %4255 = vmatprep.subr.mxu0 0.0
    %4256 = vmatpush2.msra.mxu0 0.0
    %4257 = vmatprep.subr.mxu0 0.0
    %4258 = vmatpush2.msra.mxu0 0.0
    %4259 = vmatprep.subr.mxu0 0.0
    %4260 = vmatpush2.msra.mxu0 0.0
    %4261 = vmatprep.subr.mxu0 0.0
    %4262 = vmatpush2.msra.mxu0 0.0
    %4263 = vmatprep.subr.mxu0 0.0
    %4264 = vmatpush2.msra.mxu0 0.0
    %4265 = vmatprep.subr.mxu0 0.0
    %4266 = vmatpush2.msra.mxu0 0.0
    %4267 = vmatprep.subr.mxu0 0.0
    %4268 = vmatpush2.msra.mxu0 0.0
    %4269 = vmatprep.subr.mxu0 0.0
    %4270 = vmatpush2.msra.mxu0 0.0
    %4271 = vmatprep.subr.mxu0 0.0
    %4272 = vmatpush2.msra.mxu0 0.0
    %4273 = vmatprep.subr.mxu0 0.0
    %4274 = vmatpush2.msra.mxu0 0.0
    %4275 = vmatprep.subr.mxu0 0.0
    %4276 = vmatpush2.msra.mxu0 0.0
    %4277 = vmatprep.subr.mxu0 0.0
    %4278 = vmatpush2.msra.mxu0 0.0
    %4279 = vmatprep.subr.mxu0 0.0
    %4280 = vmatpush2.msra.mxu0 0.0
    %4281 = vmatprep.subr.mxu0 0.0
    %4282 = vmatpush2.msra.mxu0 0.0
    %4283 = vmatprep.mubr.f32.mxu0 0.0
    %4284 = vmatmul.mubr.f32.gmra.mxu0 %v4075
    %v4285 = vpop.f32.mrf.mxu0
    %v4286 = vadd.f32 0.0, %v4285
    %v4287 = vpop.f32.mrf.mxu0
    %v4288 = vadd.f32 0.0, %v4287
    %4289 = vdwg.mxu0
    %v4290 = vadd.f32 %v3927, %v4144
    %v4291 = vadd.f32 %v3929, %v4146
    %v4292 = vadd.f32 %v3998, %v4215
    %v4293 = vadd.f32 %v4000, %v4217
    %v4294 = vadd.f32 %v4069, %v4286
    %v4295 = vadd.f32 %v4071, %v4288
    %v4296 = vld [vmem:[%s1515] sm:$0xff]
    %4298 = vset.pattern.permute.xlu0 0
    %4299 = vperm.xlu0 %4298, %v4296
    %v4300 = vpop.permute.xlu0 %4299
    %v4302 = vadd.f32 %v4290, %v4300
    %v4303 = vadd.f32 %v4291, %v4300
    %v4304 = vadd.f32 %v4292, %v4300
    %v4305 = vadd.f32 %v4293, %v4300
    %v4306 = vadd.f32 %v4294, %v4300
    %v4307 = vadd.f32 %v4295, %v4300
    %v4308 = vsel %vm1534, %v4302, 0.0
    %v4309 = vsel %vm1535, %v4303, 0.0
    %v4310 = vsel %vm1536, %v4304, 0.0
    %v4311 = vsel %vm1537, %v4305, 0.0
    %v4312 = vsel %vm1538, %v4306, 0.0
    %v4313 = vsel %vm1539, %v4307, 0.0
    %v4314 = vadd.f32 %v4308, %v4309
    %v4315 = vadd.f32 %v4314, %v4310
    %v4316 = vadd.f32 %v4315, %v4311
    %v4317 = vadd.f32 %v4316, %v4312
    %v4318 = vadd.f32 %v4317, %v4313
    %4319 = vadd.xlane.f32.xlu0 %v4318
    %v4320 = vpop.xlane.xlu0 %4319
    %v4321 = vmul.f32 %v4308, %v4302
    %v4322 = vmul.f32 %v4309, %v4303
    %v4323 = vmul.f32 %v4310, %v4304
    %v4324 = vmul.f32 %v4311, %v4305
    %v4325 = vmul.f32 %v4312, %v4306
    %v4326 = vmul.f32 %v4313, %v4307
    %v4327 = vadd.f32 %v4321, %v4322
    %v4328 = vadd.f32 %v4327, %v4323
    %v4329 = vadd.f32 %v4328, %v4324
    %v4330 = vadd.f32 %v4329, %v4325
    %v4331 = vadd.f32 %v4330, %v4326
    %4332 = vadd.xlane.f32.xlu0 %v4331
    %v4333 = vpop.xlane.xlu0 %4332
    %v4334 = vmul.f32 %v4320, 0.027777778
    %v4335 = vmul.f32 %v4333, 0.027777778
    %v4336 = vmul.f32 %v4334, %v4334
    %v4337 = vsub.f32 %v4335, %v4336
    %v4338 = vmax.f32 %v4337, 0.0
    %v4339 = vsub.f32 %v4302, %v4334
    %v4340 = vsub.f32 %v4303, %v4334
    %v4341 = vsub.f32 %v4304, %v4334
    %v4342 = vsub.f32 %v4305, %v4334
    %v4343 = vsub.f32 %v4306, %v4334
    %v4344 = vsub.f32 %v4307, %v4334
    %v4345 = vadd.f32 %v4338, 1e-05
    %v4346 = vrsqrt.pop %v4345
    %v4347 = vmul.f32 %v4339, %v4346
    %v4348 = vmul.f32 %v4340, %v4346
    %v4349 = vmul.f32 %v4341, %v4346
    %v4350 = vmul.f32 %v4342, %v4346
    %v4351 = vmul.f32 %v4343, %v4346
    %v4352 = vmul.f32 %v4344, %v4346
    %v4353 = vmax.f32 %v4347, 0.0
    %v4354 = vmax.f32 %v4348, 0.0
    %v4355 = vmax.f32 %v4349, 0.0
    %v4356 = vmax.f32 %v4350, 0.0
    %v4357 = vmax.f32 %v4351, 0.0
    %v4358 = vmax.f32 %v4352, 0.0
    %v4359 = vld [vmem:[%s1591] sm:$0xff]
    %v4360 = vld [vmem:[%s1593] sm:$0xff]
    %4362 = vset.pattern.permute.xlu0 0
    %4363 = vperm.xlu0 %4362, %v4360
    %v4364 = vpop.permute.xlu0 %4363
    %v4367 = vsel %vm437, %v4359, 0
    %4369 = vmatprep.subr.mxu0 0.0
    %4370 = vmatpush1.msra.mxu0 0.0
    %4371 = vmatprep.subr.mxu0 0.0
    %4372 = vmatpush1.msra.mxu0 0.0
    %4373 = vmatprep.subr.mxu0 0.0
    %4374 = vmatpush1.msra.mxu0 0.0
    %4375 = vmatprep.subr.mxu0 0.0
    %4376 = vmatpush1.msra.mxu0 0.0
    %4377 = vmatprep.subr.mxu0 0.0
    %4378 = vmatpush1.msra.mxu0 0.0
    %4379 = vmatprep.subr.mxu0 0.0
    %4380 = vmatpush1.msra.mxu0 0.0
    %4381 = vmatprep.subr.mxu0 0.0
    %4382 = vmatpush1.msra.mxu0 0.0
    %4383 = vmatprep.subr.mxu0 0.0
    %4384 = vmatpush1.msra.mxu0 0.0
    %4385 = vmatprep.subr.mxu0 0.0
    %4386 = vmatpush1.msra.mxu0 0.0
    %4387 = vmatprep.subr.mxu0 0.0
    %4388 = vmatpush1.msra.mxu0 0.0
    %4389 = vmatprep.subr.mxu0 0.0
    %4390 = vmatpush1.msra.mxu0 0.0
    %4391 = vmatprep.subr.mxu0 0.0
    %4392 = vmatpush1.msra.mxu0 0.0
    %4393 = vmatprep.subr.mxu0 0.0
    %4394 = vmatpush1.msra.mxu0 0.0
    %4395 = vmatprep.subr.mxu0 0.0
    %4396 = vmatpush1.msra.mxu0 0.0
    %4397 = vmatprep.subr.mxu0 0.0
    %4398 = vmatpush1.msra.mxu0 0.0
    %4399 = vmatprep.subr.mxu0 %v4354
    %4400 = vmatpush1.msra.mxu0 %v4353
    %4401 = vmatprep.subr.mxu0 0.0
    %4402 = vmatpush2.msra.mxu0 0.0
    %4403 = vmatprep.subr.mxu0 0.0
    %4404 = vmatpush2.msra.mxu0 0.0
    %4405 = vmatprep.subr.mxu0 0.0
    %4406 = vmatpush2.msra.mxu0 0.0
    %4407 = vmatprep.subr.mxu0 0.0
    %4408 = vmatpush2.msra.mxu0 0.0
    %4409 = vmatprep.subr.mxu0 0.0
    %4410 = vmatpush2.msra.mxu0 0.0
    %4411 = vmatprep.subr.mxu0 0.0
    %4412 = vmatpush2.msra.mxu0 0.0
    %4413 = vmatprep.subr.mxu0 0.0
    %4414 = vmatpush2.msra.mxu0 0.0
    %4415 = vmatprep.subr.mxu0 0.0
    %4416 = vmatpush2.msra.mxu0 0.0
    %4417 = vmatprep.subr.mxu0 0.0
    %4418 = vmatpush2.msra.mxu0 0.0
    %4419 = vmatprep.subr.mxu0 0.0
    %4420 = vmatpush2.msra.mxu0 0.0
    %4421 = vmatprep.subr.mxu0 0.0
    %4422 = vmatpush2.msra.mxu0 0.0
    %4423 = vmatprep.subr.mxu0 0.0
    %4424 = vmatpush2.msra.mxu0 0.0
    %4425 = vmatprep.subr.mxu0 0.0
    %4426 = vmatpush2.msra.mxu0 0.0
    %4427 = vmatprep.subr.mxu0 0.0
    %4428 = vmatpush2.msra.mxu0 0.0
    %4429 = vmatprep.subr.mxu0 0.0
    %4430 = vmatpush2.msra.mxu0 0.0
    %4431 = vmatprep.subr.mxu0 0.0
    %4432 = vmatpush2.msra.mxu0 0.0
    %4433 = vmatprep.mubr.f32.mxu0 0.0
    %4434 = vmatmul.mubr.f32.gmra.mxu0 %v4367
    %v4435 = vpop.f32.mrf.mxu0
    %v4436 = vadd.f32 %v4364, %v4435
    %v4437 = vpop.f32.mrf.mxu0
    %v4438 = vadd.f32 %v4364, %v4437
    %4439 = vdwg.mxu0
    %4440 = vmatprep.subr.mxu0 0.0
    %4441 = vmatpush1.msra.mxu0 0.0
    %4442 = vmatprep.subr.mxu0 0.0
    %4443 = vmatpush1.msra.mxu0 0.0
    %4444 = vmatprep.subr.mxu0 0.0
    %4445 = vmatpush1.msra.mxu0 0.0
    %4446 = vmatprep.subr.mxu0 0.0
    %4447 = vmatpush1.msra.mxu0 0.0
    %4448 = vmatprep.subr.mxu0 0.0
    %4449 = vmatpush1.msra.mxu0 0.0
    %4450 = vmatprep.subr.mxu0 0.0
    %4451 = vmatpush1.msra.mxu0 0.0
    %4452 = vmatprep.subr.mxu0 0.0
    %4453 = vmatpush1.msra.mxu0 0.0
    %4454 = vmatprep.subr.mxu0 0.0
    %4455 = vmatpush1.msra.mxu0 0.0
    %4456 = vmatprep.subr.mxu0 0.0
    %4457 = vmatpush1.msra.mxu0 0.0
    %4458 = vmatprep.subr.mxu0 0.0
    %4459 = vmatpush1.msra.mxu0 0.0
    %4460 = vmatprep.subr.mxu0 0.0
    %4461 = vmatpush1.msra.mxu0 0.0
    %4462 = vmatprep.subr.mxu0 0.0
    %4463 = vmatpush1.msra.mxu0 0.0
    %4464 = vmatprep.subr.mxu0 0.0
    %4465 = vmatpush1.msra.mxu0 0.0
    %4466 = vmatprep.subr.mxu0 0.0
    %4467 = vmatpush1.msra.mxu0 0.0
    %4468 = vmatprep.subr.mxu0 0.0
    %4469 = vmatpush1.msra.mxu0 0.0
    %4470 = vmatprep.subr.mxu0 %v4356
    %4471 = vmatpush1.msra.mxu0 %v4355
    %4472 = vmatprep.subr.mxu0 0.0
    %4473 = vmatpush2.msra.mxu0 0.0
    %4474 = vmatprep.subr.mxu0 0.0
    %4475 = vmatpush2.msra.mxu0 0.0
    %4476 = vmatprep.subr.mxu0 0.0
    %4477 = vmatpush2.msra.mxu0 0.0
    %4478 = vmatprep.subr.mxu0 0.0
    %4479 = vmatpush2.msra.mxu0 0.0
    %4480 = vmatprep.subr.mxu0 0.0
    %4481 = vmatpush2.msra.mxu0 0.0
    %4482 = vmatprep.subr.mxu0 0.0
    %4483 = vmatpush2.msra.mxu0 0.0
    %4484 = vmatprep.subr.mxu0 0.0
    %4485 = vmatpush2.msra.mxu0 0.0
    %4486 = vmatprep.subr.mxu0 0.0
    %4487 = vmatpush2.msra.mxu0 0.0
    %4488 = vmatprep.subr.mxu0 0.0
    %4489 = vmatpush2.msra.mxu0 0.0
    %4490 = vmatprep.subr.mxu0 0.0
    %4491 = vmatpush2.msra.mxu0 0.0
    %4492 = vmatprep.subr.mxu0 0.0
    %4493 = vmatpush2.msra.mxu0 0.0
    %4494 = vmatprep.subr.mxu0 0.0
    %4495 = vmatpush2.msra.mxu0 0.0
    %4496 = vmatprep.subr.mxu0 0.0
    %4497 = vmatpush2.msra.mxu0 0.0
    %4498 = vmatprep.subr.mxu0 0.0
    %4499 = vmatpush2.msra.mxu0 0.0
    %4500 = vmatprep.subr.mxu0 0.0
    %4501 = vmatpush2.msra.mxu0 0.0
    %4502 = vmatprep.subr.mxu0 0.0
    %4503 = vmatpush2.msra.mxu0 0.0
    %4504 = vmatprep.mubr.f32.mxu0 0.0
    %4505 = vmatmul.mubr.f32.gmra.mxu0 %v4367
    %v4506 = vpop.f32.mrf.mxu0
    %v4507 = vadd.f32 %v4364, %v4506
    %v4508 = vpop.f32.mrf.mxu0
    %v4509 = vadd.f32 %v4364, %v4508
    %4510 = vdwg.mxu0
    %4511 = vmatprep.subr.mxu0 0.0
    %4512 = vmatpush1.msra.mxu0 0.0
    %4513 = vmatprep.subr.mxu0 0.0
    %4514 = vmatpush1.msra.mxu0 0.0
    %4515 = vmatprep.subr.mxu0 0.0
    %4516 = vmatpush1.msra.mxu0 0.0
    %4517 = vmatprep.subr.mxu0 0.0
    %4518 = vmatpush1.msra.mxu0 0.0
    %4519 = vmatprep.subr.mxu0 0.0
    %4520 = vmatpush1.msra.mxu0 0.0
    %4521 = vmatprep.subr.mxu0 0.0
    %4522 = vmatpush1.msra.mxu0 0.0
    %4523 = vmatprep.subr.mxu0 0.0
    %4524 = vmatpush1.msra.mxu0 0.0
    %4525 = vmatprep.subr.mxu0 0.0
    %4526 = vmatpush1.msra.mxu0 0.0
    %4527 = vmatprep.subr.mxu0 0.0
    %4528 = vmatpush1.msra.mxu0 0.0
    %4529 = vmatprep.subr.mxu0 0.0
    %4530 = vmatpush1.msra.mxu0 0.0
    %4531 = vmatprep.subr.mxu0 0.0
    %4532 = vmatpush1.msra.mxu0 0.0
    %4533 = vmatprep.subr.mxu0 0.0
    %4534 = vmatpush1.msra.mxu0 0.0
    %4535 = vmatprep.subr.mxu0 0.0
    %4536 = vmatpush1.msra.mxu0 0.0
    %4537 = vmatprep.subr.mxu0 0.0
    %4538 = vmatpush1.msra.mxu0 0.0
    %4539 = vmatprep.subr.mxu0 0.0
    %4540 = vmatpush1.msra.mxu0 0.0
    %4541 = vmatprep.subr.mxu0 %v4358
    %4542 = vmatpush1.msra.mxu0 %v4357
    %4543 = vmatprep.subr.mxu0 0.0
    %4544 = vmatpush2.msra.mxu0 0.0
    %4545 = vmatprep.subr.mxu0 0.0
    %4546 = vmatpush2.msra.mxu0 0.0
    %4547 = vmatprep.subr.mxu0 0.0
    %4548 = vmatpush2.msra.mxu0 0.0
    %4549 = vmatprep.subr.mxu0 0.0
    %4550 = vmatpush2.msra.mxu0 0.0
    %4551 = vmatprep.subr.mxu0 0.0
    %4552 = vmatpush2.msra.mxu0 0.0
    %4553 = vmatprep.subr.mxu0 0.0
    %4554 = vmatpush2.msra.mxu0 0.0
    %4555 = vmatprep.subr.mxu0 0.0
    %4556 = vmatpush2.msra.mxu0 0.0
    %4557 = vmatprep.subr.mxu0 0.0
    %4558 = vmatpush2.msra.mxu0 0.0
    %4559 = vmatprep.subr.mxu0 0.0
    %4560 = vmatpush2.msra.mxu0 0.0
    %4561 = vmatprep.subr.mxu0 0.0
    %4562 = vmatpush2.msra.mxu0 0.0
    %4563 = vmatprep.subr.mxu0 0.0
    %4564 = vmatpush2.msra.mxu0 0.0
    %4565 = vmatprep.subr.mxu0 0.0
    %4566 = vmatpush2.msra.mxu0 0.0
    %4567 = vmatprep.subr.mxu0 0.0
    %4568 = vmatpush2.msra.mxu0 0.0
    %4569 = vmatprep.subr.mxu0 0.0
    %4570 = vmatpush2.msra.mxu0 0.0
    %4571 = vmatprep.subr.mxu0 0.0
    %4572 = vmatpush2.msra.mxu0 0.0
    %4573 = vmatprep.subr.mxu0 0.0
    %4574 = vmatpush2.msra.mxu0 0.0
    %4575 = vmatprep.mubr.f32.mxu0 0.0
    %4576 = vmatmul.mubr.f32.gmra.mxu0 %v4367
    %v4577 = vpop.f32.mrf.mxu0
    %v4578 = vadd.f32 %v4364, %v4577
    %v4579 = vpop.f32.mrf.mxu0
    %v4580 = vadd.f32 %v4364, %v4579
    %4581 = vdwg.mxu0
    %v4582 = vsel %vm1534, %v4436, 0.0
    %v4583 = vsel %vm1535, %v4438, 0.0
    %v4584 = vsel %vm1536, %v4507, 0.0
    %v4585 = vsel %vm1537, %v4509, 0.0
    %v4586 = vsel %vm1538, %v4578, 0.0
    %v4587 = vsel %vm1539, %v4580, 0.0
    %v4588 = vadd.f32 %v4582, %v4583
    %v4589 = vadd.f32 %v4588, %v4584
    %v4590 = vadd.f32 %v4589, %v4585
    %v4591 = vadd.f32 %v4590, %v4586
    %v4592 = vadd.f32 %v4591, %v4587
    %4593 = vadd.xlane.f32.xlu0 %v4592
    %v4594 = vpop.xlane.xlu0 %4593
    %v4595 = vmul.f32 %v4582, %v4436
    %v4596 = vmul.f32 %v4583, %v4438
    %v4597 = vmul.f32 %v4584, %v4507
    %v4598 = vmul.f32 %v4585, %v4509
    %v4599 = vmul.f32 %v4586, %v4578
    %v4600 = vmul.f32 %v4587, %v4580
    %v4601 = vadd.f32 %v4595, %v4596
    %v4602 = vadd.f32 %v4601, %v4597
    %v4603 = vadd.f32 %v4602, %v4598
    %v4604 = vadd.f32 %v4603, %v4599
    %v4605 = vadd.f32 %v4604, %v4600
    %4606 = vadd.xlane.f32.xlu0 %v4605
    %v4607 = vpop.xlane.xlu0 %4606
    %v4608 = vmul.f32 %v4594, 0.027777778
    %v4609 = vmul.f32 %v4607, 0.027777778
    %v4610 = vmul.f32 %v4608, %v4608
    %v4611 = vsub.f32 %v4609, %v4610
    %v4612 = vmax.f32 %v4611, 0.0
    %v4613 = vsub.f32 %v4436, %v4608
    %v4614 = vsub.f32 %v4438, %v4608
    %v4615 = vsub.f32 %v4507, %v4608
    %v4616 = vsub.f32 %v4509, %v4608
    %v4617 = vsub.f32 %v4578, %v4608
    %v4618 = vsub.f32 %v4580, %v4608
    %v4619 = vadd.f32 %v4612, 1e-05
    %v4620 = vrsqrt.pop %v4619
    %v4621 = vmul.f32 %v4613, %v4620
    %v4622 = vmul.f32 %v4614, %v4620
    %v4623 = vmul.f32 %v4615, %v4620
    %v4624 = vmul.f32 %v4616, %v4620
    %v4625 = vmul.f32 %v4617, %v4620
    %v4626 = vmul.f32 %v4618, %v4620
    %v4627 = vadd.f32 %v3231, %v4621
    %v4628 = vadd.f32 %v3230, %v4622
    %v4629 = vadd.f32 %v3229, %v4623
    %v4630 = vadd.f32 %v3228, %v4624
    %v4631 = vadd.f32 %v3227, %v4625
    %v4632 = vadd.f32 %v3226, %v4626
    %4633 = vrot.lane.b32.xlu0 %v4628, 127
    %v4634 = vpop.permute.xlu0 %4633
    %4635 = vrot.lane.b32.xlu0 %v4629, 127
    %v4636 = vpop.permute.xlu0 %4635
    %4637 = vrot.lane.b32.xlu0 %v4630, 127
    %v4638 = vpop.permute.xlu0 %4637
    %4639 = vrot.lane.b32.xlu0 %v4631, 127
    %v4640 = vpop.permute.xlu0 %4639
    %4641 = vrot.lane.b32.xlu0 %v4632, 127
    %v4642 = vpop.permute.xlu0 %4641
    %v4643 = vsel %vm422, %v4640, %v4642
    %v4644 = vsel %vm422, %v4638, %v4640
    %v4645 = vsel %vm422, %v4636, %v4638
    %v4646 = vsel %vm422, %v4634, %v4636
    %v4647 = vld [vmem:[%s1881] sm:$0xff]
    %v4648 = vld [vmem:[%s1883] sm:$0xff]
    %4650 = vset.pattern.permute.xlu0 0
    %4651 = vperm.xlu0 %4650, %v4648
    %v4652 = vpop.permute.xlu0 %4651
    %v4655 = vsel %vm437, %v4647, 0
    %4657 = vmatprep.subr.mxu0 0.0
    %4658 = vmatpush1.msra.mxu0 0.0
    %4659 = vmatprep.subr.mxu0 0.0
    %4660 = vmatpush1.msra.mxu0 0.0
    %4661 = vmatprep.subr.mxu0 0.0
    %4662 = vmatpush1.msra.mxu0 0.0
    %4663 = vmatprep.subr.mxu0 0.0
    %4664 = vmatpush1.msra.mxu0 0.0
    %4665 = vmatprep.subr.mxu0 0.0
    %4666 = vmatpush1.msra.mxu0 0.0
    %4667 = vmatprep.subr.mxu0 0.0
    %4668 = vmatpush1.msra.mxu0 0.0
    %4669 = vmatprep.subr.mxu0 0.0
    %4670 = vmatpush1.msra.mxu0 0.0
    %4671 = vmatprep.subr.mxu0 0.0
    %4672 = vmatpush1.msra.mxu0 0.0
    %4673 = vmatprep.subr.mxu0 0.0
    %4674 = vmatpush1.msra.mxu0 0.0
    %4675 = vmatprep.subr.mxu0 0.0
    %4676 = vmatpush1.msra.mxu0 0.0
    %4677 = vmatprep.subr.mxu0 0.0
    %4678 = vmatpush1.msra.mxu0 0.0
    %4679 = vmatprep.subr.mxu0 0.0
    %4680 = vmatpush1.msra.mxu0 0.0
    %4681 = vmatprep.subr.mxu0 0.0
    %4682 = vmatpush1.msra.mxu0 0.0
    %4683 = vmatprep.subr.mxu0 0.0
    %4684 = vmatpush1.msra.mxu0 0.0
    %4685 = vmatprep.subr.mxu0 0.0
    %4686 = vmatpush1.msra.mxu0 0.0
    %4687 = vmatprep.subr.mxu0 %v4628
    %4688 = vmatpush1.msra.mxu0 %v4627
    %4689 = vmatprep.subr.mxu0 0.0
    %4690 = vmatpush2.msra.mxu0 0.0
    %4691 = vmatprep.subr.mxu0 0.0
    %4692 = vmatpush2.msra.mxu0 0.0
    %4693 = vmatprep.subr.mxu0 0.0
    %4694 = vmatpush2.msra.mxu0 0.0
    %4695 = vmatprep.subr.mxu0 0.0
    %4696 = vmatpush2.msra.mxu0 0.0
    %4697 = vmatprep.subr.mxu0 0.0
    %4698 = vmatpush2.msra.mxu0 0.0
    %4699 = vmatprep.subr.mxu0 0.0
    %4700 = vmatpush2.msra.mxu0 0.0
    %4701 = vmatprep.subr.mxu0 0.0
    %4702 = vmatpush2.msra.mxu0 0.0
    %4703 = vmatprep.subr.mxu0 0.0
    %4704 = vmatpush2.msra.mxu0 0.0
    %4705 = vmatprep.subr.mxu0 0.0
    %4706 = vmatpush2.msra.mxu0 0.0
    %4707 = vmatprep.subr.mxu0 0.0
    %4708 = vmatpush2.msra.mxu0 0.0
    %4709 = vmatprep.subr.mxu0 0.0
    %4710 = vmatpush2.msra.mxu0 0.0
    %4711 = vmatprep.subr.mxu0 0.0
    %4712 = vmatpush2.msra.mxu0 0.0
    %4713 = vmatprep.subr.mxu0 0.0
    %4714 = vmatpush2.msra.mxu0 0.0
    %4715 = vmatprep.subr.mxu0 0.0
    %4716 = vmatpush2.msra.mxu0 0.0
    %4717 = vmatprep.subr.mxu0 0.0
    %4718 = vmatpush2.msra.mxu0 0.0
    %4719 = vmatprep.subr.mxu0 0.0
    %4720 = vmatpush2.msra.mxu0 0.0
    %4721 = vmatprep.mubr.f32.mxu0 0.0
    %4722 = vmatmul.mubr.f32.gmra.mxu0 %v4655
    %v4723 = vpop.f32.mrf.mxu0
    %v4724 = vadd.f32 %v4652, %v4723
    %v4725 = vpop.f32.mrf.mxu0
    %v4726 = vadd.f32 %v4652, %v4725
    %4727 = vdwg.mxu0
    %4728 = vmatprep.subr.mxu0 0.0
    %4729 = vmatpush1.msra.mxu0 0.0
    %4730 = vmatprep.subr.mxu0 0.0
    %4731 = vmatpush1.msra.mxu0 0.0
    %4732 = vmatprep.subr.mxu0 0.0
    %4733 = vmatpush1.msra.mxu0 0.0
    %4734 = vmatprep.subr.mxu0 0.0
    %4735 = vmatpush1.msra.mxu0 0.0
    %4736 = vmatprep.subr.mxu0 0.0
    %4737 = vmatpush1.msra.mxu0 0.0
    %4738 = vmatprep.subr.mxu0 0.0
    %4739 = vmatpush1.msra.mxu0 0.0
    %4740 = vmatprep.subr.mxu0 0.0
    %4741 = vmatpush1.msra.mxu0 0.0
    %4742 = vmatprep.subr.mxu0 0.0
    %4743 = vmatpush1.msra.mxu0 0.0
    %4744 = vmatprep.subr.mxu0 0.0
    %4745 = vmatpush1.msra.mxu0 0.0
    %4746 = vmatprep.subr.mxu0 0.0
    %4747 = vmatpush1.msra.mxu0 0.0
    %4748 = vmatprep.subr.mxu0 0.0
    %4749 = vmatpush1.msra.mxu0 0.0
    %4750 = vmatprep.subr.mxu0 0.0
    %4751 = vmatpush1.msra.mxu0 0.0
    %4752 = vmatprep.subr.mxu0 0.0
    %4753 = vmatpush1.msra.mxu0 0.0
    %4754 = vmatprep.subr.mxu0 0.0
    %4755 = vmatpush1.msra.mxu0 0.0
    %4756 = vmatprep.subr.mxu0 0.0
    %4757 = vmatpush1.msra.mxu0 0.0
    %4758 = vmatprep.subr.mxu0 %v4630
    %4759 = vmatpush1.msra.mxu0 %v4629
    %4760 = vmatprep.subr.mxu0 0.0
    %4761 = vmatpush2.msra.mxu0 0.0
    %4762 = vmatprep.subr.mxu0 0.0
    %4763 = vmatpush2.msra.mxu0 0.0
    %4764 = vmatprep.subr.mxu0 0.0
    %4765 = vmatpush2.msra.mxu0 0.0
    %4766 = vmatprep.subr.mxu0 0.0
    %4767 = vmatpush2.msra.mxu0 0.0
    %4768 = vmatprep.subr.mxu0 0.0
    %4769 = vmatpush2.msra.mxu0 0.0
    %4770 = vmatprep.subr.mxu0 0.0
    %4771 = vmatpush2.msra.mxu0 0.0
    %4772 = vmatprep.subr.mxu0 0.0
    %4773 = vmatpush2.msra.mxu0 0.0
    %4774 = vmatprep.subr.mxu0 0.0
    %4775 = vmatpush2.msra.mxu0 0.0
    %4776 = vmatprep.subr.mxu0 0.0
    %4777 = vmatpush2.msra.mxu0 0.0
    %4778 = vmatprep.subr.mxu0 0.0
    %4779 = vmatpush2.msra.mxu0 0.0
    %4780 = vmatprep.subr.mxu0 0.0
    %4781 = vmatpush2.msra.mxu0 0.0
    %4782 = vmatprep.subr.mxu0 0.0
    %4783 = vmatpush2.msra.mxu0 0.0
    %4784 = vmatprep.subr.mxu0 0.0
    %4785 = vmatpush2.msra.mxu0 0.0
    %4786 = vmatprep.subr.mxu0 0.0
    %4787 = vmatpush2.msra.mxu0 0.0
    %4788 = vmatprep.subr.mxu0 0.0
    %4789 = vmatpush2.msra.mxu0 0.0
    %4790 = vmatprep.subr.mxu0 0.0
    %4791 = vmatpush2.msra.mxu0 0.0
    %4792 = vmatprep.mubr.f32.mxu0 0.0
    %4793 = vmatmul.mubr.f32.gmra.mxu0 %v4655
    %v4794 = vpop.f32.mrf.mxu0
    %v4795 = vadd.f32 %v4652, %v4794
    %v4796 = vpop.f32.mrf.mxu0
    %v4797 = vadd.f32 %v4652, %v4796
    %4798 = vdwg.mxu0
    %4799 = vmatprep.subr.mxu0 0.0
    %4800 = vmatpush1.msra.mxu0 0.0
    %4801 = vmatprep.subr.mxu0 0.0
    %4802 = vmatpush1.msra.mxu0 0.0
    %4803 = vmatprep.subr.mxu0 0.0
    %4804 = vmatpush1.msra.mxu0 0.0
    %4805 = vmatprep.subr.mxu0 0.0
    %4806 = vmatpush1.msra.mxu0 0.0
    %4807 = vmatprep.subr.mxu0 0.0
    %4808 = vmatpush1.msra.mxu0 0.0
    %4809 = vmatprep.subr.mxu0 0.0
    %4810 = vmatpush1.msra.mxu0 0.0
    %4811 = vmatprep.subr.mxu0 0.0
    %4812 = vmatpush1.msra.mxu0 0.0
    %4813 = vmatprep.subr.mxu0 0.0
    %4814 = vmatpush1.msra.mxu0 0.0
    %4815 = vmatprep.subr.mxu0 0.0
    %4816 = vmatpush1.msra.mxu0 0.0
    %4817 = vmatprep.subr.mxu0 0.0
    %4818 = vmatpush1.msra.mxu0 0.0
    %4819 = vmatprep.subr.mxu0 0.0
    %4820 = vmatpush1.msra.mxu0 0.0
    %4821 = vmatprep.subr.mxu0 0.0
    %4822 = vmatpush1.msra.mxu0 0.0
    %4823 = vmatprep.subr.mxu0 0.0
    %4824 = vmatpush1.msra.mxu0 0.0
    %4825 = vmatprep.subr.mxu0 0.0
    %4826 = vmatpush1.msra.mxu0 0.0
    %4827 = vmatprep.subr.mxu0 0.0
    %4828 = vmatpush1.msra.mxu0 0.0
    %4829 = vmatprep.subr.mxu0 %v4632
    %4830 = vmatpush1.msra.mxu0 %v4631
    %4831 = vmatprep.subr.mxu0 0.0
    %4832 = vmatpush2.msra.mxu0 0.0
    %4833 = vmatprep.subr.mxu0 0.0
    %4834 = vmatpush2.msra.mxu0 0.0
    %4835 = vmatprep.subr.mxu0 0.0
    %4836 = vmatpush2.msra.mxu0 0.0
    %4837 = vmatprep.subr.mxu0 0.0
    %4838 = vmatpush2.msra.mxu0 0.0
    %4839 = vmatprep.subr.mxu0 0.0
    %4840 = vmatpush2.msra.mxu0 0.0
    %4841 = vmatprep.subr.mxu0 0.0
    %4842 = vmatpush2.msra.mxu0 0.0
    %4843 = vmatprep.subr.mxu0 0.0
    %4844 = vmatpush2.msra.mxu0 0.0
    %4845 = vmatprep.subr.mxu0 0.0
    %4846 = vmatpush2.msra.mxu0 0.0
    %4847 = vmatprep.subr.mxu0 0.0
    %4848 = vmatpush2.msra.mxu0 0.0
    %4849 = vmatprep.subr.mxu0 0.0
    %4850 = vmatpush2.msra.mxu0 0.0
    %4851 = vmatprep.subr.mxu0 0.0
    %4852 = vmatpush2.msra.mxu0 0.0
    %4853 = vmatprep.subr.mxu0 0.0
    %4854 = vmatpush2.msra.mxu0 0.0
    %4855 = vmatprep.subr.mxu0 0.0
    %4856 = vmatpush2.msra.mxu0 0.0
    %4857 = vmatprep.subr.mxu0 0.0
    %4858 = vmatpush2.msra.mxu0 0.0
    %4859 = vmatprep.subr.mxu0 0.0
    %4860 = vmatpush2.msra.mxu0 0.0
    %4861 = vmatprep.subr.mxu0 0.0
    %4862 = vmatpush2.msra.mxu0 0.0
    %4863 = vmatprep.mubr.f32.mxu0 0.0
    %4864 = vmatmul.mubr.f32.gmra.mxu0 %v4655
    %v4865 = vpop.f32.mrf.mxu0
    %v4866 = vadd.f32 %v4652, %v4865
    %v4867 = vpop.f32.mrf.mxu0
    %v4868 = vadd.f32 %v4652, %v4867
    %4869 = vdwg.mxu0
    %v4870 = vsel %vm1534, %v4724, 0.0
    %v4871 = vsel %vm1535, %v4726, 0.0
    %v4872 = vsel %vm1536, %v4795, 0.0
    %v4873 = vsel %vm1537, %v4797, 0.0
    %v4874 = vsel %vm1538, %v4866, 0.0
    %v4875 = vsel %vm1539, %v4868, 0.0
    %v4876 = vadd.f32 %v4870, %v4871
    %v4877 = vadd.f32 %v4876, %v4872
    %v4878 = vadd.f32 %v4877, %v4873
    %v4879 = vadd.f32 %v4878, %v4874
    %v4880 = vadd.f32 %v4879, %v4875
    %4881 = vadd.xlane.f32.xlu0 %v4880
    %v4882 = vpop.xlane.xlu0 %4881
    %v4883 = vmul.f32 %v4870, %v4724
    %v4884 = vmul.f32 %v4871, %v4726
    %v4885 = vmul.f32 %v4872, %v4795
    %v4886 = vmul.f32 %v4873, %v4797
    %v4887 = vmul.f32 %v4874, %v4866
    %v4888 = vmul.f32 %v4875, %v4868
    %v4889 = vadd.f32 %v4883, %v4884
    %v4890 = vadd.f32 %v4889, %v4885
    %v4891 = vadd.f32 %v4890, %v4886
    %v4892 = vadd.f32 %v4891, %v4887
    %v4893 = vadd.f32 %v4892, %v4888
    %4894 = vadd.xlane.f32.xlu0 %v4893
    %v4895 = vpop.xlane.xlu0 %4894
    %v4896 = vmul.f32 %v4882, 0.027777778
    %v4897 = vmul.f32 %v4895, 0.027777778
    %v4898 = vmul.f32 %v4896, %v4896
    %v4899 = vsub.f32 %v4897, %v4898
    %v4900 = vmax.f32 %v4899, 0.0
    %v4901 = vsub.f32 %v4724, %v4896
    %v4902 = vsub.f32 %v4726, %v4896
    %v4903 = vsub.f32 %v4795, %v4896
    %v4904 = vsub.f32 %v4797, %v4896
    %v4905 = vsub.f32 %v4866, %v4896
    %v4906 = vsub.f32 %v4868, %v4896
    %v4907 = vadd.f32 %v4900, 1e-05
    %v4908 = vrsqrt.pop %v4907
    %v4909 = vmul.f32 %v4901, %v4908
    %v4910 = vmul.f32 %v4902, %v4908
    %v4911 = vmul.f32 %v4903, %v4908
    %v4912 = vmul.f32 %v4904, %v4908
    %v4913 = vmul.f32 %v4905, %v4908
    %v4914 = vmul.f32 %v4906, %v4908
    %v4915 = vmax.f32 %v4909, 0.0
    %v4916 = vmax.f32 %v4910, 0.0
    %v4917 = vmax.f32 %v4911, 0.0
    %v4918 = vmax.f32 %v4912, 0.0
    %v4919 = vmax.f32 %v4913, 0.0
    %v4920 = vmax.f32 %v4914, 0.0
    %4921 = vrot.lane.b32.xlu0 %v4915, 127
    %v4922 = vpop.permute.xlu0 %4921
    %4923 = vrot.lane.b32.xlu0 %v4916, 127
    %v4924 = vpop.permute.xlu0 %4923
    %4925 = vrot.lane.b32.xlu0 %v4917, 127
    %v4926 = vpop.permute.xlu0 %4925
    %4927 = vrot.lane.b32.xlu0 %v4918, 127
    %v4928 = vpop.permute.xlu0 %4927
    %4929 = vrot.lane.b32.xlu0 %v4919, 127
    %v4930 = vpop.permute.xlu0 %4929
    %4931 = vrot.lane.b32.xlu0 %v4920, 127
    %v4932 = vpop.permute.xlu0 %4931
    %v4933 = vsel %vm422, %v4930, %v4932
    %v4934 = vsel %vm422, %v4928, %v4930
    %v4935 = vsel %vm422, %v4926, %v4928
    %v4936 = vsel %vm422, %v4924, %v4926
    %v4937 = vsel %vm422, %v4922, %v4924
    %v4938 = vsel %vm422, %v4932, %v4922
    %4939 = vrot.lane.b32.xlu0 %v4915, 126
    %v4940 = vpop.permute.xlu0 %4939
    %4941 = vrot.lane.b32.xlu0 %v4916, 126
    %v4942 = vpop.permute.xlu0 %4941
    %4943 = vrot.lane.b32.xlu0 %v4917, 126
    %v4944 = vpop.permute.xlu0 %4943
    %4945 = vrot.lane.b32.xlu0 %v4918, 126
    %v4946 = vpop.permute.xlu0 %4945
    %4947 = vrot.lane.b32.xlu0 %v4919, 126
    %v4948 = vpop.permute.xlu0 %4947
    %4949 = vrot.lane.b32.xlu0 %v4920, 126
    %v4950 = vpop.permute.xlu0 %4949
    %v4951 = vsel %vm846, %v4948, %v4950
    %v4952 = vsel %vm846, %v4946, %v4948
    %v4953 = vsel %vm846, %v4944, %v4946
    %v4954 = vsel %vm846, %v4942, %v4944
    %v4955 = vsel %vm846, %v4940, %v4942
    %v4956 = vsel %vm846, %v4950, %v4940
    %v4957 = vld [vmem:[%s2193] sm:$0xff]
    %v4958 = vld [vmem:[%s2195] sm:$0xff]
    %v4960 = vsel %vm858, %v4958, 0
    %4962 = vmatprep.subr.mxu0 0.0
    %4963 = vmatpush1.msra.mxu0 0.0
    %4964 = vmatprep.subr.mxu0 0.0
    %4965 = vmatpush1.msra.mxu0 0.0
    %4966 = vmatprep.subr.mxu0 0.0
    %4967 = vmatpush1.msra.mxu0 0.0
    %4968 = vmatprep.subr.mxu0 0.0
    %4969 = vmatpush1.msra.mxu0 0.0
    %4970 = vmatprep.subr.mxu0 0.0
    %4971 = vmatpush1.msra.mxu0 0.0
    %4972 = vmatprep.subr.mxu0 0.0
    %4973 = vmatpush1.msra.mxu0 0.0
    %4974 = vmatprep.subr.mxu0 0.0
    %4975 = vmatpush1.msra.mxu0 0.0
    %4976 = vmatprep.subr.mxu0 0.0
    %4977 = vmatpush1.msra.mxu0 0.0
    %4978 = vmatprep.subr.mxu0 0.0
    %4979 = vmatpush1.msra.mxu0 0.0
    %4980 = vmatprep.subr.mxu0 0.0
    %4981 = vmatpush1.msra.mxu0 0.0
    %4982 = vmatprep.subr.mxu0 0.0
    %4983 = vmatpush1.msra.mxu0 0.0
    %4984 = vmatprep.subr.mxu0 0.0
    %4985 = vmatpush1.msra.mxu0 0.0
    %4986 = vmatprep.subr.mxu0 0.0
    %4987 = vmatpush1.msra.mxu0 0.0
    %4988 = vmatprep.subr.mxu0 %v4953
    %4989 = vmatpush1.msra.mxu0 %v4954
    %4990 = vmatprep.subr.mxu0 %v4935
    %4991 = vmatpush1.msra.mxu0 %v4936
    %4992 = vmatprep.subr.mxu0 %v4917
    %4993 = vmatpush1.msra.mxu0 %v4916
    %4994 = vmatprep.subr.mxu0 0.0
    %4995 = vmatpush2.msra.mxu0 0.0
    %4996 = vmatprep.subr.mxu0 0.0
    %4997 = vmatpush2.msra.mxu0 0.0
    %4998 = vmatprep.subr.mxu0 0.0
    %4999 = vmatpush2.msra.mxu0 0.0
    %5000 = vmatprep.subr.mxu0 0.0
    %5001 = vmatpush2.msra.mxu0 0.0
    %5002 = vmatprep.subr.mxu0 0.0
    %5003 = vmatpush2.msra.mxu0 0.0
    %5004 = vmatprep.subr.mxu0 0.0
    %5005 = vmatpush2.msra.mxu0 0.0
    %5006 = vmatprep.subr.mxu0 0.0
    %5007 = vmatpush2.msra.mxu0 0.0
    %5008 = vmatprep.subr.mxu0 0.0
    %5009 = vmatpush2.msra.mxu0 0.0
    %5010 = vmatprep.subr.mxu0 0.0
    %5011 = vmatpush2.msra.mxu0 0.0
    %5012 = vmatprep.subr.mxu0 0.0
    %5013 = vmatpush2.msra.mxu0 0.0
    %5014 = vmatprep.subr.mxu0 0.0
    %5015 = vmatpush2.msra.mxu0 0.0
    %5016 = vmatprep.subr.mxu0 0.0
    %5017 = vmatpush2.msra.mxu0 0.0
    %5018 = vmatprep.subr.mxu0 0.0
    %5019 = vmatpush2.msra.mxu0 0.0
    %5020 = vmatprep.subr.mxu0 0.0
    %5021 = vmatpush2.msra.mxu0 0.0
    %5022 = vmatprep.subr.mxu0 0.0
    %5023 = vmatpush2.msra.mxu0 0.0
    %5024 = vmatprep.subr.mxu0 0.0
    %5025 = vmatpush2.msra.mxu0 0.0
    %5026 = vmatprep.mubr.f32.mxu0 0.0
    %5027 = vmatmul.mubr.f32.gmra.mxu0 %v4960
    %v5028 = vpop.f32.mrf.mxu0
    %v5029 = vadd.f32 0.0, %v5028
    %v5030 = vpop.f32.mrf.mxu0
    %v5031 = vadd.f32 0.0, %v5030
    %5032 = vdwg.mxu0
    %5033 = vmatprep.subr.mxu0 0.0
    %5034 = vmatpush1.msra.mxu0 0.0
    %5035 = vmatprep.subr.mxu0 0.0
    %5036 = vmatpush1.msra.mxu0 0.0
    %5037 = vmatprep.subr.mxu0 0.0
    %5038 = vmatpush1.msra.mxu0 0.0
    %5039 = vmatprep.subr.mxu0 0.0
    %5040 = vmatpush1.msra.mxu0 0.0
    %5041 = vmatprep.subr.mxu0 0.0
    %5042 = vmatpush1.msra.mxu0 0.0
    %5043 = vmatprep.subr.mxu0 0.0
    %5044 = vmatpush1.msra.mxu0 0.0
    %5045 = vmatprep.subr.mxu0 0.0
    %5046 = vmatpush1.msra.mxu0 0.0
    %5047 = vmatprep.subr.mxu0 0.0
    %5048 = vmatpush1.msra.mxu0 0.0
    %5049 = vmatprep.subr.mxu0 0.0
    %5050 = vmatpush1.msra.mxu0 0.0
    %5051 = vmatprep.subr.mxu0 0.0
    %5052 = vmatpush1.msra.mxu0 0.0
    %5053 = vmatprep.subr.mxu0 0.0
    %5054 = vmatpush1.msra.mxu0 0.0
    %5055 = vmatprep.subr.mxu0 0.0
    %5056 = vmatpush1.msra.mxu0 0.0
    %5057 = vmatprep.subr.mxu0 0.0
    %5058 = vmatpush1.msra.mxu0 0.0
    %5059 = vmatprep.subr.mxu0 %v4951
    %5060 = vmatpush1.msra.mxu0 %v4952
    %5061 = vmatprep.subr.mxu0 %v4933
    %5062 = vmatpush1.msra.mxu0 %v4934
    %5063 = vmatprep.subr.mxu0 %v4919
    %5064 = vmatpush1.msra.mxu0 %v4918
    %5065 = vmatprep.subr.mxu0 0.0
    %5066 = vmatpush2.msra.mxu0 0.0
    %5067 = vmatprep.subr.mxu0 0.0
    %5068 = vmatpush2.msra.mxu0 0.0
    %5069 = vmatprep.subr.mxu0 0.0
    %5070 = vmatpush2.msra.mxu0 0.0
    %5071 = vmatprep.subr.mxu0 0.0
    %5072 = vmatpush2.msra.mxu0 0.0
    %5073 = vmatprep.subr.mxu0 0.0
    %5074 = vmatpush2.msra.mxu0 0.0
    %5075 = vmatprep.subr.mxu0 0.0
    %5076 = vmatpush2.msra.mxu0 0.0
    %5077 = vmatprep.subr.mxu0 0.0
    %5078 = vmatpush2.msra.mxu0 0.0
    %5079 = vmatprep.subr.mxu0 0.0
    %5080 = vmatpush2.msra.mxu0 0.0
    %5081 = vmatprep.subr.mxu0 0.0
    %5082 = vmatpush2.msra.mxu0 0.0
    %5083 = vmatprep.subr.mxu0 0.0
    %5084 = vmatpush2.msra.mxu0 0.0
    %5085 = vmatprep.subr.mxu0 0.0
    %5086 = vmatpush2.msra.mxu0 0.0
    %5087 = vmatprep.subr.mxu0 0.0
    %5088 = vmatpush2.msra.mxu0 0.0
    %5089 = vmatprep.subr.mxu0 0.0
    %5090 = vmatpush2.msra.mxu0 0.0
    %5091 = vmatprep.subr.mxu0 0.0
    %5092 = vmatpush2.msra.mxu0 0.0
    %5093 = vmatprep.subr.mxu0 0.0
    %5094 = vmatpush2.msra.mxu0 0.0
    %5095 = vmatprep.subr.mxu0 0.0
    %5096 = vmatpush2.msra.mxu0 0.0
    %5097 = vmatprep.mubr.f32.mxu0 0.0
    %5098 = vmatmul.mubr.f32.gmra.mxu0 %v4960
    %v5099 = vpop.f32.mrf.mxu0
    %v5100 = vadd.f32 0.0, %v5099
    %v5101 = vpop.f32.mrf.mxu0
    %v5102 = vadd.f32 0.0, %v5101
    %5103 = vdwg.mxu0
    %v5105 = vsel %vm858, %v4957, 0
    %5107 = vmatprep.subr.mxu0 0.0
    %5108 = vmatpush1.msra.mxu0 0.0
    %5109 = vmatprep.subr.mxu0 0.0
    %5110 = vmatpush1.msra.mxu0 0.0
    %5111 = vmatprep.subr.mxu0 0.0
    %5112 = vmatpush1.msra.mxu0 0.0
    %5113 = vmatprep.subr.mxu0 0.0
    %5114 = vmatpush1.msra.mxu0 0.0
    %5115 = vmatprep.subr.mxu0 0.0
    %5116 = vmatpush1.msra.mxu0 0.0
    %5117 = vmatprep.subr.mxu0 0.0
    %5118 = vmatpush1.msra.mxu0 0.0
    %5119 = vmatprep.subr.mxu0 0.0
    %5120 = vmatpush1.msra.mxu0 0.0
    %5121 = vmatprep.subr.mxu0 0.0
    %5122 = vmatpush1.msra.mxu0 0.0
    %5123 = vmatprep.subr.mxu0 0.0
    %5124 = vmatpush1.msra.mxu0 0.0
    %5125 = vmatprep.subr.mxu0 0.0
    %5126 = vmatpush1.msra.mxu0 0.0
    %5127 = vmatprep.subr.mxu0 0.0
    %5128 = vmatpush1.msra.mxu0 0.0
    %5129 = vmatprep.subr.mxu0 0.0
    %5130 = vmatpush1.msra.mxu0 0.0
    %5131 = vmatprep.subr.mxu0 0.0
    %5132 = vmatpush1.msra.mxu0 0.0
    %5133 = vmatprep.subr.mxu0 %v4954
    %5134 = vmatpush1.msra.mxu0 %v4955
    %5135 = vmatprep.subr.mxu0 %v4936
    %5136 = vmatpush1.msra.mxu0 %v4937
    %5137 = vmatprep.subr.mxu0 %v4916
    %5138 = vmatpush1.msra.mxu0 %v4915
    %5139 = vmatprep.subr.mxu0 0.0
    %5140 = vmatpush2.msra.mxu0 0.0
    %5141 = vmatprep.subr.mxu0 0.0
    %5142 = vmatpush2.msra.mxu0 0.0
    %5143 = vmatprep.subr.mxu0 0.0
    %5144 = vmatpush2.msra.mxu0 0.0
    %5145 = vmatprep.subr.mxu0 0.0
    %5146 = vmatpush2.msra.mxu0 0.0
    %5147 = vmatprep.subr.mxu0 0.0
    %5148 = vmatpush2.msra.mxu0 0.0
    %5149 = vmatprep.subr.mxu0 0.0
    %5150 = vmatpush2.msra.mxu0 0.0
    %5151 = vmatprep.subr.mxu0 0.0
    %5152 = vmatpush2.msra.mxu0 0.0
    %5153 = vmatprep.subr.mxu0 0.0
    %5154 = vmatpush2.msra.mxu0 0.0
    %5155 = vmatprep.subr.mxu0 0.0
    %5156 = vmatpush2.msra.mxu0 0.0
    %5157 = vmatprep.subr.mxu0 0.0
    %5158 = vmatpush2.msra.mxu0 0.0
    %5159 = vmatprep.subr.mxu0 0.0
    %5160 = vmatpush2.msra.mxu0 0.0
    %5161 = vmatprep.subr.mxu0 0.0
    %5162 = vmatpush2.msra.mxu0 0.0
    %5163 = vmatprep.subr.mxu0 0.0
    %5164 = vmatpush2.msra.mxu0 0.0
    %5165 = vmatprep.subr.mxu0 0.0
    %5166 = vmatpush2.msra.mxu0 0.0
    %5167 = vmatprep.subr.mxu0 0.0
    %5168 = vmatpush2.msra.mxu0 0.0
    %5169 = vmatprep.subr.mxu0 0.0
    %5170 = vmatpush2.msra.mxu0 0.0
    %5171 = vmatprep.mubr.f32.mxu0 0.0
    %5172 = vmatmul.mubr.f32.gmra.mxu0 %v5105
    %v5173 = vpop.f32.mrf.mxu0
    %v5174 = vadd.f32 %v5029, %v5173
    %v5175 = vpop.f32.mrf.mxu0
    %v5176 = vadd.f32 %v5031, %v5175
    %5177 = vdwg.mxu0
    %5178 = vmatprep.subr.mxu0 0.0
    %5179 = vmatpush1.msra.mxu0 0.0
    %5180 = vmatprep.subr.mxu0 0.0
    %5181 = vmatpush1.msra.mxu0 0.0
    %5182 = vmatprep.subr.mxu0 0.0
    %5183 = vmatpush1.msra.mxu0 0.0
    %5184 = vmatprep.subr.mxu0 0.0
    %5185 = vmatpush1.msra.mxu0 0.0
    %5186 = vmatprep.subr.mxu0 0.0
    %5187 = vmatpush1.msra.mxu0 0.0
    %5188 = vmatprep.subr.mxu0 0.0
    %5189 = vmatpush1.msra.mxu0 0.0
    %5190 = vmatprep.subr.mxu0 0.0
    %5191 = vmatpush1.msra.mxu0 0.0
    %5192 = vmatprep.subr.mxu0 0.0
    %5193 = vmatpush1.msra.mxu0 0.0
    %5194 = vmatprep.subr.mxu0 0.0
    %5195 = vmatpush1.msra.mxu0 0.0
    %5196 = vmatprep.subr.mxu0 0.0
    %5197 = vmatpush1.msra.mxu0 0.0
    %5198 = vmatprep.subr.mxu0 0.0
    %5199 = vmatpush1.msra.mxu0 0.0
    %5200 = vmatprep.subr.mxu0 0.0
    %5201 = vmatpush1.msra.mxu0 0.0
    %5202 = vmatprep.subr.mxu0 0.0
    %5203 = vmatpush1.msra.mxu0 0.0
    %5204 = vmatprep.subr.mxu0 %v4952
    %5205 = vmatpush1.msra.mxu0 %v4953
    %5206 = vmatprep.subr.mxu0 %v4934
    %5207 = vmatpush1.msra.mxu0 %v4935
    %5208 = vmatprep.subr.mxu0 %v4918
    %5209 = vmatpush1.msra.mxu0 %v4917
    %5210 = vmatprep.subr.mxu0 0.0
    %5211 = vmatpush2.msra.mxu0 0.0
    %5212 = vmatprep.subr.mxu0 0.0
    %5213 = vmatpush2.msra.mxu0 0.0
    %5214 = vmatprep.subr.mxu0 0.0
    %5215 = vmatpush2.msra.mxu0 0.0
    %5216 = vmatprep.subr.mxu0 0.0
    %5217 = vmatpush2.msra.mxu0 0.0
    %5218 = vmatprep.subr.mxu0 0.0
    %5219 = vmatpush2.msra.mxu0 0.0
    %5220 = vmatprep.subr.mxu0 0.0
    %5221 = vmatpush2.msra.mxu0 0.0
    %5222 = vmatprep.subr.mxu0 0.0
    %5223 = vmatpush2.msra.mxu0 0.0
    %5224 = vmatprep.subr.mxu0 0.0
    %5225 = vmatpush2.msra.mxu0 0.0
    %5226 = vmatprep.subr.mxu0 0.0
    %5227 = vmatpush2.msra.mxu0 0.0
    %5228 = vmatprep.subr.mxu0 0.0
    %5229 = vmatpush2.msra.mxu0 0.0
    %5230 = vmatprep.subr.mxu0 0.0
    %5231 = vmatpush2.msra.mxu0 0.0
    %5232 = vmatprep.subr.mxu0 0.0
    %5233 = vmatpush2.msra.mxu0 0.0
    %5234 = vmatprep.subr.mxu0 0.0
    %5235 = vmatpush2.msra.mxu0 0.0
    %5236 = vmatprep.subr.mxu0 0.0
    %5237 = vmatpush2.msra.mxu0 0.0
    %5238 = vmatprep.subr.mxu0 0.0
    %5239 = vmatpush2.msra.mxu0 0.0
    %5240 = vmatprep.subr.mxu0 0.0
    %5241 = vmatpush2.msra.mxu0 0.0
    %5242 = vmatprep.mubr.f32.mxu0 0.0
    %5243 = vmatmul.mubr.f32.gmra.mxu0 %v5105
    %v5244 = vpop.f32.mrf.mxu0
    %v5245 = vadd.f32 %v5100, %v5244
    %v5246 = vpop.f32.mrf.mxu0
    %v5247 = vadd.f32 %v5102, %v5246
    %5248 = vdwg.mxu0
    %v5249 = vld [vmem:[%s2487] sm:$0xff]
    %v5251 = vsel %vm858, %v5249, 0
    %5253 = vmatprep.subr.mxu0 0.0
    %5254 = vmatpush1.msra.mxu0 0.0
    %5255 = vmatprep.subr.mxu0 0.0
    %5256 = vmatpush1.msra.mxu0 0.0
    %5257 = vmatprep.subr.mxu0 0.0
    %5258 = vmatpush1.msra.mxu0 0.0
    %5259 = vmatprep.subr.mxu0 0.0
    %5260 = vmatpush1.msra.mxu0 0.0
    %5261 = vmatprep.subr.mxu0 0.0
    %5262 = vmatpush1.msra.mxu0 0.0
    %5263 = vmatprep.subr.mxu0 0.0
    %5264 = vmatpush1.msra.mxu0 0.0
    %5265 = vmatprep.subr.mxu0 0.0
    %5266 = vmatpush1.msra.mxu0 0.0
    %5267 = vmatprep.subr.mxu0 0.0
    %5268 = vmatpush1.msra.mxu0 0.0
    %5269 = vmatprep.subr.mxu0 0.0
    %5270 = vmatpush1.msra.mxu0 0.0
    %5271 = vmatprep.subr.mxu0 0.0
    %5272 = vmatpush1.msra.mxu0 0.0
    %5273 = vmatprep.subr.mxu0 0.0
    %5274 = vmatpush1.msra.mxu0 0.0
    %5275 = vmatprep.subr.mxu0 0.0
    %5276 = vmatpush1.msra.mxu0 0.0
    %5277 = vmatprep.subr.mxu0 0.0
    %5278 = vmatpush1.msra.mxu0 0.0
    %5279 = vmatprep.subr.mxu0 %v4952
    %5280 = vmatpush1.msra.mxu0 %v4953
    %5281 = vmatprep.subr.mxu0 %v4934
    %5282 = vmatpush1.msra.mxu0 %v4935
    %5283 = vmatprep.subr.mxu0 %v4918
    %5284 = vmatpush1.msra.mxu0 %v4917
    %5285 = vmatprep.subr.mxu0 0.0
    %5286 = vmatpush2.msra.mxu0 0.0
    %5287 = vmatprep.subr.mxu0 0.0
    %5288 = vmatpush2.msra.mxu0 0.0
    %5289 = vmatprep.subr.mxu0 0.0
    %5290 = vmatpush2.msra.mxu0 0.0
    %5291 = vmatprep.subr.mxu0 0.0
    %5292 = vmatpush2.msra.mxu0 0.0
    %5293 = vmatprep.subr.mxu0 0.0
    %5294 = vmatpush2.msra.mxu0 0.0
    %5295 = vmatprep.subr.mxu0 0.0
    %5296 = vmatpush2.msra.mxu0 0.0
    %5297 = vmatprep.subr.mxu0 0.0
    %5298 = vmatpush2.msra.mxu0 0.0
    %5299 = vmatprep.subr.mxu0 0.0
    %5300 = vmatpush2.msra.mxu0 0.0
    %5301 = vmatprep.subr.mxu0 0.0
    %5302 = vmatpush2.msra.mxu0 0.0
    %5303 = vmatprep.subr.mxu0 0.0
    %5304 = vmatpush2.msra.mxu0 0.0
    %5305 = vmatprep.subr.mxu0 0.0
    %5306 = vmatpush2.msra.mxu0 0.0
    %5307 = vmatprep.subr.mxu0 0.0
    %5308 = vmatpush2.msra.mxu0 0.0
    %5309 = vmatprep.subr.mxu0 0.0
    %5310 = vmatpush2.msra.mxu0 0.0
    %5311 = vmatprep.subr.mxu0 0.0
    %5312 = vmatpush2.msra.mxu0 0.0
    %5313 = vmatprep.subr.mxu0 0.0
    %5314 = vmatpush2.msra.mxu0 0.0
    %5315 = vmatprep.subr.mxu0 0.0
    %5316 = vmatpush2.msra.mxu0 0.0
    %5317 = vmatprep.mubr.f32.mxu0 0.0
    %5318 = vmatmul.mubr.f32.gmra.mxu0 %v5251
    %v5319 = vpop.f32.mrf.mxu0
    %v5320 = vadd.f32 0.0, %v5319
    %v5321 = vpop.f32.mrf.mxu0
    %v5322 = vadd.f32 0.0, %v5321
    %5323 = vdwg.mxu0
    %5324 = vmatprep.subr.mxu0 0.0
    %5325 = vmatpush1.msra.mxu0 0.0
    %5326 = vmatprep.subr.mxu0 0.0
    %5327 = vmatpush1.msra.mxu0 0.0
    %5328 = vmatprep.subr.mxu0 0.0
    %5329 = vmatpush1.msra.mxu0 0.0
    %5330 = vmatprep.subr.mxu0 0.0
    %5331 = vmatpush1.msra.mxu0 0.0
    %5332 = vmatprep.subr.mxu0 0.0
    %5333 = vmatpush1.msra.mxu0 0.0
    %5334 = vmatprep.subr.mxu0 0.0
    %5335 = vmatpush1.msra.mxu0 0.0
    %5336 = vmatprep.subr.mxu0 0.0
    %5337 = vmatpush1.msra.mxu0 0.0
    %5338 = vmatprep.subr.mxu0 0.0
    %5339 = vmatpush1.msra.mxu0 0.0
    %5340 = vmatprep.subr.mxu0 0.0
    %5341 = vmatpush1.msra.mxu0 0.0
    %5342 = vmatprep.subr.mxu0 0.0
    %5343 = vmatpush1.msra.mxu0 0.0
    %5344 = vmatprep.subr.mxu0 0.0
    %5345 = vmatpush1.msra.mxu0 0.0
    %5346 = vmatprep.subr.mxu0 0.0
    %5347 = vmatpush1.msra.mxu0 0.0
    %5348 = vmatprep.subr.mxu0 0.0
    %5349 = vmatpush1.msra.mxu0 0.0
    %5350 = vmatprep.subr.mxu0 %v4956
    %5351 = vmatpush1.msra.mxu0 %v4951
    %5352 = vmatprep.subr.mxu0 %v4938
    %5353 = vmatpush1.msra.mxu0 %v4933
    %5354 = vmatprep.subr.mxu0 %v4920
    %5355 = vmatpush1.msra.mxu0 %v4919
    %5356 = vmatprep.subr.mxu0 0.0
    %5357 = vmatpush2.msra.mxu0 0.0
    %5358 = vmatprep.subr.mxu0 0.0
    %5359 = vmatpush2.msra.mxu0 0.0
    %5360 = vmatprep.subr.mxu0 0.0
    %5361 = vmatpush2.msra.mxu0 0.0
    %5362 = vmatprep.subr.mxu0 0.0
    %5363 = vmatpush2.msra.mxu0 0.0
    %5364 = vmatprep.subr.mxu0 0.0
    %5365 = vmatpush2.msra.mxu0 0.0
    %5366 = vmatprep.subr.mxu0 0.0
    %5367 = vmatpush2.msra.mxu0 0.0
    %5368 = vmatprep.subr.mxu0 0.0
    %5369 = vmatpush2.msra.mxu0 0.0
    %5370 = vmatprep.subr.mxu0 0.0
    %5371 = vmatpush2.msra.mxu0 0.0
    %5372 = vmatprep.subr.mxu0 0.0
    %5373 = vmatpush2.msra.mxu0 0.0
    %5374 = vmatprep.subr.mxu0 0.0
    %5375 = vmatpush2.msra.mxu0 0.0
    %5376 = vmatprep.subr.mxu0 0.0
    %5377 = vmatpush2.msra.mxu0 0.0
    %5378 = vmatprep.subr.mxu0 0.0
    %5379 = vmatpush2.msra.mxu0 0.0
    %5380 = vmatprep.subr.mxu0 0.0
    %5381 = vmatpush2.msra.mxu0 0.0
    %5382 = vmatprep.subr.mxu0 0.0
    %5383 = vmatpush2.msra.mxu0 0.0
    %5384 = vmatprep.subr.mxu0 0.0
    %5385 = vmatpush2.msra.mxu0 0.0
    %5386 = vmatprep.subr.mxu0 0.0
    %5387 = vmatpush2.msra.mxu0 0.0
    %5388 = vmatprep.mubr.f32.mxu0 0.0
    %5389 = vmatmul.mubr.f32.gmra.mxu0 %v5251
    %v5390 = vpop.f32.mrf.mxu0
    %v5391 = vadd.f32 0.0, %v5390
    %v5392 = vpop.f32.mrf.mxu0
    %v5393 = vadd.f32 0.0, %v5392
    %5394 = vdwg.mxu0
    %v5395 = vadd.f32 %v5174, %v5320
    %v5396 = vadd.f32 %v5176, %v5322
    %v5397 = vadd.f32 %v5245, %v5391
    %v5398 = vadd.f32 %v5247, %v5393
    %v5399 = vld [vmem:[%s2638] sm:$0xff]
    %5401 = vset.pattern.permute.xlu0 0
    %5402 = vperm.xlu0 %5401, %v5399
    %v5403 = vpop.permute.xlu0 %5402
    %v5405 = vadd.f32 %v5395, %v5403
    %v5406 = vadd.f32 %v5396, %v5403
    %v5407 = vadd.f32 %v5397, %v5403
    %v5408 = vadd.f32 %v5398, %v5403
    %v5409 = vsel %vm2653, %v5405, 0.0
    %v5410 = vsel %vm2654, %v5406, 0.0
    %v5411 = vsel %vm2655, %v5407, 0.0
    %v5412 = vsel %vm2656, %v5408, 0.0
    %v5413 = vadd.f32 %v5409, %v5410
    %v5414 = vadd.f32 %v5413, %v5411
    %v5415 = vadd.f32 %v5414, %v5412
    %5416 = vadd.xlane.f32.xlu0 %v5415
    %v5417 = vpop.xlane.xlu0 %5416
    %v5418 = vmul.f32 %v5409, %v5405
    %v5419 = vmul.f32 %v5410, %v5406
    %v5420 = vmul.f32 %v5411, %v5407
    %v5421 = vmul.f32 %v5412, %v5408
    %v5422 = vadd.f32 %v5418, %v5419
    %v5423 = vadd.f32 %v5422, %v5420
    %v5424 = vadd.f32 %v5423, %v5421
    %5425 = vadd.xlane.f32.xlu0 %v5424
    %v5426 = vpop.xlane.xlu0 %5425
    %v5427 = vmul.f32 %v5417, 0.0625
    %v5428 = vmul.f32 %v5426, 0.0625
    %v5429 = vmul.f32 %v5427, %v5427
    %v5430 = vsub.f32 %v5428, %v5429
    %v5431 = vmax.f32 %v5430, 0.0
    %v5432 = vsub.f32 %v5405, %v5427
    %v5433 = vsub.f32 %v5406, %v5427
    %v5434 = vsub.f32 %v5407, %v5427
    %v5435 = vsub.f32 %v5408, %v5427
    %v5436 = vadd.f32 %v5431, 1e-05
    %v5437 = vrsqrt.pop %v5436
    %v5438 = vmul.f32 %v5432, %v5437
    %v5439 = vmul.f32 %v5433, %v5437
    %v5440 = vmul.f32 %v5434, %v5437
    %v5441 = vmul.f32 %v5435, %v5437
    %v5442 = vmax.f32 %v5438, 0.0
    %v5443 = vmax.f32 %v5439, 0.0
    %v5444 = vmax.f32 %v5440, 0.0
    %v5445 = vmax.f32 %v5441, 0.0
    %v5446 = vld [vmem:[%s2694] sm:$0xff]
    %v5447 = vld [vmem:[%s2696] sm:$0xff]
    %5449 = vset.pattern.permute.xlu0 0
    %5450 = vperm.xlu0 %5449, %v5447
    %v5451 = vpop.permute.xlu0 %5450
    %v5454 = vsel %vm437, %v5446, 0
    %5456 = vmatprep.subr.mxu0 0.0
    %5457 = vmatpush1.msra.mxu0 0.0
    %5458 = vmatprep.subr.mxu0 0.0
    %5459 = vmatpush1.msra.mxu0 0.0
    %5460 = vmatprep.subr.mxu0 0.0
    %5461 = vmatpush1.msra.mxu0 0.0
    %5462 = vmatprep.subr.mxu0 0.0
    %5463 = vmatpush1.msra.mxu0 0.0
    %5464 = vmatprep.subr.mxu0 0.0
    %5465 = vmatpush1.msra.mxu0 0.0
    %5466 = vmatprep.subr.mxu0 0.0
    %5467 = vmatpush1.msra.mxu0 0.0
    %5468 = vmatprep.subr.mxu0 0.0
    %5469 = vmatpush1.msra.mxu0 0.0
    %5470 = vmatprep.subr.mxu0 0.0
    %5471 = vmatpush1.msra.mxu0 0.0
    %5472 = vmatprep.subr.mxu0 0.0
    %5473 = vmatpush1.msra.mxu0 0.0
    %5474 = vmatprep.subr.mxu0 0.0
    %5475 = vmatpush1.msra.mxu0 0.0
    %5476 = vmatprep.subr.mxu0 0.0
    %5477 = vmatpush1.msra.mxu0 0.0
    %5478 = vmatprep.subr.mxu0 0.0
    %5479 = vmatpush1.msra.mxu0 0.0
    %5480 = vmatprep.subr.mxu0 0.0
    %5481 = vmatpush1.msra.mxu0 0.0
    %5482 = vmatprep.subr.mxu0 0.0
    %5483 = vmatpush1.msra.mxu0 0.0
    %5484 = vmatprep.subr.mxu0 0.0
    %5485 = vmatpush1.msra.mxu0 0.0
    %5486 = vmatprep.subr.mxu0 %v5443
    %5487 = vmatpush1.msra.mxu0 %v5442
    %5488 = vmatprep.subr.mxu0 0.0
    %5489 = vmatpush2.msra.mxu0 0.0
    %5490 = vmatprep.subr.mxu0 0.0
    %5491 = vmatpush2.msra.mxu0 0.0
    %5492 = vmatprep.subr.mxu0 0.0
    %5493 = vmatpush2.msra.mxu0 0.0
    %5494 = vmatprep.subr.mxu0 0.0
    %5495 = vmatpush2.msra.mxu0 0.0
    %5496 = vmatprep.subr.mxu0 0.0
    %5497 = vmatpush2.msra.mxu0 0.0
    %5498 = vmatprep.subr.mxu0 0.0
    %5499 = vmatpush2.msra.mxu0 0.0
    %5500 = vmatprep.subr.mxu0 0.0
    %5501 = vmatpush2.msra.mxu0 0.0
    %5502 = vmatprep.subr.mxu0 0.0
    %5503 = vmatpush2.msra.mxu0 0.0
    %5504 = vmatprep.subr.mxu0 0.0
    %5505 = vmatpush2.msra.mxu0 0.0
    %5506 = vmatprep.subr.mxu0 0.0
    %5507 = vmatpush2.msra.mxu0 0.0
    %5508 = vmatprep.subr.mxu0 0.0
    %5509 = vmatpush2.msra.mxu0 0.0
    %5510 = vmatprep.subr.mxu0 0.0
    %5511 = vmatpush2.msra.mxu0 0.0
    %5512 = vmatprep.subr.mxu0 0.0
    %5513 = vmatpush2.msra.mxu0 0.0
    %5514 = vmatprep.subr.mxu0 0.0
    %5515 = vmatpush2.msra.mxu0 0.0
    %5516 = vmatprep.subr.mxu0 0.0
    %5517 = vmatpush2.msra.mxu0 0.0
    %5518 = vmatprep.subr.mxu0 0.0
    %5519 = vmatpush2.msra.mxu0 0.0
    %5520 = vmatprep.mubr.f32.mxu0 0.0
    %5521 = vmatmul.mubr.f32.gmra.mxu0 %v5454
    %v5522 = vpop.f32.mrf.mxu0
    %v5523 = vadd.f32 %v5451, %v5522
    %v5524 = vpop.f32.mrf.mxu0
    %v5525 = vadd.f32 %v5451, %v5524
    %5526 = vdwg.mxu0
    %5527 = vmatprep.subr.mxu0 0.0
    %5528 = vmatpush1.msra.mxu0 0.0
    %5529 = vmatprep.subr.mxu0 0.0
    %5530 = vmatpush1.msra.mxu0 0.0
    %5531 = vmatprep.subr.mxu0 0.0
    %5532 = vmatpush1.msra.mxu0 0.0
    %5533 = vmatprep.subr.mxu0 0.0
    %5534 = vmatpush1.msra.mxu0 0.0
    %5535 = vmatprep.subr.mxu0 0.0
    %5536 = vmatpush1.msra.mxu0 0.0
    %5537 = vmatprep.subr.mxu0 0.0
    %5538 = vmatpush1.msra.mxu0 0.0
    %5539 = vmatprep.subr.mxu0 0.0
    %5540 = vmatpush1.msra.mxu0 0.0
    %5541 = vmatprep.subr.mxu0 0.0
    %5542 = vmatpush1.msra.mxu0 0.0
    %5543 = vmatprep.subr.mxu0 0.0
    %5544 = vmatpush1.msra.mxu0 0.0
    %5545 = vmatprep.subr.mxu0 0.0
    %5546 = vmatpush1.msra.mxu0 0.0
    %5547 = vmatprep.subr.mxu0 0.0
    %5548 = vmatpush1.msra.mxu0 0.0
    %5549 = vmatprep.subr.mxu0 0.0
    %5550 = vmatpush1.msra.mxu0 0.0
    %5551 = vmatprep.subr.mxu0 0.0
    %5552 = vmatpush1.msra.mxu0 0.0
    %5553 = vmatprep.subr.mxu0 0.0
    %5554 = vmatpush1.msra.mxu0 0.0
    %5555 = vmatprep.subr.mxu0 0.0
    %5556 = vmatpush1.msra.mxu0 0.0
    %5557 = vmatprep.subr.mxu0 %v5445
    %5558 = vmatpush1.msra.mxu0 %v5444
    %5559 = vmatprep.subr.mxu0 0.0
    %5560 = vmatpush2.msra.mxu0 0.0
    %5561 = vmatprep.subr.mxu0 0.0
    %5562 = vmatpush2.msra.mxu0 0.0
    %5563 = vmatprep.subr.mxu0 0.0
    %5564 = vmatpush2.msra.mxu0 0.0
    %5565 = vmatprep.subr.mxu0 0.0
    %5566 = vmatpush2.msra.mxu0 0.0
    %5567 = vmatprep.subr.mxu0 0.0
    %5568 = vmatpush2.msra.mxu0 0.0
    %5569 = vmatprep.subr.mxu0 0.0
    %5570 = vmatpush2.msra.mxu0 0.0
    %5571 = vmatprep.subr.mxu0 0.0
    %5572 = vmatpush2.msra.mxu0 0.0
    %5573 = vmatprep.subr.mxu0 0.0
    %5574 = vmatpush2.msra.mxu0 0.0
    %5575 = vmatprep.subr.mxu0 0.0
    %5576 = vmatpush2.msra.mxu0 0.0
    %5577 = vmatprep.subr.mxu0 0.0
    %5578 = vmatpush2.msra.mxu0 0.0
    %5579 = vmatprep.subr.mxu0 0.0
    %5580 = vmatpush2.msra.mxu0 0.0
    %5581 = vmatprep.subr.mxu0 0.0
    %5582 = vmatpush2.msra.mxu0 0.0
    %5583 = vmatprep.subr.mxu0 0.0
    %5584 = vmatpush2.msra.mxu0 0.0
    %5585 = vmatprep.subr.mxu0 0.0
    %5586 = vmatpush2.msra.mxu0 0.0
    %5587 = vmatprep.subr.mxu0 0.0
    %5588 = vmatpush2.msra.mxu0 0.0
    %5589 = vmatprep.subr.mxu0 0.0
    %5590 = vmatpush2.msra.mxu0 0.0
    %5591 = vmatprep.mubr.f32.mxu0 0.0
    %5592 = vmatmul.mubr.f32.gmra.mxu0 %v5454
    %v5593 = vpop.f32.mrf.mxu0
    %v5594 = vadd.f32 %v5451, %v5593
    %v5595 = vpop.f32.mrf.mxu0
    %v5596 = vadd.f32 %v5451, %v5595
    %5597 = vdwg.mxu0
    %v5598 = vsel %vm2653, %v5523, 0.0
    %v5599 = vsel %vm2654, %v5525, 0.0
    %v5600 = vsel %vm2655, %v5594, 0.0
    %v5601 = vsel %vm2656, %v5596, 0.0
    %v5602 = vadd.f32 %v5598, %v5599
    %v5603 = vadd.f32 %v5602, %v5600
    %v5604 = vadd.f32 %v5603, %v5601
    %5605 = vadd.xlane.f32.xlu0 %v5604
    %v5606 = vpop.xlane.xlu0 %5605
    %v5607 = vmul.f32 %v5598, %v5523
    %v5608 = vmul.f32 %v5599, %v5525
    %v5609 = vmul.f32 %v5600, %v5594
    %v5610 = vmul.f32 %v5601, %v5596
    %v5611 = vadd.f32 %v5607, %v5608
    %v5612 = vadd.f32 %v5611, %v5609
    %v5613 = vadd.f32 %v5612, %v5610
    %5614 = vadd.xlane.f32.xlu0 %v5613
    %v5615 = vpop.xlane.xlu0 %5614
    %v5616 = vmul.f32 %v5606, 0.0625
    %v5617 = vmul.f32 %v5615, 0.0625
    %v5618 = vmul.f32 %v5616, %v5616
    %v5619 = vsub.f32 %v5617, %v5618
    %v5620 = vmax.f32 %v5619, 0.0
    %v5621 = vsub.f32 %v5523, %v5616
    %v5622 = vsub.f32 %v5525, %v5616
    %v5623 = vsub.f32 %v5594, %v5616
    %v5624 = vsub.f32 %v5596, %v5616
    %v5625 = vadd.f32 %v5620, 1e-05
    %v5626 = vrsqrt.pop %v5625
    %v5627 = vmul.f32 %v5621, %v5626
    %v5628 = vmul.f32 %v5622, %v5626
    %v5629 = vmul.f32 %v5623, %v5626
    %v5630 = vmul.f32 %v5624, %v5626
    %v5631 = vadd.f32 %v4646, %v5627
    %v5632 = vadd.f32 %v4645, %v5628
    %v5633 = vadd.f32 %v4644, %v5629
    %v5634 = vadd.f32 %v4643, %v5630
    %s5635 = scalar_lea.vmem [#allocation7], 32
    %5636 = vst [vmem:[%s5635] sm:$0xff] %v5631
    %5637 = vst [vmem:[%s5635 + $0x8] sm:$0xff] %v5632
    %5638 = vst [vmem:[%s5635 + $0x10] sm:$0xff] %v5633
    %5639 = vst [vmem:[%s5635 + $0x18] sm:$0xff] %v5634
    // Predicated region
    $region30: #{tpu_custom_call.1} parent=1 // pred_check
      _
    $region31: #{tpu_custom_call.1} parent=1 // pred_check_branch
      %5641 = sbr.rel (0) target = $region33
    $region32: #{tpu_custom_call.1} parent=1 // pred_region
      %s5643 = ssub.s32 1024, 1024
      %5644 = vsyncadd [#allocation4], %s5643
      %s5645 = sshll.u32 [#allocation7], 4
      %s5646 = int_to_ptr.vmem [resolvable:$true] %s5645
      %5651 = dma.vmem_to_hbm [thread:$0]  %s5646, 1024, %s5, [#allocation4], 512, 512, 32
    $region33: #{tpu_custom_call.1} parent=1 // pred_fallthru
      _
    // Predicated region
    $region34: #{tpu_custom_call.1} parent=1 // pred_check
      _
    $region35: #{tpu_custom_call.1} parent=1 // pred_check_branch
      %5653 = sbr.rel (0) target = $region37
    $region36: #{tpu_custom_call.1} parent=1 // pred_region
      %5654 = dma.done [#allocation4], 1024
    $region37: #{tpu_custom_call.1} parent=1 // pred_fallthru
      _
    %5655 = vsyncpa [#allocation3], 1
    %5656 = vsyncpa [#allocation6], 1
    %5657 = vsyncpa [#allocation4], 1

</llo_original>
